<compile_context>
chip_gen: v5e
topology: v5e:2x2
jax: 0.10.0
libtpu: 0.0.40
codegen_flags: <defaults>
</compile_context>

<pallas_src>
import functools

import numpy as np
import jax
import jax.numpy as jnp
from jax import lax
from jax.experimental import pallas as pl
from jax.experimental.pallas import tpu as pltpu


# --------------------------------------------------------------------------------------
# model config (scaled-down VGG)
# --------------------------------------------------------------------------------------
_CFG = [8, 'M', 16, 'M', 32, 32, 'M']   # conv widths, 'M' = 2x2 maxpool
_HIDDEN = 64                            # stands in for VGG's 4096-wide classifier layers
_IN_CH = 3
_SPATIAL = 16


def _round_up(v, m):
    return ((v + m - 1) // m) * m


@functools.lru_cache(maxsize=None)
def _feature_plan():
    """Static layer plan + final (Ho, Wo, C)."""
    plan = []
    h = w = _SPATIAL
    cin = _IN_CH
    for v in _CFG:
        if v == 'M':
            plan.append(('pool', h, w, cin))
            h //= 2
            w //= 2
        else:
            plan.append(('conv', h, w, cin, v))
            cin = v
    return tuple(plan), h, w, cin


@functools.lru_cache(maxsize=None)
def _static_tables(n_batch):
    """Per-conv border masks (N*H*W, 9) and per-pool 0/1 row-selection matrices."""
    plan, _, _, _ = _feature_plan()
    tables = []
    for op in plan:
        if op[0] == 'conv':
            _, h, w, _, _ = op
            r = np.arange(n_batch * h * w)
            y = (r // w) % h
            x = r % w
            cols = []
            for dy in (-1, 0, 1):
                for dx in (-1, 0, 1):
                    ok = (y + dy >= 0) & (y + dy < h) & (x + dx >= 0) & (x + dx < w)
                    cols.append(ok.astype(np.float32))
            tables.append(jnp.asarray(np.stack(cols, axis=1)))          # (N*H*W, 9)
        else:
            _, h, w, _ = op
            ho, wo = h // 2, w // 2
            rows = n_batch * ho * wo
            i = np.arange(rows)
            n = i // (ho * wo)
            rem = i % (ho * wo)
            yo, xo = rem // wo, rem % wo
            src = n * h * w + (2 * yo) * w + 2 * xo
            sel = np.zeros((rows, n_batch * h * w), np.float32)
            sel[i, src] = 1.0
            tables.append(jnp.asarray(sel))                             # (N*Ho*Wo, N*H*W)
    return tuple(tables)


# --------------------------------------------------------------------------------------
# Fused kernel
# --------------------------------------------------------------------------------------
def _make_fused_kernel(plan, n_batch, rpi, c_last, hidden):
    """Builds the single fused forward kernel (features + classifier)."""

    def kernel(*refs):
        out_ref = refs[-1]
        it = iter(refs[:-1])
        x = next(it)[...]                                   # (N*H*W, Cin) flat NHWC rows

        # ---------------- feature stack: conv3x3+ReLU / fused 2x2 maxpool --------------
        for op in plan:
            if op[0] == 'conv':
                _, h, w, cin, cout = op
                w_ref, b_ref, m_ref = next(it), next(it), next(it)
                nhw = n_batch * h * w
                pad = _round_up(w + 1, 8)                   # sublane-aligned zero apron
                zpad = jnp.zeros((pad, cin), jnp.float32)
                xpad = jnp.concatenate([zpad, x, zpad], axis=0)
                acc = jnp.zeros((nhw, cout), jnp.float32)
                t = 0
                for dy in (-1, 0, 1):
                    for dx in (-1, 0, 1):
                        off = dy * w + dx
                        tap = xpad[pad + off: pad + off + nhw, :]   # shifted rows
                        if not (dy == 0 and dx == 0):
                            tap = tap * m_ref[:, t:t + 1]           # zero out-of-image taps
                        acc = acc + jnp.dot(tap, w_ref[t],
                                            preferred_element_type=jnp.float32)
                        t += 1
                x = jnp.maximum(acc + b_ref[...], 0.0)
            else:  # 'pool' : 2x2 / stride 2, fused right after the conv (data stays in VMEM)
                _, h, w, c = op
                s_ref = next(it)
                nhw = n_batch * h * w
                pad = _round_up(w + 1, 8)
                zpad = jnp.zeros((pad, c), jnp.float32)
                xp = jnp.concatenate([x, zpad], axis=0)
                a = jnp.maximum(x, xp[1:1 + nhw, :])        # max with +x neighbour
                ap = jnp.concatenate([a, zpad], axis=0)
                m2 = jnp.maximum(a, ap[w:w + nhw, :])       # max with +y neighbour
                # compact to (even y, even x) rows with a 0/1 selection matmul
                x = jnp.dot(s_ref[...], m2, preferred_element_type=jnp.float32)

        # -------- classifier[0:6]: Linear+ReLU+Dropout, Linear+ReLU+Dropout ------------
        # Flatten is fused into the first Linear (w1 rows pre-permuted to NHWC order).
        # TODO(synk): nn.Dropout is identity in eval mode; train-mode stochastic dropout
        #             (pltpu.prng_*) is not implemented.
        w1_ref, b1_ref, w2_ref, b2_ref = next(it), next(it), next(it), next(it)
        for i in range(n_batch):
            acc1 = jnp.zeros((1, hidden), jnp.float32)
            for p in range(rpi):
                row = x[i * rpi + p: i * rpi + p + 1, :]                 # (1, C)
                acc1 = acc1 + jnp.dot(row,
                                      w1_ref[p * c_last:(p + 1) * c_last, :],
                                      preferred_element_type=jnp.float32)
            h1 = jnp.maximum(acc1 + b1_ref[...], 0.0)
            h2 = jnp.dot(h1, w2_ref[...], preferred_element_type=jnp.float32)
            h2 = jnp.maximum(h2 + b2_ref[...], 0.0)
            out_ref[i:i + 1, :] = h2

    return kernel


# --------------------------------------------------------------------------------------
# Parameters (deterministic synthetic init)
# --------------------------------------------------------------------------------------
def init_params(key):
    plan, ho, wo, c_last = _feature_plan()
    params = {'convs': [], 'fc': None}
    for op in plan:
        if op[0] != 'conv':
            continue
        _, h, w, cin, cout = op
        key, k1, k2 = jax.random.split(key, 3)
        std = (2.0 / (cin * 9)) ** 0.5
        wgt = std * jax.random.normal(k1, (3, 3, cin, cout), jnp.float32)
        b = 0.01 * jax.random.normal(k2, (cout,), jnp.float32)
        params['convs'].append((wgt, b))

    d_flat = c_last * ho * wo
    key, k1, k2, k3, k4 = jax.random.split(key, 5)
    # w1 is generated in torch's NCHW-flatten row order (what a ported checkpoint would use),
    # then its rows are permuted ONCE to NHWC-flatten order so the kernel consumes the
    # NHWC-resident activation directly (no runtime transpose) with identical results.
    w1_nchw = (2.0 / d_flat) ** 0.5 * jax.random.normal(k1, (d_flat, _HIDDEN), jnp.float32)
    w1 = (w1_nchw.reshape(c_last, ho, wo, _HIDDEN)
          .transpose(1, 2, 0, 3)
          .reshape(d_flat, _HIDDEN))
    b1 = 0.01 * jax.random.normal(k2, (_HIDDEN,), jnp.float32)
    w2 = (2.0 / _HIDDEN) ** 0.5 * jax.random.normal(k3, (_HIDDEN, _HIDDEN), jnp.float32)
    b2 = 0.01 * jax.random.normal(k4, (_HIDDEN,), jnp.float32)
    params['fc'] = (w1, b1, w2, b2)
    return params


# --------------------------------------------------------------------------------------
# Forward (single fused pallas_call)
# --------------------------------------------------------------------------------------
def vgg_base_forward(x_nchw, params):
    n = x_nchw.shape[0]
    plan, ho, wo, c_last = _feature_plan()
    rpi = ho * wo
    tables = _static_tables(n)

    # single cheap layout transform: NCHW -> flat (N*H*W, C) NHWC rows
    x_flat = jnp.transpose(x_nchw, (0, 2, 3, 1)).reshape(n * _SPATIAL * _SPATIAL, _IN_CH)

    inputs = [x_flat]
    conv_i = 0
    for op, tbl in zip(plan, tables):
        if op[0] == 'conv':
            _, h, w, cin, cout = op
            wgt, b = params['convs'][conv_i]
            conv_i += 1
            inputs += [wgt.reshape(9, cin, cout), b.reshape(1, cout), tbl]
        else:
            inputs += [tbl]
    w1, b1, w2, b2 = params['fc']
    inputs += [w1, b1.reshape(1, _HIDDEN), w2, b2.reshape(1, _HIDDEN)]

    kernel = _make_fused_kernel(plan, n, rpi, c_last, _HIDDEN)
    return pl.pallas_call(
        kernel,
        out_shape=jax.ShapeDtypeStruct((n, _HIDDEN), jnp.float32),
        in_specs=[pl.BlockSpec(memory_space=pltpu.MemorySpace.VMEM)] * len(inputs),
        out_specs=pl.BlockSpec(memory_space=pltpu.MemorySpace.VMEM),
    )(*inputs)


# --------------------------------------------------------------------------------------
# Pure-JAX reference (for correctness check)
# --------------------------------------------------------------------------------------
def _reference_forward(x_nchw, params):
    plan, _, _, _ = _feature_plan()
    x = jnp.transpose(x_nchw, (0, 2, 3, 1))                 # NHWC
    conv_i = 0
    for op in plan:
        if op[0] == 'conv':
            wgt, b = params['convs'][conv_i]
            conv_i += 1
            x = lax.conv_general_dilated(x, wgt, window_strides=(1, 1), padding='SAME',
                                         dimension_numbers=('NHWC', 'HWIO', 'NHWC'))
            x = jnp.maximum(x + b, 0.0)
        else:
            x = lax.reduce_window(x, -jnp.inf, lax.max,
                                  (1, 2, 2, 1), (1, 2, 2, 1), 'VALID')
    n = x.shape[0]
    flat = x.reshape(n, -1)                                 # NHWC flatten (matches permuted w1)
    w1, b1, w2, b2 = params['fc']
    h1 = jnp.maximum(flat @ w1 + b1, 0.0)
    return jnp.maximum(h1 @ w2 + b2, 0.0)


if __name__ == "__main__":
    key = jax.random.PRNGKey(0)
    kx, kp = jax.random.split(key)
    x = jax.random.normal(kx, (2, _IN_CH, _SPATIAL, _SPATIAL), jnp.float32)
    params = init_params(kp)

    out = vgg_base_forward(x, params)
    out = jax.block_until_ready(out)

    assert out.shape == (2, _HIDDEN), out.shape
    assert bool(jnp.all(jnp.isfinite(out)))

    ref = _reference_forward(x, params)
    err = float(jnp.max(jnp.abs(out - ref)))
    assert bool(jnp.allclose(out, ref, atol=1e-3, rtol=1e-3)), err

    print("KERNEL_OK")
</pallas_src>

<mosaic_0001>
module attributes {stable_mosaic.version = 11 : i64} {
  func.func @kernel(%arg0: memref<512x3xf32, #tpu.memory_space<vmem>>, %arg1: memref<9x3x8xf32, #tpu.memory_space<vmem>>, %arg2: memref<1x8xf32, #tpu.memory_space<vmem>>, %arg3: memref<512x9xf32, #tpu.memory_space<vmem>>, %arg4: memref<128x512xf32, #tpu.memory_space<vmem>>, %arg5: memref<9x8x16xf32, #tpu.memory_space<vmem>>, %arg6: memref<1x16xf32, #tpu.memory_space<vmem>>, %arg7: memref<128x9xf32, #tpu.memory_space<vmem>>, %arg8: memref<32x128xf32, #tpu.memory_space<vmem>>, %arg9: memref<9x16x32xf32, #tpu.memory_space<vmem>>, %arg10: memref<1x32xf32, #tpu.memory_space<vmem>>, %arg11: memref<32x9xf32, #tpu.memory_space<vmem>>, %arg12: memref<9x32x32xf32, #tpu.memory_space<vmem>>, %arg13: memref<1x32xf32, #tpu.memory_space<vmem>>, %arg14: memref<32x9xf32, #tpu.memory_space<vmem>>, %arg15: memref<8x32xf32, #tpu.memory_space<vmem>>, %arg16: memref<128x64xf32, #tpu.memory_space<vmem>>, %arg17: memref<1x64xf32, #tpu.memory_space<vmem>>, %arg18: memref<64x64xf32, #tpu.memory_space<vmem>>, %arg19: memref<1x64xf32, #tpu.memory_space<vmem>>, %arg20: memref<2x64xf32, #tpu.memory_space<vmem>>) attributes {dimension_semantics = [], scalar_prefetch = 0 : i64, scratch_operands = 0 : i64, tpu.core_type = #tpu.core_type<tc>} {
    %c0 = arith.constant 0 : index
    %c0_0 = arith.constant 0 : index
    %0 = vector.load %arg0[%c0, %c0_0] : memref<512x3xf32, #tpu.memory_space<vmem>>, vector<512x3xf32>
    %cst = arith.constant 0.000000e+00 : f32
    %1 = vector.broadcast %cst : f32 to vector<24x3xf32>
    %2 = tpu.concatenate %1, %0, %1 in 0 : vector<24x3xf32>, vector<512x3xf32>, vector<24x3xf32> -> vector<560x3xf32>
    %cst_1 = arith.constant 0.000000e+00 : f32
    %3 = vector.broadcast %cst_1 : f32 to vector<512x8xf32>
    %4 = vector.extract_strided_slice %2 {offsets = [7, 0], sizes = [512, 3], strides = [1, 1]} : vector<560x3xf32> to vector<512x3xf32>
    %c0_2 = arith.constant 0 : index
    %c0_3 = arith.constant 0 : index
    %5 = vector.load %arg3[%c0_2, %c0_3] : memref<512x9xf32, #tpu.memory_space<vmem>>, vector<512x1xf32>
    %6 = vector.broadcast %5 : vector<512x1xf32> to vector<512x3xf32>
    %7 = arith.mulf %4, %6 : vector<512x3xf32>
    %c0_4 = arith.constant 0 : index
    %c0_5 = arith.constant 0 : index
    %c0_6 = arith.constant 0 : index
    %8 = vector.load %arg1[%c0_4, %c0_5, %c0_6] : memref<9x3x8xf32, #tpu.memory_space<vmem>>, vector<1x3x8xf32>
    %9 = vector.shape_cast %8 : vector<1x3x8xf32> to vector<3x8xf32>
    %cst_7 = arith.constant dense<0.000000e+00> : vector<512x8xf32>
    %10 = tpu.matmul %7, %9, %cst_7 {dimension_numbers = #tpu.dot_dimension_numbers<[1], [0], [0], [1], [0, 0, 1, 1], [], []>} : vector<512x3xf32>, vector<3x8xf32>, vector<512x8xf32> -> vector<512x8xf32>
    %11 = arith.addf %3, %10 : vector<512x8xf32>
    %12 = vector.extract_strided_slice %2 {offsets = [8, 0], sizes = [512, 3], strides = [1, 1]} : vector<560x3xf32> to vector<512x3xf32>
    %c0_8 = arith.constant 0 : index
    %c1 = arith.constant 1 : index
    %13 = vector.load %arg3[%c0_8, %c1] : memref<512x9xf32, #tpu.memory_space<vmem>>, vector<512x1xf32>
    %14 = vector.broadcast %13 : vector<512x1xf32> to vector<512x3xf32>
    %15 = arith.mulf %12, %14 : vector<512x3xf32>
    %c1_9 = arith.constant 1 : index
    %c0_10 = arith.constant 0 : index
    %c0_11 = arith.constant 0 : index
    %16 = vector.load %arg1[%c1_9, %c0_10, %c0_11] : memref<9x3x8xf32, #tpu.memory_space<vmem>>, vector<1x3x8xf32>
    %17 = vector.shape_cast %16 : vector<1x3x8xf32> to vector<3x8xf32>
    %cst_12 = arith.constant dense<0.000000e+00> : vector<512x8xf32>
    %18 = tpu.matmul %15, %17, %cst_12 {dimension_numbers = #tpu.dot_dimension_numbers<[1], [0], [0], [1], [0, 0, 1, 1], [], []>} : vector<512x3xf32>, vector<3x8xf32>, vector<512x8xf32> -> vector<512x8xf32>
    %19 = arith.addf %11, %18 : vector<512x8xf32>
    %20 = vector.extract_strided_slice %2 {offsets = [9, 0], sizes = [512, 3], strides = [1, 1]} : vector<560x3xf32> to vector<512x3xf32>
    %c0_13 = arith.constant 0 : index
    %c2 = arith.constant 2 : index
    %21 = vector.load %arg3[%c0_13, %c2] : memref<512x9xf32, #tpu.memory_space<vmem>>, vector<512x1xf32>
    %22 = vector.broadcast %21 : vector<512x1xf32> to vector<512x3xf32>
    %23 = arith.mulf %20, %22 : vector<512x3xf32>
    %c2_14 = arith.constant 2 : index
    %c0_15 = arith.constant 0 : index
    %c0_16 = arith.constant 0 : index
    %24 = vector.load %arg1[%c2_14, %c0_15, %c0_16] : memref<9x3x8xf32, #tpu.memory_space<vmem>>, vector<1x3x8xf32>
    %25 = vector.shape_cast %24 : vector<1x3x8xf32> to vector<3x8xf32>
    %cst_17 = arith.constant dense<0.000000e+00> : vector<512x8xf32>
    %26 = tpu.matmul %23, %25, %cst_17 {dimension_numbers = #tpu.dot_dimension_numbers<[1], [0], [0], [1], [0, 0, 1, 1], [], []>} : vector<512x3xf32>, vector<3x8xf32>, vector<512x8xf32> -> vector<512x8xf32>
    %27 = arith.addf %19, %26 : vector<512x8xf32>
    %28 = vector.extract_strided_slice %2 {offsets = [23, 0], sizes = [512, 3], strides = [1, 1]} : vector<560x3xf32> to vector<512x3xf32>
    %c0_18 = arith.constant 0 : index
    %c3 = arith.constant 3 : index
    %29 = vector.load %arg3[%c0_18, %c3] : memref<512x9xf32, #tpu.memory_space<vmem>>, vector<512x1xf32>
    %30 = vector.broadcast %29 : vector<512x1xf32> to vector<512x3xf32>
    %31 = arith.mulf %28, %30 : vector<512x3xf32>
    %c3_19 = arith.constant 3 : index
    %c0_20 = arith.constant 0 : index
    %c0_21 = arith.constant 0 : index
    %32 = vector.load %arg1[%c3_19, %c0_20, %c0_21] : memref<9x3x8xf32, #tpu.memory_space<vmem>>, vector<1x3x8xf32>
    %33 = vector.shape_cast %32 : vector<1x3x8xf32> to vector<3x8xf32>
    %cst_22 = arith.constant dense<0.000000e+00> : vector<512x8xf32>
    %34 = tpu.matmul %31, %33, %cst_22 {dimension_numbers = #tpu.dot_dimension_numbers<[1], [0], [0], [1], [0, 0, 1, 1], [], []>} : vector<512x3xf32>, vector<3x8xf32>, vector<512x8xf32> -> vector<512x8xf32>
    %35 = arith.addf %27, %34 : vector<512x8xf32>
    %36 = vector.extract_strided_slice %2 {offsets = [24, 0], sizes = [512, 3], strides = [1, 1]} : vector<560x3xf32> to vector<512x3xf32>
    %c4 = arith.constant 4 : index
    %c0_23 = arith.constant 0 : index
    %c0_24 = arith.constant 0 : index
    %37 = vector.load %arg1[%c4, %c0_23, %c0_24] : memref<9x3x8xf32, #tpu.memory_space<vmem>>, vector<1x3x8xf32>
    %38 = vector.shape_cast %37 : vector<1x3x8xf32> to vector<3x8xf32>
    %cst_25 = arith.constant dense<0.000000e+00> : vector<512x8xf32>
    %39 = tpu.matmul %36, %38, %cst_25 {dimension_numbers = #tpu.dot_dimension_numbers<[1], [0], [0], [1], [0, 0, 1, 1], [], []>} : vector<512x3xf32>, vector<3x8xf32>, vector<512x8xf32> -> vector<512x8xf32>
    %40 = arith.addf %35, %39 : vector<512x8xf32>
    %41 = vector.extract_strided_slice %2 {offsets = [25, 0], sizes = [512, 3], strides = [1, 1]} : vector<560x3xf32> to vector<512x3xf32>
    %c0_26 = arith.constant 0 : index
    %c5 = arith.constant 5 : index
    %42 = vector.load %arg3[%c0_26, %c5] : memref<512x9xf32, #tpu.memory_space<vmem>>, vector<512x1xf32>
    %43 = vector.broadcast %42 : vector<512x1xf32> to vector<512x3xf32>
    %44 = arith.mulf %41, %43 : vector<512x3xf32>
    %c5_27 = arith.constant 5 : index
    %c0_28 = arith.constant 0 : index
    %c0_29 = arith.constant 0 : index
    %45 = vector.load %arg1[%c5_27, %c0_28, %c0_29] : memref<9x3x8xf32, #tpu.memory_space<vmem>>, vector<1x3x8xf32>
    %46 = vector.shape_cast %45 : vector<1x3x8xf32> to vector<3x8xf32>
    %cst_30 = arith.constant dense<0.000000e+00> : vector<512x8xf32>
    %47 = tpu.matmul %44, %46, %cst_30 {dimension_numbers = #tpu.dot_dimension_numbers<[1], [0], [0], [1], [0, 0, 1, 1], [], []>} : vector<512x3xf32>, vector<3x8xf32>, vector<512x8xf32> -> vector<512x8xf32>
    %48 = arith.addf %40, %47 : vector<512x8xf32>
    %49 = vector.extract_strided_slice %2 {offsets = [39, 0], sizes = [512, 3], strides = [1, 1]} : vector<560x3xf32> to vector<512x3xf32>
    %c0_31 = arith.constant 0 : index
    %c6 = arith.constant 6 : index
    %50 = vector.load %arg3[%c0_31, %c6] : memref<512x9xf32, #tpu.memory_space<vmem>>, vector<512x1xf32>
    %51 = vector.broadcast %50 : vector<512x1xf32> to vector<512x3xf32>
    %52 = arith.mulf %49, %51 : vector<512x3xf32>
    %c6_32 = arith.constant 6 : index
    %c0_33 = arith.constant 0 : index
    %c0_34 = arith.constant 0 : index
    %53 = vector.load %arg1[%c6_32, %c0_33, %c0_34] : memref<9x3x8xf32, #tpu.memory_space<vmem>>, vector<1x3x8xf32>
    %54 = vector.shape_cast %53 : vector<1x3x8xf32> to vector<3x8xf32>
    %cst_35 = arith.constant dense<0.000000e+00> : vector<512x8xf32>
    %55 = tpu.matmul %52, %54, %cst_35 {dimension_numbers = #tpu.dot_dimension_numbers<[1], [0], [0], [1], [0, 0, 1, 1], [], []>} : vector<512x3xf32>, vector<3x8xf32>, vector<512x8xf32> -> vector<512x8xf32>
    %56 = arith.addf %48, %55 : vector<512x8xf32>
    %57 = vector.extract_strided_slice %2 {offsets = [40, 0], sizes = [512, 3], strides = [1, 1]} : vector<560x3xf32> to vector<512x3xf32>
    %c0_36 = arith.constant 0 : index
    %c7 = arith.constant 7 : index
    %58 = vector.load %arg3[%c0_36, %c7] : memref<512x9xf32, #tpu.memory_space<vmem>>, vector<512x1xf32>
    %59 = vector.broadcast %58 : vector<512x1xf32> to vector<512x3xf32>
    %60 = arith.mulf %57, %59 : vector<512x3xf32>
    %c7_37 = arith.constant 7 : index
    %c0_38 = arith.constant 0 : index
    %c0_39 = arith.constant 0 : index
    %61 = vector.load %arg1[%c7_37, %c0_38, %c0_39] : memref<9x3x8xf32, #tpu.memory_space<vmem>>, vector<1x3x8xf32>
    %62 = vector.shape_cast %61 : vector<1x3x8xf32> to vector<3x8xf32>
    %cst_40 = arith.constant dense<0.000000e+00> : vector<512x8xf32>
    %63 = tpu.matmul %60, %62, %cst_40 {dimension_numbers = #tpu.dot_dimension_numbers<[1], [0], [0], [1], [0, 0, 1, 1], [], []>} : vector<512x3xf32>, vector<3x8xf32>, vector<512x8xf32> -> vector<512x8xf32>
    %64 = arith.addf %56, %63 : vector<512x8xf32>
    %65 = vector.extract_strided_slice %2 {offsets = [41, 0], sizes = [512, 3], strides = [1, 1]} : vector<560x3xf32> to vector<512x3xf32>
    %c0_41 = arith.constant 0 : index
    %c8 = arith.constant 8 : index
    %66 = vector.load %arg3[%c0_41, %c8] : memref<512x9xf32, #tpu.memory_space<vmem>>, vector<512x1xf32>
    %67 = vector.broadcast %66 : vector<512x1xf32> to vector<512x3xf32>
    %68 = arith.mulf %65, %67 : vector<512x3xf32>
    %c8_42 = arith.constant 8 : index
    %c0_43 = arith.constant 0 : index
    %c0_44 = arith.constant 0 : index
    %69 = vector.load %arg1[%c8_42, %c0_43, %c0_44] : memref<9x3x8xf32, #tpu.memory_space<vmem>>, vector<1x3x8xf32>
    %70 = vector.shape_cast %69 : vector<1x3x8xf32> to vector<3x8xf32>
    %cst_45 = arith.constant dense<0.000000e+00> : vector<512x8xf32>
    %71 = tpu.matmul %68, %70, %cst_45 {dimension_numbers = #tpu.dot_dimension_numbers<[1], [0], [0], [1], [0, 0, 1, 1], [], []>} : vector<512x3xf32>, vector<3x8xf32>, vector<512x8xf32> -> vector<512x8xf32>
    %72 = arith.addf %64, %71 : vector<512x8xf32>
    %c0_46 = arith.constant 0 : index
    %c0_47 = arith.constant 0 : index
    %73 = vector.load %arg2[%c0_46, %c0_47] : memref<1x8xf32, #tpu.memory_space<vmem>>, vector<1x8xf32>
    %74 = vector.broadcast %73 : vector<1x8xf32> to vector<512x8xf32>
    %75 = arith.addf %72, %74 : vector<512x8xf32>
    %cst_48 = arith.constant 0.000000e+00 : f32
    %76 = vector.broadcast %cst_48 : f32 to vector<512x8xf32>
    %77 = arith.maximumf %75, %76 : vector<512x8xf32>
    %cst_49 = arith.constant 0.000000e+00 : f32
    %78 = vector.broadcast %cst_49 : f32 to vector<24x8xf32>
    %79 = tpu.concatenate %77, %78 in 0 : vector<512x8xf32>, vector<24x8xf32> -> vector<536x8xf32>
    %80 = vector.extract_strided_slice %79 {offsets = [1, 0], sizes = [512, 8], strides = [1, 1]} : vector<536x8xf32> to vector<512x8xf32>
    %81 = arith.maximumf %77, %80 : vector<512x8xf32>
    %82 = tpu.concatenate %81, %78 in 0 : vector<512x8xf32>, vector<24x8xf32> -> vector<536x8xf32>
    %83 = vector.extract_strided_slice %82 {offsets = [16, 0], sizes = [512, 8], strides = [1, 1]} : vector<536x8xf32> to vector<512x8xf32>
    %84 = arith.maximumf %81, %83 : vector<512x8xf32>
    %c0_50 = arith.constant 0 : index
    %c0_51 = arith.constant 0 : index
    %85 = vector.load %arg4[%c0_50, %c0_51] : memref<128x512xf32, #tpu.memory_space<vmem>>, vector<128x512xf32>
    %cst_52 = arith.constant dense<0.000000e+00> : vector<128x8xf32>
    %86 = tpu.matmul %85, %84, %cst_52 {dimension_numbers = #tpu.dot_dimension_numbers<[1], [0], [0], [1], [0, 0, 1, 1], [], []>} : vector<128x512xf32>, vector<512x8xf32>, vector<128x8xf32> -> vector<128x8xf32>
    %cst_53 = arith.constant 0.000000e+00 : f32
    %87 = vector.broadcast %cst_53 : f32 to vector<16x8xf32>
    %88 = tpu.concatenate %87, %86, %87 in 0 : vector<16x8xf32>, vector<128x8xf32>, vector<16x8xf32> -> vector<160x8xf32>
    %cst_54 = arith.constant 0.000000e+00 : f32
    %89 = vector.broadcast %cst_54 : f32 to vector<128x16xf32>
    %90 = vector.extract_strided_slice %88 {offsets = [7, 0], sizes = [128, 8], strides = [1, 1]} : vector<160x8xf32> to vector<128x8xf32>
    %c0_55 = arith.constant 0 : index
    %c0_56 = arith.constant 0 : index
    %91 = vector.load %arg7[%c0_55, %c0_56] : memref<128x9xf32, #tpu.memory_space<vmem>>, vector<128x1xf32>
    %92 = vector.broadcast %91 : vector<128x1xf32> to vector<128x8xf32>
    %93 = arith.mulf %90, %92 : vector<128x8xf32>
    %c0_57 = arith.constant 0 : index
    %c0_58 = arith.constant 0 : index
    %c0_59 = arith.constant 0 : index
    %94 = vector.load %arg5[%c0_57, %c0_58, %c0_59] : memref<9x8x16xf32, #tpu.memory_space<vmem>>, vector<1x8x16xf32>
    %95 = vector.shape_cast %94 : vector<1x8x16xf32> to vector<8x16xf32>
    %cst_60 = arith.constant dense<0.000000e+00> : vector<128x16xf32>
    %96 = tpu.matmul %93, %95, %cst_60 {dimension_numbers = #tpu.dot_dimension_numbers<[1], [0], [0], [1], [0, 0, 1, 1], [], []>} : vector<128x8xf32>, vector<8x16xf32>, vector<128x16xf32> -> vector<128x16xf32>
    %97 = arith.addf %89, %96 : vector<128x16xf32>
    %98 = vector.extract_strided_slice %88 {offsets = [8, 0], sizes = [128, 8], strides = [1, 1]} : vector<160x8xf32> to vector<128x8xf32>
    %c0_61 = arith.constant 0 : index
    %c1_62 = arith.constant 1 : index
    %99 = vector.load %arg7[%c0_61, %c1_62] : memref<128x9xf32, #tpu.memory_space<vmem>>, vector<128x1xf32>
    %100 = vector.broadcast %99 : vector<128x1xf32> to vector<128x8xf32>
    %101 = arith.mulf %98, %100 : vector<128x8xf32>
    %c1_63 = arith.constant 1 : index
    %c0_64 = arith.constant 0 : index
    %c0_65 = arith.constant 0 : index
    %102 = vector.load %arg5[%c1_63, %c0_64, %c0_65] : memref<9x8x16xf32, #tpu.memory_space<vmem>>, vector<1x8x16xf32>
    %103 = vector.shape_cast %102 : vector<1x8x16xf32> to vector<8x16xf32>
    %cst_66 = arith.constant dense<0.000000e+00> : vector<128x16xf32>
    %104 = tpu.matmul %101, %103, %cst_66 {dimension_numbers = #tpu.dot_dimension_numbers<[1], [0], [0], [1], [0, 0, 1, 1], [], []>} : vector<128x8xf32>, vector<8x16xf32>, vector<128x16xf32> -> vector<128x16xf32>
    %105 = arith.addf %97, %104 : vector<128x16xf32>
    %106 = vector.extract_strided_slice %88 {offsets = [9, 0], sizes = [128, 8], strides = [1, 1]} : vector<160x8xf32> to vector<128x8xf32>
    %c0_67 = arith.constant 0 : index
    %c2_68 = arith.constant 2 : index
    %107 = vector.load %arg7[%c0_67, %c2_68] : memref<128x9xf32, #tpu.memory_space<vmem>>, vector<128x1xf32>
    %108 = vector.broadcast %107 : vector<128x1xf32> to vector<128x8xf32>
    %109 = arith.mulf %106, %108 : vector<128x8xf32>
    %c2_69 = arith.constant 2 : index
    %c0_70 = arith.constant 0 : index
    %c0_71 = arith.constant 0 : index
    %110 = vector.load %arg5[%c2_69, %c0_70, %c0_71] : memref<9x8x16xf32, #tpu.memory_space<vmem>>, vector<1x8x16xf32>
    %111 = vector.shape_cast %110 : vector<1x8x16xf32> to vector<8x16xf32>
    %cst_72 = arith.constant dense<0.000000e+00> : vector<128x16xf32>
    %112 = tpu.matmul %109, %111, %cst_72 {dimension_numbers = #tpu.dot_dimension_numbers<[1], [0], [0], [1], [0, 0, 1, 1], [], []>} : vector<128x8xf32>, vector<8x16xf32>, vector<128x16xf32> -> vector<128x16xf32>
    %113 = arith.addf %105, %112 : vector<128x16xf32>
    %114 = vector.extract_strided_slice %88 {offsets = [15, 0], sizes = [128, 8], strides = [1, 1]} : vector<160x8xf32> to vector<128x8xf32>
    %c0_73 = arith.constant 0 : index
    %c3_74 = arith.constant 3 : index
    %115 = vector.load %arg7[%c0_73, %c3_74] : memref<128x9xf32, #tpu.memory_space<vmem>>, vector<128x1xf32>
    %116 = vector.broadcast %115 : vector<128x1xf32> to vector<128x8xf32>
    %117 = arith.mulf %114, %116 : vector<128x8xf32>
    %c3_75 = arith.constant 3 : index
    %c0_76 = arith.constant 0 : index
    %c0_77 = arith.constant 0 : index
    %118 = vector.load %arg5[%c3_75, %c0_76, %c0_77] : memref<9x8x16xf32, #tpu.memory_space<vmem>>, vector<1x8x16xf32>
    %119 = vector.shape_cast %118 : vector<1x8x16xf32> to vector<8x16xf32>
    %cst_78 = arith.constant dense<0.000000e+00> : vector<128x16xf32>
    %120 = tpu.matmul %117, %119, %cst_78 {dimension_numbers = #tpu.dot_dimension_numbers<[1], [0], [0], [1], [0, 0, 1, 1], [], []>} : vector<128x8xf32>, vector<8x16xf32>, vector<128x16xf32> -> vector<128x16xf32>
    %121 = arith.addf %113, %120 : vector<128x16xf32>
    %122 = vector.extract_strided_slice %88 {offsets = [16, 0], sizes = [128, 8], strides = [1, 1]} : vector<160x8xf32> to vector<128x8xf32>
    %c4_79 = arith.constant 4 : index
    %c0_80 = arith.constant 0 : index
    %c0_81 = arith.constant 0 : index
    %123 = vector.load %arg5[%c4_79, %c0_80, %c0_81] : memref<9x8x16xf32, #tpu.memory_space<vmem>>, vector<1x8x16xf32>
    %124 = vector.shape_cast %123 : vector<1x8x16xf32> to vector<8x16xf32>
    %cst_82 = arith.constant dense<0.000000e+00> : vector<128x16xf32>
    %125 = tpu.matmul %122, %124, %cst_82 {dimension_numbers = #tpu.dot_dimension_numbers<[1], [0], [0], [1], [0, 0, 1, 1], [], []>} : vector<128x8xf32>, vector<8x16xf32>, vector<128x16xf32> -> vector<128x16xf32>
    %126 = arith.addf %121, %125 : vector<128x16xf32>
    %127 = vector.extract_strided_slice %88 {offsets = [17, 0], sizes = [128, 8], strides = [1, 1]} : vector<160x8xf32> to vector<128x8xf32>
    %c0_83 = arith.constant 0 : index
    %c5_84 = arith.constant 5 : index
    %128 = vector.load %arg7[%c0_83, %c5_84] : memref<128x9xf32, #tpu.memory_space<vmem>>, vector<128x1xf32>
    %129 = vector.broadcast %128 : vector<128x1xf32> to vector<128x8xf32>
    %130 = arith.mulf %127, %129 : vector<128x8xf32>
    %c5_85 = arith.constant 5 : index
    %c0_86 = arith.constant 0 : index
    %c0_87 = arith.constant 0 : index
    %131 = vector.load %arg5[%c5_85, %c0_86, %c0_87] : memref<9x8x16xf32, #tpu.memory_space<vmem>>, vector<1x8x16xf32>
    %132 = vector.shape_cast %131 : vector<1x8x16xf32> to vector<8x16xf32>
    %cst_88 = arith.constant dense<0.000000e+00> : vector<128x16xf32>
    %133 = tpu.matmul %130, %132, %cst_88 {dimension_numbers = #tpu.dot_dimension_numbers<[1], [0], [0], [1], [0, 0, 1, 1], [], []>} : vector<128x8xf32>, vector<8x16xf32>, vector<128x16xf32> -> vector<128x16xf32>
    %134 = arith.addf %126, %133 : vector<128x16xf32>
    %135 = vector.extract_strided_slice %88 {offsets = [23, 0], sizes = [128, 8], strides = [1, 1]} : vector<160x8xf32> to vector<128x8xf32>
    %c0_89 = arith.constant 0 : index
    %c6_90 = arith.constant 6 : index
    %136 = vector.load %arg7[%c0_89, %c6_90] : memref<128x9xf32, #tpu.memory_space<vmem>>, vector<128x1xf32>
    %137 = vector.broadcast %136 : vector<128x1xf32> to vector<128x8xf32>
    %138 = arith.mulf %135, %137 : vector<128x8xf32>
    %c6_91 = arith.constant 6 : index
    %c0_92 = arith.constant 0 : index
    %c0_93 = arith.constant 0 : index
    %139 = vector.load %arg5[%c6_91, %c0_92, %c0_93] : memref<9x8x16xf32, #tpu.memory_space<vmem>>, vector<1x8x16xf32>
    %140 = vector.shape_cast %139 : vector<1x8x16xf32> to vector<8x16xf32>
    %cst_94 = arith.constant dense<0.000000e+00> : vector<128x16xf32>
    %141 = tpu.matmul %138, %140, %cst_94 {dimension_numbers = #tpu.dot_dimension_numbers<[1], [0], [0], [1], [0, 0, 1, 1], [], []>} : vector<128x8xf32>, vector<8x16xf32>, vector<128x16xf32> -> vector<128x16xf32>
    %142 = arith.addf %134, %141 : vector<128x16xf32>
    %143 = vector.extract_strided_slice %88 {offsets = [24, 0], sizes = [128, 8], strides = [1, 1]} : vector<160x8xf32> to vector<128x8xf32>
    %c0_95 = arith.constant 0 : index
    %c7_96 = arith.constant 7 : index
    %144 = vector.load %arg7[%c0_95, %c7_96] : memref<128x9xf32, #tpu.memory_space<vmem>>, vector<128x1xf32>
    %145 = vector.broadcast %144 : vector<128x1xf32> to vector<128x8xf32>
    %146 = arith.mulf %143, %145 : vector<128x8xf32>
    %c7_97 = arith.constant 7 : index
    %c0_98 = arith.constant 0 : index
    %c0_99 = arith.constant 0 : index
    %147 = vector.load %arg5[%c7_97, %c0_98, %c0_99] : memref<9x8x16xf32, #tpu.memory_space<vmem>>, vector<1x8x16xf32>
    %148 = vector.shape_cast %147 : vector<1x8x16xf32> to vector<8x16xf32>
    %cst_100 = arith.constant dense<0.000000e+00> : vector<128x16xf32>
    %149 = tpu.matmul %146, %148, %cst_100 {dimension_numbers = #tpu.dot_dimension_numbers<[1], [0], [0], [1], [0, 0, 1, 1], [], []>} : vector<128x8xf32>, vector<8x16xf32>, vector<128x16xf32> -> vector<128x16xf32>
    %150 = arith.addf %142, %149 : vector<128x16xf32>
    %151 = vector.extract_strided_slice %88 {offsets = [25, 0], sizes = [128, 8], strides = [1, 1]} : vector<160x8xf32> to vector<128x8xf32>
    %c0_101 = arith.constant 0 : index
    %c8_102 = arith.constant 8 : index
    %152 = vector.load %arg7[%c0_101, %c8_102] : memref<128x9xf32, #tpu.memory_space<vmem>>, vector<128x1xf32>
    %153 = vector.broadcast %152 : vector<128x1xf32> to vector<128x8xf32>
    %154 = arith.mulf %151, %153 : vector<128x8xf32>
    %c8_103 = arith.constant 8 : index
    %c0_104 = arith.constant 0 : index
    %c0_105 = arith.constant 0 : index
    %155 = vector.load %arg5[%c8_103, %c0_104, %c0_105] : memref<9x8x16xf32, #tpu.memory_space<vmem>>, vector<1x8x16xf32>
    %156 = vector.shape_cast %155 : vector<1x8x16xf32> to vector<8x16xf32>
    %cst_106 = arith.constant dense<0.000000e+00> : vector<128x16xf32>
    %157 = tpu.matmul %154, %156, %cst_106 {dimension_numbers = #tpu.dot_dimension_numbers<[1], [0], [0], [1], [0, 0, 1, 1], [], []>} : vector<128x8xf32>, vector<8x16xf32>, vector<128x16xf32> -> vector<128x16xf32>
    %158 = arith.addf %150, %157 : vector<128x16xf32>
    %c0_107 = arith.constant 0 : index
    %c0_108 = arith.constant 0 : index
    %159 = vector.load %arg6[%c0_107, %c0_108] : memref<1x16xf32, #tpu.memory_space<vmem>>, vector<1x16xf32>
    %160 = vector.broadcast %159 : vector<1x16xf32> to vector<128x16xf32>
    %161 = arith.addf %158, %160 : vector<128x16xf32>
    %cst_109 = arith.constant 0.000000e+00 : f32
    %162 = vector.broadcast %cst_109 : f32 to vector<128x16xf32>
    %163 = arith.maximumf %161, %162 : vector<128x16xf32>
    %cst_110 = arith.constant 0.000000e+00 : f32
    %164 = vector.broadcast %cst_110 : f32 to vector<16x16xf32>
    %165 = tpu.concatenate %163, %164 in 0 : vector<128x16xf32>, vector<16x16xf32> -> vector<144x16xf32>
    %166 = vector.extract_strided_slice %165 {offsets = [1, 0], sizes = [128, 16], strides = [1, 1]} : vector<144x16xf32> to vector<128x16xf32>
    %167 = arith.maximumf %163, %166 : vector<128x16xf32>
    %168 = tpu.concatenate %167, %164 in 0 : vector<128x16xf32>, vector<16x16xf32> -> vector<144x16xf32>
    %169 = vector.extract_strided_slice %168 {offsets = [8, 0], sizes = [128, 16], strides = [1, 1]} : vector<144x16xf32> to vector<128x16xf32>
    %170 = arith.maximumf %167, %169 : vector<128x16xf32>
    %c0_111 = arith.constant 0 : index
    %c0_112 = arith.constant 0 : index
    %171 = vector.load %arg8[%c0_111, %c0_112] : memref<32x128xf32, #tpu.memory_space<vmem>>, vector<32x128xf32>
    %cst_113 = arith.constant dense<0.000000e+00> : vector<32x16xf32>
    %172 = tpu.matmul %171, %170, %cst_113 {dimension_numbers = #tpu.dot_dimension_numbers<[1], [0], [0], [1], [0, 0, 1, 1], [], []>} : vector<32x128xf32>, vector<128x16xf32>, vector<32x16xf32> -> vector<32x16xf32>
    %cst_114 = arith.constant 0.000000e+00 : f32
    %173 = vector.broadcast %cst_114 : f32 to vector<8x16xf32>
    %174 = tpu.concatenate %173, %172, %173 in 0 : vector<8x16xf32>, vector<32x16xf32>, vector<8x16xf32> -> vector<48x16xf32>
    %cst_115 = arith.constant 0.000000e+00 : f32
    %175 = vector.broadcast %cst_115 : f32 to vector<32x32xf32>
    %176 = vector.extract_strided_slice %174 {offsets = [3, 0], sizes = [32, 16], strides = [1, 1]} : vector<48x16xf32> to vector<32x16xf32>
    %c0_116 = arith.constant 0 : index
    %c0_117 = arith.constant 0 : index
    %177 = vector.load %arg11[%c0_116, %c0_117] : memref<32x9xf32, #tpu.memory_space<vmem>>, vector<32x1xf32>
    %178 = vector.broadcast %177 : vector<32x1xf32> to vector<32x16xf32>
    %179 = arith.mulf %176, %178 : vector<32x16xf32>
    %c0_118 = arith.constant 0 : index
    %c0_119 = arith.constant 0 : index
    %c0_120 = arith.constant 0 : index
    %180 = vector.load %arg9[%c0_118, %c0_119, %c0_120] : memref<9x16x32xf32, #tpu.memory_space<vmem>>, vector<1x16x32xf32>
    %181 = vector.shape_cast %180 : vector<1x16x32xf32> to vector<16x32xf32>
    %cst_121 = arith.constant dense<0.000000e+00> : vector<32x32xf32>
    %182 = tpu.matmul %179, %181, %cst_121 {dimension_numbers = #tpu.dot_dimension_numbers<[1], [0], [0], [1], [0, 0, 1, 1], [], []>} : vector<32x16xf32>, vector<16x32xf32>, vector<32x32xf32> -> vector<32x32xf32>
    %183 = arith.addf %175, %182 : vector<32x32xf32>
    %184 = vector.extract_strided_slice %174 {offsets = [4, 0], sizes = [32, 16], strides = [1, 1]} : vector<48x16xf32> to vector<32x16xf32>
    %c0_122 = arith.constant 0 : index
    %c1_123 = arith.constant 1 : index
    %185 = vector.load %arg11[%c0_122, %c1_123] : memref<32x9xf32, #tpu.memory_space<vmem>>, vector<32x1xf32>
    %186 = vector.broadcast %185 : vector<32x1xf32> to vector<32x16xf32>
    %187 = arith.mulf %184, %186 : vector<32x16xf32>
    %c1_124 = arith.constant 1 : index
    %c0_125 = arith.constant 0 : index
    %c0_126 = arith.constant 0 : index
    %188 = vector.load %arg9[%c1_124, %c0_125, %c0_126] : memref<9x16x32xf32, #tpu.memory_space<vmem>>, vector<1x16x32xf32>
    %189 = vector.shape_cast %188 : vector<1x16x32xf32> to vector<16x32xf32>
    %cst_127 = arith.constant dense<0.000000e+00> : vector<32x32xf32>
    %190 = tpu.matmul %187, %189, %cst_127 {dimension_numbers = #tpu.dot_dimension_numbers<[1], [0], [0], [1], [0, 0, 1, 1], [], []>} : vector<32x16xf32>, vector<16x32xf32>, vector<32x32xf32> -> vector<32x32xf32>
    %191 = arith.addf %183, %190 : vector<32x32xf32>
    %192 = vector.extract_strided_slice %174 {offsets = [5, 0], sizes = [32, 16], strides = [1, 1]} : vector<48x16xf32> to vector<32x16xf32>
    %c0_128 = arith.constant 0 : index
    %c2_129 = arith.constant 2 : index
    %193 = vector.load %arg11[%c0_128, %c2_129] : memref<32x9xf32, #tpu.memory_space<vmem>>, vector<32x1xf32>
    %194 = vector.broadcast %193 : vector<32x1xf32> to vector<32x16xf32>
    %195 = arith.mulf %192, %194 : vector<32x16xf32>
    %c2_130 = arith.constant 2 : index
    %c0_131 = arith.constant 0 : index
    %c0_132 = arith.constant 0 : index
    %196 = vector.load %arg9[%c2_130, %c0_131, %c0_132] : memref<9x16x32xf32, #tpu.memory_space<vmem>>, vector<1x16x32xf32>
    %197 = vector.shape_cast %196 : vector<1x16x32xf32> to vector<16x32xf32>
    %cst_133 = arith.constant dense<0.000000e+00> : vector<32x32xf32>
    %198 = tpu.matmul %195, %197, %cst_133 {dimension_numbers = #tpu.dot_dimension_numbers<[1], [0], [0], [1], [0, 0, 1, 1], [], []>} : vector<32x16xf32>, vector<16x32xf32>, vector<32x32xf32> -> vector<32x32xf32>
    %199 = arith.addf %191, %198 : vector<32x32xf32>
    %200 = vector.extract_strided_slice %174 {offsets = [7, 0], sizes = [32, 16], strides = [1, 1]} : vector<48x16xf32> to vector<32x16xf32>
    %c0_134 = arith.constant 0 : index
    %c3_135 = arith.constant 3 : index
    %201 = vector.load %arg11[%c0_134, %c3_135] : memref<32x9xf32, #tpu.memory_space<vmem>>, vector<32x1xf32>
    %202 = vector.broadcast %201 : vector<32x1xf32> to vector<32x16xf32>
    %203 = arith.mulf %200, %202 : vector<32x16xf32>
    %c3_136 = arith.constant 3 : index
    %c0_137 = arith.constant 0 : index
    %c0_138 = arith.constant 0 : index
    %204 = vector.load %arg9[%c3_136, %c0_137, %c0_138] : memref<9x16x32xf32, #tpu.memory_space<vmem>>, vector<1x16x32xf32>
    %205 = vector.shape_cast %204 : vector<1x16x32xf32> to vector<16x32xf32>
    %cst_139 = arith.constant dense<0.000000e+00> : vector<32x32xf32>
    %206 = tpu.matmul %203, %205, %cst_139 {dimension_numbers = #tpu.dot_dimension_numbers<[1], [0], [0], [1], [0, 0, 1, 1], [], []>} : vector<32x16xf32>, vector<16x32xf32>, vector<32x32xf32> -> vector<32x32xf32>
    %207 = arith.addf %199, %206 : vector<32x32xf32>
    %208 = vector.extract_strided_slice %174 {offsets = [8, 0], sizes = [32, 16], strides = [1, 1]} : vector<48x16xf32> to vector<32x16xf32>
    %c4_140 = arith.constant 4 : index
    %c0_141 = arith.constant 0 : index
    %c0_142 = arith.constant 0 : index
    %209 = vector.load %arg9[%c4_140, %c0_141, %c0_142] : memref<9x16x32xf32, #tpu.memory_space<vmem>>, vector<1x16x32xf32>
    %210 = vector.shape_cast %209 : vector<1x16x32xf32> to vector<16x32xf32>
    %cst_143 = arith.constant dense<0.000000e+00> : vector<32x32xf32>
    %211 = tpu.matmul %208, %210, %cst_143 {dimension_numbers = #tpu.dot_dimension_numbers<[1], [0], [0], [1], [0, 0, 1, 1], [], []>} : vector<32x16xf32>, vector<16x32xf32>, vector<32x32xf32> -> vector<32x32xf32>
    %212 = arith.addf %207, %211 : vector<32x32xf32>
    %213 = vector.extract_strided_slice %174 {offsets = [9, 0], sizes = [32, 16], strides = [1, 1]} : vector<48x16xf32> to vector<32x16xf32>
    %c0_144 = arith.constant 0 : index
    %c5_145 = arith.constant 5 : index
    %214 = vector.load %arg11[%c0_144, %c5_145] : memref<32x9xf32, #tpu.memory_space<vmem>>, vector<32x1xf32>
    %215 = vector.broadcast %214 : vector<32x1xf32> to vector<32x16xf32>
    %216 = arith.mulf %213, %215 : vector<32x16xf32>
    %c5_146 = arith.constant 5 : index
    %c0_147 = arith.constant 0 : index
    %c0_148 = arith.constant 0 : index
    %217 = vector.load %arg9[%c5_146, %c0_147, %c0_148] : memref<9x16x32xf32, #tpu.memory_space<vmem>>, vector<1x16x32xf32>
    %218 = vector.shape_cast %217 : vector<1x16x32xf32> to vector<16x32xf32>
    %cst_149 = arith.constant dense<0.000000e+00> : vector<32x32xf32>
    %219 = tpu.matmul %216, %218, %cst_149 {dimension_numbers = #tpu.dot_dimension_numbers<[1], [0], [0], [1], [0, 0, 1, 1], [], []>} : vector<32x16xf32>, vector<16x32xf32>, vector<32x32xf32> -> vector<32x32xf32>
    %220 = arith.addf %212, %219 : vector<32x32xf32>
    %221 = vector.extract_strided_slice %174 {offsets = [11, 0], sizes = [32, 16], strides = [1, 1]} : vector<48x16xf32> to vector<32x16xf32>
    %c0_150 = arith.constant 0 : index
    %c6_151 = arith.constant 6 : index
    %222 = vector.load %arg11[%c0_150, %c6_151] : memref<32x9xf32, #tpu.memory_space<vmem>>, vector<32x1xf32>
    %223 = vector.broadcast %222 : vector<32x1xf32> to vector<32x16xf32>
    %224 = arith.mulf %221, %223 : vector<32x16xf32>
    %c6_152 = arith.constant 6 : index
    %c0_153 = arith.constant 0 : index
    %c0_154 = arith.constant 0 : index
    %225 = vector.load %arg9[%c6_152, %c0_153, %c0_154] : memref<9x16x32xf32, #tpu.memory_space<vmem>>, vector<1x16x32xf32>
    %226 = vector.shape_cast %225 : vector<1x16x32xf32> to vector<16x32xf32>
    %cst_155 = arith.constant dense<0.000000e+00> : vector<32x32xf32>
    %227 = tpu.matmul %224, %226, %cst_155 {dimension_numbers = #tpu.dot_dimension_numbers<[1], [0], [0], [1], [0, 0, 1, 1], [], []>} : vector<32x16xf32>, vector<16x32xf32>, vector<32x32xf32> -> vector<32x32xf32>
    %228 = arith.addf %220, %227 : vector<32x32xf32>
    %229 = vector.extract_strided_slice %174 {offsets = [12, 0], sizes = [32, 16], strides = [1, 1]} : vector<48x16xf32> to vector<32x16xf32>
    %c0_156 = arith.constant 0 : index
    %c7_157 = arith.constant 7 : index
    %230 = vector.load %arg11[%c0_156, %c7_157] : memref<32x9xf32, #tpu.memory_space<vmem>>, vector<32x1xf32>
    %231 = vector.broadcast %230 : vector<32x1xf32> to vector<32x16xf32>
    %232 = arith.mulf %229, %231 : vector<32x16xf32>
    %c7_158 = arith.constant 7 : index
    %c0_159 = arith.constant 0 : index
    %c0_160 = arith.constant 0 : index
    %233 = vector.load %arg9[%c7_158, %c0_159, %c0_160] : memref<9x16x32xf32, #tpu.memory_space<vmem>>, vector<1x16x32xf32>
    %234 = vector.shape_cast %233 : vector<1x16x32xf32> to vector<16x32xf32>
    %cst_161 = arith.constant dense<0.000000e+00> : vector<32x32xf32>
    %235 = tpu.matmul %232, %234, %cst_161 {dimension_numbers = #tpu.dot_dimension_numbers<[1], [0], [0], [1], [0, 0, 1, 1], [], []>} : vector<32x16xf32>, vector<16x32xf32>, vector<32x32xf32> -> vector<32x32xf32>
    %236 = arith.addf %228, %235 : vector<32x32xf32>
    %237 = vector.extract_strided_slice %174 {offsets = [13, 0], sizes = [32, 16], strides = [1, 1]} : vector<48x16xf32> to vector<32x16xf32>
    %c0_162 = arith.constant 0 : index
    %c8_163 = arith.constant 8 : index
    %238 = vector.load %arg11[%c0_162, %c8_163] : memref<32x9xf32, #tpu.memory_space<vmem>>, vector<32x1xf32>
    %239 = vector.broadcast %238 : vector<32x1xf32> to vector<32x16xf32>
    %240 = arith.mulf %237, %239 : vector<32x16xf32>
    %c8_164 = arith.constant 8 : index
    %c0_165 = arith.constant 0 : index
    %c0_166 = arith.constant 0 : index
    %241 = vector.load %arg9[%c8_164, %c0_165, %c0_166] : memref<9x16x32xf32, #tpu.memory_space<vmem>>, vector<1x16x32xf32>
    %242 = vector.shape_cast %241 : vector<1x16x32xf32> to vector<16x32xf32>
    %cst_167 = arith.constant dense<0.000000e+00> : vector<32x32xf32>
    %243 = tpu.matmul %240, %242, %cst_167 {dimension_numbers = #tpu.dot_dimension_numbers<[1], [0], [0], [1], [0, 0, 1, 1], [], []>} : vector<32x16xf32>, vector<16x32xf32>, vector<32x32xf32> -> vector<32x32xf32>
    %244 = arith.addf %236, %243 : vector<32x32xf32>
    %c0_168 = arith.constant 0 : index
    %c0_169 = arith.constant 0 : index
    %245 = vector.load %arg10[%c0_168, %c0_169] : memref<1x32xf32, #tpu.memory_space<vmem>>, vector<1x32xf32>
    %246 = vector.broadcast %245 : vector<1x32xf32> to vector<32x32xf32>
    %247 = arith.addf %244, %246 : vector<32x32xf32>
    %cst_170 = arith.constant 0.000000e+00 : f32
    %248 = vector.broadcast %cst_170 : f32 to vector<32x32xf32>
    %249 = arith.maximumf %247, %248 : vector<32x32xf32>
    %cst_171 = arith.constant 0.000000e+00 : f32
    %250 = vector.broadcast %cst_171 : f32 to vector<8x32xf32>
    %251 = tpu.concatenate %250, %249, %250 in 0 : vector<8x32xf32>, vector<32x32xf32>, vector<8x32xf32> -> vector<48x32xf32>
    %cst_172 = arith.constant 0.000000e+00 : f32
    %252 = vector.broadcast %cst_172 : f32 to vector<32x32xf32>
    %253 = vector.extract_strided_slice %251 {offsets = [3, 0], sizes = [32, 32], strides = [1, 1]} : vector<48x32xf32> to vector<32x32xf32>
    %c0_173 = arith.constant 0 : index
    %c0_174 = arith.constant 0 : index
    %254 = vector.load %arg14[%c0_173, %c0_174] : memref<32x9xf32, #tpu.memory_space<vmem>>, vector<32x1xf32>
    %255 = vector.broadcast %254 : vector<32x1xf32> to vector<32x32xf32>
    %256 = arith.mulf %253, %255 : vector<32x32xf32>
    %c0_175 = arith.constant 0 : index
    %c0_176 = arith.constant 0 : index
    %c0_177 = arith.constant 0 : index
    %257 = vector.load %arg12[%c0_175, %c0_176, %c0_177] : memref<9x32x32xf32, #tpu.memory_space<vmem>>, vector<1x32x32xf32>
    %258 = vector.shape_cast %257 : vector<1x32x32xf32> to vector<32x32xf32>
    %cst_178 = arith.constant dense<0.000000e+00> : vector<32x32xf32>
    %259 = tpu.matmul %256, %258, %cst_178 {dimension_numbers = #tpu.dot_dimension_numbers<[1], [0], [0], [1], [0, 0, 1, 1], [], []>} : vector<32x32xf32>, vector<32x32xf32>, vector<32x32xf32> -> vector<32x32xf32>
    %260 = arith.addf %252, %259 : vector<32x32xf32>
    %261 = vector.extract_strided_slice %251 {offsets = [4, 0], sizes = [32, 32], strides = [1, 1]} : vector<48x32xf32> to vector<32x32xf32>
    %c0_179 = arith.constant 0 : index
    %c1_180 = arith.constant 1 : index
    %262 = vector.load %arg14[%c0_179, %c1_180] : memref<32x9xf32, #tpu.memory_space<vmem>>, vector<32x1xf32>
    %263 = vector.broadcast %262 : vector<32x1xf32> to vector<32x32xf32>
    %264 = arith.mulf %261, %263 : vector<32x32xf32>
    %c1_181 = arith.constant 1 : index
    %c0_182 = arith.constant 0 : index
    %c0_183 = arith.constant 0 : index
    %265 = vector.load %arg12[%c1_181, %c0_182, %c0_183] : memref<9x32x32xf32, #tpu.memory_space<vmem>>, vector<1x32x32xf32>
    %266 = vector.shape_cast %265 : vector<1x32x32xf32> to vector<32x32xf32>
    %cst_184 = arith.constant dense<0.000000e+00> : vector<32x32xf32>
    %267 = tpu.matmul %264, %266, %cst_184 {dimension_numbers = #tpu.dot_dimension_numbers<[1], [0], [0], [1], [0, 0, 1, 1], [], []>} : vector<32x32xf32>, vector<32x32xf32>, vector<32x32xf32> -> vector<32x32xf32>
    %268 = arith.addf %260, %267 : vector<32x32xf32>
    %269 = vector.extract_strided_slice %251 {offsets = [5, 0], sizes = [32, 32], strides = [1, 1]} : vector<48x32xf32> to vector<32x32xf32>
    %c0_185 = arith.constant 0 : index
    %c2_186 = arith.constant 2 : index
    %270 = vector.load %arg14[%c0_185, %c2_186] : memref<32x9xf32, #tpu.memory_space<vmem>>, vector<32x1xf32>
    %271 = vector.broadcast %270 : vector<32x1xf32> to vector<32x32xf32>
    %272 = arith.mulf %269, %271 : vector<32x32xf32>
    %c2_187 = arith.constant 2 : index
    %c0_188 = arith.constant 0 : index
    %c0_189 = arith.constant 0 : index
    %273 = vector.load %arg12[%c2_187, %c0_188, %c0_189] : memref<9x32x32xf32, #tpu.memory_space<vmem>>, vector<1x32x32xf32>
    %274 = vector.shape_cast %273 : vector<1x32x32xf32> to vector<32x32xf32>
    %cst_190 = arith.constant dense<0.000000e+00> : vector<32x32xf32>
    %275 = tpu.matmul %272, %274, %cst_190 {dimension_numbers = #tpu.dot_dimension_numbers<[1], [0], [0], [1], [0, 0, 1, 1], [], []>} : vector<32x32xf32>, vector<32x32xf32>, vector<32x32xf32> -> vector<32x32xf32>
    %276 = arith.addf %268, %275 : vector<32x32xf32>
    %277 = vector.extract_strided_slice %251 {offsets = [7, 0], sizes = [32, 32], strides = [1, 1]} : vector<48x32xf32> to vector<32x32xf32>
    %c0_191 = arith.constant 0 : index
    %c3_192 = arith.constant 3 : index
    %278 = vector.load %arg14[%c0_191, %c3_192] : memref<32x9xf32, #tpu.memory_space<vmem>>, vector<32x1xf32>
    %279 = vector.broadcast %278 : vector<32x1xf32> to vector<32x32xf32>
    %280 = arith.mulf %277, %279 : vector<32x32xf32>
    %c3_193 = arith.constant 3 : index
    %c0_194 = arith.constant 0 : index
    %c0_195 = arith.constant 0 : index
    %281 = vector.load %arg12[%c3_193, %c0_194, %c0_195] : memref<9x32x32xf32, #tpu.memory_space<vmem>>, vector<1x32x32xf32>
    %282 = vector.shape_cast %281 : vector<1x32x32xf32> to vector<32x32xf32>
    %cst_196 = arith.constant dense<0.000000e+00> : vector<32x32xf32>
    %283 = tpu.matmul %280, %282, %cst_196 {dimension_numbers = #tpu.dot_dimension_numbers<[1], [0], [0], [1], [0, 0, 1, 1], [], []>} : vector<32x32xf32>, vector<32x32xf32>, vector<32x32xf32> -> vector<32x32xf32>
    %284 = arith.addf %276, %283 : vector<32x32xf32>
    %285 = vector.extract_strided_slice %251 {offsets = [8, 0], sizes = [32, 32], strides = [1, 1]} : vector<48x32xf32> to vector<32x32xf32>
    %c4_197 = arith.constant 4 : index
    %c0_198 = arith.constant 0 : index
    %c0_199 = arith.constant 0 : index
    %286 = vector.load %arg12[%c4_197, %c0_198, %c0_199] : memref<9x32x32xf32, #tpu.memory_space<vmem>>, vector<1x32x32xf32>
    %287 = vector.shape_cast %286 : vector<1x32x32xf32> to vector<32x32xf32>
    %cst_200 = arith.constant dense<0.000000e+00> : vector<32x32xf32>
    %288 = tpu.matmul %285, %287, %cst_200 {dimension_numbers = #tpu.dot_dimension_numbers<[1], [0], [0], [1], [0, 0, 1, 1], [], []>} : vector<32x32xf32>, vector<32x32xf32>, vector<32x32xf32> -> vector<32x32xf32>
    %289 = arith.addf %284, %288 : vector<32x32xf32>
    %290 = vector.extract_strided_slice %251 {offsets = [9, 0], sizes = [32, 32], strides = [1, 1]} : vector<48x32xf32> to vector<32x32xf32>
    %c0_201 = arith.constant 0 : index
    %c5_202 = arith.constant 5 : index
    %291 = vector.load %arg14[%c0_201, %c5_202] : memref<32x9xf32, #tpu.memory_space<vmem>>, vector<32x1xf32>
    %292 = vector.broadcast %291 : vector<32x1xf32> to vector<32x32xf32>
    %293 = arith.mulf %290, %292 : vector<32x32xf32>
    %c5_203 = arith.constant 5 : index
    %c0_204 = arith.constant 0 : index
    %c0_205 = arith.constant 0 : index
    %294 = vector.load %arg12[%c5_203, %c0_204, %c0_205] : memref<9x32x32xf32, #tpu.memory_space<vmem>>, vector<1x32x32xf32>
    %295 = vector.shape_cast %294 : vector<1x32x32xf32> to vector<32x32xf32>
    %cst_206 = arith.constant dense<0.000000e+00> : vector<32x32xf32>
    %296 = tpu.matmul %293, %295, %cst_206 {dimension_numbers = #tpu.dot_dimension_numbers<[1], [0], [0], [1], [0, 0, 1, 1], [], []>} : vector<32x32xf32>, vector<32x32xf32>, vector<32x32xf32> -> vector<32x32xf32>
    %297 = arith.addf %289, %296 : vector<32x32xf32>
    %298 = vector.extract_strided_slice %251 {offsets = [11, 0], sizes = [32, 32], strides = [1, 1]} : vector<48x32xf32> to vector<32x32xf32>
    %c0_207 = arith.constant 0 : index
    %c6_208 = arith.constant 6 : index
    %299 = vector.load %arg14[%c0_207, %c6_208] : memref<32x9xf32, #tpu.memory_space<vmem>>, vector<32x1xf32>
    %300 = vector.broadcast %299 : vector<32x1xf32> to vector<32x32xf32>
    %301 = arith.mulf %298, %300 : vector<32x32xf32>
    %c6_209 = arith.constant 6 : index
    %c0_210 = arith.constant 0 : index
    %c0_211 = arith.constant 0 : index
    %302 = vector.load %arg12[%c6_209, %c0_210, %c0_211] : memref<9x32x32xf32, #tpu.memory_space<vmem>>, vector<1x32x32xf32>
    %303 = vector.shape_cast %302 : vector<1x32x32xf32> to vector<32x32xf32>
    %cst_212 = arith.constant dense<0.000000e+00> : vector<32x32xf32>
    %304 = tpu.matmul %301, %303, %cst_212 {dimension_numbers = #tpu.dot_dimension_numbers<[1], [0], [0], [1], [0, 0, 1, 1], [], []>} : vector<32x32xf32>, vector<32x32xf32>, vector<32x32xf32> -> vector<32x32xf32>
    %305 = arith.addf %297, %304 : vector<32x32xf32>
    %306 = vector.extract_strided_slice %251 {offsets = [12, 0], sizes = [32, 32], strides = [1, 1]} : vector<48x32xf32> to vector<32x32xf32>
    %c0_213 = arith.constant 0 : index
    %c7_214 = arith.constant 7 : index
    %307 = vector.load %arg14[%c0_213, %c7_214] : memref<32x9xf32, #tpu.memory_space<vmem>>, vector<32x1xf32>
    %308 = vector.broadcast %307 : vector<32x1xf32> to vector<32x32xf32>
    %309 = arith.mulf %306, %308 : vector<32x32xf32>
    %c7_215 = arith.constant 7 : index
    %c0_216 = arith.constant 0 : index
    %c0_217 = arith.constant 0 : index
    %310 = vector.load %arg12[%c7_215, %c0_216, %c0_217] : memref<9x32x32xf32, #tpu.memory_space<vmem>>, vector<1x32x32xf32>
    %311 = vector.shape_cast %310 : vector<1x32x32xf32> to vector<32x32xf32>
    %cst_218 = arith.constant dense<0.000000e+00> : vector<32x32xf32>
    %312 = tpu.matmul %309, %311, %cst_218 {dimension_numbers = #tpu.dot_dimension_numbers<[1], [0], [0], [1], [0, 0, 1, 1], [], []>} : vector<32x32xf32>, vector<32x32xf32>, vector<32x32xf32> -> vector<32x32xf32>
    %313 = arith.addf %305, %312 : vector<32x32xf32>
    %314 = vector.extract_strided_slice %251 {offsets = [13, 0], sizes = [32, 32], strides = [1, 1]} : vector<48x32xf32> to vector<32x32xf32>
    %c0_219 = arith.constant 0 : index
    %c8_220 = arith.constant 8 : index
    %315 = vector.load %arg14[%c0_219, %c8_220] : memref<32x9xf32, #tpu.memory_space<vmem>>, vector<32x1xf32>
    %316 = vector.broadcast %315 : vector<32x1xf32> to vector<32x32xf32>
    %317 = arith.mulf %314, %316 : vector<32x32xf32>
    %c8_221 = arith.constant 8 : index
    %c0_222 = arith.constant 0 : index
    %c0_223 = arith.constant 0 : index
    %318 = vector.load %arg12[%c8_221, %c0_222, %c0_223] : memref<9x32x32xf32, #tpu.memory_space<vmem>>, vector<1x32x32xf32>
    %319 = vector.shape_cast %318 : vector<1x32x32xf32> to vector<32x32xf32>
    %cst_224 = arith.constant dense<0.000000e+00> : vector<32x32xf32>
    %320 = tpu.matmul %317, %319, %cst_224 {dimension_numbers = #tpu.dot_dimension_numbers<[1], [0], [0], [1], [0, 0, 1, 1], [], []>} : vector<32x32xf32>, vector<32x32xf32>, vector<32x32xf32> -> vector<32x32xf32>
    %321 = arith.addf %313, %320 : vector<32x32xf32>
    %c0_225 = arith.constant 0 : index
    %c0_226 = arith.constant 0 : index
    %322 = vector.load %arg13[%c0_225, %c0_226] : memref<1x32xf32, #tpu.memory_space<vmem>>, vector<1x32xf32>
    %323 = vector.broadcast %322 : vector<1x32xf32> to vector<32x32xf32>
    %324 = arith.addf %321, %323 : vector<32x32xf32>
    %cst_227 = arith.constant 0.000000e+00 : f32
    %325 = vector.broadcast %cst_227 : f32 to vector<32x32xf32>
    %326 = arith.maximumf %324, %325 : vector<32x32xf32>
    %cst_228 = arith.constant 0.000000e+00 : f32
    %327 = vector.broadcast %cst_228 : f32 to vector<8x32xf32>
    %328 = tpu.concatenate %326, %327 in 0 : vector<32x32xf32>, vector<8x32xf32> -> vector<40x32xf32>
    %329 = vector.extract_strided_slice %328 {offsets = [1, 0], sizes = [32, 32], strides = [1, 1]} : vector<40x32xf32> to vector<32x32xf32>
    %330 = arith.maximumf %326, %329 : vector<32x32xf32>
    %331 = tpu.concatenate %330, %327 in 0 : vector<32x32xf32>, vector<8x32xf32> -> vector<40x32xf32>
    %332 = vector.extract_strided_slice %331 {offsets = [4, 0], sizes = [32, 32], strides = [1, 1]} : vector<40x32xf32> to vector<32x32xf32>
    %333 = arith.maximumf %330, %332 : vector<32x32xf32>
    %c0_229 = arith.constant 0 : index
    %c0_230 = arith.constant 0 : index
    %334 = vector.load %arg15[%c0_229, %c0_230] : memref<8x32xf32, #tpu.memory_space<vmem>>, vector<8x32xf32>
    %cst_231 = arith.constant dense<0.000000e+00> : vector<8x32xf32>
    %335 = tpu.matmul %334, %333, %cst_231 {dimension_numbers = #tpu.dot_dimension_numbers<[1], [0], [0], [1], [0, 0, 1, 1], [], []>} : vector<8x32xf32>, vector<32x32xf32>, vector<8x32xf32> -> vector<8x32xf32>
    %cst_232 = arith.constant 0.000000e+00 : f32
    %336 = vector.broadcast %cst_232 : f32 to vector<1x64xf32>
    %337 = vector.extract_strided_slice %335 {offsets = [0, 0], sizes = [1, 32], strides = [1, 1]} : vector<8x32xf32> to vector<1x32xf32>
    %c0_233 = arith.constant 0 : index
    %c0_234 = arith.constant 0 : index
    %338 = vector.load %arg16[%c0_233, %c0_234] : memref<128x64xf32, #tpu.memory_space<vmem>>, vector<32x64xf32>
    %cst_235 = arith.constant dense<0.000000e+00> : vector<1x64xf32>
    %339 = tpu.matmul %337, %338, %cst_235 {dimension_numbers = #tpu.dot_dimension_numbers<[1], [0], [0], [1], [0, 0, 1, 1], [], []>} : vector<1x32xf32>, vector<32x64xf32>, vector<1x64xf32> -> vector<1x64xf32>
    %340 = arith.addf %336, %339 : vector<1x64xf32>
    %341 = vector.extract_strided_slice %335 {offsets = [1, 0], sizes = [1, 32], strides = [1, 1]} : vector<8x32xf32> to vector<1x32xf32>
    %c32 = arith.constant 32 : index
    %c0_236 = arith.constant 0 : index
    %342 = vector.load %arg16[%c32, %c0_236] : memref<128x64xf32, #tpu.memory_space<vmem>>, vector<32x64xf32>
    %cst_237 = arith.constant dense<0.000000e+00> : vector<1x64xf32>
    %343 = tpu.matmul %341, %342, %cst_237 {dimension_numbers = #tpu.dot_dimension_numbers<[1], [0], [0], [1], [0, 0, 1, 1], [], []>} : vector<1x32xf32>, vector<32x64xf32>, vector<1x64xf32> -> vector<1x64xf32>
    %344 = arith.addf %340, %343 : vector<1x64xf32>
    %345 = vector.extract_strided_slice %335 {offsets = [2, 0], sizes = [1, 32], strides = [1, 1]} : vector<8x32xf32> to vector<1x32xf32>
    %c64 = arith.constant 64 : index
    %c0_238 = arith.constant 0 : index
    %346 = vector.load %arg16[%c64, %c0_238] : memref<128x64xf32, #tpu.memory_space<vmem>>, vector<32x64xf32>
    %cst_239 = arith.constant dense<0.000000e+00> : vector<1x64xf32>
    %347 = tpu.matmul %345, %346, %cst_239 {dimension_numbers = #tpu.dot_dimension_numbers<[1], [0], [0], [1], [0, 0, 1, 1], [], []>} : vector<1x32xf32>, vector<32x64xf32>, vector<1x64xf32> -> vector<1x64xf32>
    %348 = arith.addf %344, %347 : vector<1x64xf32>
    %349 = vector.extract_strided_slice %335 {offsets = [3, 0], sizes = [1, 32], strides = [1, 1]} : vector<8x32xf32> to vector<1x32xf32>
    %c96 = arith.constant 96 : index
    %c0_240 = arith.constant 0 : index
    %350 = vector.load %arg16[%c96, %c0_240] : memref<128x64xf32, #tpu.memory_space<vmem>>, vector<32x64xf32>
    %cst_241 = arith.constant dense<0.000000e+00> : vector<1x64xf32>
    %351 = tpu.matmul %349, %350, %cst_241 {dimension_numbers = #tpu.dot_dimension_numbers<[1], [0], [0], [1], [0, 0, 1, 1], [], []>} : vector<1x32xf32>, vector<32x64xf32>, vector<1x64xf32> -> vector<1x64xf32>
    %352 = arith.addf %348, %351 : vector<1x64xf32>
    %c0_242 = arith.constant 0 : index
    %c0_243 = arith.constant 0 : index
    %353 = vector.load %arg17[%c0_242, %c0_243] : memref<1x64xf32, #tpu.memory_space<vmem>>, vector<1x64xf32>
    %354 = arith.addf %352, %353 : vector<1x64xf32>
    %cst_244 = arith.constant 0.000000e+00 : f32
    %355 = vector.broadcast %cst_244 : f32 to vector<1x64xf32>
    %356 = arith.maximumf %354, %355 : vector<1x64xf32>
    %c0_245 = arith.constant 0 : index
    %c0_246 = arith.constant 0 : index
    %357 = vector.load %arg18[%c0_245, %c0_246] : memref<64x64xf32, #tpu.memory_space<vmem>>, vector<64x64xf32>
    %cst_247 = arith.constant dense<0.000000e+00> : vector<1x64xf32>
    %358 = tpu.matmul %356, %357, %cst_247 {dimension_numbers = #tpu.dot_dimension_numbers<[1], [0], [0], [1], [0, 0, 1, 1], [], []>} : vector<1x64xf32>, vector<64x64xf32>, vector<1x64xf32> -> vector<1x64xf32>
    %c0_248 = arith.constant 0 : index
    %c0_249 = arith.constant 0 : index
    %359 = vector.load %arg19[%c0_248, %c0_249] : memref<1x64xf32, #tpu.memory_space<vmem>>, vector<1x64xf32>
    %360 = arith.addf %358, %359 : vector<1x64xf32>
    %cst_250 = arith.constant 0.000000e+00 : f32
    %361 = vector.broadcast %cst_250 : f32 to vector<1x64xf32>
    %362 = arith.maximumf %360, %361 : vector<1x64xf32>
    %c0_251 = arith.constant 0 : index
    %c0_252 = arith.constant 0 : index
    %363 = vector.load %arg20[%c0_251, %c0_252] : memref<2x64xf32, #tpu.memory_space<vmem>>, vector<1x64xf32>
    tpu.vector_store %arg20[%c0_251, %c0_252], %362 {strides = array<i32>} : memref<2x64xf32, #tpu.memory_space<vmem>>, vector<1x64xf32>,
    %cst_253 = arith.constant 0.000000e+00 : f32
    %364 = vector.broadcast %cst_253 : f32 to vector<1x64xf32>
    %365 = vector.extract_strided_slice %335 {offsets = [4, 0], sizes = [1, 32], strides = [1, 1]} : vector<8x32xf32> to vector<1x32xf32>
    %c0_254 = arith.constant 0 : index
    %c0_255 = arith.constant 0 : index
    %366 = vector.load %arg16[%c0_254, %c0_255] : memref<128x64xf32, #tpu.memory_space<vmem>>, vector<32x64xf32>
    %cst_256 = arith.constant dense<0.000000e+00> : vector<1x64xf32>
    %367 = tpu.matmul %365, %366, %cst_256 {dimension_numbers = #tpu.dot_dimension_numbers<[1], [0], [0], [1], [0, 0, 1, 1], [], []>} : vector<1x32xf32>, vector<32x64xf32>, vector<1x64xf32> -> vector<1x64xf32>
    %368 = arith.addf %364, %367 : vector<1x64xf32>
    %369 = vector.extract_strided_slice %335 {offsets = [5, 0], sizes = [1, 32], strides = [1, 1]} : vector<8x32xf32> to vector<1x32xf32>
    %c32_257 = arith.constant 32 : index
    %c0_258 = arith.constant 0 : index
    %370 = vector.load %arg16[%c32_257, %c0_258] : memref<128x64xf32, #tpu.memory_space<vmem>>, vector<32x64xf32>
    %cst_259 = arith.constant dense<0.000000e+00> : vector<1x64xf32>
    %371 = tpu.matmul %369, %370, %cst_259 {dimension_numbers = #tpu.dot_dimension_numbers<[1], [0], [0], [1], [0, 0, 1, 1], [], []>} : vector<1x32xf32>, vector<32x64xf32>, vector<1x64xf32> -> vector<1x64xf32>
    %372 = arith.addf %368, %371 : vector<1x64xf32>
    %373 = vector.extract_strided_slice %335 {offsets = [6, 0], sizes = [1, 32], strides = [1, 1]} : vector<8x32xf32> to vector<1x32xf32>
    %c64_260 = arith.constant 64 : index
    %c0_261 = arith.constant 0 : index
    %374 = vector.load %arg16[%c64_260, %c0_261] : memref<128x64xf32, #tpu.memory_space<vmem>>, vector<32x64xf32>
    %cst_262 = arith.constant dense<0.000000e+00> : vector<1x64xf32>
    %375 = tpu.matmul %373, %374, %cst_262 {dimension_numbers = #tpu.dot_dimension_numbers<[1], [0], [0], [1], [0, 0, 1, 1], [], []>} : vector<1x32xf32>, vector<32x64xf32>, vector<1x64xf32> -> vector<1x64xf32>
    %376 = arith.addf %372, %375 : vector<1x64xf32>
    %377 = vector.extract_strided_slice %335 {offsets = [7, 0], sizes = [1, 32], strides = [1, 1]} : vector<8x32xf32> to vector<1x32xf32>
    %c96_263 = arith.constant 96 : index
    %c0_264 = arith.constant 0 : index
    %378 = vector.load %arg16[%c96_263, %c0_264] : memref<128x64xf32, #tpu.memory_space<vmem>>, vector<32x64xf32>
    %cst_265 = arith.constant dense<0.000000e+00> : vector<1x64xf32>
    %379 = tpu.matmul %377, %378, %cst_265 {dimension_numbers = #tpu.dot_dimension_numbers<[1], [0], [0], [1], [0, 0, 1, 1], [], []>} : vector<1x32xf32>, vector<32x64xf32>, vector<1x64xf32> -> vector<1x64xf32>
    %380 = arith.addf %376, %379 : vector<1x64xf32>
    %c0_266 = arith.constant 0 : index
    %c0_267 = arith.constant 0 : index
    %381 = vector.load %arg17[%c0_266, %c0_267] : memref<1x64xf32, #tpu.memory_space<vmem>>, vector<1x64xf32>
    %382 = arith.addf %380, %381 : vector<1x64xf32>
    %cst_268 = arith.constant 0.000000e+00 : f32
    %383 = vector.broadcast %cst_268 : f32 to vector<1x64xf32>
    %384 = arith.maximumf %382, %383 : vector<1x64xf32>
    %c0_269 = arith.constant 0 : index
    %c0_270 = arith.constant 0 : index
    %385 = vector.load %arg18[%c0_269, %c0_270] : memref<64x64xf32, #tpu.memory_space<vmem>>, vector<64x64xf32>
    %cst_271 = arith.constant dense<0.000000e+00> : vector<1x64xf32>
    %386 = tpu.matmul %384, %385, %cst_271 {dimension_numbers = #tpu.dot_dimension_numbers<[1], [0], [0], [1], [0, 0, 1, 1], [], []>} : vector<1x64xf32>, vector<64x64xf32>, vector<1x64xf32> -> vector<1x64xf32>
    %c0_272 = arith.constant 0 : index
    %c0_273 = arith.constant 0 : index
    %387 = vector.load %arg19[%c0_272, %c0_273] : memref<1x64xf32, #tpu.memory_space<vmem>>, vector<1x64xf32>
    %388 = arith.addf %386, %387 : vector<1x64xf32>
    %cst_274 = arith.constant 0.000000e+00 : f32
    %389 = vector.broadcast %cst_274 : f32 to vector<1x64xf32>
    %390 = arith.maximumf %388, %389 : vector<1x64xf32>
    %c1_275 = arith.constant 1 : index
    %c0_276 = arith.constant 0 : index
    %391 = vector.load %arg20[%c1_275, %c0_276] : memref<2x64xf32, #tpu.memory_space<vmem>>, vector<1x64xf32>
    tpu.vector_store %arg20[%c1_275, %c0_276], %390 {strides = array<i32>} : memref<2x64xf32, #tpu.memory_space<vmem>>, vector<1x64xf32>,
    return
  }
}

</mosaic_0001>

<llo_original>
// kernel: tpu_custom_call.1
$region0: #{tpu_custom_call.1}
  #allocation0 [shape = 'u32[]', space=smem, size = 0x4, offset = 0x4, fixed_abs, tag = 'smem constant byte address 0x4 - core index']
  #allocation1 [shape = 'u32[72,128]{1,0:T(1,128)}', space=vmem, size = 0x9000, scoped, tag = 'internal scratch']
  %s0 = inlined_call_operand.vmem [shape: f32[512,3], index: 0, kind: input, shape index: {}]
  %s1 = inlined_call_operand.vmem [shape: f32[9,3,8], index: 1, kind: input, shape index: {}]
  %s2 = inlined_call_operand.vmem [shape: f32[1,8], index: 2, kind: input, shape index: {}]
  %s3 = inlined_call_operand.vmem [shape: f32[512,9], index: 3, kind: input, shape index: {}]
  %s4 = inlined_call_operand.vmem [shape: f32[128,512], index: 4, kind: input, shape index: {}]
  %s5 = inlined_call_operand.vmem [shape: f32[9,8,16], index: 5, kind: input, shape index: {}]
  %s6 = inlined_call_operand.vmem [shape: f32[1,16], index: 6, kind: input, shape index: {}]
  %s7 = inlined_call_operand.vmem [shape: f32[128,9], index: 7, kind: input, shape index: {}]
  %s8 = inlined_call_operand.vmem [shape: f32[32,128], index: 8, kind: input, shape index: {}]
  %s9 = inlined_call_operand.vmem [shape: f32[9,16,32], index: 9, kind: input, shape index: {}]
  %s10 = inlined_call_operand.vmem [shape: f32[1,32], index: 10, kind: input, shape index: {}]
  %s11 = inlined_call_operand.vmem [shape: f32[32,9], index: 11, kind: input, shape index: {}]
  %s12 = inlined_call_operand.vmem [shape: f32[9,32,32], index: 12, kind: input, shape index: {}]
  %s13 = inlined_call_operand.vmem [shape: f32[1,32], index: 13, kind: input, shape index: {}]
  %s14 = inlined_call_operand.vmem [shape: f32[32,9], index: 14, kind: input, shape index: {}]
  %s15 = inlined_call_operand.vmem [shape: f32[8,32], index: 15, kind: input, shape index: {}]
  %s16 = inlined_call_operand.vmem [shape: f32[128,64], index: 16, kind: input, shape index: {}]
  %s17 = inlined_call_operand.vmem [shape: f32[1,64], index: 17, kind: input, shape index: {}]
  %s18 = inlined_call_operand.vmem [shape: f32[64,64], index: 18, kind: input, shape index: {}]
  %s19 = inlined_call_operand.vmem [shape: f32[1,64], index: 19, kind: input, shape index: {}]
  %s20 = inlined_call_operand.hbm [shape: f32[2,64], index: 20, kind: output, shape index: {}]
  %s21 = sld [smem:[#allocation0]]
  $region90: #{tpu_custom_call.1} parent=0
    _
  %s23 = ssub.s32 1, %s21
  %s24 = scalar_select 0, %s23, %s21
  $region1: #{tpu_custom_call.1} parent=0
    #allocation2 [shape = 'u8[1024]{0}', space=vmem, size = 0x400, scoped, tag = 'output window, operand 0, single buffered']
    #allocation3 [shape = 's32[1]{0}', space=sflag, size = 0x4, scoped, tag = 'scoped memory for tpu_custom_call.1']
    %25 = vsyncpa [#allocation3], 0
    // Predicated region
    $region2: #{tpu_custom_call.1} parent=1 // pred_check
      _
    $region3: #{tpu_custom_call.1} parent=1 // pred_check_branch
      %27 = sbr.rel (0) target = $region5
    $region4: #{tpu_custom_call.1} parent=1 // pred_region
      _
    $region5: #{tpu_custom_call.1} parent=1 // pred_fallthru
      _
    // Predicated region
    $region6: #{tpu_custom_call.1} parent=1 // pred_check
      _
    $region7: #{tpu_custom_call.1} parent=1 // pred_check_branch
      %29 = sbr.rel (0) target = $region9
    $region8: #{tpu_custom_call.1} parent=1 // pred_region
      _
    $region9: #{tpu_custom_call.1} parent=1 // pred_fallthru
      _
    // Predicated region
    $region10: #{tpu_custom_call.1} parent=1 // pred_check
      _
    $region11: #{tpu_custom_call.1} parent=1 // pred_check_branch
      %31 = sbr.rel (0) target = $region13
    $region12: #{tpu_custom_call.1} parent=1 // pred_region
      _
    $region13: #{tpu_custom_call.1} parent=1 // pred_fallthru
      _
    // Predicated region
    $region14: #{tpu_custom_call.1} parent=1 // pred_check
      _
    $region15: #{tpu_custom_call.1} parent=1 // pred_check_branch
      %33 = sbr.rel (0) target = $region17
    $region16: #{tpu_custom_call.1} parent=1 // pred_region
      _
    $region17: #{tpu_custom_call.1} parent=1 // pred_fallthru
      _
    // Predicated region
    $region18: #{tpu_custom_call.1} parent=1 // pred_check
      _
    $region19: #{tpu_custom_call.1} parent=1 // pred_check_branch
      %35 = sbr.rel (0) target = $region21
    $region20: #{tpu_custom_call.1} parent=1 // pred_region
      _
    $region21: #{tpu_custom_call.1} parent=1 // pred_fallthru
      _
    // Predicated region
    $region22: #{tpu_custom_call.1} parent=1 // pred_check
      _
    $region23: #{tpu_custom_call.1} parent=1 // pred_check_branch
      %37 = sbr.rel (0) target = $region25
    $region24: #{tpu_custom_call.1} parent=1 // pred_region
      _
    $region25: #{tpu_custom_call.1} parent=1 // pred_fallthru
      _
    // Predicated region
    $region26: #{tpu_custom_call.1} parent=1 // pred_check
      _
    $region27: #{tpu_custom_call.1} parent=1 // pred_check_branch
      %39 = sbr.rel (0) target = $region29
    $region28: #{tpu_custom_call.1} parent=1 // pred_region
      _
    $region29: #{tpu_custom_call.1} parent=1 // pred_fallthru
      _
    // Predicated region
    $region30: #{tpu_custom_call.1} parent=1 // pred_check
      _
    $region31: #{tpu_custom_call.1} parent=1 // pred_check_branch
      %41 = sbr.rel (0) target = $region33
    $region32: #{tpu_custom_call.1} parent=1 // pred_region
      _
    $region33: #{tpu_custom_call.1} parent=1 // pred_fallthru
      _
    // Predicated region
    $region34: #{tpu_custom_call.1} parent=1 // pred_check
      _
    $region35: #{tpu_custom_call.1} parent=1 // pred_check_branch
      %43 = sbr.rel (0) target = $region37
    $region36: #{tpu_custom_call.1} parent=1 // pred_region
      _
    $region37: #{tpu_custom_call.1} parent=1 // pred_fallthru
      _
    // Predicated region
    $region38: #{tpu_custom_call.1} parent=1 // pred_check
      _
    $region39: #{tpu_custom_call.1} parent=1 // pred_check_branch
      %45 = sbr.rel (0) target = $region41
    $region40: #{tpu_custom_call.1} parent=1 // pred_region
      _
    $region41: #{tpu_custom_call.1} parent=1 // pred_fallthru
      _
    // Predicated region
    $region42: #{tpu_custom_call.1} parent=1 // pred_check
      _
    $region43: #{tpu_custom_call.1} parent=1 // pred_check_branch
      %47 = sbr.rel (0) target = $region45
    $region44: #{tpu_custom_call.1} parent=1 // pred_region
      _
    $region45: #{tpu_custom_call.1} parent=1 // pred_fallthru
      _
    // Predicated region
    $region46: #{tpu_custom_call.1} parent=1 // pred_check
      _
    $region47: #{tpu_custom_call.1} parent=1 // pred_check_branch
      %49 = sbr.rel (0) target = $region49
    $region48: #{tpu_custom_call.1} parent=1 // pred_region
      _
    $region49: #{tpu_custom_call.1} parent=1 // pred_fallthru
      _
    // Predicated region
    $region50: #{tpu_custom_call.1} parent=1 // pred_check
      _
    $region51: #{tpu_custom_call.1} parent=1 // pred_check_branch
      %51 = sbr.rel (0) target = $region53
    $region52: #{tpu_custom_call.1} parent=1 // pred_region
      _
    $region53: #{tpu_custom_call.1} parent=1 // pred_fallthru
      _
    // Predicated region
    $region54: #{tpu_custom_call.1} parent=1 // pred_check
      _
    $region55: #{tpu_custom_call.1} parent=1 // pred_check_branch
      %53 = sbr.rel (0) target = $region57
    $region56: #{tpu_custom_call.1} parent=1 // pred_region
      _
    $region57: #{tpu_custom_call.1} parent=1 // pred_fallthru
      _
    // Predicated region
    $region58: #{tpu_custom_call.1} parent=1 // pred_check
      _
    $region59: #{tpu_custom_call.1} parent=1 // pred_check_branch
      %55 = sbr.rel (0) target = $region61
    $region60: #{tpu_custom_call.1} parent=1 // pred_region
      _
    $region61: #{tpu_custom_call.1} parent=1 // pred_fallthru
      _
    // Predicated region
    $region62: #{tpu_custom_call.1} parent=1 // pred_check
      _
    $region63: #{tpu_custom_call.1} parent=1 // pred_check_branch
      %57 = sbr.rel (0) target = $region65
    $region64: #{tpu_custom_call.1} parent=1 // pred_region
      _
    $region65: #{tpu_custom_call.1} parent=1 // pred_fallthru
      _
    // Predicated region
    $region66: #{tpu_custom_call.1} parent=1 // pred_check
      _
    $region67: #{tpu_custom_call.1} parent=1 // pred_check_branch
      %59 = sbr.rel (0) target = $region69
    $region68: #{tpu_custom_call.1} parent=1 // pred_region
      _
    $region69: #{tpu_custom_call.1} parent=1 // pred_fallthru
      _
    // Predicated region
    $region70: #{tpu_custom_call.1} parent=1 // pred_check
      _
    $region71: #{tpu_custom_call.1} parent=1 // pred_check_branch
      %61 = sbr.rel (0) target = $region73
    $region72: #{tpu_custom_call.1} parent=1 // pred_region
      _
    $region73: #{tpu_custom_call.1} parent=1 // pred_fallthru
      _
    // Predicated region
    $region74: #{tpu_custom_call.1} parent=1 // pred_check
      _
    $region75: #{tpu_custom_call.1} parent=1 // pred_check_branch
      %63 = sbr.rel (0) target = $region77
    $region76: #{tpu_custom_call.1} parent=1 // pred_region
      _
    $region77: #{tpu_custom_call.1} parent=1 // pred_fallthru
      _
    // Predicated region
    $region78: #{tpu_custom_call.1} parent=1 // pred_check
      _
    $region79: #{tpu_custom_call.1} parent=1 // pred_check_branch
      %65 = sbr.rel (0) target = $region81
    $region80: #{tpu_custom_call.1} parent=1 // pred_region
      _
    $region81: #{tpu_custom_call.1} parent=1 // pred_fallthru
      _
    %v66 = vld [vmem:[%s0] sm:$0xff]
    %v67 = vld [vmem:[%s0 + $0x8] sm:$0xff]
    %v68 = vld [vmem:[%s0 + $0x10] sm:$0xff]
    %v69 = vld [vmem:[%s0 + $0x18] sm:$0xff]
    %v70 = vld [vmem:[%s0 + $0x20] sm:$0xff]
    %v71 = vld [vmem:[%s0 + $0x28] sm:$0xff]
    %v72 = vld [vmem:[%s0 + $0x30] sm:$0xff]
    %v73 = vld [vmem:[%s0 + $0x38] sm:$0xff]
    %v74 = vld [vmem:[%s0 + $0x40] sm:$0xff]
    %v75 = vld [vmem:[%s0 + $0x48] sm:$0xff]
    %v76 = vld [vmem:[%s0 + $0x50] sm:$0xff]
    %v77 = vld [vmem:[%s0 + $0x58] sm:$0xff]
    %v78 = vld [vmem:[%s0 + $0x60] sm:$0xff]
    %v79 = vld [vmem:[%s0 + $0x68] sm:$0xff]
    %v80 = vld [vmem:[%s0 + $0x70] sm:$0xff]
    %v81 = vld [vmem:[%s0 + $0x78] sm:$0xff]
    %v82 = vld [vmem:[%s0 + $0x80] sm:$0xff]
    %v83 = vld [vmem:[%s0 + $0x88] sm:$0xff]
    %v84 = vld [vmem:[%s0 + $0x90] sm:$0xff]
    %v85 = vld [vmem:[%s0 + $0x98] sm:$0xff]
    %v86 = vld [vmem:[%s0 + $0xa0] sm:$0xff]
    %v87 = vld [vmem:[%s0 + $0xa8] sm:$0xff]
    %v88 = vld [vmem:[%s0 + $0xb0] sm:$0xff]
    %v89 = vld [vmem:[%s0 + $0xb8] sm:$0xff]
    %v90 = vld [vmem:[%s0 + $0xc0] sm:$0xff]
    %v91 = vld [vmem:[%s0 + $0xc8] sm:$0xff]
    %v92 = vld [vmem:[%s0 + $0xd0] sm:$0xff]
    %v93 = vld [vmem:[%s0 + $0xd8] sm:$0xff]
    %v94 = vld [vmem:[%s0 + $0xe0] sm:$0xff]
    %v95 = vld [vmem:[%s0 + $0xe8] sm:$0xff]
    %v96 = vld [vmem:[%s0 + $0xf0] sm:$0xff]
    %v97 = vld [vmem:[%s0 + $0xf8] sm:$0xff]
    %v98 = vld [vmem:[%s0 + $0x100] sm:$0xff]
    %v99 = vld [vmem:[%s0 + $0x108] sm:$0xff]
    %v100 = vld [vmem:[%s0 + $0x110] sm:$0xff]
    %v101 = vld [vmem:[%s0 + $0x118] sm:$0xff]
    %v102 = vld [vmem:[%s0 + $0x120] sm:$0xff]
    %v103 = vld [vmem:[%s0 + $0x128] sm:$0xff]
    %v104 = vld [vmem:[%s0 + $0x130] sm:$0xff]
    %v105 = vld [vmem:[%s0 + $0x138] sm:$0xff]
    %v106 = vld [vmem:[%s0 + $0x140] sm:$0xff]
    %v107 = vld [vmem:[%s0 + $0x148] sm:$0xff]
    %v108 = vld [vmem:[%s0 + $0x150] sm:$0xff]
    %v109 = vld [vmem:[%s0 + $0x158] sm:$0xff]
    %v110 = vld [vmem:[%s0 + $0x160] sm:$0xff]
    %v111 = vld [vmem:[%s0 + $0x168] sm:$0xff]
    %v112 = vld [vmem:[%s0 + $0x170] sm:$0xff]
    %v113 = vld [vmem:[%s0 + $0x178] sm:$0xff]
    %v114 = vld [vmem:[%s0 + $0x180] sm:$0xff]
    %v115 = vld [vmem:[%s0 + $0x188] sm:$0xff]
    %v116 = vld [vmem:[%s0 + $0x190] sm:$0xff]
    %v117 = vld [vmem:[%s0 + $0x198] sm:$0xff]
    %v118 = vld [vmem:[%s0 + $0x1a0] sm:$0xff]
    %v119 = vld [vmem:[%s0 + $0x1a8] sm:$0xff]
    %v120 = vld [vmem:[%s0 + $0x1b0] sm:$0xff]
    %v121 = vld [vmem:[%s0 + $0x1b8] sm:$0xff]
    %v122 = vld [vmem:[%s0 + $0x1c0] sm:$0xff]
    %v123 = vld [vmem:[%s0 + $0x1c8] sm:$0xff]
    %v124 = vld [vmem:[%s0 + $0x1d0] sm:$0xff]
    %v125 = vld [vmem:[%s0 + $0x1d8] sm:$0xff]
    %v126 = vld [vmem:[%s0 + $0x1e0] sm:$0xff]
    %v127 = vld [vmem:[%s0 + $0x1e8] sm:$0xff]
    %v128 = vld [vmem:[%s0 + $0x1f0] sm:$0xff]
    %v129 = vld [vmem:[%s0 + $0x1f8] sm:$0xff]
    %v130 = vld [vmem:[%s3] sm:$0xff]
    %v131 = vld [vmem:[%s3 + $0x8] sm:$0xff]
    %v132 = vld [vmem:[%s3 + $0x10] sm:$0xff]
    %v133 = vld [vmem:[%s3 + $0x18] sm:$0xff]
    %v134 = vld [vmem:[%s3 + $0x20] sm:$0xff]
    %v135 = vld [vmem:[%s3 + $0x28] sm:$0xff]
    %v136 = vld [vmem:[%s3 + $0x30] sm:$0xff]
    %v137 = vld [vmem:[%s3 + $0x38] sm:$0xff]
    %v138 = vld [vmem:[%s3 + $0x40] sm:$0xff]
    %v139 = vld [vmem:[%s3 + $0x48] sm:$0xff]
    %v140 = vld [vmem:[%s3 + $0x50] sm:$0xff]
    %v141 = vld [vmem:[%s3 + $0x58] sm:$0xff]
    %v142 = vld [vmem:[%s3 + $0x60] sm:$0xff]
    %v143 = vld [vmem:[%s3 + $0x68] sm:$0xff]
    %v144 = vld [vmem:[%s3 + $0x70] sm:$0xff]
    %v145 = vld [vmem:[%s3 + $0x78] sm:$0xff]
    %v146 = vld [vmem:[%s3 + $0x80] sm:$0xff]
    %v147 = vld [vmem:[%s3 + $0x88] sm:$0xff]
    %v148 = vld [vmem:[%s3 + $0x90] sm:$0xff]
    %v149 = vld [vmem:[%s3 + $0x98] sm:$0xff]
    %v150 = vld [vmem:[%s3 + $0xa0] sm:$0xff]
    %v151 = vld [vmem:[%s3 + $0xa8] sm:$0xff]
    %v152 = vld [vmem:[%s3 + $0xb0] sm:$0xff]
    %v153 = vld [vmem:[%s3 + $0xb8] sm:$0xff]
    %v154 = vld [vmem:[%s3 + $0xc0] sm:$0xff]
    %v155 = vld [vmem:[%s3 + $0xc8] sm:$0xff]
    %v156 = vld [vmem:[%s3 + $0xd0] sm:$0xff]
    %v157 = vld [vmem:[%s3 + $0xd8] sm:$0xff]
    %v158 = vld [vmem:[%s3 + $0xe0] sm:$0xff]
    %v159 = vld [vmem:[%s3 + $0xe8] sm:$0xff]
    %v160 = vld [vmem:[%s3 + $0xf0] sm:$0xff]
    %v161 = vld [vmem:[%s3 + $0xf8] sm:$0xff]
    %v162 = vld [vmem:[%s3 + $0x100] sm:$0xff]
    %v163 = vld [vmem:[%s3 + $0x108] sm:$0xff]
    %v164 = vld [vmem:[%s3 + $0x110] sm:$0xff]
    %v165 = vld [vmem:[%s3 + $0x118] sm:$0xff]
    %v166 = vld [vmem:[%s3 + $0x120] sm:$0xff]
    %v167 = vld [vmem:[%s3 + $0x128] sm:$0xff]
    %v168 = vld [vmem:[%s3 + $0x130] sm:$0xff]
    %v169 = vld [vmem:[%s3 + $0x138] sm:$0xff]
    %v170 = vld [vmem:[%s3 + $0x140] sm:$0xff]
    %v171 = vld [vmem:[%s3 + $0x148] sm:$0xff]
    %v172 = vld [vmem:[%s3 + $0x150] sm:$0xff]
    %v173 = vld [vmem:[%s3 + $0x158] sm:$0xff]
    %v174 = vld [vmem:[%s3 + $0x160] sm:$0xff]
    %v175 = vld [vmem:[%s3 + $0x168] sm:$0xff]
    %v176 = vld [vmem:[%s3 + $0x170] sm:$0xff]
    %v177 = vld [vmem:[%s3 + $0x178] sm:$0xff]
    %v178 = vld [vmem:[%s3 + $0x180] sm:$0xff]
    %v179 = vld [vmem:[%s3 + $0x188] sm:$0xff]
    %v180 = vld [vmem:[%s3 + $0x190] sm:$0xff]
    %v181 = vld [vmem:[%s3 + $0x198] sm:$0xff]
    %v182 = vld [vmem:[%s3 + $0x1a0] sm:$0xff]
    %v183 = vld [vmem:[%s3 + $0x1a8] sm:$0xff]
    %v184 = vld [vmem:[%s3 + $0x1b0] sm:$0xff]
    %v185 = vld [vmem:[%s3 + $0x1b8] sm:$0xff]
    %v186 = vld [vmem:[%s3 + $0x1c0] sm:$0xff]
    %v187 = vld [vmem:[%s3 + $0x1c8] sm:$0xff]
    %v188 = vld [vmem:[%s3 + $0x1d0] sm:$0xff]
    %v189 = vld [vmem:[%s3 + $0x1d8] sm:$0xff]
    %v190 = vld [vmem:[%s3 + $0x1e0] sm:$0xff]
    %v191 = vld [vmem:[%s3 + $0x1e8] sm:$0xff]
    %v192 = vld [vmem:[%s3 + $0x1f0] sm:$0xff]
    %v193 = vld [vmem:[%s3 + $0x1f8] sm:$0xff]
    %195 = vset.pattern.permute.xlu0 0
    %196 = vperm.xlu0 %195, %v130
    %v197 = vpop.permute.xlu0 %196
    %199 = vset.pattern.permute.xlu0 0
    %200 = vperm.xlu0 %199, %v131
    %v201 = vpop.permute.xlu0 %200
    %203 = vset.pattern.permute.xlu0 0
    %204 = vperm.xlu0 %203, %v132
    %v205 = vpop.permute.xlu0 %204
    %207 = vset.pattern.permute.xlu0 0
    %208 = vperm.xlu0 %207, %v133
    %v209 = vpop.permute.xlu0 %208
    %211 = vset.pattern.permute.xlu0 0
    %212 = vperm.xlu0 %211, %v134
    %v213 = vpop.permute.xlu0 %212
    %215 = vset.pattern.permute.xlu0 0
    %216 = vperm.xlu0 %215, %v135
    %v217 = vpop.permute.xlu0 %216
    %219 = vset.pattern.permute.xlu0 0
    %220 = vperm.xlu0 %219, %v136
    %v221 = vpop.permute.xlu0 %220
    %223 = vset.pattern.permute.xlu0 0
    %224 = vperm.xlu0 %223, %v137
    %v225 = vpop.permute.xlu0 %224
    %227 = vset.pattern.permute.xlu0 0
    %228 = vperm.xlu0 %227, %v138
    %v229 = vpop.permute.xlu0 %228
    %231 = vset.pattern.permute.xlu0 0
    %232 = vperm.xlu0 %231, %v139
    %v233 = vpop.permute.xlu0 %232
    %235 = vset.pattern.permute.xlu0 0
    %236 = vperm.xlu0 %235, %v140
    %v237 = vpop.permute.xlu0 %236
    %239 = vset.pattern.permute.xlu0 0
    %240 = vperm.xlu0 %239, %v141
    %v241 = vpop.permute.xlu0 %240
    %243 = vset.pattern.permute.xlu0 0
    %244 = vperm.xlu0 %243, %v142
    %v245 = vpop.permute.xlu0 %244
    %247 = vset.pattern.permute.xlu0 0
    %248 = vperm.xlu0 %247, %v143
    %v249 = vpop.permute.xlu0 %248
    %251 = vset.pattern.permute.xlu0 0
    %252 = vperm.xlu0 %251, %v144
    %v253 = vpop.permute.xlu0 %252
    %255 = vset.pattern.permute.xlu0 0
    %256 = vperm.xlu0 %255, %v145
    %v257 = vpop.permute.xlu0 %256
    %259 = vset.pattern.permute.xlu0 0
    %260 = vperm.xlu0 %259, %v146
    %v261 = vpop.permute.xlu0 %260
    %263 = vset.pattern.permute.xlu0 0
    %264 = vperm.xlu0 %263, %v147
    %v265 = vpop.permute.xlu0 %264
    %267 = vset.pattern.permute.xlu0 0
    %268 = vperm.xlu0 %267, %v148
    %v269 = vpop.permute.xlu0 %268
    %271 = vset.pattern.permute.xlu0 0
    %272 = vperm.xlu0 %271, %v149
    %v273 = vpop.permute.xlu0 %272
    %275 = vset.pattern.permute.xlu0 0
    %276 = vperm.xlu0 %275, %v150
    %v277 = vpop.permute.xlu0 %276
    %279 = vset.pattern.permute.xlu0 0
    %280 = vperm.xlu0 %279, %v151
    %v281 = vpop.permute.xlu0 %280
    %283 = vset.pattern.permute.xlu0 0
    %284 = vperm.xlu0 %283, %v152
    %v285 = vpop.permute.xlu0 %284
    %287 = vset.pattern.permute.xlu0 0
    %288 = vperm.xlu0 %287, %v153
    %v289 = vpop.permute.xlu0 %288
    %291 = vset.pattern.permute.xlu0 0
    %292 = vperm.xlu0 %291, %v154
    %v293 = vpop.permute.xlu0 %292
    %295 = vset.pattern.permute.xlu0 0
    %296 = vperm.xlu0 %295, %v155
    %v297 = vpop.permute.xlu0 %296
    %299 = vset.pattern.permute.xlu0 0
    %300 = vperm.xlu0 %299, %v156
    %v301 = vpop.permute.xlu0 %300
    %303 = vset.pattern.permute.xlu0 0
    %304 = vperm.xlu0 %303, %v157
    %v305 = vpop.permute.xlu0 %304
    %307 = vset.pattern.permute.xlu0 0
    %308 = vperm.xlu0 %307, %v158
    %v309 = vpop.permute.xlu0 %308
    %311 = vset.pattern.permute.xlu0 0
    %312 = vperm.xlu0 %311, %v159
    %v313 = vpop.permute.xlu0 %312
    %315 = vset.pattern.permute.xlu0 0
    %316 = vperm.xlu0 %315, %v160
    %v317 = vpop.permute.xlu0 %316
    %319 = vset.pattern.permute.xlu0 0
    %320 = vperm.xlu0 %319, %v161
    %v321 = vpop.permute.xlu0 %320
    %323 = vset.pattern.permute.xlu0 0
    %324 = vperm.xlu0 %323, %v162
    %v325 = vpop.permute.xlu0 %324
    %327 = vset.pattern.permute.xlu0 0
    %328 = vperm.xlu0 %327, %v163
    %v329 = vpop.permute.xlu0 %328
    %331 = vset.pattern.permute.xlu0 0
    %332 = vperm.xlu0 %331, %v164
    %v333 = vpop.permute.xlu0 %332
    %335 = vset.pattern.permute.xlu0 0
    %336 = vperm.xlu0 %335, %v165
    %v337 = vpop.permute.xlu0 %336
    %339 = vset.pattern.permute.xlu0 0
    %340 = vperm.xlu0 %339, %v166
    %v341 = vpop.permute.xlu0 %340
    %343 = vset.pattern.permute.xlu0 0
    %344 = vperm.xlu0 %343, %v167
    %v345 = vpop.permute.xlu0 %344
    %347 = vset.pattern.permute.xlu0 0
    %348 = vperm.xlu0 %347, %v168
    %v349 = vpop.permute.xlu0 %348
    %351 = vset.pattern.permute.xlu0 0
    %352 = vperm.xlu0 %351, %v169
    %v353 = vpop.permute.xlu0 %352
    %355 = vset.pattern.permute.xlu0 0
    %356 = vperm.xlu0 %355, %v170
    %v357 = vpop.permute.xlu0 %356
    %359 = vset.pattern.permute.xlu0 0
    %360 = vperm.xlu0 %359, %v171
    %v361 = vpop.permute.xlu0 %360
    %363 = vset.pattern.permute.xlu0 0
    %364 = vperm.xlu0 %363, %v172
    %v365 = vpop.permute.xlu0 %364
    %367 = vset.pattern.permute.xlu0 0
    %368 = vperm.xlu0 %367, %v173
    %v369 = vpop.permute.xlu0 %368
    %371 = vset.pattern.permute.xlu0 0
    %372 = vperm.xlu0 %371, %v174
    %v373 = vpop.permute.xlu0 %372
    %375 = vset.pattern.permute.xlu0 0
    %376 = vperm.xlu0 %375, %v175
    %v377 = vpop.permute.xlu0 %376
    %379 = vset.pattern.permute.xlu0 0
    %380 = vperm.xlu0 %379, %v176
    %v381 = vpop.permute.xlu0 %380
    %383 = vset.pattern.permute.xlu0 0
    %384 = vperm.xlu0 %383, %v177
    %v385 = vpop.permute.xlu0 %384
    %387 = vset.pattern.permute.xlu0 0
    %388 = vperm.xlu0 %387, %v178
    %v389 = vpop.permute.xlu0 %388
    %391 = vset.pattern.permute.xlu0 0
    %392 = vperm.xlu0 %391, %v179
    %v393 = vpop.permute.xlu0 %392
    %395 = vset.pattern.permute.xlu0 0
    %396 = vperm.xlu0 %395, %v180
    %v397 = vpop.permute.xlu0 %396
    %399 = vset.pattern.permute.xlu0 0
    %400 = vperm.xlu0 %399, %v181
    %v401 = vpop.permute.xlu0 %400
    %403 = vset.pattern.permute.xlu0 0
    %404 = vperm.xlu0 %403, %v182
    %v405 = vpop.permute.xlu0 %404
    %407 = vset.pattern.permute.xlu0 0
    %408 = vperm.xlu0 %407, %v183
    %v409 = vpop.permute.xlu0 %408
    %411 = vset.pattern.permute.xlu0 0
    %412 = vperm.xlu0 %411, %v184
    %v413 = vpop.permute.xlu0 %412
    %415 = vset.pattern.permute.xlu0 0
    %416 = vperm.xlu0 %415, %v185
    %v417 = vpop.permute.xlu0 %416
    %419 = vset.pattern.permute.xlu0 0
    %420 = vperm.xlu0 %419, %v186
    %v421 = vpop.permute.xlu0 %420
    %423 = vset.pattern.permute.xlu0 0
    %424 = vperm.xlu0 %423, %v187
    %v425 = vpop.permute.xlu0 %424
    %427 = vset.pattern.permute.xlu0 0
    %428 = vperm.xlu0 %427, %v188
    %v429 = vpop.permute.xlu0 %428
    %431 = vset.pattern.permute.xlu0 0
    %432 = vperm.xlu0 %431, %v189
    %v433 = vpop.permute.xlu0 %432
    %435 = vset.pattern.permute.xlu0 0
    %436 = vperm.xlu0 %435, %v190
    %v437 = vpop.permute.xlu0 %436
    %439 = vset.pattern.permute.xlu0 0
    %440 = vperm.xlu0 %439, %v191
    %v441 = vpop.permute.xlu0 %440
    %443 = vset.pattern.permute.xlu0 0
    %444 = vperm.xlu0 %443, %v192
    %v445 = vpop.permute.xlu0 %444
    %447 = vset.pattern.permute.xlu0 0
    %448 = vperm.xlu0 %447, %v193
    %v449 = vpop.permute.xlu0 %448
    %vm450 = vcmask 1046528
    %v451 = vrot.slane %v197, 1
    %v452 = vrot.slane %v201, 1
    %v453 = vsel %vm450, %v451, %v452
    %v454 = vrot.slane %v205, 1
    %v455 = vsel %vm450, %v452, %v454
    %v456 = vrot.slane %v209, 1
    %v457 = vsel %vm450, %v454, %v456
    %v458 = vrot.slane %v213, 1
    %v459 = vsel %vm450, %v456, %v458
    %v460 = vrot.slane %v217, 1
    %v461 = vsel %vm450, %v458, %v460
    %v462 = vrot.slane %v221, 1
    %v463 = vsel %vm450, %v460, %v462
    %v464 = vrot.slane %v225, 1
    %v465 = vsel %vm450, %v462, %v464
    %v466 = vrot.slane %v229, 1
    %v467 = vsel %vm450, %v464, %v466
    %v468 = vrot.slane %v233, 1
    %v469 = vsel %vm450, %v466, %v468
    %v470 = vrot.slane %v237, 1
    %v471 = vsel %vm450, %v468, %v470
    %v472 = vrot.slane %v241, 1
    %v473 = vsel %vm450, %v470, %v472
    %v474 = vrot.slane %v245, 1
    %v475 = vsel %vm450, %v472, %v474
    %v476 = vrot.slane %v249, 1
    %v477 = vsel %vm450, %v474, %v476
    %v478 = vrot.slane %v253, 1
    %v479 = vsel %vm450, %v476, %v478
    %v480 = vrot.slane %v257, 1
    %v481 = vsel %vm450, %v478, %v480
    %v482 = vrot.slane %v261, 1
    %v483 = vsel %vm450, %v480, %v482
    %v484 = vrot.slane %v265, 1
    %v485 = vsel %vm450, %v482, %v484
    %v486 = vrot.slane %v269, 1
    %v487 = vsel %vm450, %v484, %v486
    %v488 = vrot.slane %v273, 1
    %v489 = vsel %vm450, %v486, %v488
    %v490 = vrot.slane %v277, 1
    %v491 = vsel %vm450, %v488, %v490
    %v492 = vrot.slane %v281, 1
    %v493 = vsel %vm450, %v490, %v492
    %v494 = vrot.slane %v285, 1
    %v495 = vsel %vm450, %v492, %v494
    %v496 = vrot.slane %v289, 1
    %v497 = vsel %vm450, %v494, %v496
    %v498 = vrot.slane %v293, 1
    %v499 = vsel %vm450, %v496, %v498
    %v500 = vrot.slane %v297, 1
    %v501 = vsel %vm450, %v498, %v500
    %v502 = vrot.slane %v301, 1
    %v503 = vsel %vm450, %v500, %v502
    %v504 = vrot.slane %v305, 1
    %v505 = vsel %vm450, %v502, %v504
    %v506 = vrot.slane %v309, 1
    %v507 = vsel %vm450, %v504, %v506
    %v508 = vrot.slane %v313, 1
    %v509 = vsel %vm450, %v506, %v508
    %v510 = vrot.slane %v317, 1
    %v511 = vsel %vm450, %v508, %v510
    %v512 = vrot.slane %v321, 1
    %v513 = vsel %vm450, %v510, %v512
    %v514 = vrot.slane %v325, 1
    %v515 = vsel %vm450, %v512, %v514
    %v516 = vrot.slane %v329, 1
    %v517 = vsel %vm450, %v514, %v516
    %v518 = vrot.slane %v333, 1
    %v519 = vsel %vm450, %v516, %v518
    %v520 = vrot.slane %v337, 1
    %v521 = vsel %vm450, %v518, %v520
    %v522 = vrot.slane %v341, 1
    %v523 = vsel %vm450, %v520, %v522
    %v524 = vrot.slane %v345, 1
    %v525 = vsel %vm450, %v522, %v524
    %v526 = vrot.slane %v349, 1
    %v527 = vsel %vm450, %v524, %v526
    %v528 = vrot.slane %v353, 1
    %v529 = vsel %vm450, %v526, %v528
    %v530 = vrot.slane %v357, 1
    %v531 = vsel %vm450, %v528, %v530
    %v532 = vrot.slane %v361, 1
    %v533 = vsel %vm450, %v530, %v532
    %v534 = vrot.slane %v365, 1
    %v535 = vsel %vm450, %v532, %v534
    %v536 = vrot.slane %v369, 1
    %v537 = vsel %vm450, %v534, %v536
    %v538 = vrot.slane %v373, 1
    %v539 = vsel %vm450, %v536, %v538
    %v540 = vrot.slane %v377, 1
    %v541 = vsel %vm450, %v538, %v540
    %v542 = vrot.slane %v381, 1
    %v543 = vsel %vm450, %v540, %v542
    %v544 = vrot.slane %v385, 1
    %v545 = vsel %vm450, %v542, %v544
    %v546 = vrot.slane %v389, 1
    %v547 = vsel %vm450, %v544, %v546
    %v548 = vrot.slane %v393, 1
    %v549 = vsel %vm450, %v546, %v548
    %v550 = vrot.slane %v397, 1
    %v551 = vsel %vm450, %v548, %v550
    %v552 = vrot.slane %v401, 1
    %v553 = vsel %vm450, %v550, %v552
    %v554 = vrot.slane %v405, 1
    %v555 = vsel %vm450, %v552, %v554
    %v556 = vrot.slane %v409, 1
    %v557 = vsel %vm450, %v554, %v556
    %v558 = vrot.slane %v413, 1
    %v559 = vsel %vm450, %v556, %v558
    %v560 = vrot.slane %v417, 1
    %v561 = vsel %vm450, %v558, %v560
    %v562 = vrot.slane %v421, 1
    %v563 = vsel %vm450, %v560, %v562
    %v564 = vrot.slane %v425, 1
    %v565 = vsel %vm450, %v562, %v564
    %v566 = vrot.slane %v429, 1
    %v567 = vsel %vm450, %v564, %v566
    %v568 = vrot.slane %v433, 1
    %v569 = vsel %vm450, %v566, %v568
    %v570 = vrot.slane %v437, 1
    %v571 = vsel %vm450, %v568, %v570
    %v572 = vrot.slane %v441, 1
    %v573 = vsel %vm450, %v570, %v572
    %v574 = vrot.slane %v445, 1
    %v575 = vsel %vm450, %v572, %v574
    %v576 = vrot.slane %v449, 1
    %v577 = vsel %vm450, %v574, %v576
    %v643 = vmul.f32 %v451, 0.0
    %v644 = vmul.f32 %v453, 0.0
    %v645 = vmul.f32 %v455, 0.0
    %v646 = vmul.f32 %v66, %v457
    %v647 = vmul.f32 %v67, %v459
    %v648 = vmul.f32 %v68, %v461
    %v649 = vmul.f32 %v69, %v463
    %v650 = vmul.f32 %v70, %v465
    %v651 = vmul.f32 %v71, %v467
    %v652 = vmul.f32 %v72, %v469
    %v653 = vmul.f32 %v73, %v471
    %v654 = vmul.f32 %v74, %v473
    %v655 = vmul.f32 %v75, %v475
    %v656 = vmul.f32 %v76, %v477
    %v657 = vmul.f32 %v77, %v479
    %v658 = vmul.f32 %v78, %v481
    %v659 = vmul.f32 %v79, %v483
    %v660 = vmul.f32 %v80, %v485
    %v661 = vmul.f32 %v81, %v487
    %v662 = vmul.f32 %v82, %v489
    %v663 = vmul.f32 %v83, %v491
    %v664 = vmul.f32 %v84, %v493
    %v665 = vmul.f32 %v85, %v495
    %v666 = vmul.f32 %v86, %v497
    %v667 = vmul.f32 %v87, %v499
    %v668 = vmul.f32 %v88, %v501
    %v669 = vmul.f32 %v89, %v503
    %v670 = vmul.f32 %v90, %v505
    %v671 = vmul.f32 %v91, %v507
    %v672 = vmul.f32 %v92, %v509
    %v673 = vmul.f32 %v93, %v511
    %v674 = vmul.f32 %v94, %v513
    %v675 = vmul.f32 %v95, %v515
    %v676 = vmul.f32 %v96, %v517
    %v677 = vmul.f32 %v97, %v519
    %v678 = vmul.f32 %v98, %v521
    %v679 = vmul.f32 %v99, %v523
    %v680 = vmul.f32 %v100, %v525
    %v681 = vmul.f32 %v101, %v527
    %v682 = vmul.f32 %v102, %v529
    %v683 = vmul.f32 %v103, %v531
    %v684 = vmul.f32 %v104, %v533
    %v685 = vmul.f32 %v105, %v535
    %v686 = vmul.f32 %v106, %v537
    %v687 = vmul.f32 %v107, %v539
    %v688 = vmul.f32 %v108, %v541
    %v689 = vmul.f32 %v109, %v543
    %v690 = vmul.f32 %v110, %v545
    %v691 = vmul.f32 %v111, %v547
    %v692 = vmul.f32 %v112, %v549
    %v693 = vmul.f32 %v113, %v551
    %v694 = vmul.f32 %v114, %v553
    %v695 = vmul.f32 %v115, %v555
    %v696 = vmul.f32 %v116, %v557
    %v697 = vmul.f32 %v117, %v559
    %v698 = vmul.f32 %v118, %v561
    %v699 = vmul.f32 %v119, %v563
    %v700 = vmul.f32 %v120, %v565
    %v701 = vmul.f32 %v121, %v567
    %v702 = vmul.f32 %v122, %v569
    %v703 = vmul.f32 %v123, %v571
    %v704 = vmul.f32 %v124, %v573
    %v705 = vmul.f32 %v125, %v575
    %v706 = vmul.f32 %v126, %v577
    %v707 = vmul.f32 %v127, %v576
    %v708 = vld [vmem:[%s1] sm:$0x7]
    %709 = vset.pattern.permute.xlu0 1
    %710 = vperm.xlu0 %709, %v130
    %v711 = vpop.permute.xlu0 %710
    %713 = vset.pattern.permute.xlu0 1
    %714 = vperm.xlu0 %713, %v131
    %v715 = vpop.permute.xlu0 %714
    %717 = vset.pattern.permute.xlu0 1
    %718 = vperm.xlu0 %717, %v132
    %v719 = vpop.permute.xlu0 %718
    %721 = vset.pattern.permute.xlu0 1
    %722 = vperm.xlu0 %721, %v133
    %v723 = vpop.permute.xlu0 %722
    %725 = vset.pattern.permute.xlu0 1
    %726 = vperm.xlu0 %725, %v134
    %v727 = vpop.permute.xlu0 %726
    %729 = vset.pattern.permute.xlu0 1
    %730 = vperm.xlu0 %729, %v135
    %v731 = vpop.permute.xlu0 %730
    %733 = vset.pattern.permute.xlu0 1
    %734 = vperm.xlu0 %733, %v136
    %v735 = vpop.permute.xlu0 %734
    %737 = vset.pattern.permute.xlu0 1
    %738 = vperm.xlu0 %737, %v137
    %v739 = vpop.permute.xlu0 %738
    %741 = vset.pattern.permute.xlu0 1
    %742 = vperm.xlu0 %741, %v138
    %v743 = vpop.permute.xlu0 %742
    %745 = vset.pattern.permute.xlu0 1
    %746 = vperm.xlu0 %745, %v139
    %v747 = vpop.permute.xlu0 %746
    %749 = vset.pattern.permute.xlu0 1
    %750 = vperm.xlu0 %749, %v140
    %v751 = vpop.permute.xlu0 %750
    %753 = vset.pattern.permute.xlu0 1
    %754 = vperm.xlu0 %753, %v141
    %v755 = vpop.permute.xlu0 %754
    %757 = vset.pattern.permute.xlu0 1
    %758 = vperm.xlu0 %757, %v142
    %v759 = vpop.permute.xlu0 %758
    %761 = vset.pattern.permute.xlu0 1
    %762 = vperm.xlu0 %761, %v143
    %v763 = vpop.permute.xlu0 %762
    %765 = vset.pattern.permute.xlu0 1
    %766 = vperm.xlu0 %765, %v144
    %v767 = vpop.permute.xlu0 %766
    %769 = vset.pattern.permute.xlu0 1
    %770 = vperm.xlu0 %769, %v145
    %v771 = vpop.permute.xlu0 %770
    %773 = vset.pattern.permute.xlu0 1
    %774 = vperm.xlu0 %773, %v146
    %v775 = vpop.permute.xlu0 %774
    %777 = vset.pattern.permute.xlu0 1
    %778 = vperm.xlu0 %777, %v147
    %v779 = vpop.permute.xlu0 %778
    %781 = vset.pattern.permute.xlu0 1
    %782 = vperm.xlu0 %781, %v148
    %v783 = vpop.permute.xlu0 %782
    %785 = vset.pattern.permute.xlu0 1
    %786 = vperm.xlu0 %785, %v149
    %v787 = vpop.permute.xlu0 %786
    %789 = vset.pattern.permute.xlu0 1
    %790 = vperm.xlu0 %789, %v150
    %v791 = vpop.permute.xlu0 %790
    %793 = vset.pattern.permute.xlu0 1
    %794 = vperm.xlu0 %793, %v151
    %v795 = vpop.permute.xlu0 %794
    %797 = vset.pattern.permute.xlu0 1
    %798 = vperm.xlu0 %797, %v152
    %v799 = vpop.permute.xlu0 %798
    %801 = vset.pattern.permute.xlu0 1
    %802 = vperm.xlu0 %801, %v153
    %v803 = vpop.permute.xlu0 %802
    %805 = vset.pattern.permute.xlu0 1
    %806 = vperm.xlu0 %805, %v154
    %v807 = vpop.permute.xlu0 %806
    %809 = vset.pattern.permute.xlu0 1
    %810 = vperm.xlu0 %809, %v155
    %v811 = vpop.permute.xlu0 %810
    %813 = vset.pattern.permute.xlu0 1
    %814 = vperm.xlu0 %813, %v156
    %v815 = vpop.permute.xlu0 %814
    %817 = vset.pattern.permute.xlu0 1
    %818 = vperm.xlu0 %817, %v157
    %v819 = vpop.permute.xlu0 %818
    %821 = vset.pattern.permute.xlu0 1
    %822 = vperm.xlu0 %821, %v158
    %v823 = vpop.permute.xlu0 %822
    %825 = vset.pattern.permute.xlu0 1
    %826 = vperm.xlu0 %825, %v159
    %v827 = vpop.permute.xlu0 %826
    %829 = vset.pattern.permute.xlu0 1
    %830 = vperm.xlu0 %829, %v160
    %v831 = vpop.permute.xlu0 %830
    %833 = vset.pattern.permute.xlu0 1
    %834 = vperm.xlu0 %833, %v161
    %v835 = vpop.permute.xlu0 %834
    %837 = vset.pattern.permute.xlu0 1
    %838 = vperm.xlu0 %837, %v162
    %v839 = vpop.permute.xlu0 %838
    %841 = vset.pattern.permute.xlu0 1
    %842 = vperm.xlu0 %841, %v163
    %v843 = vpop.permute.xlu0 %842
    %845 = vset.pattern.permute.xlu0 1
    %846 = vperm.xlu0 %845, %v164
    %v847 = vpop.permute.xlu0 %846
    %849 = vset.pattern.permute.xlu0 1
    %850 = vperm.xlu0 %849, %v165
    %v851 = vpop.permute.xlu0 %850
    %853 = vset.pattern.permute.xlu0 1
    %854 = vperm.xlu0 %853, %v166
    %v855 = vpop.permute.xlu0 %854
    %857 = vset.pattern.permute.xlu0 1
    %858 = vperm.xlu0 %857, %v167
    %v859 = vpop.permute.xlu0 %858
    %861 = vset.pattern.permute.xlu0 1
    %862 = vperm.xlu0 %861, %v168
    %v863 = vpop.permute.xlu0 %862
    %865 = vset.pattern.permute.xlu0 1
    %866 = vperm.xlu0 %865, %v169
    %v867 = vpop.permute.xlu0 %866
    %869 = vset.pattern.permute.xlu0 1
    %870 = vperm.xlu0 %869, %v170
    %v871 = vpop.permute.xlu0 %870
    %873 = vset.pattern.permute.xlu0 1
    %874 = vperm.xlu0 %873, %v171
    %v875 = vpop.permute.xlu0 %874
    %877 = vset.pattern.permute.xlu0 1
    %878 = vperm.xlu0 %877, %v172
    %v879 = vpop.permute.xlu0 %878
    %881 = vset.pattern.permute.xlu0 1
    %882 = vperm.xlu0 %881, %v173
    %v883 = vpop.permute.xlu0 %882
    %885 = vset.pattern.permute.xlu0 1
    %886 = vperm.xlu0 %885, %v174
    %v887 = vpop.permute.xlu0 %886
    %889 = vset.pattern.permute.xlu0 1
    %890 = vperm.xlu0 %889, %v175
    %v891 = vpop.permute.xlu0 %890
    %893 = vset.pattern.permute.xlu0 1
    %894 = vperm.xlu0 %893, %v176
    %v895 = vpop.permute.xlu0 %894
    %897 = vset.pattern.permute.xlu0 1
    %898 = vperm.xlu0 %897, %v177
    %v899 = vpop.permute.xlu0 %898
    %901 = vset.pattern.permute.xlu0 1
    %902 = vperm.xlu0 %901, %v178
    %v903 = vpop.permute.xlu0 %902
    %905 = vset.pattern.permute.xlu0 1
    %906 = vperm.xlu0 %905, %v179
    %v907 = vpop.permute.xlu0 %906
    %909 = vset.pattern.permute.xlu0 1
    %910 = vperm.xlu0 %909, %v180
    %v911 = vpop.permute.xlu0 %910
    %913 = vset.pattern.permute.xlu0 1
    %914 = vperm.xlu0 %913, %v181
    %v915 = vpop.permute.xlu0 %914
    %917 = vset.pattern.permute.xlu0 1
    %918 = vperm.xlu0 %917, %v182
    %v919 = vpop.permute.xlu0 %918
    %921 = vset.pattern.permute.xlu0 1
    %922 = vperm.xlu0 %921, %v183
    %v923 = vpop.permute.xlu0 %922
    %925 = vset.pattern.permute.xlu0 1
    %926 = vperm.xlu0 %925, %v184
    %v927 = vpop.permute.xlu0 %926
    %929 = vset.pattern.permute.xlu0 1
    %930 = vperm.xlu0 %929, %v185
    %v931 = vpop.permute.xlu0 %930
    %933 = vset.pattern.permute.xlu0 1
    %934 = vperm.xlu0 %933, %v186
    %v935 = vpop.permute.xlu0 %934
    %937 = vset.pattern.permute.xlu0 1
    %938 = vperm.xlu0 %937, %v187
    %v939 = vpop.permute.xlu0 %938
    %941 = vset.pattern.permute.xlu0 1
    %942 = vperm.xlu0 %941, %v188
    %v943 = vpop.permute.xlu0 %942
    %945 = vset.pattern.permute.xlu0 1
    %946 = vperm.xlu0 %945, %v189
    %v947 = vpop.permute.xlu0 %946
    %949 = vset.pattern.permute.xlu0 1
    %950 = vperm.xlu0 %949, %v190
    %v951 = vpop.permute.xlu0 %950
    %953 = vset.pattern.permute.xlu0 1
    %954 = vperm.xlu0 %953, %v191
    %v955 = vpop.permute.xlu0 %954
    %957 = vset.pattern.permute.xlu0 1
    %958 = vperm.xlu0 %957, %v192
    %v959 = vpop.permute.xlu0 %958
    %961 = vset.pattern.permute.xlu0 1
    %962 = vperm.xlu0 %961, %v193
    %v963 = vpop.permute.xlu0 %962
    %v965 = vmul.f32 %v711, 0.0
    %v966 = vmul.f32 %v715, 0.0
    %v967 = vmul.f32 %v66, %v719
    %v968 = vmul.f32 %v67, %v723
    %v969 = vmul.f32 %v68, %v727
    %v970 = vmul.f32 %v69, %v731
    %v971 = vmul.f32 %v70, %v735
    %v972 = vmul.f32 %v71, %v739
    %v973 = vmul.f32 %v72, %v743
    %v974 = vmul.f32 %v73, %v747
    %v975 = vmul.f32 %v74, %v751
    %v976 = vmul.f32 %v75, %v755
    %v977 = vmul.f32 %v76, %v759
    %v978 = vmul.f32 %v77, %v763
    %v979 = vmul.f32 %v78, %v767
    %v980 = vmul.f32 %v79, %v771
    %v981 = vmul.f32 %v80, %v775
    %v982 = vmul.f32 %v81, %v779
    %v983 = vmul.f32 %v82, %v783
    %v984 = vmul.f32 %v83, %v787
    %v985 = vmul.f32 %v84, %v791
    %v986 = vmul.f32 %v85, %v795
    %v987 = vmul.f32 %v86, %v799
    %v988 = vmul.f32 %v87, %v803
    %v989 = vmul.f32 %v88, %v807
    %v990 = vmul.f32 %v89, %v811
    %v991 = vmul.f32 %v90, %v815
    %v992 = vmul.f32 %v91, %v819
    %v993 = vmul.f32 %v92, %v823
    %v994 = vmul.f32 %v93, %v827
    %v995 = vmul.f32 %v94, %v831
    %v996 = vmul.f32 %v95, %v835
    %v997 = vmul.f32 %v96, %v839
    %v998 = vmul.f32 %v97, %v843
    %v999 = vmul.f32 %v98, %v847
    %v1000 = vmul.f32 %v99, %v851
    %v1001 = vmul.f32 %v100, %v855
    %v1002 = vmul.f32 %v101, %v859
    %v1003 = vmul.f32 %v102, %v863
    %v1004 = vmul.f32 %v103, %v867
    %v1005 = vmul.f32 %v104, %v871
    %v1006 = vmul.f32 %v105, %v875
    %v1007 = vmul.f32 %v106, %v879
    %v1008 = vmul.f32 %v107, %v883
    %v1009 = vmul.f32 %v108, %v887
    %v1010 = vmul.f32 %v109, %v891
    %v1011 = vmul.f32 %v110, %v895
    %v1012 = vmul.f32 %v111, %v899
    %v1013 = vmul.f32 %v112, %v903
    %v1014 = vmul.f32 %v113, %v907
    %v1015 = vmul.f32 %v114, %v911
    %v1016 = vmul.f32 %v115, %v915
    %v1017 = vmul.f32 %v116, %v919
    %v1018 = vmul.f32 %v117, %v923
    %v1019 = vmul.f32 %v118, %v927
    %v1020 = vmul.f32 %v119, %v931
    %v1021 = vmul.f32 %v120, %v935
    %v1022 = vmul.f32 %v121, %v939
    %v1023 = vmul.f32 %v122, %v943
    %v1024 = vmul.f32 %v123, %v947
    %v1025 = vmul.f32 %v124, %v951
    %v1026 = vmul.f32 %v125, %v955
    %v1027 = vmul.f32 %v126, %v959
    %v1028 = vmul.f32 %v127, %v963
    %s1029 = scalar_lea.vmem %s1, 4
    %v1030 = vld [vmem:[%s1029] sm:$0x7]
    %vm1031 = vcmask 23552
    %v1033 = vsel %vm1031, %v965, 0
    %v1036 = vsel %vm1031, %v966, 0
    %v1039 = vsel %vm1031, %v967, 0
    %v1042 = vsel %vm1031, %v968, 0
    %v1045 = vsel %vm1031, %v969, 0
    %v1048 = vsel %vm1031, %v970, 0
    %v1051 = vsel %vm1031, %v971, 0
    %v1054 = vsel %vm1031, %v972, 0
    %v1057 = vsel %vm1031, %v973, 0
    %v1060 = vsel %vm1031, %v974, 0
    %v1063 = vsel %vm1031, %v975, 0
    %v1066 = vsel %vm1031, %v976, 0
    %v1069 = vsel %vm1031, %v977, 0
    %v1072 = vsel %vm1031, %v978, 0
    %v1075 = vsel %vm1031, %v979, 0
    %v1078 = vsel %vm1031, %v980, 0
    %v1081 = vsel %vm1031, %v981, 0
    %v1084 = vsel %vm1031, %v982, 0
    %v1087 = vsel %vm1031, %v983, 0
    %v1090 = vsel %vm1031, %v984, 0
    %v1093 = vsel %vm1031, %v985, 0
    %v1096 = vsel %vm1031, %v986, 0
    %v1099 = vsel %vm1031, %v987, 0
    %v1102 = vsel %vm1031, %v988, 0
    %v1105 = vsel %vm1031, %v989, 0
    %v1108 = vsel %vm1031, %v990, 0
    %v1111 = vsel %vm1031, %v991, 0
    %v1114 = vsel %vm1031, %v992, 0
    %v1117 = vsel %vm1031, %v993, 0
    %v1120 = vsel %vm1031, %v994, 0
    %v1123 = vsel %vm1031, %v995, 0
    %v1126 = vsel %vm1031, %v996, 0
    %v1129 = vsel %vm1031, %v997, 0
    %v1132 = vsel %vm1031, %v998, 0
    %v1135 = vsel %vm1031, %v999, 0
    %v1138 = vsel %vm1031, %v1000, 0
    %v1141 = vsel %vm1031, %v1001, 0
    %v1144 = vsel %vm1031, %v1002, 0
    %v1147 = vsel %vm1031, %v1003, 0
    %v1150 = vsel %vm1031, %v1004, 0
    %v1153 = vsel %vm1031, %v1005, 0
    %v1156 = vsel %vm1031, %v1006, 0
    %v1159 = vsel %vm1031, %v1007, 0
    %v1162 = vsel %vm1031, %v1008, 0
    %v1165 = vsel %vm1031, %v1009, 0
    %v1168 = vsel %vm1031, %v1010, 0
    %v1171 = vsel %vm1031, %v1011, 0
    %v1174 = vsel %vm1031, %v1012, 0
    %v1177 = vsel %vm1031, %v1013, 0
    %v1180 = vsel %vm1031, %v1014, 0
    %v1183 = vsel %vm1031, %v1015, 0
    %v1186 = vsel %vm1031, %v1016, 0
    %v1189 = vsel %vm1031, %v1017, 0
    %v1192 = vsel %vm1031, %v1018, 0
    %v1195 = vsel %vm1031, %v1019, 0
    %v1198 = vsel %vm1031, %v1020, 0
    %v1201 = vsel %vm1031, %v1021, 0
    %v1204 = vsel %vm1031, %v1022, 0
    %v1207 = vsel %vm1031, %v1023, 0
    %v1210 = vsel %vm1031, %v1024, 0
    %v1213 = vsel %vm1031, %v1025, 0
    %v1216 = vsel %vm1031, %v1026, 0
    %v1219 = vsel %vm1031, %v1027, 0
    %v1222 = vsel %vm1031, %v1028, 0
    %vm1224 = vcmask 1042432
    %v1226 = vsel %vm1224, %v1030, 0
    %1228 = vmatpush.msra.mxu0 0.0
    %1229 = vmatpush.msra.mxu0 0.0
    %1230 = vmatpush.msra.mxu0 0.0
    %1231 = vmatpush.msra.mxu0 0.0
    %1232 = vmatpush.msra.mxu0 0.0
    %1233 = vmatpush.msra.mxu0 0.0
    %1234 = vmatpush.msra.mxu0 0.0
    %1235 = vmatpush.msra.mxu0 0.0
    %1236 = vmatpush.msra.mxu0 0.0
    %1237 = vmatpush.msra.mxu0 0.0
    %1238 = vmatpush.msra.mxu0 0.0
    %1239 = vmatpush.msra.mxu0 0.0
    %1240 = vmatpush.msra.mxu0 0.0
    %1241 = vmatpush.msra.mxu0 0.0
    %1242 = vmatpush.msra.mxu0 0.0
    %1243 = vmatpush.msra.mxu0 %v1226
    %1244 = vmatmul.f32.gmra.mxu0 %v1033
    %v1245 = vpop.f32.mrf.mxu0
    %v1246 = vadd.f32 0.0, %v1245
    %1247 = vmatmul.f32.gmra.mxu0 %v1036
    %v1248 = vpop.f32.mrf.mxu0
    %v1249 = vadd.f32 0.0, %v1248
    %1250 = vmatmul.f32.gmra.mxu0 %v1039
    %v1251 = vpop.f32.mrf.mxu0
    %v1252 = vadd.f32 0.0, %v1251
    %1253 = vmatmul.f32.gmra.mxu0 %v1042
    %v1254 = vpop.f32.mrf.mxu0
    %v1255 = vadd.f32 0.0, %v1254
    %1256 = vmatmul.f32.gmra.mxu0 %v1045
    %v1257 = vpop.f32.mrf.mxu0
    %v1258 = vadd.f32 0.0, %v1257
    %1259 = vmatmul.f32.gmra.mxu0 %v1048
    %v1260 = vpop.f32.mrf.mxu0
    %v1261 = vadd.f32 0.0, %v1260
    %1262 = vmatmul.f32.gmra.mxu0 %v1051
    %v1263 = vpop.f32.mrf.mxu0
    %v1264 = vadd.f32 0.0, %v1263
    %1265 = vmatmul.f32.gmra.mxu0 %v1054
    %v1266 = vpop.f32.mrf.mxu0
    %v1267 = vadd.f32 0.0, %v1266
    %1268 = vmatmul.f32.gmra.mxu0 %v1057
    %v1269 = vpop.f32.mrf.mxu0
    %v1270 = vadd.f32 0.0, %v1269
    %1271 = vmatmul.f32.gmra.mxu0 %v1060
    %v1272 = vpop.f32.mrf.mxu0
    %v1273 = vadd.f32 0.0, %v1272
    %1274 = vmatmul.f32.gmra.mxu0 %v1063
    %v1275 = vpop.f32.mrf.mxu0
    %v1276 = vadd.f32 0.0, %v1275
    %1277 = vmatmul.f32.gmra.mxu0 %v1066
    %v1278 = vpop.f32.mrf.mxu0
    %v1279 = vadd.f32 0.0, %v1278
    %1280 = vmatmul.f32.gmra.mxu0 %v1069
    %v1281 = vpop.f32.mrf.mxu0
    %v1282 = vadd.f32 0.0, %v1281
    %1283 = vmatmul.f32.gmra.mxu0 %v1072
    %v1284 = vpop.f32.mrf.mxu0
    %v1285 = vadd.f32 0.0, %v1284
    %1286 = vmatmul.f32.gmra.mxu0 %v1075
    %v1287 = vpop.f32.mrf.mxu0
    %v1288 = vadd.f32 0.0, %v1287
    %1289 = vmatmul.f32.gmra.mxu0 %v1078
    %v1290 = vpop.f32.mrf.mxu0
    %v1291 = vadd.f32 0.0, %v1290
    %1292 = vmatmul.f32.gmra.mxu0 %v1081
    %v1293 = vpop.f32.mrf.mxu0
    %v1294 = vadd.f32 0.0, %v1293
    %1295 = vmatmul.f32.gmra.mxu0 %v1084
    %v1296 = vpop.f32.mrf.mxu0
    %v1297 = vadd.f32 0.0, %v1296
    %1298 = vmatmul.f32.gmra.mxu0 %v1087
    %v1299 = vpop.f32.mrf.mxu0
    %v1300 = vadd.f32 0.0, %v1299
    %1301 = vmatmul.f32.gmra.mxu0 %v1090
    %v1302 = vpop.f32.mrf.mxu0
    %v1303 = vadd.f32 0.0, %v1302
    %1304 = vmatmul.f32.gmra.mxu0 %v1093
    %v1305 = vpop.f32.mrf.mxu0
    %v1306 = vadd.f32 0.0, %v1305
    %1307 = vmatmul.f32.gmra.mxu0 %v1096
    %v1308 = vpop.f32.mrf.mxu0
    %v1309 = vadd.f32 0.0, %v1308
    %1310 = vmatmul.f32.gmra.mxu0 %v1099
    %v1311 = vpop.f32.mrf.mxu0
    %v1312 = vadd.f32 0.0, %v1311
    %1313 = vmatmul.f32.gmra.mxu0 %v1102
    %v1314 = vpop.f32.mrf.mxu0
    %v1315 = vadd.f32 0.0, %v1314
    %1316 = vmatmul.f32.gmra.mxu0 %v1105
    %v1317 = vpop.f32.mrf.mxu0
    %v1318 = vadd.f32 0.0, %v1317
    %1319 = vmatmul.f32.gmra.mxu0 %v1108
    %v1320 = vpop.f32.mrf.mxu0
    %v1321 = vadd.f32 0.0, %v1320
    %1322 = vmatmul.f32.gmra.mxu0 %v1111
    %v1323 = vpop.f32.mrf.mxu0
    %v1324 = vadd.f32 0.0, %v1323
    %1325 = vmatmul.f32.gmra.mxu0 %v1114
    %v1326 = vpop.f32.mrf.mxu0
    %v1327 = vadd.f32 0.0, %v1326
    %1328 = vmatmul.f32.gmra.mxu0 %v1117
    %v1329 = vpop.f32.mrf.mxu0
    %v1330 = vadd.f32 0.0, %v1329
    %1331 = vmatmul.f32.gmra.mxu0 %v1120
    %v1332 = vpop.f32.mrf.mxu0
    %v1333 = vadd.f32 0.0, %v1332
    %1334 = vmatmul.f32.gmra.mxu0 %v1123
    %v1335 = vpop.f32.mrf.mxu0
    %v1336 = vadd.f32 0.0, %v1335
    %1337 = vmatmul.f32.gmra.mxu0 %v1126
    %v1338 = vpop.f32.mrf.mxu0
    %v1339 = vadd.f32 0.0, %v1338
    %1340 = vmatmul.f32.gmra.mxu0 %v1129
    %v1341 = vpop.f32.mrf.mxu0
    %v1342 = vadd.f32 0.0, %v1341
    %1343 = vmatmul.f32.gmra.mxu0 %v1132
    %v1344 = vpop.f32.mrf.mxu0
    %v1345 = vadd.f32 0.0, %v1344
    %1346 = vmatmul.f32.gmra.mxu0 %v1135
    %v1347 = vpop.f32.mrf.mxu0
    %v1348 = vadd.f32 0.0, %v1347
    %1349 = vmatmul.f32.gmra.mxu0 %v1138
    %v1350 = vpop.f32.mrf.mxu0
    %v1351 = vadd.f32 0.0, %v1350
    %1352 = vmatmul.f32.gmra.mxu0 %v1141
    %v1353 = vpop.f32.mrf.mxu0
    %v1354 = vadd.f32 0.0, %v1353
    %1355 = vmatmul.f32.gmra.mxu0 %v1144
    %v1356 = vpop.f32.mrf.mxu0
    %v1357 = vadd.f32 0.0, %v1356
    %1358 = vmatmul.f32.gmra.mxu0 %v1147
    %v1359 = vpop.f32.mrf.mxu0
    %v1360 = vadd.f32 0.0, %v1359
    %1361 = vmatmul.f32.gmra.mxu0 %v1150
    %v1362 = vpop.f32.mrf.mxu0
    %v1363 = vadd.f32 0.0, %v1362
    %1364 = vmatmul.f32.gmra.mxu0 %v1153
    %v1365 = vpop.f32.mrf.mxu0
    %v1366 = vadd.f32 0.0, %v1365
    %1367 = vmatmul.f32.gmra.mxu0 %v1156
    %v1368 = vpop.f32.mrf.mxu0
    %v1369 = vadd.f32 0.0, %v1368
    %1370 = vmatmul.f32.gmra.mxu0 %v1159
    %v1371 = vpop.f32.mrf.mxu0
    %v1372 = vadd.f32 0.0, %v1371
    %1373 = vmatmul.f32.gmra.mxu0 %v1162
    %v1374 = vpop.f32.mrf.mxu0
    %v1375 = vadd.f32 0.0, %v1374
    %1376 = vmatmul.f32.gmra.mxu0 %v1165
    %v1377 = vpop.f32.mrf.mxu0
    %v1378 = vadd.f32 0.0, %v1377
    %1379 = vmatmul.f32.gmra.mxu0 %v1168
    %v1380 = vpop.f32.mrf.mxu0
    %v1381 = vadd.f32 0.0, %v1380
    %1382 = vmatmul.f32.gmra.mxu0 %v1171
    %v1383 = vpop.f32.mrf.mxu0
    %v1384 = vadd.f32 0.0, %v1383
    %1385 = vmatmul.f32.gmra.mxu0 %v1174
    %v1386 = vpop.f32.mrf.mxu0
    %v1387 = vadd.f32 0.0, %v1386
    %1388 = vmatmul.f32.gmra.mxu0 %v1177
    %v1389 = vpop.f32.mrf.mxu0
    %v1390 = vadd.f32 0.0, %v1389
    %1391 = vmatmul.f32.gmra.mxu0 %v1180
    %v1392 = vpop.f32.mrf.mxu0
    %v1393 = vadd.f32 0.0, %v1392
    %1394 = vmatmul.f32.gmra.mxu0 %v1183
    %v1395 = vpop.f32.mrf.mxu0
    %v1396 = vadd.f32 0.0, %v1395
    %1397 = vmatmul.f32.gmra.mxu0 %v1186
    %v1398 = vpop.f32.mrf.mxu0
    %v1399 = vadd.f32 0.0, %v1398
    %1400 = vmatmul.f32.gmra.mxu0 %v1189
    %v1401 = vpop.f32.mrf.mxu0
    %v1402 = vadd.f32 0.0, %v1401
    %1403 = vmatmul.f32.gmra.mxu0 %v1192
    %v1404 = vpop.f32.mrf.mxu0
    %v1405 = vadd.f32 0.0, %v1404
    %1406 = vmatmul.f32.gmra.mxu0 %v1195
    %v1407 = vpop.f32.mrf.mxu0
    %v1408 = vadd.f32 0.0, %v1407
    %1409 = vmatmul.f32.gmra.mxu0 %v1198
    %v1410 = vpop.f32.mrf.mxu0
    %v1411 = vadd.f32 0.0, %v1410
    %1412 = vmatmul.f32.gmra.mxu0 %v1201
    %v1413 = vpop.f32.mrf.mxu0
    %v1414 = vadd.f32 0.0, %v1413
    %1415 = vmatmul.f32.gmra.mxu0 %v1204
    %v1416 = vpop.f32.mrf.mxu0
    %v1417 = vadd.f32 0.0, %v1416
    %1418 = vmatmul.f32.gmra.mxu0 %v1207
    %v1419 = vpop.f32.mrf.mxu0
    %v1420 = vadd.f32 0.0, %v1419
    %1421 = vmatmul.f32.gmra.mxu0 %v1210
    %v1422 = vpop.f32.mrf.mxu0
    %v1423 = vadd.f32 0.0, %v1422
    %1424 = vmatmul.f32.gmra.mxu0 %v1213
    %v1425 = vpop.f32.mrf.mxu0
    %v1426 = vadd.f32 0.0, %v1425
    %1427 = vmatmul.f32.gmra.mxu0 %v1216
    %v1428 = vpop.f32.mrf.mxu0
    %v1429 = vadd.f32 0.0, %v1428
    %1430 = vmatmul.f32.gmra.mxu0 %v1219
    %v1431 = vpop.f32.mrf.mxu0
    %v1432 = vadd.f32 0.0, %v1431
    %1433 = vmatmul.f32.gmra.mxu0 %v1222
    %v1434 = vpop.f32.mrf.mxu0
    %v1435 = vadd.f32 0.0, %v1434
    %1436 = vdwg.mxu0
    %vm1502 = vcmask 1040384
    %v1503 = vrot.slane %v643, 7
    %v1504 = vrot.slane %v644, 7
    %v1505 = vsel %vm1502, %v1503, %v1504
    %v1506 = vrot.slane %v645, 7
    %v1507 = vsel %vm1502, %v1504, %v1506
    %v1508 = vrot.slane %v646, 7
    %v1509 = vsel %vm1502, %v1506, %v1508
    %v1510 = vrot.slane %v647, 7
    %v1511 = vsel %vm1502, %v1508, %v1510
    %v1512 = vrot.slane %v648, 7
    %v1513 = vsel %vm1502, %v1510, %v1512
    %v1514 = vrot.slane %v649, 7
    %v1515 = vsel %vm1502, %v1512, %v1514
    %v1516 = vrot.slane %v650, 7
    %v1517 = vsel %vm1502, %v1514, %v1516
    %v1518 = vrot.slane %v651, 7
    %v1519 = vsel %vm1502, %v1516, %v1518
    %v1520 = vrot.slane %v652, 7
    %v1521 = vsel %vm1502, %v1518, %v1520
    %v1522 = vrot.slane %v653, 7
    %v1523 = vsel %vm1502, %v1520, %v1522
    %v1524 = vrot.slane %v654, 7
    %v1525 = vsel %vm1502, %v1522, %v1524
    %v1526 = vrot.slane %v655, 7
    %v1527 = vsel %vm1502, %v1524, %v1526
    %v1528 = vrot.slane %v656, 7
    %v1529 = vsel %vm1502, %v1526, %v1528
    %v1530 = vrot.slane %v657, 7
    %v1531 = vsel %vm1502, %v1528, %v1530
    %v1532 = vrot.slane %v658, 7
    %v1533 = vsel %vm1502, %v1530, %v1532
    %v1534 = vrot.slane %v659, 7
    %v1535 = vsel %vm1502, %v1532, %v1534
    %v1536 = vrot.slane %v660, 7
    %v1537 = vsel %vm1502, %v1534, %v1536
    %v1538 = vrot.slane %v661, 7
    %v1539 = vsel %vm1502, %v1536, %v1538
    %v1540 = vrot.slane %v662, 7
    %v1541 = vsel %vm1502, %v1538, %v1540
    %v1542 = vrot.slane %v663, 7
    %v1543 = vsel %vm1502, %v1540, %v1542
    %v1544 = vrot.slane %v664, 7
    %v1545 = vsel %vm1502, %v1542, %v1544
    %v1546 = vrot.slane %v665, 7
    %v1547 = vsel %vm1502, %v1544, %v1546
    %v1548 = vrot.slane %v666, 7
    %v1549 = vsel %vm1502, %v1546, %v1548
    %v1550 = vrot.slane %v667, 7
    %v1551 = vsel %vm1502, %v1548, %v1550
    %v1552 = vrot.slane %v668, 7
    %v1553 = vsel %vm1502, %v1550, %v1552
    %v1554 = vrot.slane %v669, 7
    %v1555 = vsel %vm1502, %v1552, %v1554
    %v1556 = vrot.slane %v670, 7
    %v1557 = vsel %vm1502, %v1554, %v1556
    %v1558 = vrot.slane %v671, 7
    %v1559 = vsel %vm1502, %v1556, %v1558
    %v1560 = vrot.slane %v672, 7
    %v1561 = vsel %vm1502, %v1558, %v1560
    %v1562 = vrot.slane %v673, 7
    %v1563 = vsel %vm1502, %v1560, %v1562
    %v1564 = vrot.slane %v674, 7
    %v1565 = vsel %vm1502, %v1562, %v1564
    %v1566 = vrot.slane %v675, 7
    %v1567 = vsel %vm1502, %v1564, %v1566
    %v1568 = vrot.slane %v676, 7
    %v1569 = vsel %vm1502, %v1566, %v1568
    %v1570 = vrot.slane %v677, 7
    %v1571 = vsel %vm1502, %v1568, %v1570
    %v1572 = vrot.slane %v678, 7
    %v1573 = vsel %vm1502, %v1570, %v1572
    %v1574 = vrot.slane %v679, 7
    %v1575 = vsel %vm1502, %v1572, %v1574
    %v1576 = vrot.slane %v680, 7
    %v1577 = vsel %vm1502, %v1574, %v1576
    %v1578 = vrot.slane %v681, 7
    %v1579 = vsel %vm1502, %v1576, %v1578
    %v1580 = vrot.slane %v682, 7
    %v1581 = vsel %vm1502, %v1578, %v1580
    %v1582 = vrot.slane %v683, 7
    %v1583 = vsel %vm1502, %v1580, %v1582
    %v1584 = vrot.slane %v684, 7
    %v1585 = vsel %vm1502, %v1582, %v1584
    %v1586 = vrot.slane %v685, 7
    %v1587 = vsel %vm1502, %v1584, %v1586
    %v1588 = vrot.slane %v686, 7
    %v1589 = vsel %vm1502, %v1586, %v1588
    %v1590 = vrot.slane %v687, 7
    %v1591 = vsel %vm1502, %v1588, %v1590
    %v1592 = vrot.slane %v688, 7
    %v1593 = vsel %vm1502, %v1590, %v1592
    %v1594 = vrot.slane %v689, 7
    %v1595 = vsel %vm1502, %v1592, %v1594
    %v1596 = vrot.slane %v690, 7
    %v1597 = vsel %vm1502, %v1594, %v1596
    %v1598 = vrot.slane %v691, 7
    %v1599 = vsel %vm1502, %v1596, %v1598
    %v1600 = vrot.slane %v692, 7
    %v1601 = vsel %vm1502, %v1598, %v1600
    %v1602 = vrot.slane %v693, 7
    %v1603 = vsel %vm1502, %v1600, %v1602
    %v1604 = vrot.slane %v694, 7
    %v1605 = vsel %vm1502, %v1602, %v1604
    %v1606 = vrot.slane %v695, 7
    %v1607 = vsel %vm1502, %v1604, %v1606
    %v1608 = vrot.slane %v696, 7
    %v1609 = vsel %vm1502, %v1606, %v1608
    %v1610 = vrot.slane %v697, 7
    %v1611 = vsel %vm1502, %v1608, %v1610
    %v1612 = vrot.slane %v698, 7
    %v1613 = vsel %vm1502, %v1610, %v1612
    %v1614 = vrot.slane %v699, 7
    %v1615 = vsel %vm1502, %v1612, %v1614
    %v1616 = vrot.slane %v700, 7
    %v1617 = vsel %vm1502, %v1614, %v1616
    %v1618 = vrot.slane %v701, 7
    %v1619 = vsel %vm1502, %v1616, %v1618
    %v1620 = vrot.slane %v702, 7
    %v1621 = vsel %vm1502, %v1618, %v1620
    %v1622 = vrot.slane %v703, 7
    %v1623 = vsel %vm1502, %v1620, %v1622
    %v1624 = vrot.slane %v704, 7
    %v1625 = vsel %vm1502, %v1622, %v1624
    %v1626 = vrot.slane %v705, 7
    %v1627 = vsel %vm1502, %v1624, %v1626
    %v1628 = vrot.slane %v706, 7
    %v1629 = vsel %vm1502, %v1626, %v1628
    %v1630 = vrot.slane %v707, 7
    %v1631 = vsel %vm1502, %v1628, %v1630
    %v1632 = vsel %vm1031, %v1505, 0
    %v1634 = vsel %vm1031, %v1507, 0
    %v1636 = vsel %vm1031, %v1509, 0
    %v1638 = vsel %vm1031, %v1511, 0
    %v1640 = vsel %vm1031, %v1513, 0
    %v1642 = vsel %vm1031, %v1515, 0
    %v1644 = vsel %vm1031, %v1517, 0
    %v1646 = vsel %vm1031, %v1519, 0
    %v1648 = vsel %vm1031, %v1521, 0
    %v1650 = vsel %vm1031, %v1523, 0
    %v1652 = vsel %vm1031, %v1525, 0
    %v1654 = vsel %vm1031, %v1527, 0
    %v1656 = vsel %vm1031, %v1529, 0
    %v1658 = vsel %vm1031, %v1531, 0
    %v1660 = vsel %vm1031, %v1533, 0
    %v1662 = vsel %vm1031, %v1535, 0
    %v1664 = vsel %vm1031, %v1537, 0
    %v1666 = vsel %vm1031, %v1539, 0
    %v1668 = vsel %vm1031, %v1541, 0
    %v1670 = vsel %vm1031, %v1543, 0
    %v1672 = vsel %vm1031, %v1545, 0
    %v1674 = vsel %vm1031, %v1547, 0
    %v1676 = vsel %vm1031, %v1549, 0
    %v1678 = vsel %vm1031, %v1551, 0
    %v1680 = vsel %vm1031, %v1553, 0
    %v1682 = vsel %vm1031, %v1555, 0
    %v1684 = vsel %vm1031, %v1557, 0
    %v1686 = vsel %vm1031, %v1559, 0
    %v1688 = vsel %vm1031, %v1561, 0
    %v1690 = vsel %vm1031, %v1563, 0
    %v1692 = vsel %vm1031, %v1565, 0
    %v1694 = vsel %vm1031, %v1567, 0
    %v1696 = vsel %vm1031, %v1569, 0
    %v1698 = vsel %vm1031, %v1571, 0
    %v1700 = vsel %vm1031, %v1573, 0
    %v1702 = vsel %vm1031, %v1575, 0
    %v1704 = vsel %vm1031, %v1577, 0
    %v1706 = vsel %vm1031, %v1579, 0
    %v1708 = vsel %vm1031, %v1581, 0
    %v1710 = vsel %vm1031, %v1583, 0
    %v1712 = vsel %vm1031, %v1585, 0
    %v1714 = vsel %vm1031, %v1587, 0
    %v1716 = vsel %vm1031, %v1589, 0
    %v1718 = vsel %vm1031, %v1591, 0
    %v1720 = vsel %vm1031, %v1593, 0
    %v1722 = vsel %vm1031, %v1595, 0
    %v1724 = vsel %vm1031, %v1597, 0
    %v1726 = vsel %vm1031, %v1599, 0
    %v1728 = vsel %vm1031, %v1601, 0
    %v1730 = vsel %vm1031, %v1603, 0
    %v1732 = vsel %vm1031, %v1605, 0
    %v1734 = vsel %vm1031, %v1607, 0
    %v1736 = vsel %vm1031, %v1609, 0
    %v1738 = vsel %vm1031, %v1611, 0
    %v1740 = vsel %vm1031, %v1613, 0
    %v1742 = vsel %vm1031, %v1615, 0
    %v1744 = vsel %vm1031, %v1617, 0
    %v1746 = vsel %vm1031, %v1619, 0
    %v1748 = vsel %vm1031, %v1621, 0
    %v1750 = vsel %vm1031, %v1623, 0
    %v1752 = vsel %vm1031, %v1625, 0
    %v1754 = vsel %vm1031, %v1627, 0
    %v1756 = vsel %vm1031, %v1629, 0
    %v1758 = vsel %vm1031, %v1631, 0
    %v1761 = vsel %vm1224, %v708, 0
    %1763 = vmatpush.msra.mxu0 0.0
    %1764 = vmatpush.msra.mxu0 0.0
    %1765 = vmatpush.msra.mxu0 0.0
    %1766 = vmatpush.msra.mxu0 0.0
    %1767 = vmatpush.msra.mxu0 0.0
    %1768 = vmatpush.msra.mxu0 0.0
    %1769 = vmatpush.msra.mxu0 0.0
    %1770 = vmatpush.msra.mxu0 0.0
    %1771 = vmatpush.msra.mxu0 0.0
    %1772 = vmatpush.msra.mxu0 0.0
    %1773 = vmatpush.msra.mxu0 0.0
    %1774 = vmatpush.msra.mxu0 0.0
    %1775 = vmatpush.msra.mxu0 0.0
    %1776 = vmatpush.msra.mxu0 0.0
    %1777 = vmatpush.msra.mxu0 0.0
    %1778 = vmatpush.msra.mxu0 %v1761
    %1779 = vmatmul.f32.gmra.mxu0 %v1632
    %v1780 = vpop.f32.mrf.mxu0
    %v1781 = vadd.f32 %v1246, %v1780
    %1782 = vmatmul.f32.gmra.mxu0 %v1634
    %v1783 = vpop.f32.mrf.mxu0
    %v1784 = vadd.f32 %v1249, %v1783
    %1785 = vmatmul.f32.gmra.mxu0 %v1636
    %v1786 = vpop.f32.mrf.mxu0
    %v1787 = vadd.f32 %v1252, %v1786
    %1788 = vmatmul.f32.gmra.mxu0 %v1638
    %v1789 = vpop.f32.mrf.mxu0
    %v1790 = vadd.f32 %v1255, %v1789
    %1791 = vmatmul.f32.gmra.mxu0 %v1640
    %v1792 = vpop.f32.mrf.mxu0
    %v1793 = vadd.f32 %v1258, %v1792
    %1794 = vmatmul.f32.gmra.mxu0 %v1642
    %v1795 = vpop.f32.mrf.mxu0
    %v1796 = vadd.f32 %v1261, %v1795
    %1797 = vmatmul.f32.gmra.mxu0 %v1644
    %v1798 = vpop.f32.mrf.mxu0
    %v1799 = vadd.f32 %v1264, %v1798
    %1800 = vmatmul.f32.gmra.mxu0 %v1646
    %v1801 = vpop.f32.mrf.mxu0
    %v1802 = vadd.f32 %v1267, %v1801
    %1803 = vmatmul.f32.gmra.mxu0 %v1648
    %v1804 = vpop.f32.mrf.mxu0
    %v1805 = vadd.f32 %v1270, %v1804
    %1806 = vmatmul.f32.gmra.mxu0 %v1650
    %v1807 = vpop.f32.mrf.mxu0
    %v1808 = vadd.f32 %v1273, %v1807
    %1809 = vmatmul.f32.gmra.mxu0 %v1652
    %v1810 = vpop.f32.mrf.mxu0
    %v1811 = vadd.f32 %v1276, %v1810
    %1812 = vmatmul.f32.gmra.mxu0 %v1654
    %v1813 = vpop.f32.mrf.mxu0
    %v1814 = vadd.f32 %v1279, %v1813
    %1815 = vmatmul.f32.gmra.mxu0 %v1656
    %v1816 = vpop.f32.mrf.mxu0
    %v1817 = vadd.f32 %v1282, %v1816
    %1818 = vmatmul.f32.gmra.mxu0 %v1658
    %v1819 = vpop.f32.mrf.mxu0
    %v1820 = vadd.f32 %v1285, %v1819
    %1821 = vmatmul.f32.gmra.mxu0 %v1660
    %v1822 = vpop.f32.mrf.mxu0
    %v1823 = vadd.f32 %v1288, %v1822
    %1824 = vmatmul.f32.gmra.mxu0 %v1662
    %v1825 = vpop.f32.mrf.mxu0
    %v1826 = vadd.f32 %v1291, %v1825
    %1827 = vmatmul.f32.gmra.mxu0 %v1664
    %v1828 = vpop.f32.mrf.mxu0
    %v1829 = vadd.f32 %v1294, %v1828
    %1830 = vmatmul.f32.gmra.mxu0 %v1666
    %v1831 = vpop.f32.mrf.mxu0
    %v1832 = vadd.f32 %v1297, %v1831
    %1833 = vmatmul.f32.gmra.mxu0 %v1668
    %v1834 = vpop.f32.mrf.mxu0
    %v1835 = vadd.f32 %v1300, %v1834
    %1836 = vmatmul.f32.gmra.mxu0 %v1670
    %v1837 = vpop.f32.mrf.mxu0
    %v1838 = vadd.f32 %v1303, %v1837
    %1839 = vmatmul.f32.gmra.mxu0 %v1672
    %v1840 = vpop.f32.mrf.mxu0
    %v1841 = vadd.f32 %v1306, %v1840
    %1842 = vmatmul.f32.gmra.mxu0 %v1674
    %v1843 = vpop.f32.mrf.mxu0
    %v1844 = vadd.f32 %v1309, %v1843
    %1845 = vmatmul.f32.gmra.mxu0 %v1676
    %v1846 = vpop.f32.mrf.mxu0
    %v1847 = vadd.f32 %v1312, %v1846
    %1848 = vmatmul.f32.gmra.mxu0 %v1678
    %v1849 = vpop.f32.mrf.mxu0
    %v1850 = vadd.f32 %v1315, %v1849
    %1851 = vmatmul.f32.gmra.mxu0 %v1680
    %v1852 = vpop.f32.mrf.mxu0
    %v1853 = vadd.f32 %v1318, %v1852
    %1854 = vmatmul.f32.gmra.mxu0 %v1682
    %v1855 = vpop.f32.mrf.mxu0
    %v1856 = vadd.f32 %v1321, %v1855
    %1857 = vmatmul.f32.gmra.mxu0 %v1684
    %v1858 = vpop.f32.mrf.mxu0
    %v1859 = vadd.f32 %v1324, %v1858
    %1860 = vmatmul.f32.gmra.mxu0 %v1686
    %v1861 = vpop.f32.mrf.mxu0
    %v1862 = vadd.f32 %v1327, %v1861
    %1863 = vmatmul.f32.gmra.mxu0 %v1688
    %v1864 = vpop.f32.mrf.mxu0
    %v1865 = vadd.f32 %v1330, %v1864
    %1866 = vmatmul.f32.gmra.mxu0 %v1690
    %v1867 = vpop.f32.mrf.mxu0
    %v1868 = vadd.f32 %v1333, %v1867
    %1869 = vmatmul.f32.gmra.mxu0 %v1692
    %v1870 = vpop.f32.mrf.mxu0
    %v1871 = vadd.f32 %v1336, %v1870
    %1872 = vmatmul.f32.gmra.mxu0 %v1694
    %v1873 = vpop.f32.mrf.mxu0
    %v1874 = vadd.f32 %v1339, %v1873
    %1875 = vmatmul.f32.gmra.mxu0 %v1696
    %v1876 = vpop.f32.mrf.mxu0
    %v1877 = vadd.f32 %v1342, %v1876
    %1878 = vmatmul.f32.gmra.mxu0 %v1698
    %v1879 = vpop.f32.mrf.mxu0
    %v1880 = vadd.f32 %v1345, %v1879
    %1881 = vmatmul.f32.gmra.mxu0 %v1700
    %v1882 = vpop.f32.mrf.mxu0
    %v1883 = vadd.f32 %v1348, %v1882
    %1884 = vmatmul.f32.gmra.mxu0 %v1702
    %v1885 = vpop.f32.mrf.mxu0
    %v1886 = vadd.f32 %v1351, %v1885
    %1887 = vmatmul.f32.gmra.mxu0 %v1704
    %v1888 = vpop.f32.mrf.mxu0
    %v1889 = vadd.f32 %v1354, %v1888
    %1890 = vmatmul.f32.gmra.mxu0 %v1706
    %v1891 = vpop.f32.mrf.mxu0
    %v1892 = vadd.f32 %v1357, %v1891
    %1893 = vmatmul.f32.gmra.mxu0 %v1708
    %v1894 = vpop.f32.mrf.mxu0
    %v1895 = vadd.f32 %v1360, %v1894
    %1896 = vmatmul.f32.gmra.mxu0 %v1710
    %v1897 = vpop.f32.mrf.mxu0
    %v1898 = vadd.f32 %v1363, %v1897
    %1899 = vmatmul.f32.gmra.mxu0 %v1712
    %v1900 = vpop.f32.mrf.mxu0
    %v1901 = vadd.f32 %v1366, %v1900
    %1902 = vmatmul.f32.gmra.mxu0 %v1714
    %v1903 = vpop.f32.mrf.mxu0
    %v1904 = vadd.f32 %v1369, %v1903
    %1905 = vmatmul.f32.gmra.mxu0 %v1716
    %v1906 = vpop.f32.mrf.mxu0
    %v1907 = vadd.f32 %v1372, %v1906
    %1908 = vmatmul.f32.gmra.mxu0 %v1718
    %v1909 = vpop.f32.mrf.mxu0
    %v1910 = vadd.f32 %v1375, %v1909
    %1911 = vmatmul.f32.gmra.mxu0 %v1720
    %v1912 = vpop.f32.mrf.mxu0
    %v1913 = vadd.f32 %v1378, %v1912
    %1914 = vmatmul.f32.gmra.mxu0 %v1722
    %v1915 = vpop.f32.mrf.mxu0
    %v1916 = vadd.f32 %v1381, %v1915
    %1917 = vmatmul.f32.gmra.mxu0 %v1724
    %v1918 = vpop.f32.mrf.mxu0
    %v1919 = vadd.f32 %v1384, %v1918
    %1920 = vmatmul.f32.gmra.mxu0 %v1726
    %v1921 = vpop.f32.mrf.mxu0
    %v1922 = vadd.f32 %v1387, %v1921
    %1923 = vmatmul.f32.gmra.mxu0 %v1728
    %v1924 = vpop.f32.mrf.mxu0
    %v1925 = vadd.f32 %v1390, %v1924
    %1926 = vmatmul.f32.gmra.mxu0 %v1730
    %v1927 = vpop.f32.mrf.mxu0
    %v1928 = vadd.f32 %v1393, %v1927
    %1929 = vmatmul.f32.gmra.mxu0 %v1732
    %v1930 = vpop.f32.mrf.mxu0
    %v1931 = vadd.f32 %v1396, %v1930
    %1932 = vmatmul.f32.gmra.mxu0 %v1734
    %v1933 = vpop.f32.mrf.mxu0
    %v1934 = vadd.f32 %v1399, %v1933
    %1935 = vmatmul.f32.gmra.mxu0 %v1736
    %v1936 = vpop.f32.mrf.mxu0
    %v1937 = vadd.f32 %v1402, %v1936
    %1938 = vmatmul.f32.gmra.mxu0 %v1738
    %v1939 = vpop.f32.mrf.mxu0
    %v1940 = vadd.f32 %v1405, %v1939
    %1941 = vmatmul.f32.gmra.mxu0 %v1740
    %v1942 = vpop.f32.mrf.mxu0
    %v1943 = vadd.f32 %v1408, %v1942
    %1944 = vmatmul.f32.gmra.mxu0 %v1742
    %v1945 = vpop.f32.mrf.mxu0
    %v1946 = vadd.f32 %v1411, %v1945
    %1947 = vmatmul.f32.gmra.mxu0 %v1744
    %v1948 = vpop.f32.mrf.mxu0
    %v1949 = vadd.f32 %v1414, %v1948
    %1950 = vmatmul.f32.gmra.mxu0 %v1746
    %v1951 = vpop.f32.mrf.mxu0
    %v1952 = vadd.f32 %v1417, %v1951
    %1953 = vmatmul.f32.gmra.mxu0 %v1748
    %v1954 = vpop.f32.mrf.mxu0
    %v1955 = vadd.f32 %v1420, %v1954
    %1956 = vmatmul.f32.gmra.mxu0 %v1750
    %v1957 = vpop.f32.mrf.mxu0
    %v1958 = vadd.f32 %v1423, %v1957
    %1959 = vmatmul.f32.gmra.mxu0 %v1752
    %v1960 = vpop.f32.mrf.mxu0
    %v1961 = vadd.f32 %v1426, %v1960
    %1962 = vmatmul.f32.gmra.mxu0 %v1754
    %v1963 = vpop.f32.mrf.mxu0
    %v1964 = vadd.f32 %v1429, %v1963
    %1965 = vmatmul.f32.gmra.mxu0 %v1756
    %v1966 = vpop.f32.mrf.mxu0
    %v1967 = vadd.f32 %v1432, %v1966
    %1968 = vmatmul.f32.gmra.mxu0 %v1758
    %v1969 = vpop.f32.mrf.mxu0
    %v1970 = vadd.f32 %v1435, %v1969
    %1971 = vdwg.mxu0
    %1972 = vset.pattern.permute.xlu0 2
    %1973 = vperm.xlu0 %1972, %v130
    %v1974 = vpop.permute.xlu0 %1973
    %1975 = vset.pattern.permute.xlu0 2
    %1976 = vperm.xlu0 %1975, %v131
    %v1977 = vpop.permute.xlu0 %1976
    %1978 = vset.pattern.permute.xlu0 2
    %1979 = vperm.xlu0 %1978, %v132
    %v1980 = vpop.permute.xlu0 %1979
    %1981 = vset.pattern.permute.xlu0 2
    %1982 = vperm.xlu0 %1981, %v133
    %v1983 = vpop.permute.xlu0 %1982
    %1984 = vset.pattern.permute.xlu0 2
    %1985 = vperm.xlu0 %1984, %v134
    %v1986 = vpop.permute.xlu0 %1985
    %1987 = vset.pattern.permute.xlu0 2
    %1988 = vperm.xlu0 %1987, %v135
    %v1989 = vpop.permute.xlu0 %1988
    %1990 = vset.pattern.permute.xlu0 2
    %1991 = vperm.xlu0 %1990, %v136
    %v1992 = vpop.permute.xlu0 %1991
    %1993 = vset.pattern.permute.xlu0 2
    %1994 = vperm.xlu0 %1993, %v137
    %v1995 = vpop.permute.xlu0 %1994
    %1996 = vset.pattern.permute.xlu0 2
    %1997 = vperm.xlu0 %1996, %v138
    %v1998 = vpop.permute.xlu0 %1997
    %1999 = vset.pattern.permute.xlu0 2
    %2000 = vperm.xlu0 %1999, %v139
    %v2001 = vpop.permute.xlu0 %2000
    %2002 = vset.pattern.permute.xlu0 2
    %2003 = vperm.xlu0 %2002, %v140
    %v2004 = vpop.permute.xlu0 %2003
    %2005 = vset.pattern.permute.xlu0 2
    %2006 = vperm.xlu0 %2005, %v141
    %v2007 = vpop.permute.xlu0 %2006
    %2008 = vset.pattern.permute.xlu0 2
    %2009 = vperm.xlu0 %2008, %v142
    %v2010 = vpop.permute.xlu0 %2009
    %2011 = vset.pattern.permute.xlu0 2
    %2012 = vperm.xlu0 %2011, %v143
    %v2013 = vpop.permute.xlu0 %2012
    %2014 = vset.pattern.permute.xlu0 2
    %2015 = vperm.xlu0 %2014, %v144
    %v2016 = vpop.permute.xlu0 %2015
    %2017 = vset.pattern.permute.xlu0 2
    %2018 = vperm.xlu0 %2017, %v145
    %v2019 = vpop.permute.xlu0 %2018
    %2020 = vset.pattern.permute.xlu0 2
    %2021 = vperm.xlu0 %2020, %v146
    %v2022 = vpop.permute.xlu0 %2021
    %2023 = vset.pattern.permute.xlu0 2
    %2024 = vperm.xlu0 %2023, %v147
    %v2025 = vpop.permute.xlu0 %2024
    %2026 = vset.pattern.permute.xlu0 2
    %2027 = vperm.xlu0 %2026, %v148
    %v2028 = vpop.permute.xlu0 %2027
    %2029 = vset.pattern.permute.xlu0 2
    %2030 = vperm.xlu0 %2029, %v149
    %v2031 = vpop.permute.xlu0 %2030
    %2032 = vset.pattern.permute.xlu0 2
    %2033 = vperm.xlu0 %2032, %v150
    %v2034 = vpop.permute.xlu0 %2033
    %2035 = vset.pattern.permute.xlu0 2
    %2036 = vperm.xlu0 %2035, %v151
    %v2037 = vpop.permute.xlu0 %2036
    %2038 = vset.pattern.permute.xlu0 2
    %2039 = vperm.xlu0 %2038, %v152
    %v2040 = vpop.permute.xlu0 %2039
    %2041 = vset.pattern.permute.xlu0 2
    %2042 = vperm.xlu0 %2041, %v153
    %v2043 = vpop.permute.xlu0 %2042
    %2044 = vset.pattern.permute.xlu0 2
    %2045 = vperm.xlu0 %2044, %v154
    %v2046 = vpop.permute.xlu0 %2045
    %2047 = vset.pattern.permute.xlu0 2
    %2048 = vperm.xlu0 %2047, %v155
    %v2049 = vpop.permute.xlu0 %2048
    %2050 = vset.pattern.permute.xlu0 2
    %2051 = vperm.xlu0 %2050, %v156
    %v2052 = vpop.permute.xlu0 %2051
    %2053 = vset.pattern.permute.xlu0 2
    %2054 = vperm.xlu0 %2053, %v157
    %v2055 = vpop.permute.xlu0 %2054
    %2056 = vset.pattern.permute.xlu0 2
    %2057 = vperm.xlu0 %2056, %v158
    %v2058 = vpop.permute.xlu0 %2057
    %2059 = vset.pattern.permute.xlu0 2
    %2060 = vperm.xlu0 %2059, %v159
    %v2061 = vpop.permute.xlu0 %2060
    %2062 = vset.pattern.permute.xlu0 2
    %2063 = vperm.xlu0 %2062, %v160
    %v2064 = vpop.permute.xlu0 %2063
    %2065 = vset.pattern.permute.xlu0 2
    %2066 = vperm.xlu0 %2065, %v161
    %v2067 = vpop.permute.xlu0 %2066
    %2068 = vset.pattern.permute.xlu0 2
    %2069 = vperm.xlu0 %2068, %v162
    %v2070 = vpop.permute.xlu0 %2069
    %2071 = vset.pattern.permute.xlu0 2
    %2072 = vperm.xlu0 %2071, %v163
    %v2073 = vpop.permute.xlu0 %2072
    %2074 = vset.pattern.permute.xlu0 2
    %2075 = vperm.xlu0 %2074, %v164
    %v2076 = vpop.permute.xlu0 %2075
    %2077 = vset.pattern.permute.xlu0 2
    %2078 = vperm.xlu0 %2077, %v165
    %v2079 = vpop.permute.xlu0 %2078
    %2080 = vset.pattern.permute.xlu0 2
    %2081 = vperm.xlu0 %2080, %v166
    %v2082 = vpop.permute.xlu0 %2081
    %2083 = vset.pattern.permute.xlu0 2
    %2084 = vperm.xlu0 %2083, %v167
    %v2085 = vpop.permute.xlu0 %2084
    %2086 = vset.pattern.permute.xlu0 2
    %2087 = vperm.xlu0 %2086, %v168
    %v2088 = vpop.permute.xlu0 %2087
    %2089 = vset.pattern.permute.xlu0 2
    %2090 = vperm.xlu0 %2089, %v169
    %v2091 = vpop.permute.xlu0 %2090
    %2092 = vset.pattern.permute.xlu0 2
    %2093 = vperm.xlu0 %2092, %v170
    %v2094 = vpop.permute.xlu0 %2093
    %2095 = vset.pattern.permute.xlu0 2
    %2096 = vperm.xlu0 %2095, %v171
    %v2097 = vpop.permute.xlu0 %2096
    %2098 = vset.pattern.permute.xlu0 2
    %2099 = vperm.xlu0 %2098, %v172
    %v2100 = vpop.permute.xlu0 %2099
    %2101 = vset.pattern.permute.xlu0 2
    %2102 = vperm.xlu0 %2101, %v173
    %v2103 = vpop.permute.xlu0 %2102
    %2104 = vset.pattern.permute.xlu0 2
    %2105 = vperm.xlu0 %2104, %v174
    %v2106 = vpop.permute.xlu0 %2105
    %2107 = vset.pattern.permute.xlu0 2
    %2108 = vperm.xlu0 %2107, %v175
    %v2109 = vpop.permute.xlu0 %2108
    %2110 = vset.pattern.permute.xlu0 2
    %2111 = vperm.xlu0 %2110, %v176
    %v2112 = vpop.permute.xlu0 %2111
    %2113 = vset.pattern.permute.xlu0 2
    %2114 = vperm.xlu0 %2113, %v177
    %v2115 = vpop.permute.xlu0 %2114
    %2116 = vset.pattern.permute.xlu0 2
    %2117 = vperm.xlu0 %2116, %v178
    %v2118 = vpop.permute.xlu0 %2117
    %2119 = vset.pattern.permute.xlu0 2
    %2120 = vperm.xlu0 %2119, %v179
    %v2121 = vpop.permute.xlu0 %2120
    %2122 = vset.pattern.permute.xlu0 2
    %2123 = vperm.xlu0 %2122, %v180
    %v2124 = vpop.permute.xlu0 %2123
    %2125 = vset.pattern.permute.xlu0 2
    %2126 = vperm.xlu0 %2125, %v181
    %v2127 = vpop.permute.xlu0 %2126
    %2128 = vset.pattern.permute.xlu0 2
    %2129 = vperm.xlu0 %2128, %v182
    %v2130 = vpop.permute.xlu0 %2129
    %2131 = vset.pattern.permute.xlu0 2
    %2132 = vperm.xlu0 %2131, %v183
    %v2133 = vpop.permute.xlu0 %2132
    %2134 = vset.pattern.permute.xlu0 2
    %2135 = vperm.xlu0 %2134, %v184
    %v2136 = vpop.permute.xlu0 %2135
    %2137 = vset.pattern.permute.xlu0 2
    %2138 = vperm.xlu0 %2137, %v185
    %v2139 = vpop.permute.xlu0 %2138
    %2140 = vset.pattern.permute.xlu0 2
    %2141 = vperm.xlu0 %2140, %v186
    %v2142 = vpop.permute.xlu0 %2141
    %2143 = vset.pattern.permute.xlu0 2
    %2144 = vperm.xlu0 %2143, %v187
    %v2145 = vpop.permute.xlu0 %2144
    %2146 = vset.pattern.permute.xlu0 2
    %2147 = vperm.xlu0 %2146, %v188
    %v2148 = vpop.permute.xlu0 %2147
    %2149 = vset.pattern.permute.xlu0 2
    %2150 = vperm.xlu0 %2149, %v189
    %v2151 = vpop.permute.xlu0 %2150
    %2152 = vset.pattern.permute.xlu0 2
    %2153 = vperm.xlu0 %2152, %v190
    %v2154 = vpop.permute.xlu0 %2153
    %2155 = vset.pattern.permute.xlu0 2
    %2156 = vperm.xlu0 %2155, %v191
    %v2157 = vpop.permute.xlu0 %2156
    %2158 = vset.pattern.permute.xlu0 2
    %2159 = vperm.xlu0 %2158, %v192
    %v2160 = vpop.permute.xlu0 %2159
    %2161 = vset.pattern.permute.xlu0 2
    %2162 = vperm.xlu0 %2161, %v193
    %v2163 = vpop.permute.xlu0 %2162
    %v2164 = vrot.slane %v1974, 7
    %v2165 = vrot.slane %v1977, 7
    %v2166 = vsel %vm1502, %v2164, %v2165
    %v2167 = vrot.slane %v1980, 7
    %v2168 = vsel %vm1502, %v2165, %v2167
    %v2169 = vrot.slane %v1983, 7
    %v2170 = vsel %vm1502, %v2167, %v2169
    %v2171 = vrot.slane %v1986, 7
    %v2172 = vsel %vm1502, %v2169, %v2171
    %v2173 = vrot.slane %v1989, 7
    %v2174 = vsel %vm1502, %v2171, %v2173
    %v2175 = vrot.slane %v1992, 7
    %v2176 = vsel %vm1502, %v2173, %v2175
    %v2177 = vrot.slane %v1995, 7
    %v2178 = vsel %vm1502, %v2175, %v2177
    %v2179 = vrot.slane %v1998, 7
    %v2180 = vsel %vm1502, %v2177, %v2179
    %v2181 = vrot.slane %v2001, 7
    %v2182 = vsel %vm1502, %v2179, %v2181
    %v2183 = vrot.slane %v2004, 7
    %v2184 = vsel %vm1502, %v2181, %v2183
    %v2185 = vrot.slane %v2007, 7
    %v2186 = vsel %vm1502, %v2183, %v2185
    %v2187 = vrot.slane %v2010, 7
    %v2188 = vsel %vm1502, %v2185, %v2187
    %v2189 = vrot.slane %v2013, 7
    %v2190 = vsel %vm1502, %v2187, %v2189
    %v2191 = vrot.slane %v2016, 7
    %v2192 = vsel %vm1502, %v2189, %v2191
    %v2193 = vrot.slane %v2019, 7
    %v2194 = vsel %vm1502, %v2191, %v2193
    %v2195 = vrot.slane %v2022, 7
    %v2196 = vsel %vm1502, %v2193, %v2195
    %v2197 = vrot.slane %v2025, 7
    %v2198 = vsel %vm1502, %v2195, %v2197
    %v2199 = vrot.slane %v2028, 7
    %v2200 = vsel %vm1502, %v2197, %v2199
    %v2201 = vrot.slane %v2031, 7
    %v2202 = vsel %vm1502, %v2199, %v2201
    %v2203 = vrot.slane %v2034, 7
    %v2204 = vsel %vm1502, %v2201, %v2203
    %v2205 = vrot.slane %v2037, 7
    %v2206 = vsel %vm1502, %v2203, %v2205
    %v2207 = vrot.slane %v2040, 7
    %v2208 = vsel %vm1502, %v2205, %v2207
    %v2209 = vrot.slane %v2043, 7
    %v2210 = vsel %vm1502, %v2207, %v2209
    %v2211 = vrot.slane %v2046, 7
    %v2212 = vsel %vm1502, %v2209, %v2211
    %v2213 = vrot.slane %v2049, 7
    %v2214 = vsel %vm1502, %v2211, %v2213
    %v2215 = vrot.slane %v2052, 7
    %v2216 = vsel %vm1502, %v2213, %v2215
    %v2217 = vrot.slane %v2055, 7
    %v2218 = vsel %vm1502, %v2215, %v2217
    %v2219 = vrot.slane %v2058, 7
    %v2220 = vsel %vm1502, %v2217, %v2219
    %v2221 = vrot.slane %v2061, 7
    %v2222 = vsel %vm1502, %v2219, %v2221
    %v2223 = vrot.slane %v2064, 7
    %v2224 = vsel %vm1502, %v2221, %v2223
    %v2225 = vrot.slane %v2067, 7
    %v2226 = vsel %vm1502, %v2223, %v2225
    %v2227 = vrot.slane %v2070, 7
    %v2228 = vsel %vm1502, %v2225, %v2227
    %v2229 = vrot.slane %v2073, 7
    %v2230 = vsel %vm1502, %v2227, %v2229
    %v2231 = vrot.slane %v2076, 7
    %v2232 = vsel %vm1502, %v2229, %v2231
    %v2233 = vrot.slane %v2079, 7
    %v2234 = vsel %vm1502, %v2231, %v2233
    %v2235 = vrot.slane %v2082, 7
    %v2236 = vsel %vm1502, %v2233, %v2235
    %v2237 = vrot.slane %v2085, 7
    %v2238 = vsel %vm1502, %v2235, %v2237
    %v2239 = vrot.slane %v2088, 7
    %v2240 = vsel %vm1502, %v2237, %v2239
    %v2241 = vrot.slane %v2091, 7
    %v2242 = vsel %vm1502, %v2239, %v2241
    %v2243 = vrot.slane %v2094, 7
    %v2244 = vsel %vm1502, %v2241, %v2243
    %v2245 = vrot.slane %v2097, 7
    %v2246 = vsel %vm1502, %v2243, %v2245
    %v2247 = vrot.slane %v2100, 7
    %v2248 = vsel %vm1502, %v2245, %v2247
    %v2249 = vrot.slane %v2103, 7
    %v2250 = vsel %vm1502, %v2247, %v2249
    %v2251 = vrot.slane %v2106, 7
    %v2252 = vsel %vm1502, %v2249, %v2251
    %v2253 = vrot.slane %v2109, 7
    %v2254 = vsel %vm1502, %v2251, %v2253
    %v2255 = vrot.slane %v2112, 7
    %v2256 = vsel %vm1502, %v2253, %v2255
    %v2257 = vrot.slane %v2115, 7
    %v2258 = vsel %vm1502, %v2255, %v2257
    %v2259 = vrot.slane %v2118, 7
    %v2260 = vsel %vm1502, %v2257, %v2259
    %v2261 = vrot.slane %v2121, 7
    %v2262 = vsel %vm1502, %v2259, %v2261
    %v2263 = vrot.slane %v2124, 7
    %v2264 = vsel %vm1502, %v2261, %v2263
    %v2265 = vrot.slane %v2127, 7
    %v2266 = vsel %vm1502, %v2263, %v2265
    %v2267 = vrot.slane %v2130, 7
    %v2268 = vsel %vm1502, %v2265, %v2267
    %v2269 = vrot.slane %v2133, 7
    %v2270 = vsel %vm1502, %v2267, %v2269
    %v2271 = vrot.slane %v2136, 7
    %v2272 = vsel %vm1502, %v2269, %v2271
    %v2273 = vrot.slane %v2139, 7
    %v2274 = vsel %vm1502, %v2271, %v2273
    %v2275 = vrot.slane %v2142, 7
    %v2276 = vsel %vm1502, %v2273, %v2275
    %v2277 = vrot.slane %v2145, 7
    %v2278 = vsel %vm1502, %v2275, %v2277
    %v2279 = vrot.slane %v2148, 7
    %v2280 = vsel %vm1502, %v2277, %v2279
    %v2281 = vrot.slane %v2151, 7
    %v2282 = vsel %vm1502, %v2279, %v2281
    %v2283 = vrot.slane %v2154, 7
    %v2284 = vsel %vm1502, %v2281, %v2283
    %v2285 = vrot.slane %v2157, 7
    %v2286 = vsel %vm1502, %v2283, %v2285
    %v2287 = vrot.slane %v2160, 7
    %v2288 = vsel %vm1502, %v2285, %v2287
    %v2289 = vrot.slane %v2163, 7
    %v2290 = vsel %vm1502, %v2287, %v2289
    %v2356 = vmul.f32 %v2164, 0.0
    %v2357 = vmul.f32 %v2166, 0.0
    %v2358 = vmul.f32 %v66, %v2168
    %v2359 = vmul.f32 %v67, %v2170
    %v2360 = vmul.f32 %v68, %v2172
    %v2361 = vmul.f32 %v69, %v2174
    %v2362 = vmul.f32 %v70, %v2176
    %v2363 = vmul.f32 %v71, %v2178
    %v2364 = vmul.f32 %v72, %v2180
    %v2365 = vmul.f32 %v73, %v2182
    %v2366 = vmul.f32 %v74, %v2184
    %v2367 = vmul.f32 %v75, %v2186
    %v2368 = vmul.f32 %v76, %v2188
    %v2369 = vmul.f32 %v77, %v2190
    %v2370 = vmul.f32 %v78, %v2192
    %v2371 = vmul.f32 %v79, %v2194
    %v2372 = vmul.f32 %v80, %v2196
    %v2373 = vmul.f32 %v81, %v2198
    %v2374 = vmul.f32 %v82, %v2200
    %v2375 = vmul.f32 %v83, %v2202
    %v2376 = vmul.f32 %v84, %v2204
    %v2377 = vmul.f32 %v85, %v2206
    %v2378 = vmul.f32 %v86, %v2208
    %v2379 = vmul.f32 %v87, %v2210
    %v2380 = vmul.f32 %v88, %v2212
    %v2381 = vmul.f32 %v89, %v2214
    %v2382 = vmul.f32 %v90, %v2216
    %v2383 = vmul.f32 %v91, %v2218
    %v2384 = vmul.f32 %v92, %v2220
    %v2385 = vmul.f32 %v93, %v2222
    %v2386 = vmul.f32 %v94, %v2224
    %v2387 = vmul.f32 %v95, %v2226
    %v2388 = vmul.f32 %v96, %v2228
    %v2389 = vmul.f32 %v97, %v2230
    %v2390 = vmul.f32 %v98, %v2232
    %v2391 = vmul.f32 %v99, %v2234
    %v2392 = vmul.f32 %v100, %v2236
    %v2393 = vmul.f32 %v101, %v2238
    %v2394 = vmul.f32 %v102, %v2240
    %v2395 = vmul.f32 %v103, %v2242
    %v2396 = vmul.f32 %v104, %v2244
    %v2397 = vmul.f32 %v105, %v2246
    %v2398 = vmul.f32 %v106, %v2248
    %v2399 = vmul.f32 %v107, %v2250
    %v2400 = vmul.f32 %v108, %v2252
    %v2401 = vmul.f32 %v109, %v2254
    %v2402 = vmul.f32 %v110, %v2256
    %v2403 = vmul.f32 %v111, %v2258
    %v2404 = vmul.f32 %v112, %v2260
    %v2405 = vmul.f32 %v113, %v2262
    %v2406 = vmul.f32 %v114, %v2264
    %v2407 = vmul.f32 %v115, %v2266
    %v2408 = vmul.f32 %v116, %v2268
    %v2409 = vmul.f32 %v117, %v2270
    %v2410 = vmul.f32 %v118, %v2272
    %v2411 = vmul.f32 %v119, %v2274
    %v2412 = vmul.f32 %v120, %v2276
    %v2413 = vmul.f32 %v121, %v2278
    %v2414 = vmul.f32 %v122, %v2280
    %v2415 = vmul.f32 %v123, %v2282
    %v2416 = vmul.f32 %v124, %v2284
    %v2417 = vmul.f32 %v125, %v2286
    %v2418 = vmul.f32 %v126, %v2288
    %v2419 = vmul.f32 %v127, %v2290
    %v2420 = vmul.f32 %v128, %v2289
    %s2421 = scalar_lea.vmem %s1, 8
    %v2422 = vld [vmem:[%s2421] sm:$0x7]
    %v2488 = vrot.slane %v2356, 1
    %v2489 = vrot.slane %v2357, 1
    %v2490 = vsel %vm450, %v2488, %v2489
    %v2491 = vrot.slane %v2358, 1
    %v2492 = vsel %vm450, %v2489, %v2491
    %v2493 = vrot.slane %v2359, 1
    %v2494 = vsel %vm450, %v2491, %v2493
    %v2495 = vrot.slane %v2360, 1
    %v2496 = vsel %vm450, %v2493, %v2495
    %v2497 = vrot.slane %v2361, 1
    %v2498 = vsel %vm450, %v2495, %v2497
    %v2499 = vrot.slane %v2362, 1
    %v2500 = vsel %vm450, %v2497, %v2499
    %v2501 = vrot.slane %v2363, 1
    %v2502 = vsel %vm450, %v2499, %v2501
    %v2503 = vrot.slane %v2364, 1
    %v2504 = vsel %vm450, %v2501, %v2503
    %v2505 = vrot.slane %v2365, 1
    %v2506 = vsel %vm450, %v2503, %v2505
    %v2507 = vrot.slane %v2366, 1
    %v2508 = vsel %vm450, %v2505, %v2507
    %v2509 = vrot.slane %v2367, 1
    %v2510 = vsel %vm450, %v2507, %v2509
    %v2511 = vrot.slane %v2368, 1
    %v2512 = vsel %vm450, %v2509, %v2511
    %v2513 = vrot.slane %v2369, 1
    %v2514 = vsel %vm450, %v2511, %v2513
    %v2515 = vrot.slane %v2370, 1
    %v2516 = vsel %vm450, %v2513, %v2515
    %v2517 = vrot.slane %v2371, 1
    %v2518 = vsel %vm450, %v2515, %v2517
    %v2519 = vrot.slane %v2372, 1
    %v2520 = vsel %vm450, %v2517, %v2519
    %v2521 = vrot.slane %v2373, 1
    %v2522 = vsel %vm450, %v2519, %v2521
    %v2523 = vrot.slane %v2374, 1
    %v2524 = vsel %vm450, %v2521, %v2523
    %v2525 = vrot.slane %v2375, 1
    %v2526 = vsel %vm450, %v2523, %v2525
    %v2527 = vrot.slane %v2376, 1
    %v2528 = vsel %vm450, %v2525, %v2527
    %v2529 = vrot.slane %v2377, 1
    %v2530 = vsel %vm450, %v2527, %v2529
    %v2531 = vrot.slane %v2378, 1
    %v2532 = vsel %vm450, %v2529, %v2531
    %v2533 = vrot.slane %v2379, 1
    %v2534 = vsel %vm450, %v2531, %v2533
    %v2535 = vrot.slane %v2380, 1
    %v2536 = vsel %vm450, %v2533, %v2535
    %v2537 = vrot.slane %v2381, 1
    %v2538 = vsel %vm450, %v2535, %v2537
    %v2539 = vrot.slane %v2382, 1
    %v2540 = vsel %vm450, %v2537, %v2539
    %v2541 = vrot.slane %v2383, 1
    %v2542 = vsel %vm450, %v2539, %v2541
    %v2543 = vrot.slane %v2384, 1
    %v2544 = vsel %vm450, %v2541, %v2543
    %v2545 = vrot.slane %v2385, 1
    %v2546 = vsel %vm450, %v2543, %v2545
    %v2547 = vrot.slane %v2386, 1
    %v2548 = vsel %vm450, %v2545, %v2547
    %v2549 = vrot.slane %v2387, 1
    %v2550 = vsel %vm450, %v2547, %v2549
    %v2551 = vrot.slane %v2388, 1
    %v2552 = vsel %vm450, %v2549, %v2551
    %v2553 = vrot.slane %v2389, 1
    %v2554 = vsel %vm450, %v2551, %v2553
    %v2555 = vrot.slane %v2390, 1
    %v2556 = vsel %vm450, %v2553, %v2555
    %v2557 = vrot.slane %v2391, 1
    %v2558 = vsel %vm450, %v2555, %v2557
    %v2559 = vrot.slane %v2392, 1
    %v2560 = vsel %vm450, %v2557, %v2559
    %v2561 = vrot.slane %v2393, 1
    %v2562 = vsel %vm450, %v2559, %v2561
    %v2563 = vrot.slane %v2394, 1
    %v2564 = vsel %vm450, %v2561, %v2563
    %v2565 = vrot.slane %v2395, 1
    %v2566 = vsel %vm450, %v2563, %v2565
    %v2567 = vrot.slane %v2396, 1
    %v2568 = vsel %vm450, %v2565, %v2567
    %v2569 = vrot.slane %v2397, 1
    %v2570 = vsel %vm450, %v2567, %v2569
    %v2571 = vrot.slane %v2398, 1
    %v2572 = vsel %vm450, %v2569, %v2571
    %v2573 = vrot.slane %v2399, 1
    %v2574 = vsel %vm450, %v2571, %v2573
    %v2575 = vrot.slane %v2400, 1
    %v2576 = vsel %vm450, %v2573, %v2575
    %v2577 = vrot.slane %v2401, 1
    %v2578 = vsel %vm450, %v2575, %v2577
    %v2579 = vrot.slane %v2402, 1
    %v2580 = vsel %vm450, %v2577, %v2579
    %v2581 = vrot.slane %v2403, 1
    %v2582 = vsel %vm450, %v2579, %v2581
    %v2583 = vrot.slane %v2404, 1
    %v2584 = vsel %vm450, %v2581, %v2583
    %v2585 = vrot.slane %v2405, 1
    %v2586 = vsel %vm450, %v2583, %v2585
    %v2587 = vrot.slane %v2406, 1
    %v2588 = vsel %vm450, %v2585, %v2587
    %v2589 = vrot.slane %v2407, 1
    %v2590 = vsel %vm450, %v2587, %v2589
    %v2591 = vrot.slane %v2408, 1
    %v2592 = vsel %vm450, %v2589, %v2591
    %v2593 = vrot.slane %v2409, 1
    %v2594 = vsel %vm450, %v2591, %v2593
    %v2595 = vrot.slane %v2410, 1
    %v2596 = vsel %vm450, %v2593, %v2595
    %v2597 = vrot.slane %v2411, 1
    %v2598 = vsel %vm450, %v2595, %v2597
    %v2599 = vrot.slane %v2412, 1
    %v2600 = vsel %vm450, %v2597, %v2599
    %v2601 = vrot.slane %v2413, 1
    %v2602 = vsel %vm450, %v2599, %v2601
    %v2603 = vrot.slane %v2414, 1
    %v2604 = vsel %vm450, %v2601, %v2603
    %v2605 = vrot.slane %v2415, 1
    %v2606 = vsel %vm450, %v2603, %v2605
    %v2607 = vrot.slane %v2416, 1
    %v2608 = vsel %vm450, %v2605, %v2607
    %v2609 = vrot.slane %v2417, 1
    %v2610 = vsel %vm450, %v2607, %v2609
    %v2611 = vrot.slane %v2418, 1
    %v2612 = vsel %vm450, %v2609, %v2611
    %v2613 = vrot.slane %v2419, 1
    %v2614 = vsel %vm450, %v2611, %v2613
    %v2615 = vrot.slane %v2420, 1
    %v2616 = vsel %vm450, %v2613, %v2615
    %v2617 = vsel %vm1031, %v2490, 0
    %v2619 = vsel %vm1031, %v2492, 0
    %v2621 = vsel %vm1031, %v2494, 0
    %v2623 = vsel %vm1031, %v2496, 0
    %v2625 = vsel %vm1031, %v2498, 0
    %v2627 = vsel %vm1031, %v2500, 0
    %v2629 = vsel %vm1031, %v2502, 0
    %v2631 = vsel %vm1031, %v2504, 0
    %v2633 = vsel %vm1031, %v2506, 0
    %v2635 = vsel %vm1031, %v2508, 0
    %v2637 = vsel %vm1031, %v2510, 0
    %v2639 = vsel %vm1031, %v2512, 0
    %v2641 = vsel %vm1031, %v2514, 0
    %v2643 = vsel %vm1031, %v2516, 0
    %v2645 = vsel %vm1031, %v2518, 0
    %v2647 = vsel %vm1031, %v2520, 0
    %v2649 = vsel %vm1031, %v2522, 0
    %v2651 = vsel %vm1031, %v2524, 0
    %v2653 = vsel %vm1031, %v2526, 0
    %v2655 = vsel %vm1031, %v2528, 0
    %v2657 = vsel %vm1031, %v2530, 0
    %v2659 = vsel %vm1031, %v2532, 0
    %v2661 = vsel %vm1031, %v2534, 0
    %v2663 = vsel %vm1031, %v2536, 0
    %v2665 = vsel %vm1031, %v2538, 0
    %v2667 = vsel %vm1031, %v2540, 0
    %v2669 = vsel %vm1031, %v2542, 0
    %v2671 = vsel %vm1031, %v2544, 0
    %v2673 = vsel %vm1031, %v2546, 0
    %v2675 = vsel %vm1031, %v2548, 0
    %v2677 = vsel %vm1031, %v2550, 0
    %v2679 = vsel %vm1031, %v2552, 0
    %v2681 = vsel %vm1031, %v2554, 0
    %v2683 = vsel %vm1031, %v2556, 0
    %v2685 = vsel %vm1031, %v2558, 0
    %v2687 = vsel %vm1031, %v2560, 0
    %v2689 = vsel %vm1031, %v2562, 0
    %v2691 = vsel %vm1031, %v2564, 0
    %v2693 = vsel %vm1031, %v2566, 0
    %v2695 = vsel %vm1031, %v2568, 0
    %v2697 = vsel %vm1031, %v2570, 0
    %v2699 = vsel %vm1031, %v2572, 0
    %v2701 = vsel %vm1031, %v2574, 0
    %v2703 = vsel %vm1031, %v2576, 0
    %v2705 = vsel %vm1031, %v2578, 0
    %v2707 = vsel %vm1031, %v2580, 0
    %v2709 = vsel %vm1031, %v2582, 0
    %v2711 = vsel %vm1031, %v2584, 0
    %v2713 = vsel %vm1031, %v2586, 0
    %v2715 = vsel %vm1031, %v2588, 0
    %v2717 = vsel %vm1031, %v2590, 0
    %v2719 = vsel %vm1031, %v2592, 0
    %v2721 = vsel %vm1031, %v2594, 0
    %v2723 = vsel %vm1031, %v2596, 0
    %v2725 = vsel %vm1031, %v2598, 0
    %v2727 = vsel %vm1031, %v2600, 0
    %v2729 = vsel %vm1031, %v2602, 0
    %v2731 = vsel %vm1031, %v2604, 0
    %v2733 = vsel %vm1031, %v2606, 0
    %v2735 = vsel %vm1031, %v2608, 0
    %v2737 = vsel %vm1031, %v2610, 0
    %v2739 = vsel %vm1031, %v2612, 0
    %v2741 = vsel %vm1031, %v2614, 0
    %v2743 = vsel %vm1031, %v2616, 0
    %v2746 = vsel %vm1224, %v2422, 0
    %2748 = vmatpush.msra.mxu0 0.0
    %2749 = vmatpush.msra.mxu0 0.0
    %2750 = vmatpush.msra.mxu0 0.0
    %2751 = vmatpush.msra.mxu0 0.0
    %2752 = vmatpush.msra.mxu0 0.0
    %2753 = vmatpush.msra.mxu0 0.0
    %2754 = vmatpush.msra.mxu0 0.0
    %2755 = vmatpush.msra.mxu0 0.0
    %2756 = vmatpush.msra.mxu0 0.0
    %2757 = vmatpush.msra.mxu0 0.0
    %2758 = vmatpush.msra.mxu0 0.0
    %2759 = vmatpush.msra.mxu0 0.0
    %2760 = vmatpush.msra.mxu0 0.0
    %2761 = vmatpush.msra.mxu0 0.0
    %2762 = vmatpush.msra.mxu0 0.0
    %2763 = vmatpush.msra.mxu0 %v2746
    %2764 = vmatmul.f32.gmra.mxu0 %v2617
    %v2765 = vpop.f32.mrf.mxu0
    %v2766 = vadd.f32 0.0, %v2765
    %2767 = vmatmul.f32.gmra.mxu0 %v2619
    %v2768 = vpop.f32.mrf.mxu0
    %v2769 = vadd.f32 0.0, %v2768
    %2770 = vmatmul.f32.gmra.mxu0 %v2621
    %v2771 = vpop.f32.mrf.mxu0
    %v2772 = vadd.f32 0.0, %v2771
    %2773 = vmatmul.f32.gmra.mxu0 %v2623
    %v2774 = vpop.f32.mrf.mxu0
    %v2775 = vadd.f32 0.0, %v2774
    %2776 = vmatmul.f32.gmra.mxu0 %v2625
    %v2777 = vpop.f32.mrf.mxu0
    %v2778 = vadd.f32 0.0, %v2777
    %2779 = vmatmul.f32.gmra.mxu0 %v2627
    %v2780 = vpop.f32.mrf.mxu0
    %v2781 = vadd.f32 0.0, %v2780
    %2782 = vmatmul.f32.gmra.mxu0 %v2629
    %v2783 = vpop.f32.mrf.mxu0
    %v2784 = vadd.f32 0.0, %v2783
    %2785 = vmatmul.f32.gmra.mxu0 %v2631
    %v2786 = vpop.f32.mrf.mxu0
    %v2787 = vadd.f32 0.0, %v2786
    %2788 = vmatmul.f32.gmra.mxu0 %v2633
    %v2789 = vpop.f32.mrf.mxu0
    %v2790 = vadd.f32 0.0, %v2789
    %2791 = vmatmul.f32.gmra.mxu0 %v2635
    %v2792 = vpop.f32.mrf.mxu0
    %v2793 = vadd.f32 0.0, %v2792
    %2794 = vmatmul.f32.gmra.mxu0 %v2637
    %v2795 = vpop.f32.mrf.mxu0
    %v2796 = vadd.f32 0.0, %v2795
    %2797 = vmatmul.f32.gmra.mxu0 %v2639
    %v2798 = vpop.f32.mrf.mxu0
    %v2799 = vadd.f32 0.0, %v2798
    %2800 = vmatmul.f32.gmra.mxu0 %v2641
    %v2801 = vpop.f32.mrf.mxu0
    %v2802 = vadd.f32 0.0, %v2801
    %2803 = vmatmul.f32.gmra.mxu0 %v2643
    %v2804 = vpop.f32.mrf.mxu0
    %v2805 = vadd.f32 0.0, %v2804
    %2806 = vmatmul.f32.gmra.mxu0 %v2645
    %v2807 = vpop.f32.mrf.mxu0
    %v2808 = vadd.f32 0.0, %v2807
    %2809 = vmatmul.f32.gmra.mxu0 %v2647
    %v2810 = vpop.f32.mrf.mxu0
    %v2811 = vadd.f32 0.0, %v2810
    %2812 = vmatmul.f32.gmra.mxu0 %v2649
    %v2813 = vpop.f32.mrf.mxu0
    %v2814 = vadd.f32 0.0, %v2813
    %2815 = vmatmul.f32.gmra.mxu0 %v2651
    %v2816 = vpop.f32.mrf.mxu0
    %v2817 = vadd.f32 0.0, %v2816
    %2818 = vmatmul.f32.gmra.mxu0 %v2653
    %v2819 = vpop.f32.mrf.mxu0
    %v2820 = vadd.f32 0.0, %v2819
    %2821 = vmatmul.f32.gmra.mxu0 %v2655
    %v2822 = vpop.f32.mrf.mxu0
    %v2823 = vadd.f32 0.0, %v2822
    %2824 = vmatmul.f32.gmra.mxu0 %v2657
    %v2825 = vpop.f32.mrf.mxu0
    %v2826 = vadd.f32 0.0, %v2825
    %2827 = vmatmul.f32.gmra.mxu0 %v2659
    %v2828 = vpop.f32.mrf.mxu0
    %v2829 = vadd.f32 0.0, %v2828
    %2830 = vmatmul.f32.gmra.mxu0 %v2661
    %v2831 = vpop.f32.mrf.mxu0
    %v2832 = vadd.f32 0.0, %v2831
    %2833 = vmatmul.f32.gmra.mxu0 %v2663
    %v2834 = vpop.f32.mrf.mxu0
    %v2835 = vadd.f32 0.0, %v2834
    %2836 = vmatmul.f32.gmra.mxu0 %v2665
    %v2837 = vpop.f32.mrf.mxu0
    %v2838 = vadd.f32 0.0, %v2837
    %2839 = vmatmul.f32.gmra.mxu0 %v2667
    %v2840 = vpop.f32.mrf.mxu0
    %v2841 = vadd.f32 0.0, %v2840
    %2842 = vmatmul.f32.gmra.mxu0 %v2669
    %v2843 = vpop.f32.mrf.mxu0
    %v2844 = vadd.f32 0.0, %v2843
    %2845 = vmatmul.f32.gmra.mxu0 %v2671
    %v2846 = vpop.f32.mrf.mxu0
    %v2847 = vadd.f32 0.0, %v2846
    %2848 = vmatmul.f32.gmra.mxu0 %v2673
    %v2849 = vpop.f32.mrf.mxu0
    %v2850 = vadd.f32 0.0, %v2849
    %2851 = vmatmul.f32.gmra.mxu0 %v2675
    %v2852 = vpop.f32.mrf.mxu0
    %v2853 = vadd.f32 0.0, %v2852
    %2854 = vmatmul.f32.gmra.mxu0 %v2677
    %v2855 = vpop.f32.mrf.mxu0
    %v2856 = vadd.f32 0.0, %v2855
    %2857 = vmatmul.f32.gmra.mxu0 %v2679
    %v2858 = vpop.f32.mrf.mxu0
    %v2859 = vadd.f32 0.0, %v2858
    %2860 = vmatmul.f32.gmra.mxu0 %v2681
    %v2861 = vpop.f32.mrf.mxu0
    %v2862 = vadd.f32 0.0, %v2861
    %2863 = vmatmul.f32.gmra.mxu0 %v2683
    %v2864 = vpop.f32.mrf.mxu0
    %v2865 = vadd.f32 0.0, %v2864
    %2866 = vmatmul.f32.gmra.mxu0 %v2685
    %v2867 = vpop.f32.mrf.mxu0
    %v2868 = vadd.f32 0.0, %v2867
    %2869 = vmatmul.f32.gmra.mxu0 %v2687
    %v2870 = vpop.f32.mrf.mxu0
    %v2871 = vadd.f32 0.0, %v2870
    %2872 = vmatmul.f32.gmra.mxu0 %v2689
    %v2873 = vpop.f32.mrf.mxu0
    %v2874 = vadd.f32 0.0, %v2873
    %2875 = vmatmul.f32.gmra.mxu0 %v2691
    %v2876 = vpop.f32.mrf.mxu0
    %v2877 = vadd.f32 0.0, %v2876
    %2878 = vmatmul.f32.gmra.mxu0 %v2693
    %v2879 = vpop.f32.mrf.mxu0
    %v2880 = vadd.f32 0.0, %v2879
    %2881 = vmatmul.f32.gmra.mxu0 %v2695
    %v2882 = vpop.f32.mrf.mxu0
    %v2883 = vadd.f32 0.0, %v2882
    %2884 = vmatmul.f32.gmra.mxu0 %v2697
    %v2885 = vpop.f32.mrf.mxu0
    %v2886 = vadd.f32 0.0, %v2885
    %2887 = vmatmul.f32.gmra.mxu0 %v2699
    %v2888 = vpop.f32.mrf.mxu0
    %v2889 = vadd.f32 0.0, %v2888
    %2890 = vmatmul.f32.gmra.mxu0 %v2701
    %v2891 = vpop.f32.mrf.mxu0
    %v2892 = vadd.f32 0.0, %v2891
    %2893 = vmatmul.f32.gmra.mxu0 %v2703
    %v2894 = vpop.f32.mrf.mxu0
    %v2895 = vadd.f32 0.0, %v2894
    %2896 = vmatmul.f32.gmra.mxu0 %v2705
    %v2897 = vpop.f32.mrf.mxu0
    %v2898 = vadd.f32 0.0, %v2897
    %2899 = vmatmul.f32.gmra.mxu0 %v2707
    %v2900 = vpop.f32.mrf.mxu0
    %v2901 = vadd.f32 0.0, %v2900
    %2902 = vmatmul.f32.gmra.mxu0 %v2709
    %v2903 = vpop.f32.mrf.mxu0
    %v2904 = vadd.f32 0.0, %v2903
    %2905 = vmatmul.f32.gmra.mxu0 %v2711
    %v2906 = vpop.f32.mrf.mxu0
    %v2907 = vadd.f32 0.0, %v2906
    %2908 = vmatmul.f32.gmra.mxu0 %v2713
    %v2909 = vpop.f32.mrf.mxu0
    %v2910 = vadd.f32 0.0, %v2909
    %2911 = vmatmul.f32.gmra.mxu0 %v2715
    %v2912 = vpop.f32.mrf.mxu0
    %v2913 = vadd.f32 0.0, %v2912
    %2914 = vmatmul.f32.gmra.mxu0 %v2717
    %v2915 = vpop.f32.mrf.mxu0
    %v2916 = vadd.f32 0.0, %v2915
    %2917 = vmatmul.f32.gmra.mxu0 %v2719
    %v2918 = vpop.f32.mrf.mxu0
    %v2919 = vadd.f32 0.0, %v2918
    %2920 = vmatmul.f32.gmra.mxu0 %v2721
    %v2921 = vpop.f32.mrf.mxu0
    %v2922 = vadd.f32 0.0, %v2921
    %2923 = vmatmul.f32.gmra.mxu0 %v2723
    %v2924 = vpop.f32.mrf.mxu0
    %v2925 = vadd.f32 0.0, %v2924
    %2926 = vmatmul.f32.gmra.mxu0 %v2725
    %v2927 = vpop.f32.mrf.mxu0
    %v2928 = vadd.f32 0.0, %v2927
    %2929 = vmatmul.f32.gmra.mxu0 %v2727
    %v2930 = vpop.f32.mrf.mxu0
    %v2931 = vadd.f32 0.0, %v2930
    %2932 = vmatmul.f32.gmra.mxu0 %v2729
    %v2933 = vpop.f32.mrf.mxu0
    %v2934 = vadd.f32 0.0, %v2933
    %2935 = vmatmul.f32.gmra.mxu0 %v2731
    %v2936 = vpop.f32.mrf.mxu0
    %v2937 = vadd.f32 0.0, %v2936
    %2938 = vmatmul.f32.gmra.mxu0 %v2733
    %v2939 = vpop.f32.mrf.mxu0
    %v2940 = vadd.f32 0.0, %v2939
    %2941 = vmatmul.f32.gmra.mxu0 %v2735
    %v2942 = vpop.f32.mrf.mxu0
    %v2943 = vadd.f32 0.0, %v2942
    %2944 = vmatmul.f32.gmra.mxu0 %v2737
    %v2945 = vpop.f32.mrf.mxu0
    %v2946 = vadd.f32 0.0, %v2945
    %2947 = vmatmul.f32.gmra.mxu0 %v2739
    %v2948 = vpop.f32.mrf.mxu0
    %v2949 = vadd.f32 0.0, %v2948
    %2950 = vmatmul.f32.gmra.mxu0 %v2741
    %v2951 = vpop.f32.mrf.mxu0
    %v2952 = vadd.f32 0.0, %v2951
    %2953 = vmatmul.f32.gmra.mxu0 %v2743
    %v2954 = vpop.f32.mrf.mxu0
    %v2955 = vadd.f32 0.0, %v2954
    %2956 = vdwg.mxu0
    %v2957 = vadd.f32 %v1781, %v2766
    %v2958 = vadd.f32 %v1784, %v2769
    %v2959 = vadd.f32 %v1787, %v2772
    %v2960 = vadd.f32 %v1790, %v2775
    %v2961 = vadd.f32 %v1793, %v2778
    %v2962 = vadd.f32 %v1796, %v2781
    %v2963 = vadd.f32 %v1799, %v2784
    %v2964 = vadd.f32 %v1802, %v2787
    %v2965 = vadd.f32 %v1805, %v2790
    %v2966 = vadd.f32 %v1808, %v2793
    %v2967 = vadd.f32 %v1811, %v2796
    %v2968 = vadd.f32 %v1814, %v2799
    %v2969 = vadd.f32 %v1817, %v2802
    %v2970 = vadd.f32 %v1820, %v2805
    %v2971 = vadd.f32 %v1823, %v2808
    %v2972 = vadd.f32 %v1826, %v2811
    %v2973 = vadd.f32 %v1829, %v2814
    %v2974 = vadd.f32 %v1832, %v2817
    %v2975 = vadd.f32 %v1835, %v2820
    %v2976 = vadd.f32 %v1838, %v2823
    %v2977 = vadd.f32 %v1841, %v2826
    %v2978 = vadd.f32 %v1844, %v2829
    %v2979 = vadd.f32 %v1847, %v2832
    %v2980 = vadd.f32 %v1850, %v2835
    %v2981 = vadd.f32 %v1853, %v2838
    %v2982 = vadd.f32 %v1856, %v2841
    %v2983 = vadd.f32 %v1859, %v2844
    %v2984 = vadd.f32 %v1862, %v2847
    %v2985 = vadd.f32 %v1865, %v2850
    %v2986 = vadd.f32 %v1868, %v2853
    %v2987 = vadd.f32 %v1871, %v2856
    %v2988 = vadd.f32 %v1874, %v2859
    %v2989 = vadd.f32 %v1877, %v2862
    %v2990 = vadd.f32 %v1880, %v2865
    %v2991 = vadd.f32 %v1883, %v2868
    %v2992 = vadd.f32 %v1886, %v2871
    %v2993 = vadd.f32 %v1889, %v2874
    %v2994 = vadd.f32 %v1892, %v2877
    %v2995 = vadd.f32 %v1895, %v2880
    %v2996 = vadd.f32 %v1898, %v2883
    %v2997 = vadd.f32 %v1901, %v2886
    %v2998 = vadd.f32 %v1904, %v2889
    %v2999 = vadd.f32 %v1907, %v2892
    %v3000 = vadd.f32 %v1910, %v2895
    %v3001 = vadd.f32 %v1913, %v2898
    %v3002 = vadd.f32 %v1916, %v2901
    %v3003 = vadd.f32 %v1919, %v2904
    %v3004 = vadd.f32 %v1922, %v2907
    %v3005 = vadd.f32 %v1925, %v2910
    %v3006 = vadd.f32 %v1928, %v2913
    %v3007 = vadd.f32 %v1931, %v2916
    %v3008 = vadd.f32 %v1934, %v2919
    %v3009 = vadd.f32 %v1937, %v2922
    %v3010 = vadd.f32 %v1940, %v2925
    %v3011 = vadd.f32 %v1943, %v2928
    %v3012 = vadd.f32 %v1946, %v2931
    %v3013 = vadd.f32 %v1949, %v2934
    %v3014 = vadd.f32 %v1952, %v2937
    %v3015 = vadd.f32 %v1955, %v2940
    %v3016 = vadd.f32 %v1958, %v2943
    %v3017 = vadd.f32 %v1961, %v2946
    %v3018 = vadd.f32 %v1964, %v2949
    %v3019 = vadd.f32 %v1967, %v2952
    %v3020 = vadd.f32 %v1970, %v2955
    %3021 = vset.pattern.permute.xlu0 3
    %3022 = vperm.xlu0 %3021, %v130
    %v3023 = vpop.permute.xlu0 %3022
    %3024 = vset.pattern.permute.xlu0 3
    %3025 = vperm.xlu0 %3024, %v131
    %v3026 = vpop.permute.xlu0 %3025
    %3027 = vset.pattern.permute.xlu0 3
    %3028 = vperm.xlu0 %3027, %v132
    %v3029 = vpop.permute.xlu0 %3028
    %3030 = vset.pattern.permute.xlu0 3
    %3031 = vperm.xlu0 %3030, %v133
    %v3032 = vpop.permute.xlu0 %3031
    %3033 = vset.pattern.permute.xlu0 3
    %3034 = vperm.xlu0 %3033, %v134
    %v3035 = vpop.permute.xlu0 %3034
    %3036 = vset.pattern.permute.xlu0 3
    %3037 = vperm.xlu0 %3036, %v135
    %v3038 = vpop.permute.xlu0 %3037
    %3039 = vset.pattern.permute.xlu0 3
    %3040 = vperm.xlu0 %3039, %v136
    %v3041 = vpop.permute.xlu0 %3040
    %3042 = vset.pattern.permute.xlu0 3
    %3043 = vperm.xlu0 %3042, %v137
    %v3044 = vpop.permute.xlu0 %3043
    %3045 = vset.pattern.permute.xlu0 3
    %3046 = vperm.xlu0 %3045, %v138
    %v3047 = vpop.permute.xlu0 %3046
    %3048 = vset.pattern.permute.xlu0 3
    %3049 = vperm.xlu0 %3048, %v139
    %v3050 = vpop.permute.xlu0 %3049
    %3051 = vset.pattern.permute.xlu0 3
    %3052 = vperm.xlu0 %3051, %v140
    %v3053 = vpop.permute.xlu0 %3052
    %3054 = vset.pattern.permute.xlu0 3
    %3055 = vperm.xlu0 %3054, %v141
    %v3056 = vpop.permute.xlu0 %3055
    %3057 = vset.pattern.permute.xlu0 3
    %3058 = vperm.xlu0 %3057, %v142
    %v3059 = vpop.permute.xlu0 %3058
    %3060 = vset.pattern.permute.xlu0 3
    %3061 = vperm.xlu0 %3060, %v143
    %v3062 = vpop.permute.xlu0 %3061
    %3063 = vset.pattern.permute.xlu0 3
    %3064 = vperm.xlu0 %3063, %v144
    %v3065 = vpop.permute.xlu0 %3064
    %3066 = vset.pattern.permute.xlu0 3
    %3067 = vperm.xlu0 %3066, %v145
    %v3068 = vpop.permute.xlu0 %3067
    %3069 = vset.pattern.permute.xlu0 3
    %3070 = vperm.xlu0 %3069, %v146
    %v3071 = vpop.permute.xlu0 %3070
    %3072 = vset.pattern.permute.xlu0 3
    %3073 = vperm.xlu0 %3072, %v147
    %v3074 = vpop.permute.xlu0 %3073
    %3075 = vset.pattern.permute.xlu0 3
    %3076 = vperm.xlu0 %3075, %v148
    %v3077 = vpop.permute.xlu0 %3076
    %3078 = vset.pattern.permute.xlu0 3
    %3079 = vperm.xlu0 %3078, %v149
    %v3080 = vpop.permute.xlu0 %3079
    %3081 = vset.pattern.permute.xlu0 3
    %3082 = vperm.xlu0 %3081, %v150
    %v3083 = vpop.permute.xlu0 %3082
    %3084 = vset.pattern.permute.xlu0 3
    %3085 = vperm.xlu0 %3084, %v151
    %v3086 = vpop.permute.xlu0 %3085
    %3087 = vset.pattern.permute.xlu0 3
    %3088 = vperm.xlu0 %3087, %v152
    %v3089 = vpop.permute.xlu0 %3088
    %3090 = vset.pattern.permute.xlu0 3
    %3091 = vperm.xlu0 %3090, %v153
    %v3092 = vpop.permute.xlu0 %3091
    %3093 = vset.pattern.permute.xlu0 3
    %3094 = vperm.xlu0 %3093, %v154
    %v3095 = vpop.permute.xlu0 %3094
    %3096 = vset.pattern.permute.xlu0 3
    %3097 = vperm.xlu0 %3096, %v155
    %v3098 = vpop.permute.xlu0 %3097
    %3099 = vset.pattern.permute.xlu0 3
    %3100 = vperm.xlu0 %3099, %v156
    %v3101 = vpop.permute.xlu0 %3100
    %3102 = vset.pattern.permute.xlu0 3
    %3103 = vperm.xlu0 %3102, %v157
    %v3104 = vpop.permute.xlu0 %3103
    %3105 = vset.pattern.permute.xlu0 3
    %3106 = vperm.xlu0 %3105, %v158
    %v3107 = vpop.permute.xlu0 %3106
    %3108 = vset.pattern.permute.xlu0 3
    %3109 = vperm.xlu0 %3108, %v159
    %v3110 = vpop.permute.xlu0 %3109
    %3111 = vset.pattern.permute.xlu0 3
    %3112 = vperm.xlu0 %3111, %v160
    %v3113 = vpop.permute.xlu0 %3112
    %3114 = vset.pattern.permute.xlu0 3
    %3115 = vperm.xlu0 %3114, %v161
    %v3116 = vpop.permute.xlu0 %3115
    %3117 = vset.pattern.permute.xlu0 3
    %3118 = vperm.xlu0 %3117, %v162
    %v3119 = vpop.permute.xlu0 %3118
    %3120 = vset.pattern.permute.xlu0 3
    %3121 = vperm.xlu0 %3120, %v163
    %v3122 = vpop.permute.xlu0 %3121
    %3123 = vset.pattern.permute.xlu0 3
    %3124 = vperm.xlu0 %3123, %v164
    %v3125 = vpop.permute.xlu0 %3124
    %3126 = vset.pattern.permute.xlu0 3
    %3127 = vperm.xlu0 %3126, %v165
    %v3128 = vpop.permute.xlu0 %3127
    %3129 = vset.pattern.permute.xlu0 3
    %3130 = vperm.xlu0 %3129, %v166
    %v3131 = vpop.permute.xlu0 %3130
    %3132 = vset.pattern.permute.xlu0 3
    %3133 = vperm.xlu0 %3132, %v167
    %v3134 = vpop.permute.xlu0 %3133
    %3135 = vset.pattern.permute.xlu0 3
    %3136 = vperm.xlu0 %3135, %v168
    %v3137 = vpop.permute.xlu0 %3136
    %3138 = vset.pattern.permute.xlu0 3
    %3139 = vperm.xlu0 %3138, %v169
    %v3140 = vpop.permute.xlu0 %3139
    %3141 = vset.pattern.permute.xlu0 3
    %3142 = vperm.xlu0 %3141, %v170
    %v3143 = vpop.permute.xlu0 %3142
    %3144 = vset.pattern.permute.xlu0 3
    %3145 = vperm.xlu0 %3144, %v171
    %v3146 = vpop.permute.xlu0 %3145
    %3147 = vset.pattern.permute.xlu0 3
    %3148 = vperm.xlu0 %3147, %v172
    %v3149 = vpop.permute.xlu0 %3148
    %3150 = vset.pattern.permute.xlu0 3
    %3151 = vperm.xlu0 %3150, %v173
    %v3152 = vpop.permute.xlu0 %3151
    %3153 = vset.pattern.permute.xlu0 3
    %3154 = vperm.xlu0 %3153, %v174
    %v3155 = vpop.permute.xlu0 %3154
    %3156 = vset.pattern.permute.xlu0 3
    %3157 = vperm.xlu0 %3156, %v175
    %v3158 = vpop.permute.xlu0 %3157
    %3159 = vset.pattern.permute.xlu0 3
    %3160 = vperm.xlu0 %3159, %v176
    %v3161 = vpop.permute.xlu0 %3160
    %3162 = vset.pattern.permute.xlu0 3
    %3163 = vperm.xlu0 %3162, %v177
    %v3164 = vpop.permute.xlu0 %3163
    %3165 = vset.pattern.permute.xlu0 3
    %3166 = vperm.xlu0 %3165, %v178
    %v3167 = vpop.permute.xlu0 %3166
    %3168 = vset.pattern.permute.xlu0 3
    %3169 = vperm.xlu0 %3168, %v179
    %v3170 = vpop.permute.xlu0 %3169
    %3171 = vset.pattern.permute.xlu0 3
    %3172 = vperm.xlu0 %3171, %v180
    %v3173 = vpop.permute.xlu0 %3172
    %3174 = vset.pattern.permute.xlu0 3
    %3175 = vperm.xlu0 %3174, %v181
    %v3176 = vpop.permute.xlu0 %3175
    %3177 = vset.pattern.permute.xlu0 3
    %3178 = vperm.xlu0 %3177, %v182
    %v3179 = vpop.permute.xlu0 %3178
    %3180 = vset.pattern.permute.xlu0 3
    %3181 = vperm.xlu0 %3180, %v183
    %v3182 = vpop.permute.xlu0 %3181
    %3183 = vset.pattern.permute.xlu0 3
    %3184 = vperm.xlu0 %3183, %v184
    %v3185 = vpop.permute.xlu0 %3184
    %3186 = vset.pattern.permute.xlu0 3
    %3187 = vperm.xlu0 %3186, %v185
    %v3188 = vpop.permute.xlu0 %3187
    %3189 = vset.pattern.permute.xlu0 3
    %3190 = vperm.xlu0 %3189, %v186
    %v3191 = vpop.permute.xlu0 %3190
    %3192 = vset.pattern.permute.xlu0 3
    %3193 = vperm.xlu0 %3192, %v187
    %v3194 = vpop.permute.xlu0 %3193
    %3195 = vset.pattern.permute.xlu0 3
    %3196 = vperm.xlu0 %3195, %v188
    %v3197 = vpop.permute.xlu0 %3196
    %3198 = vset.pattern.permute.xlu0 3
    %3199 = vperm.xlu0 %3198, %v189
    %v3200 = vpop.permute.xlu0 %3199
    %3201 = vset.pattern.permute.xlu0 3
    %3202 = vperm.xlu0 %3201, %v190
    %v3203 = vpop.permute.xlu0 %3202
    %3204 = vset.pattern.permute.xlu0 3
    %3205 = vperm.xlu0 %3204, %v191
    %v3206 = vpop.permute.xlu0 %3205
    %3207 = vset.pattern.permute.xlu0 3
    %3208 = vperm.xlu0 %3207, %v192
    %v3209 = vpop.permute.xlu0 %3208
    %3210 = vset.pattern.permute.xlu0 3
    %3211 = vperm.xlu0 %3210, %v193
    %v3212 = vpop.permute.xlu0 %3211
    %v3213 = vrot.slane %v3023, 1
    %v3214 = vrot.slane %v3026, 1
    %v3215 = vsel %vm450, %v3213, %v3214
    %v3216 = vrot.slane %v3029, 1
    %v3217 = vsel %vm450, %v3214, %v3216
    %v3218 = vrot.slane %v3032, 1
    %v3219 = vsel %vm450, %v3216, %v3218
    %v3220 = vrot.slane %v3035, 1
    %v3221 = vsel %vm450, %v3218, %v3220
    %v3222 = vrot.slane %v3038, 1
    %v3223 = vsel %vm450, %v3220, %v3222
    %v3224 = vrot.slane %v3041, 1
    %v3225 = vsel %vm450, %v3222, %v3224
    %v3226 = vrot.slane %v3044, 1
    %v3227 = vsel %vm450, %v3224, %v3226
    %v3228 = vrot.slane %v3047, 1
    %v3229 = vsel %vm450, %v3226, %v3228
    %v3230 = vrot.slane %v3050, 1
    %v3231 = vsel %vm450, %v3228, %v3230
    %v3232 = vrot.slane %v3053, 1
    %v3233 = vsel %vm450, %v3230, %v3232
    %v3234 = vrot.slane %v3056, 1
    %v3235 = vsel %vm450, %v3232, %v3234
    %v3236 = vrot.slane %v3059, 1
    %v3237 = vsel %vm450, %v3234, %v3236
    %v3238 = vrot.slane %v3062, 1
    %v3239 = vsel %vm450, %v3236, %v3238
    %v3240 = vrot.slane %v3065, 1
    %v3241 = vsel %vm450, %v3238, %v3240
    %v3242 = vrot.slane %v3068, 1
    %v3243 = vsel %vm450, %v3240, %v3242
    %v3244 = vrot.slane %v3071, 1
    %v3245 = vsel %vm450, %v3242, %v3244
    %v3246 = vrot.slane %v3074, 1
    %v3247 = vsel %vm450, %v3244, %v3246
    %v3248 = vrot.slane %v3077, 1
    %v3249 = vsel %vm450, %v3246, %v3248
    %v3250 = vrot.slane %v3080, 1
    %v3251 = vsel %vm450, %v3248, %v3250
    %v3252 = vrot.slane %v3083, 1
    %v3253 = vsel %vm450, %v3250, %v3252
    %v3254 = vrot.slane %v3086, 1
    %v3255 = vsel %vm450, %v3252, %v3254
    %v3256 = vrot.slane %v3089, 1
    %v3257 = vsel %vm450, %v3254, %v3256
    %v3258 = vrot.slane %v3092, 1
    %v3259 = vsel %vm450, %v3256, %v3258
    %v3260 = vrot.slane %v3095, 1
    %v3261 = vsel %vm450, %v3258, %v3260
    %v3262 = vrot.slane %v3098, 1
    %v3263 = vsel %vm450, %v3260, %v3262
    %v3264 = vrot.slane %v3101, 1
    %v3265 = vsel %vm450, %v3262, %v3264
    %v3266 = vrot.slane %v3104, 1
    %v3267 = vsel %vm450, %v3264, %v3266
    %v3268 = vrot.slane %v3107, 1
    %v3269 = vsel %vm450, %v3266, %v3268
    %v3270 = vrot.slane %v3110, 1
    %v3271 = vsel %vm450, %v3268, %v3270
    %v3272 = vrot.slane %v3113, 1
    %v3273 = vsel %vm450, %v3270, %v3272
    %v3274 = vrot.slane %v3116, 1
    %v3275 = vsel %vm450, %v3272, %v3274
    %v3276 = vrot.slane %v3119, 1
    %v3277 = vsel %vm450, %v3274, %v3276
    %v3278 = vrot.slane %v3122, 1
    %v3279 = vsel %vm450, %v3276, %v3278
    %v3280 = vrot.slane %v3125, 1
    %v3281 = vsel %vm450, %v3278, %v3280
    %v3282 = vrot.slane %v3128, 1
    %v3283 = vsel %vm450, %v3280, %v3282
    %v3284 = vrot.slane %v3131, 1
    %v3285 = vsel %vm450, %v3282, %v3284
    %v3286 = vrot.slane %v3134, 1
    %v3287 = vsel %vm450, %v3284, %v3286
    %v3288 = vrot.slane %v3137, 1
    %v3289 = vsel %vm450, %v3286, %v3288
    %v3290 = vrot.slane %v3140, 1
    %v3291 = vsel %vm450, %v3288, %v3290
    %v3292 = vrot.slane %v3143, 1
    %v3293 = vsel %vm450, %v3290, %v3292
    %v3294 = vrot.slane %v3146, 1
    %v3295 = vsel %vm450, %v3292, %v3294
    %v3296 = vrot.slane %v3149, 1
    %v3297 = vsel %vm450, %v3294, %v3296
    %v3298 = vrot.slane %v3152, 1
    %v3299 = vsel %vm450, %v3296, %v3298
    %v3300 = vrot.slane %v3155, 1
    %v3301 = vsel %vm450, %v3298, %v3300
    %v3302 = vrot.slane %v3158, 1
    %v3303 = vsel %vm450, %v3300, %v3302
    %v3304 = vrot.slane %v3161, 1
    %v3305 = vsel %vm450, %v3302, %v3304
    %v3306 = vrot.slane %v3164, 1
    %v3307 = vsel %vm450, %v3304, %v3306
    %v3308 = vrot.slane %v3167, 1
    %v3309 = vsel %vm450, %v3306, %v3308
    %v3310 = vrot.slane %v3170, 1
    %v3311 = vsel %vm450, %v3308, %v3310
    %v3312 = vrot.slane %v3173, 1
    %v3313 = vsel %vm450, %v3310, %v3312
    %v3314 = vrot.slane %v3176, 1
    %v3315 = vsel %vm450, %v3312, %v3314
    %v3316 = vrot.slane %v3179, 1
    %v3317 = vsel %vm450, %v3314, %v3316
    %v3318 = vrot.slane %v3182, 1
    %v3319 = vsel %vm450, %v3316, %v3318
    %v3320 = vrot.slane %v3185, 1
    %v3321 = vsel %vm450, %v3318, %v3320
    %v3322 = vrot.slane %v3188, 1
    %v3323 = vsel %vm450, %v3320, %v3322
    %v3324 = vrot.slane %v3191, 1
    %v3325 = vsel %vm450, %v3322, %v3324
    %v3326 = vrot.slane %v3194, 1
    %v3327 = vsel %vm450, %v3324, %v3326
    %v3328 = vrot.slane %v3197, 1
    %v3329 = vsel %vm450, %v3326, %v3328
    %v3330 = vrot.slane %v3200, 1
    %v3331 = vsel %vm450, %v3328, %v3330
    %v3332 = vrot.slane %v3203, 1
    %v3333 = vsel %vm450, %v3330, %v3332
    %v3334 = vrot.slane %v3206, 1
    %v3335 = vsel %vm450, %v3332, %v3334
    %v3336 = vrot.slane %v3209, 1
    %v3337 = vsel %vm450, %v3334, %v3336
    %v3338 = vrot.slane %v3212, 1
    %v3339 = vsel %vm450, %v3336, %v3338
    %v3405 = vmul.f32 %v3213, 0.0
    %v3406 = vmul.f32 %v66, %v3215
    %v3407 = vmul.f32 %v67, %v3217
    %v3408 = vmul.f32 %v68, %v3219
    %v3409 = vmul.f32 %v69, %v3221
    %v3410 = vmul.f32 %v70, %v3223
    %v3411 = vmul.f32 %v71, %v3225
    %v3412 = vmul.f32 %v72, %v3227
    %v3413 = vmul.f32 %v73, %v3229
    %v3414 = vmul.f32 %v74, %v3231
    %v3415 = vmul.f32 %v75, %v3233
    %v3416 = vmul.f32 %v76, %v3235
    %v3417 = vmul.f32 %v77, %v3237
    %v3418 = vmul.f32 %v78, %v3239
    %v3419 = vmul.f32 %v79, %v3241
    %v3420 = vmul.f32 %v80, %v3243
    %v3421 = vmul.f32 %v81, %v3245
    %v3422 = vmul.f32 %v82, %v3247
    %v3423 = vmul.f32 %v83, %v3249
    %v3424 = vmul.f32 %v84, %v3251
    %v3425 = vmul.f32 %v85, %v3253
    %v3426 = vmul.f32 %v86, %v3255
    %v3427 = vmul.f32 %v87, %v3257
    %v3428 = vmul.f32 %v88, %v3259
    %v3429 = vmul.f32 %v89, %v3261
    %v3430 = vmul.f32 %v90, %v3263
    %v3431 = vmul.f32 %v91, %v3265
    %v3432 = vmul.f32 %v92, %v3267
    %v3433 = vmul.f32 %v93, %v3269
    %v3434 = vmul.f32 %v94, %v3271
    %v3435 = vmul.f32 %v95, %v3273
    %v3436 = vmul.f32 %v96, %v3275
    %v3437 = vmul.f32 %v97, %v3277
    %v3438 = vmul.f32 %v98, %v3279
    %v3439 = vmul.f32 %v99, %v3281
    %v3440 = vmul.f32 %v100, %v3283
    %v3441 = vmul.f32 %v101, %v3285
    %v3442 = vmul.f32 %v102, %v3287
    %v3443 = vmul.f32 %v103, %v3289
    %v3444 = vmul.f32 %v104, %v3291
    %v3445 = vmul.f32 %v105, %v3293
    %v3446 = vmul.f32 %v106, %v3295
    %v3447 = vmul.f32 %v107, %v3297
    %v3448 = vmul.f32 %v108, %v3299
    %v3449 = vmul.f32 %v109, %v3301
    %v3450 = vmul.f32 %v110, %v3303
    %v3451 = vmul.f32 %v111, %v3305
    %v3452 = vmul.f32 %v112, %v3307
    %v3453 = vmul.f32 %v113, %v3309
    %v3454 = vmul.f32 %v114, %v3311
    %v3455 = vmul.f32 %v115, %v3313
    %v3456 = vmul.f32 %v116, %v3315
    %v3457 = vmul.f32 %v117, %v3317
    %v3458 = vmul.f32 %v118, %v3319
    %v3459 = vmul.f32 %v119, %v3321
    %v3460 = vmul.f32 %v120, %v3323
    %v3461 = vmul.f32 %v121, %v3325
    %v3462 = vmul.f32 %v122, %v3327
    %v3463 = vmul.f32 %v123, %v3329
    %v3464 = vmul.f32 %v124, %v3331
    %v3465 = vmul.f32 %v125, %v3333
    %v3466 = vmul.f32 %v126, %v3335
    %v3467 = vmul.f32 %v127, %v3337
    %v3468 = vmul.f32 %v128, %v3339
    %v3469 = vmul.f32 %v129, %v3338
    %s3470 = scalar_lea.vmem %s1, 12
    %v3471 = vld [vmem:[%s3470] sm:$0x7]
    %v3537 = vrot.slane %v3405, 7
    %v3538 = vrot.slane %v3406, 7
    %v3539 = vsel %vm1502, %v3537, %v3538
    %v3540 = vrot.slane %v3407, 7
    %v3541 = vsel %vm1502, %v3538, %v3540
    %v3542 = vrot.slane %v3408, 7
    %v3543 = vsel %vm1502, %v3540, %v3542
    %v3544 = vrot.slane %v3409, 7
    %v3545 = vsel %vm1502, %v3542, %v3544
    %v3546 = vrot.slane %v3410, 7
    %v3547 = vsel %vm1502, %v3544, %v3546
    %v3548 = vrot.slane %v3411, 7
    %v3549 = vsel %vm1502, %v3546, %v3548
    %v3550 = vrot.slane %v3412, 7
    %v3551 = vsel %vm1502, %v3548, %v3550
    %v3552 = vrot.slane %v3413, 7
    %v3553 = vsel %vm1502, %v3550, %v3552
    %v3554 = vrot.slane %v3414, 7
    %v3555 = vsel %vm1502, %v3552, %v3554
    %v3556 = vrot.slane %v3415, 7
    %v3557 = vsel %vm1502, %v3554, %v3556
    %v3558 = vrot.slane %v3416, 7
    %v3559 = vsel %vm1502, %v3556, %v3558
    %v3560 = vrot.slane %v3417, 7
    %v3561 = vsel %vm1502, %v3558, %v3560
    %v3562 = vrot.slane %v3418, 7
    %v3563 = vsel %vm1502, %v3560, %v3562
    %v3564 = vrot.slane %v3419, 7
    %v3565 = vsel %vm1502, %v3562, %v3564
    %v3566 = vrot.slane %v3420, 7
    %v3567 = vsel %vm1502, %v3564, %v3566
    %v3568 = vrot.slane %v3421, 7
    %v3569 = vsel %vm1502, %v3566, %v3568
    %v3570 = vrot.slane %v3422, 7
    %v3571 = vsel %vm1502, %v3568, %v3570
    %v3572 = vrot.slane %v3423, 7
    %v3573 = vsel %vm1502, %v3570, %v3572
    %v3574 = vrot.slane %v3424, 7
    %v3575 = vsel %vm1502, %v3572, %v3574
    %v3576 = vrot.slane %v3425, 7
    %v3577 = vsel %vm1502, %v3574, %v3576
    %v3578 = vrot.slane %v3426, 7
    %v3579 = vsel %vm1502, %v3576, %v3578
    %v3580 = vrot.slane %v3427, 7
    %v3581 = vsel %vm1502, %v3578, %v3580
    %v3582 = vrot.slane %v3428, 7
    %v3583 = vsel %vm1502, %v3580, %v3582
    %v3584 = vrot.slane %v3429, 7
    %v3585 = vsel %vm1502, %v3582, %v3584
    %v3586 = vrot.slane %v3430, 7
    %v3587 = vsel %vm1502, %v3584, %v3586
    %v3588 = vrot.slane %v3431, 7
    %v3589 = vsel %vm1502, %v3586, %v3588
    %v3590 = vrot.slane %v3432, 7
    %v3591 = vsel %vm1502, %v3588, %v3590
    %v3592 = vrot.slane %v3433, 7
    %v3593 = vsel %vm1502, %v3590, %v3592
    %v3594 = vrot.slane %v3434, 7
    %v3595 = vsel %vm1502, %v3592, %v3594
    %v3596 = vrot.slane %v3435, 7
    %v3597 = vsel %vm1502, %v3594, %v3596
    %v3598 = vrot.slane %v3436, 7
    %v3599 = vsel %vm1502, %v3596, %v3598
    %v3600 = vrot.slane %v3437, 7
    %v3601 = vsel %vm1502, %v3598, %v3600
    %v3602 = vrot.slane %v3438, 7
    %v3603 = vsel %vm1502, %v3600, %v3602
    %v3604 = vrot.slane %v3439, 7
    %v3605 = vsel %vm1502, %v3602, %v3604
    %v3606 = vrot.slane %v3440, 7
    %v3607 = vsel %vm1502, %v3604, %v3606
    %v3608 = vrot.slane %v3441, 7
    %v3609 = vsel %vm1502, %v3606, %v3608
    %v3610 = vrot.slane %v3442, 7
    %v3611 = vsel %vm1502, %v3608, %v3610
    %v3612 = vrot.slane %v3443, 7
    %v3613 = vsel %vm1502, %v3610, %v3612
    %v3614 = vrot.slane %v3444, 7
    %v3615 = vsel %vm1502, %v3612, %v3614
    %v3616 = vrot.slane %v3445, 7
    %v3617 = vsel %vm1502, %v3614, %v3616
    %v3618 = vrot.slane %v3446, 7
    %v3619 = vsel %vm1502, %v3616, %v3618
    %v3620 = vrot.slane %v3447, 7
    %v3621 = vsel %vm1502, %v3618, %v3620
    %v3622 = vrot.slane %v3448, 7
    %v3623 = vsel %vm1502, %v3620, %v3622
    %v3624 = vrot.slane %v3449, 7
    %v3625 = vsel %vm1502, %v3622, %v3624
    %v3626 = vrot.slane %v3450, 7
    %v3627 = vsel %vm1502, %v3624, %v3626
    %v3628 = vrot.slane %v3451, 7
    %v3629 = vsel %vm1502, %v3626, %v3628
    %v3630 = vrot.slane %v3452, 7
    %v3631 = vsel %vm1502, %v3628, %v3630
    %v3632 = vrot.slane %v3453, 7
    %v3633 = vsel %vm1502, %v3630, %v3632
    %v3634 = vrot.slane %v3454, 7
    %v3635 = vsel %vm1502, %v3632, %v3634
    %v3636 = vrot.slane %v3455, 7
    %v3637 = vsel %vm1502, %v3634, %v3636
    %v3638 = vrot.slane %v3456, 7
    %v3639 = vsel %vm1502, %v3636, %v3638
    %v3640 = vrot.slane %v3457, 7
    %v3641 = vsel %vm1502, %v3638, %v3640
    %v3642 = vrot.slane %v3458, 7
    %v3643 = vsel %vm1502, %v3640, %v3642
    %v3644 = vrot.slane %v3459, 7
    %v3645 = vsel %vm1502, %v3642, %v3644
    %v3646 = vrot.slane %v3460, 7
    %v3647 = vsel %vm1502, %v3644, %v3646
    %v3648 = vrot.slane %v3461, 7
    %v3649 = vsel %vm1502, %v3646, %v3648
    %v3650 = vrot.slane %v3462, 7
    %v3651 = vsel %vm1502, %v3648, %v3650
    %v3652 = vrot.slane %v3463, 7
    %v3653 = vsel %vm1502, %v3650, %v3652
    %v3654 = vrot.slane %v3464, 7
    %v3655 = vsel %vm1502, %v3652, %v3654
    %v3656 = vrot.slane %v3465, 7
    %v3657 = vsel %vm1502, %v3654, %v3656
    %v3658 = vrot.slane %v3466, 7
    %v3659 = vsel %vm1502, %v3656, %v3658
    %v3660 = vrot.slane %v3467, 7
    %v3661 = vsel %vm1502, %v3658, %v3660
    %v3662 = vrot.slane %v3468, 7
    %v3663 = vsel %vm1502, %v3660, %v3662
    %v3664 = vrot.slane %v3469, 7
    %v3665 = vsel %vm1502, %v3662, %v3664
    %v3666 = vsel %vm1031, %v3539, 0
    %v3668 = vsel %vm1031, %v3541, 0
    %v3670 = vsel %vm1031, %v3543, 0
    %v3672 = vsel %vm1031, %v3545, 0
    %v3674 = vsel %vm1031, %v3547, 0
    %v3676 = vsel %vm1031, %v3549, 0
    %v3678 = vsel %vm1031, %v3551, 0
    %v3680 = vsel %vm1031, %v3553, 0
    %v3682 = vsel %vm1031, %v3555, 0
    %v3684 = vsel %vm1031, %v3557, 0
    %v3686 = vsel %vm1031, %v3559, 0
    %v3688 = vsel %vm1031, %v3561, 0
    %v3690 = vsel %vm1031, %v3563, 0
    %v3692 = vsel %vm1031, %v3565, 0
    %v3694 = vsel %vm1031, %v3567, 0
    %v3696 = vsel %vm1031, %v3569, 0
    %v3698 = vsel %vm1031, %v3571, 0
    %v3700 = vsel %vm1031, %v3573, 0
    %v3702 = vsel %vm1031, %v3575, 0
    %v3704 = vsel %vm1031, %v3577, 0
    %v3706 = vsel %vm1031, %v3579, 0
    %v3708 = vsel %vm1031, %v3581, 0
    %v3710 = vsel %vm1031, %v3583, 0
    %v3712 = vsel %vm1031, %v3585, 0
    %v3714 = vsel %vm1031, %v3587, 0
    %v3716 = vsel %vm1031, %v3589, 0
    %v3718 = vsel %vm1031, %v3591, 0
    %v3720 = vsel %vm1031, %v3593, 0
    %v3722 = vsel %vm1031, %v3595, 0
    %v3724 = vsel %vm1031, %v3597, 0
    %v3726 = vsel %vm1031, %v3599, 0
    %v3728 = vsel %vm1031, %v3601, 0
    %v3730 = vsel %vm1031, %v3603, 0
    %v3732 = vsel %vm1031, %v3605, 0
    %v3734 = vsel %vm1031, %v3607, 0
    %v3736 = vsel %vm1031, %v3609, 0
    %v3738 = vsel %vm1031, %v3611, 0
    %v3740 = vsel %vm1031, %v3613, 0
    %v3742 = vsel %vm1031, %v3615, 0
    %v3744 = vsel %vm1031, %v3617, 0
    %v3746 = vsel %vm1031, %v3619, 0
    %v3748 = vsel %vm1031, %v3621, 0
    %v3750 = vsel %vm1031, %v3623, 0
    %v3752 = vsel %vm1031, %v3625, 0
    %v3754 = vsel %vm1031, %v3627, 0
    %v3756 = vsel %vm1031, %v3629, 0
    %v3758 = vsel %vm1031, %v3631, 0
    %v3760 = vsel %vm1031, %v3633, 0
    %v3762 = vsel %vm1031, %v3635, 0
    %v3764 = vsel %vm1031, %v3637, 0
    %v3766 = vsel %vm1031, %v3639, 0
    %v3768 = vsel %vm1031, %v3641, 0
    %v3770 = vsel %vm1031, %v3643, 0
    %v3772 = vsel %vm1031, %v3645, 0
    %v3774 = vsel %vm1031, %v3647, 0
    %v3776 = vsel %vm1031, %v3649, 0
    %v3778 = vsel %vm1031, %v3651, 0
    %v3780 = vsel %vm1031, %v3653, 0
    %v3782 = vsel %vm1031, %v3655, 0
    %v3784 = vsel %vm1031, %v3657, 0
    %v3786 = vsel %vm1031, %v3659, 0
    %v3788 = vsel %vm1031, %v3661, 0
    %v3790 = vsel %vm1031, %v3663, 0
    %v3792 = vsel %vm1031, %v3665, 0
    %v3795 = vsel %vm1224, %v3471, 0
    %3797 = vmatpush.msra.mxu0 0.0
    %3798 = vmatpush.msra.mxu0 0.0
    %3799 = vmatpush.msra.mxu0 0.0
    %3800 = vmatpush.msra.mxu0 0.0
    %3801 = vmatpush.msra.mxu0 0.0
    %3802 = vmatpush.msra.mxu0 0.0
    %3803 = vmatpush.msra.mxu0 0.0
    %3804 = vmatpush.msra.mxu0 0.0
    %3805 = vmatpush.msra.mxu0 0.0
    %3806 = vmatpush.msra.mxu0 0.0
    %3807 = vmatpush.msra.mxu0 0.0
    %3808 = vmatpush.msra.mxu0 0.0
    %3809 = vmatpush.msra.mxu0 0.0
    %3810 = vmatpush.msra.mxu0 0.0
    %3811 = vmatpush.msra.mxu0 0.0
    %3812 = vmatpush.msra.mxu0 %v3795
    %3813 = vmatmul.f32.gmra.mxu0 %v3666
    %v3814 = vpop.f32.mrf.mxu0
    %v3815 = vadd.f32 0.0, %v3814
    %3816 = vmatmul.f32.gmra.mxu0 %v3668
    %v3817 = vpop.f32.mrf.mxu0
    %v3818 = vadd.f32 0.0, %v3817
    %3819 = vmatmul.f32.gmra.mxu0 %v3670
    %v3820 = vpop.f32.mrf.mxu0
    %v3821 = vadd.f32 0.0, %v3820
    %3822 = vmatmul.f32.gmra.mxu0 %v3672
    %v3823 = vpop.f32.mrf.mxu0
    %v3824 = vadd.f32 0.0, %v3823
    %3825 = vmatmul.f32.gmra.mxu0 %v3674
    %v3826 = vpop.f32.mrf.mxu0
    %v3827 = vadd.f32 0.0, %v3826
    %3828 = vmatmul.f32.gmra.mxu0 %v3676
    %v3829 = vpop.f32.mrf.mxu0
    %v3830 = vadd.f32 0.0, %v3829
    %3831 = vmatmul.f32.gmra.mxu0 %v3678
    %v3832 = vpop.f32.mrf.mxu0
    %v3833 = vadd.f32 0.0, %v3832
    %3834 = vmatmul.f32.gmra.mxu0 %v3680
    %v3835 = vpop.f32.mrf.mxu0
    %v3836 = vadd.f32 0.0, %v3835
    %3837 = vmatmul.f32.gmra.mxu0 %v3682
    %v3838 = vpop.f32.mrf.mxu0
    %v3839 = vadd.f32 0.0, %v3838
    %3840 = vmatmul.f32.gmra.mxu0 %v3684
    %v3841 = vpop.f32.mrf.mxu0
    %v3842 = vadd.f32 0.0, %v3841
    %3843 = vmatmul.f32.gmra.mxu0 %v3686
    %v3844 = vpop.f32.mrf.mxu0
    %v3845 = vadd.f32 0.0, %v3844
    %3846 = vmatmul.f32.gmra.mxu0 %v3688
    %v3847 = vpop.f32.mrf.mxu0
    %v3848 = vadd.f32 0.0, %v3847
    %3849 = vmatmul.f32.gmra.mxu0 %v3690
    %v3850 = vpop.f32.mrf.mxu0
    %v3851 = vadd.f32 0.0, %v3850
    %3852 = vmatmul.f32.gmra.mxu0 %v3692
    %v3853 = vpop.f32.mrf.mxu0
    %v3854 = vadd.f32 0.0, %v3853
    %3855 = vmatmul.f32.gmra.mxu0 %v3694
    %v3856 = vpop.f32.mrf.mxu0
    %v3857 = vadd.f32 0.0, %v3856
    %3858 = vmatmul.f32.gmra.mxu0 %v3696
    %v3859 = vpop.f32.mrf.mxu0
    %v3860 = vadd.f32 0.0, %v3859
    %3861 = vmatmul.f32.gmra.mxu0 %v3698
    %v3862 = vpop.f32.mrf.mxu0
    %v3863 = vadd.f32 0.0, %v3862
    %3864 = vmatmul.f32.gmra.mxu0 %v3700
    %v3865 = vpop.f32.mrf.mxu0
    %v3866 = vadd.f32 0.0, %v3865
    %3867 = vmatmul.f32.gmra.mxu0 %v3702
    %v3868 = vpop.f32.mrf.mxu0
    %v3869 = vadd.f32 0.0, %v3868
    %3870 = vmatmul.f32.gmra.mxu0 %v3704
    %v3871 = vpop.f32.mrf.mxu0
    %v3872 = vadd.f32 0.0, %v3871
    %3873 = vmatmul.f32.gmra.mxu0 %v3706
    %v3874 = vpop.f32.mrf.mxu0
    %v3875 = vadd.f32 0.0, %v3874
    %3876 = vmatmul.f32.gmra.mxu0 %v3708
    %v3877 = vpop.f32.mrf.mxu0
    %v3878 = vadd.f32 0.0, %v3877
    %3879 = vmatmul.f32.gmra.mxu0 %v3710
    %v3880 = vpop.f32.mrf.mxu0
    %v3881 = vadd.f32 0.0, %v3880
    %3882 = vmatmul.f32.gmra.mxu0 %v3712
    %v3883 = vpop.f32.mrf.mxu0
    %v3884 = vadd.f32 0.0, %v3883
    %3885 = vmatmul.f32.gmra.mxu0 %v3714
    %v3886 = vpop.f32.mrf.mxu0
    %v3887 = vadd.f32 0.0, %v3886
    %3888 = vmatmul.f32.gmra.mxu0 %v3716
    %v3889 = vpop.f32.mrf.mxu0
    %v3890 = vadd.f32 0.0, %v3889
    %3891 = vmatmul.f32.gmra.mxu0 %v3718
    %v3892 = vpop.f32.mrf.mxu0
    %v3893 = vadd.f32 0.0, %v3892
    %3894 = vmatmul.f32.gmra.mxu0 %v3720
    %v3895 = vpop.f32.mrf.mxu0
    %v3896 = vadd.f32 0.0, %v3895
    %3897 = vmatmul.f32.gmra.mxu0 %v3722
    %v3898 = vpop.f32.mrf.mxu0
    %v3899 = vadd.f32 0.0, %v3898
    %3900 = vmatmul.f32.gmra.mxu0 %v3724
    %v3901 = vpop.f32.mrf.mxu0
    %v3902 = vadd.f32 0.0, %v3901
    %3903 = vmatmul.f32.gmra.mxu0 %v3726
    %v3904 = vpop.f32.mrf.mxu0
    %v3905 = vadd.f32 0.0, %v3904
    %3906 = vmatmul.f32.gmra.mxu0 %v3728
    %v3907 = vpop.f32.mrf.mxu0
    %v3908 = vadd.f32 0.0, %v3907
    %3909 = vmatmul.f32.gmra.mxu0 %v3730
    %v3910 = vpop.f32.mrf.mxu0
    %v3911 = vadd.f32 0.0, %v3910
    %3912 = vmatmul.f32.gmra.mxu0 %v3732
    %v3913 = vpop.f32.mrf.mxu0
    %v3914 = vadd.f32 0.0, %v3913
    %3915 = vmatmul.f32.gmra.mxu0 %v3734
    %v3916 = vpop.f32.mrf.mxu0
    %v3917 = vadd.f32 0.0, %v3916
    %3918 = vmatmul.f32.gmra.mxu0 %v3736
    %v3919 = vpop.f32.mrf.mxu0
    %v3920 = vadd.f32 0.0, %v3919
    %3921 = vmatmul.f32.gmra.mxu0 %v3738
    %v3922 = vpop.f32.mrf.mxu0
    %v3923 = vadd.f32 0.0, %v3922
    %3924 = vmatmul.f32.gmra.mxu0 %v3740
    %v3925 = vpop.f32.mrf.mxu0
    %v3926 = vadd.f32 0.0, %v3925
    %3927 = vmatmul.f32.gmra.mxu0 %v3742
    %v3928 = vpop.f32.mrf.mxu0
    %v3929 = vadd.f32 0.0, %v3928
    %3930 = vmatmul.f32.gmra.mxu0 %v3744
    %v3931 = vpop.f32.mrf.mxu0
    %v3932 = vadd.f32 0.0, %v3931
    %3933 = vmatmul.f32.gmra.mxu0 %v3746
    %v3934 = vpop.f32.mrf.mxu0
    %v3935 = vadd.f32 0.0, %v3934
    %3936 = vmatmul.f32.gmra.mxu0 %v3748
    %v3937 = vpop.f32.mrf.mxu0
    %v3938 = vadd.f32 0.0, %v3937
    %3939 = vmatmul.f32.gmra.mxu0 %v3750
    %v3940 = vpop.f32.mrf.mxu0
    %v3941 = vadd.f32 0.0, %v3940
    %3942 = vmatmul.f32.gmra.mxu0 %v3752
    %v3943 = vpop.f32.mrf.mxu0
    %v3944 = vadd.f32 0.0, %v3943
    %3945 = vmatmul.f32.gmra.mxu0 %v3754
    %v3946 = vpop.f32.mrf.mxu0
    %v3947 = vadd.f32 0.0, %v3946
    %3948 = vmatmul.f32.gmra.mxu0 %v3756
    %v3949 = vpop.f32.mrf.mxu0
    %v3950 = vadd.f32 0.0, %v3949
    %3951 = vmatmul.f32.gmra.mxu0 %v3758
    %v3952 = vpop.f32.mrf.mxu0
    %v3953 = vadd.f32 0.0, %v3952
    %3954 = vmatmul.f32.gmra.mxu0 %v3760
    %v3955 = vpop.f32.mrf.mxu0
    %v3956 = vadd.f32 0.0, %v3955
    %3957 = vmatmul.f32.gmra.mxu0 %v3762
    %v3958 = vpop.f32.mrf.mxu0
    %v3959 = vadd.f32 0.0, %v3958
    %3960 = vmatmul.f32.gmra.mxu0 %v3764
    %v3961 = vpop.f32.mrf.mxu0
    %v3962 = vadd.f32 0.0, %v3961
    %3963 = vmatmul.f32.gmra.mxu0 %v3766
    %v3964 = vpop.f32.mrf.mxu0
    %v3965 = vadd.f32 0.0, %v3964
    %3966 = vmatmul.f32.gmra.mxu0 %v3768
    %v3967 = vpop.f32.mrf.mxu0
    %v3968 = vadd.f32 0.0, %v3967
    %3969 = vmatmul.f32.gmra.mxu0 %v3770
    %v3970 = vpop.f32.mrf.mxu0
    %v3971 = vadd.f32 0.0, %v3970
    %3972 = vmatmul.f32.gmra.mxu0 %v3772
    %v3973 = vpop.f32.mrf.mxu0
    %v3974 = vadd.f32 0.0, %v3973
    %3975 = vmatmul.f32.gmra.mxu0 %v3774
    %v3976 = vpop.f32.mrf.mxu0
    %v3977 = vadd.f32 0.0, %v3976
    %3978 = vmatmul.f32.gmra.mxu0 %v3776
    %v3979 = vpop.f32.mrf.mxu0
    %v3980 = vadd.f32 0.0, %v3979
    %3981 = vmatmul.f32.gmra.mxu0 %v3778
    %v3982 = vpop.f32.mrf.mxu0
    %v3983 = vadd.f32 0.0, %v3982
    %3984 = vmatmul.f32.gmra.mxu0 %v3780
    %v3985 = vpop.f32.mrf.mxu0
    %v3986 = vadd.f32 0.0, %v3985
    %3987 = vmatmul.f32.gmra.mxu0 %v3782
    %v3988 = vpop.f32.mrf.mxu0
    %v3989 = vadd.f32 0.0, %v3988
    %3990 = vmatmul.f32.gmra.mxu0 %v3784
    %v3991 = vpop.f32.mrf.mxu0
    %v3992 = vadd.f32 0.0, %v3991
    %3993 = vmatmul.f32.gmra.mxu0 %v3786
    %v3994 = vpop.f32.mrf.mxu0
    %v3995 = vadd.f32 0.0, %v3994
    %3996 = vmatmul.f32.gmra.mxu0 %v3788
    %v3997 = vpop.f32.mrf.mxu0
    %v3998 = vadd.f32 0.0, %v3997
    %3999 = vmatmul.f32.gmra.mxu0 %v3790
    %v4000 = vpop.f32.mrf.mxu0
    %v4001 = vadd.f32 0.0, %v4000
    %4002 = vmatmul.f32.gmra.mxu0 %v3792
    %v4003 = vpop.f32.mrf.mxu0
    %v4004 = vadd.f32 0.0, %v4003
    %4005 = vdwg.mxu0
    %v4006 = vadd.f32 %v2957, %v3815
    %v4007 = vadd.f32 %v2958, %v3818
    %v4008 = vadd.f32 %v2959, %v3821
    %v4009 = vadd.f32 %v2960, %v3824
    %v4010 = vadd.f32 %v2961, %v3827
    %v4011 = vadd.f32 %v2962, %v3830
    %v4012 = vadd.f32 %v2963, %v3833
    %v4013 = vadd.f32 %v2964, %v3836
    %v4014 = vadd.f32 %v2965, %v3839
    %v4015 = vadd.f32 %v2966, %v3842
    %v4016 = vadd.f32 %v2967, %v3845
    %v4017 = vadd.f32 %v2968, %v3848
    %v4018 = vadd.f32 %v2969, %v3851
    %v4019 = vadd.f32 %v2970, %v3854
    %v4020 = vadd.f32 %v2971, %v3857
    %v4021 = vadd.f32 %v2972, %v3860
    %v4022 = vadd.f32 %v2973, %v3863
    %v4023 = vadd.f32 %v2974, %v3866
    %v4024 = vadd.f32 %v2975, %v3869
    %v4025 = vadd.f32 %v2976, %v3872
    %v4026 = vadd.f32 %v2977, %v3875
    %v4027 = vadd.f32 %v2978, %v3878
    %v4028 = vadd.f32 %v2979, %v3881
    %v4029 = vadd.f32 %v2980, %v3884
    %v4030 = vadd.f32 %v2981, %v3887
    %v4031 = vadd.f32 %v2982, %v3890
    %v4032 = vadd.f32 %v2983, %v3893
    %v4033 = vadd.f32 %v2984, %v3896
    %v4034 = vadd.f32 %v2985, %v3899
    %v4035 = vadd.f32 %v2986, %v3902
    %v4036 = vadd.f32 %v2987, %v3905
    %v4037 = vadd.f32 %v2988, %v3908
    %v4038 = vadd.f32 %v2989, %v3911
    %v4039 = vadd.f32 %v2990, %v3914
    %v4040 = vadd.f32 %v2991, %v3917
    %v4041 = vadd.f32 %v2992, %v3920
    %v4042 = vadd.f32 %v2993, %v3923
    %v4043 = vadd.f32 %v2994, %v3926
    %v4044 = vadd.f32 %v2995, %v3929
    %v4045 = vadd.f32 %v2996, %v3932
    %v4046 = vadd.f32 %v2997, %v3935
    %v4047 = vadd.f32 %v2998, %v3938
    %v4048 = vadd.f32 %v2999, %v3941
    %v4049 = vadd.f32 %v3000, %v3944
    %v4050 = vadd.f32 %v3001, %v3947
    %v4051 = vadd.f32 %v3002, %v3950
    %v4052 = vadd.f32 %v3003, %v3953
    %v4053 = vadd.f32 %v3004, %v3956
    %v4054 = vadd.f32 %v3005, %v3959
    %v4055 = vadd.f32 %v3006, %v3962
    %v4056 = vadd.f32 %v3007, %v3965
    %v4057 = vadd.f32 %v3008, %v3968
    %v4058 = vadd.f32 %v3009, %v3971
    %v4059 = vadd.f32 %v3010, %v3974
    %v4060 = vadd.f32 %v3011, %v3977
    %v4061 = vadd.f32 %v3012, %v3980
    %v4062 = vadd.f32 %v3013, %v3983
    %v4063 = vadd.f32 %v3014, %v3986
    %v4064 = vadd.f32 %v3015, %v3989
    %v4065 = vadd.f32 %v3016, %v3992
    %v4066 = vadd.f32 %v3017, %v3995
    %v4067 = vadd.f32 %v3018, %v3998
    %v4068 = vadd.f32 %v3019, %v4001
    %v4069 = vadd.f32 %v3020, %v4004
    %s4070 = scalar_lea.vmem %s1, 16
    %v4071 = vld [vmem:[%s4070] sm:$0x7]
    %v4073 = vsel %vm1031, %v66, 0
    %v4076 = vsel %vm1031, %v67, 0
    %v4079 = vsel %vm1031, %v68, 0
    %v4082 = vsel %vm1031, %v69, 0
    %v4085 = vsel %vm1031, %v70, 0
    %v4088 = vsel %vm1031, %v71, 0
    %v4091 = vsel %vm1031, %v72, 0
    %v4094 = vsel %vm1031, %v73, 0
    %v4097 = vsel %vm1031, %v74, 0
    %v4100 = vsel %vm1031, %v75, 0
    %v4103 = vsel %vm1031, %v76, 0
    %v4106 = vsel %vm1031, %v77, 0
    %v4109 = vsel %vm1031, %v78, 0
    %v4112 = vsel %vm1031, %v79, 0
    %v4115 = vsel %vm1031, %v80, 0
    %v4118 = vsel %vm1031, %v81, 0
    %v4121 = vsel %vm1031, %v82, 0
    %v4124 = vsel %vm1031, %v83, 0
    %v4127 = vsel %vm1031, %v84, 0
    %v4130 = vsel %vm1031, %v85, 0
    %v4133 = vsel %vm1031, %v86, 0
    %v4136 = vsel %vm1031, %v87, 0
    %v4139 = vsel %vm1031, %v88, 0
    %v4142 = vsel %vm1031, %v89, 0
    %v4145 = vsel %vm1031, %v90, 0
    %v4148 = vsel %vm1031, %v91, 0
    %v4151 = vsel %vm1031, %v92, 0
    %v4154 = vsel %vm1031, %v93, 0
    %v4157 = vsel %vm1031, %v94, 0
    %v4160 = vsel %vm1031, %v95, 0
    %v4163 = vsel %vm1031, %v96, 0
    %v4166 = vsel %vm1031, %v97, 0
    %v4169 = vsel %vm1031, %v98, 0
    %v4172 = vsel %vm1031, %v99, 0
    %v4175 = vsel %vm1031, %v100, 0
    %v4178 = vsel %vm1031, %v101, 0
    %v4181 = vsel %vm1031, %v102, 0
    %v4184 = vsel %vm1031, %v103, 0
    %v4187 = vsel %vm1031, %v104, 0
    %v4190 = vsel %vm1031, %v105, 0
    %v4193 = vsel %vm1031, %v106, 0
    %v4196 = vsel %vm1031, %v107, 0
    %v4199 = vsel %vm1031, %v108, 0
    %v4202 = vsel %vm1031, %v109, 0
    %v4205 = vsel %vm1031, %v110, 0
    %v4208 = vsel %vm1031, %v111, 0
    %v4211 = vsel %vm1031, %v112, 0
    %v4214 = vsel %vm1031, %v113, 0
    %v4217 = vsel %vm1031, %v114, 0
    %v4220 = vsel %vm1031, %v115, 0
    %v4223 = vsel %vm1031, %v116, 0
    %v4226 = vsel %vm1031, %v117, 0
    %v4229 = vsel %vm1031, %v118, 0
    %v4232 = vsel %vm1031, %v119, 0
    %v4235 = vsel %vm1031, %v120, 0
    %v4238 = vsel %vm1031, %v121, 0
    %v4241 = vsel %vm1031, %v122, 0
    %v4244 = vsel %vm1031, %v123, 0
    %v4247 = vsel %vm1031, %v124, 0
    %v4250 = vsel %vm1031, %v125, 0
    %v4253 = vsel %vm1031, %v126, 0
    %v4256 = vsel %vm1031, %v127, 0
    %v4259 = vsel %vm1031, %v128, 0
    %v4262 = vsel %vm1031, %v129, 0
    %v4265 = vsel %vm1224, %v4071, 0
    %4267 = vmatpush.msra.mxu0 0.0
    %4268 = vmatpush.msra.mxu0 0.0
    %4269 = vmatpush.msra.mxu0 0.0
    %4270 = vmatpush.msra.mxu0 0.0
    %4271 = vmatpush.msra.mxu0 0.0
    %4272 = vmatpush.msra.mxu0 0.0
    %4273 = vmatpush.msra.mxu0 0.0
    %4274 = vmatpush.msra.mxu0 0.0
    %4275 = vmatpush.msra.mxu0 0.0
    %4276 = vmatpush.msra.mxu0 0.0
    %4277 = vmatpush.msra.mxu0 0.0
    %4278 = vmatpush.msra.mxu0 0.0
    %4279 = vmatpush.msra.mxu0 0.0
    %4280 = vmatpush.msra.mxu0 0.0
    %4281 = vmatpush.msra.mxu0 0.0
    %4282 = vmatpush.msra.mxu0 %v4265
    %4283 = vmatmul.f32.gmra.mxu0 %v4073
    %v4284 = vpop.f32.mrf.mxu0
    %v4285 = vadd.f32 0.0, %v4284
    %4286 = vmatmul.f32.gmra.mxu0 %v4076
    %v4287 = vpop.f32.mrf.mxu0
    %v4288 = vadd.f32 0.0, %v4287
    %4289 = vmatmul.f32.gmra.mxu0 %v4079
    %v4290 = vpop.f32.mrf.mxu0
    %v4291 = vadd.f32 0.0, %v4290
    %4292 = vmatmul.f32.gmra.mxu0 %v4082
    %v4293 = vpop.f32.mrf.mxu0
    %v4294 = vadd.f32 0.0, %v4293
    %4295 = vmatmul.f32.gmra.mxu0 %v4085
    %v4296 = vpop.f32.mrf.mxu0
    %v4297 = vadd.f32 0.0, %v4296
    %4298 = vmatmul.f32.gmra.mxu0 %v4088
    %v4299 = vpop.f32.mrf.mxu0
    %v4300 = vadd.f32 0.0, %v4299
    %4301 = vmatmul.f32.gmra.mxu0 %v4091
    %v4302 = vpop.f32.mrf.mxu0
    %v4303 = vadd.f32 0.0, %v4302
    %4304 = vmatmul.f32.gmra.mxu0 %v4094
    %v4305 = vpop.f32.mrf.mxu0
    %v4306 = vadd.f32 0.0, %v4305
    %4307 = vmatmul.f32.gmra.mxu0 %v4097
    %v4308 = vpop.f32.mrf.mxu0
    %v4309 = vadd.f32 0.0, %v4308
    %4310 = vmatmul.f32.gmra.mxu0 %v4100
    %v4311 = vpop.f32.mrf.mxu0
    %v4312 = vadd.f32 0.0, %v4311
    %4313 = vmatmul.f32.gmra.mxu0 %v4103
    %v4314 = vpop.f32.mrf.mxu0
    %v4315 = vadd.f32 0.0, %v4314
    %4316 = vmatmul.f32.gmra.mxu0 %v4106
    %v4317 = vpop.f32.mrf.mxu0
    %v4318 = vadd.f32 0.0, %v4317
    %4319 = vmatmul.f32.gmra.mxu0 %v4109
    %v4320 = vpop.f32.mrf.mxu0
    %v4321 = vadd.f32 0.0, %v4320
    %4322 = vmatmul.f32.gmra.mxu0 %v4112
    %v4323 = vpop.f32.mrf.mxu0
    %v4324 = vadd.f32 0.0, %v4323
    %4325 = vmatmul.f32.gmra.mxu0 %v4115
    %v4326 = vpop.f32.mrf.mxu0
    %v4327 = vadd.f32 0.0, %v4326
    %4328 = vmatmul.f32.gmra.mxu0 %v4118
    %v4329 = vpop.f32.mrf.mxu0
    %v4330 = vadd.f32 0.0, %v4329
    %4331 = vmatmul.f32.gmra.mxu0 %v4121
    %v4332 = vpop.f32.mrf.mxu0
    %v4333 = vadd.f32 0.0, %v4332
    %4334 = vmatmul.f32.gmra.mxu0 %v4124
    %v4335 = vpop.f32.mrf.mxu0
    %v4336 = vadd.f32 0.0, %v4335
    %4337 = vmatmul.f32.gmra.mxu0 %v4127
    %v4338 = vpop.f32.mrf.mxu0
    %v4339 = vadd.f32 0.0, %v4338
    %4340 = vmatmul.f32.gmra.mxu0 %v4130
    %v4341 = vpop.f32.mrf.mxu0
    %v4342 = vadd.f32 0.0, %v4341
    %4343 = vmatmul.f32.gmra.mxu0 %v4133
    %v4344 = vpop.f32.mrf.mxu0
    %v4345 = vadd.f32 0.0, %v4344
    %4346 = vmatmul.f32.gmra.mxu0 %v4136
    %v4347 = vpop.f32.mrf.mxu0
    %v4348 = vadd.f32 0.0, %v4347
    %4349 = vmatmul.f32.gmra.mxu0 %v4139
    %v4350 = vpop.f32.mrf.mxu0
    %v4351 = vadd.f32 0.0, %v4350
    %4352 = vmatmul.f32.gmra.mxu0 %v4142
    %v4353 = vpop.f32.mrf.mxu0
    %v4354 = vadd.f32 0.0, %v4353
    %4355 = vmatmul.f32.gmra.mxu0 %v4145
    %v4356 = vpop.f32.mrf.mxu0
    %v4357 = vadd.f32 0.0, %v4356
    %4358 = vmatmul.f32.gmra.mxu0 %v4148
    %v4359 = vpop.f32.mrf.mxu0
    %v4360 = vadd.f32 0.0, %v4359
    %4361 = vmatmul.f32.gmra.mxu0 %v4151
    %v4362 = vpop.f32.mrf.mxu0
    %v4363 = vadd.f32 0.0, %v4362
    %4364 = vmatmul.f32.gmra.mxu0 %v4154
    %v4365 = vpop.f32.mrf.mxu0
    %v4366 = vadd.f32 0.0, %v4365
    %4367 = vmatmul.f32.gmra.mxu0 %v4157
    %v4368 = vpop.f32.mrf.mxu0
    %v4369 = vadd.f32 0.0, %v4368
    %4370 = vmatmul.f32.gmra.mxu0 %v4160
    %v4371 = vpop.f32.mrf.mxu0
    %v4372 = vadd.f32 0.0, %v4371
    %4373 = vmatmul.f32.gmra.mxu0 %v4163
    %v4374 = vpop.f32.mrf.mxu0
    %v4375 = vadd.f32 0.0, %v4374
    %4376 = vmatmul.f32.gmra.mxu0 %v4166
    %v4377 = vpop.f32.mrf.mxu0
    %v4378 = vadd.f32 0.0, %v4377
    %4379 = vmatmul.f32.gmra.mxu0 %v4169
    %v4380 = vpop.f32.mrf.mxu0
    %v4381 = vadd.f32 0.0, %v4380
    %4382 = vmatmul.f32.gmra.mxu0 %v4172
    %v4383 = vpop.f32.mrf.mxu0
    %v4384 = vadd.f32 0.0, %v4383
    %4385 = vmatmul.f32.gmra.mxu0 %v4175
    %v4386 = vpop.f32.mrf.mxu0
    %v4387 = vadd.f32 0.0, %v4386
    %4388 = vmatmul.f32.gmra.mxu0 %v4178
    %v4389 = vpop.f32.mrf.mxu0
    %v4390 = vadd.f32 0.0, %v4389
    %4391 = vmatmul.f32.gmra.mxu0 %v4181
    %v4392 = vpop.f32.mrf.mxu0
    %v4393 = vadd.f32 0.0, %v4392
    %4394 = vmatmul.f32.gmra.mxu0 %v4184
    %v4395 = vpop.f32.mrf.mxu0
    %v4396 = vadd.f32 0.0, %v4395
    %4397 = vmatmul.f32.gmra.mxu0 %v4187
    %v4398 = vpop.f32.mrf.mxu0
    %v4399 = vadd.f32 0.0, %v4398
    %4400 = vmatmul.f32.gmra.mxu0 %v4190
    %v4401 = vpop.f32.mrf.mxu0
    %v4402 = vadd.f32 0.0, %v4401
    %4403 = vmatmul.f32.gmra.mxu0 %v4193
    %v4404 = vpop.f32.mrf.mxu0
    %v4405 = vadd.f32 0.0, %v4404
    %4406 = vmatmul.f32.gmra.mxu0 %v4196
    %v4407 = vpop.f32.mrf.mxu0
    %v4408 = vadd.f32 0.0, %v4407
    %4409 = vmatmul.f32.gmra.mxu0 %v4199
    %v4410 = vpop.f32.mrf.mxu0
    %v4411 = vadd.f32 0.0, %v4410
    %4412 = vmatmul.f32.gmra.mxu0 %v4202
    %v4413 = vpop.f32.mrf.mxu0
    %v4414 = vadd.f32 0.0, %v4413
    %4415 = vmatmul.f32.gmra.mxu0 %v4205
    %v4416 = vpop.f32.mrf.mxu0
    %v4417 = vadd.f32 0.0, %v4416
    %4418 = vmatmul.f32.gmra.mxu0 %v4208
    %v4419 = vpop.f32.mrf.mxu0
    %v4420 = vadd.f32 0.0, %v4419
    %4421 = vmatmul.f32.gmra.mxu0 %v4211
    %v4422 = vpop.f32.mrf.mxu0
    %v4423 = vadd.f32 0.0, %v4422
    %4424 = vmatmul.f32.gmra.mxu0 %v4214
    %v4425 = vpop.f32.mrf.mxu0
    %v4426 = vadd.f32 0.0, %v4425
    %4427 = vmatmul.f32.gmra.mxu0 %v4217
    %v4428 = vpop.f32.mrf.mxu0
    %v4429 = vadd.f32 0.0, %v4428
    %4430 = vmatmul.f32.gmra.mxu0 %v4220
    %v4431 = vpop.f32.mrf.mxu0
    %v4432 = vadd.f32 0.0, %v4431
    %4433 = vmatmul.f32.gmra.mxu0 %v4223
    %v4434 = vpop.f32.mrf.mxu0
    %v4435 = vadd.f32 0.0, %v4434
    %4436 = vmatmul.f32.gmra.mxu0 %v4226
    %v4437 = vpop.f32.mrf.mxu0
    %v4438 = vadd.f32 0.0, %v4437
    %4439 = vmatmul.f32.gmra.mxu0 %v4229
    %v4440 = vpop.f32.mrf.mxu0
    %v4441 = vadd.f32 0.0, %v4440
    %4442 = vmatmul.f32.gmra.mxu0 %v4232
    %v4443 = vpop.f32.mrf.mxu0
    %v4444 = vadd.f32 0.0, %v4443
    %4445 = vmatmul.f32.gmra.mxu0 %v4235
    %v4446 = vpop.f32.mrf.mxu0
    %v4447 = vadd.f32 0.0, %v4446
    %4448 = vmatmul.f32.gmra.mxu0 %v4238
    %v4449 = vpop.f32.mrf.mxu0
    %v4450 = vadd.f32 0.0, %v4449
    %4451 = vmatmul.f32.gmra.mxu0 %v4241
    %v4452 = vpop.f32.mrf.mxu0
    %v4453 = vadd.f32 0.0, %v4452
    %4454 = vmatmul.f32.gmra.mxu0 %v4244
    %v4455 = vpop.f32.mrf.mxu0
    %v4456 = vadd.f32 0.0, %v4455
    %4457 = vmatmul.f32.gmra.mxu0 %v4247
    %v4458 = vpop.f32.mrf.mxu0
    %v4459 = vadd.f32 0.0, %v4458
    %4460 = vmatmul.f32.gmra.mxu0 %v4250
    %v4461 = vpop.f32.mrf.mxu0
    %v4462 = vadd.f32 0.0, %v4461
    %4463 = vmatmul.f32.gmra.mxu0 %v4253
    %v4464 = vpop.f32.mrf.mxu0
    %v4465 = vadd.f32 0.0, %v4464
    %4466 = vmatmul.f32.gmra.mxu0 %v4256
    %v4467 = vpop.f32.mrf.mxu0
    %v4468 = vadd.f32 0.0, %v4467
    %4469 = vmatmul.f32.gmra.mxu0 %v4259
    %v4470 = vpop.f32.mrf.mxu0
    %v4471 = vadd.f32 0.0, %v4470
    %4472 = vmatmul.f32.gmra.mxu0 %v4262
    %v4473 = vpop.f32.mrf.mxu0
    %v4474 = vadd.f32 0.0, %v4473
    %4475 = vdwg.mxu0
    %v4476 = vadd.f32 %v4006, %v4285
    %v4477 = vadd.f32 %v4007, %v4288
    %v4478 = vadd.f32 %v4008, %v4291
    %v4479 = vadd.f32 %v4009, %v4294
    %v4480 = vadd.f32 %v4010, %v4297
    %v4481 = vadd.f32 %v4011, %v4300
    %v4482 = vadd.f32 %v4012, %v4303
    %v4483 = vadd.f32 %v4013, %v4306
    %v4484 = vadd.f32 %v4014, %v4309
    %v4485 = vadd.f32 %v4015, %v4312
    %v4486 = vadd.f32 %v4016, %v4315
    %v4487 = vadd.f32 %v4017, %v4318
    %v4488 = vadd.f32 %v4018, %v4321
    %v4489 = vadd.f32 %v4019, %v4324
    %v4490 = vadd.f32 %v4020, %v4327
    %v4491 = vadd.f32 %v4021, %v4330
    %v4492 = vadd.f32 %v4022, %v4333
    %v4493 = vadd.f32 %v4023, %v4336
    %v4494 = vadd.f32 %v4024, %v4339
    %v4495 = vadd.f32 %v4025, %v4342
    %v4496 = vadd.f32 %v4026, %v4345
    %v4497 = vadd.f32 %v4027, %v4348
    %v4498 = vadd.f32 %v4028, %v4351
    %v4499 = vadd.f32 %v4029, %v4354
    %v4500 = vadd.f32 %v4030, %v4357
    %v4501 = vadd.f32 %v4031, %v4360
    %v4502 = vadd.f32 %v4032, %v4363
    %v4503 = vadd.f32 %v4033, %v4366
    %v4504 = vadd.f32 %v4034, %v4369
    %v4505 = vadd.f32 %v4035, %v4372
    %v4506 = vadd.f32 %v4036, %v4375
    %v4507 = vadd.f32 %v4037, %v4378
    %v4508 = vadd.f32 %v4038, %v4381
    %v4509 = vadd.f32 %v4039, %v4384
    %v4510 = vadd.f32 %v4040, %v4387
    %v4511 = vadd.f32 %v4041, %v4390
    %v4512 = vadd.f32 %v4042, %v4393
    %v4513 = vadd.f32 %v4043, %v4396
    %v4514 = vadd.f32 %v4044, %v4399
    %v4515 = vadd.f32 %v4045, %v4402
    %v4516 = vadd.f32 %v4046, %v4405
    %v4517 = vadd.f32 %v4047, %v4408
    %v4518 = vadd.f32 %v4048, %v4411
    %v4519 = vadd.f32 %v4049, %v4414
    %v4520 = vadd.f32 %v4050, %v4417
    %v4521 = vadd.f32 %v4051, %v4420
    %v4522 = vadd.f32 %v4052, %v4423
    %v4523 = vadd.f32 %v4053, %v4426
    %v4524 = vadd.f32 %v4054, %v4429
    %v4525 = vadd.f32 %v4055, %v4432
    %v4526 = vadd.f32 %v4056, %v4435
    %v4527 = vadd.f32 %v4057, %v4438
    %v4528 = vadd.f32 %v4058, %v4441
    %v4529 = vadd.f32 %v4059, %v4444
    %v4530 = vadd.f32 %v4060, %v4447
    %v4531 = vadd.f32 %v4061, %v4450
    %v4532 = vadd.f32 %v4062, %v4453
    %v4533 = vadd.f32 %v4063, %v4456
    %v4534 = vadd.f32 %v4064, %v4459
    %v4535 = vadd.f32 %v4065, %v4462
    %v4536 = vadd.f32 %v4066, %v4465
    %v4537 = vadd.f32 %v4067, %v4468
    %v4538 = vadd.f32 %v4068, %v4471
    %v4539 = vadd.f32 %v4069, %v4474
    %4540 = vset.pattern.permute.xlu0 5
    %4541 = vperm.xlu0 %4540, %v130
    %v4542 = vpop.permute.xlu0 %4541
    %4543 = vset.pattern.permute.xlu0 5
    %4544 = vperm.xlu0 %4543, %v131
    %v4545 = vpop.permute.xlu0 %4544
    %4546 = vset.pattern.permute.xlu0 5
    %4547 = vperm.xlu0 %4546, %v132
    %v4548 = vpop.permute.xlu0 %4547
    %4549 = vset.pattern.permute.xlu0 5
    %4550 = vperm.xlu0 %4549, %v133
    %v4551 = vpop.permute.xlu0 %4550
    %4552 = vset.pattern.permute.xlu0 5
    %4553 = vperm.xlu0 %4552, %v134
    %v4554 = vpop.permute.xlu0 %4553
    %4555 = vset.pattern.permute.xlu0 5
    %4556 = vperm.xlu0 %4555, %v135
    %v4557 = vpop.permute.xlu0 %4556
    %4558 = vset.pattern.permute.xlu0 5
    %4559 = vperm.xlu0 %4558, %v136
    %v4560 = vpop.permute.xlu0 %4559
    %4561 = vset.pattern.permute.xlu0 5
    %4562 = vperm.xlu0 %4561, %v137
    %v4563 = vpop.permute.xlu0 %4562
    %4564 = vset.pattern.permute.xlu0 5
    %4565 = vperm.xlu0 %4564, %v138
    %v4566 = vpop.permute.xlu0 %4565
    %4567 = vset.pattern.permute.xlu0 5
    %4568 = vperm.xlu0 %4567, %v139
    %v4569 = vpop.permute.xlu0 %4568
    %4570 = vset.pattern.permute.xlu0 5
    %4571 = vperm.xlu0 %4570, %v140
    %v4572 = vpop.permute.xlu0 %4571
    %4573 = vset.pattern.permute.xlu0 5
    %4574 = vperm.xlu0 %4573, %v141
    %v4575 = vpop.permute.xlu0 %4574
    %4576 = vset.pattern.permute.xlu0 5
    %4577 = vperm.xlu0 %4576, %v142
    %v4578 = vpop.permute.xlu0 %4577
    %4579 = vset.pattern.permute.xlu0 5
    %4580 = vperm.xlu0 %4579, %v143
    %v4581 = vpop.permute.xlu0 %4580
    %4582 = vset.pattern.permute.xlu0 5
    %4583 = vperm.xlu0 %4582, %v144
    %v4584 = vpop.permute.xlu0 %4583
    %4585 = vset.pattern.permute.xlu0 5
    %4586 = vperm.xlu0 %4585, %v145
    %v4587 = vpop.permute.xlu0 %4586
    %4588 = vset.pattern.permute.xlu0 5
    %4589 = vperm.xlu0 %4588, %v146
    %v4590 = vpop.permute.xlu0 %4589
    %4591 = vset.pattern.permute.xlu0 5
    %4592 = vperm.xlu0 %4591, %v147
    %v4593 = vpop.permute.xlu0 %4592
    %4594 = vset.pattern.permute.xlu0 5
    %4595 = vperm.xlu0 %4594, %v148
    %v4596 = vpop.permute.xlu0 %4595
    %4597 = vset.pattern.permute.xlu0 5
    %4598 = vperm.xlu0 %4597, %v149
    %v4599 = vpop.permute.xlu0 %4598
    %4600 = vset.pattern.permute.xlu0 5
    %4601 = vperm.xlu0 %4600, %v150
    %v4602 = vpop.permute.xlu0 %4601
    %4603 = vset.pattern.permute.xlu0 5
    %4604 = vperm.xlu0 %4603, %v151
    %v4605 = vpop.permute.xlu0 %4604
    %4606 = vset.pattern.permute.xlu0 5
    %4607 = vperm.xlu0 %4606, %v152
    %v4608 = vpop.permute.xlu0 %4607
    %4609 = vset.pattern.permute.xlu0 5
    %4610 = vperm.xlu0 %4609, %v153
    %v4611 = vpop.permute.xlu0 %4610
    %4612 = vset.pattern.permute.xlu0 5
    %4613 = vperm.xlu0 %4612, %v154
    %v4614 = vpop.permute.xlu0 %4613
    %4615 = vset.pattern.permute.xlu0 5
    %4616 = vperm.xlu0 %4615, %v155
    %v4617 = vpop.permute.xlu0 %4616
    %4618 = vset.pattern.permute.xlu0 5
    %4619 = vperm.xlu0 %4618, %v156
    %v4620 = vpop.permute.xlu0 %4619
    %4621 = vset.pattern.permute.xlu0 5
    %4622 = vperm.xlu0 %4621, %v157
    %v4623 = vpop.permute.xlu0 %4622
    %4624 = vset.pattern.permute.xlu0 5
    %4625 = vperm.xlu0 %4624, %v158
    %v4626 = vpop.permute.xlu0 %4625
    %4627 = vset.pattern.permute.xlu0 5
    %4628 = vperm.xlu0 %4627, %v159
    %v4629 = vpop.permute.xlu0 %4628
    %4630 = vset.pattern.permute.xlu0 5
    %4631 = vperm.xlu0 %4630, %v160
    %v4632 = vpop.permute.xlu0 %4631
    %4633 = vset.pattern.permute.xlu0 5
    %4634 = vperm.xlu0 %4633, %v161
    %v4635 = vpop.permute.xlu0 %4634
    %4636 = vset.pattern.permute.xlu0 5
    %4637 = vperm.xlu0 %4636, %v162
    %v4638 = vpop.permute.xlu0 %4637
    %4639 = vset.pattern.permute.xlu0 5
    %4640 = vperm.xlu0 %4639, %v163
    %v4641 = vpop.permute.xlu0 %4640
    %4642 = vset.pattern.permute.xlu0 5
    %4643 = vperm.xlu0 %4642, %v164
    %v4644 = vpop.permute.xlu0 %4643
    %4645 = vset.pattern.permute.xlu0 5
    %4646 = vperm.xlu0 %4645, %v165
    %v4647 = vpop.permute.xlu0 %4646
    %4648 = vset.pattern.permute.xlu0 5
    %4649 = vperm.xlu0 %4648, %v166
    %v4650 = vpop.permute.xlu0 %4649
    %4651 = vset.pattern.permute.xlu0 5
    %4652 = vperm.xlu0 %4651, %v167
    %v4653 = vpop.permute.xlu0 %4652
    %4654 = vset.pattern.permute.xlu0 5
    %4655 = vperm.xlu0 %4654, %v168
    %v4656 = vpop.permute.xlu0 %4655
    %4657 = vset.pattern.permute.xlu0 5
    %4658 = vperm.xlu0 %4657, %v169
    %v4659 = vpop.permute.xlu0 %4658
    %4660 = vset.pattern.permute.xlu0 5
    %4661 = vperm.xlu0 %4660, %v170
    %v4662 = vpop.permute.xlu0 %4661
    %4663 = vset.pattern.permute.xlu0 5
    %4664 = vperm.xlu0 %4663, %v171
    %v4665 = vpop.permute.xlu0 %4664
    %4666 = vset.pattern.permute.xlu0 5
    %4667 = vperm.xlu0 %4666, %v172
    %v4668 = vpop.permute.xlu0 %4667
    %4669 = vset.pattern.permute.xlu0 5
    %4670 = vperm.xlu0 %4669, %v173
    %v4671 = vpop.permute.xlu0 %4670
    %4672 = vset.pattern.permute.xlu0 5
    %4673 = vperm.xlu0 %4672, %v174
    %v4674 = vpop.permute.xlu0 %4673
    %4675 = vset.pattern.permute.xlu0 5
    %4676 = vperm.xlu0 %4675, %v175
    %v4677 = vpop.permute.xlu0 %4676
    %4678 = vset.pattern.permute.xlu0 5
    %4679 = vperm.xlu0 %4678, %v176
    %v4680 = vpop.permute.xlu0 %4679
    %4681 = vset.pattern.permute.xlu0 5
    %4682 = vperm.xlu0 %4681, %v177
    %v4683 = vpop.permute.xlu0 %4682
    %4684 = vset.pattern.permute.xlu0 5
    %4685 = vperm.xlu0 %4684, %v178
    %v4686 = vpop.permute.xlu0 %4685
    %4687 = vset.pattern.permute.xlu0 5
    %4688 = vperm.xlu0 %4687, %v179
    %v4689 = vpop.permute.xlu0 %4688
    %4690 = vset.pattern.permute.xlu0 5
    %4691 = vperm.xlu0 %4690, %v180
    %v4692 = vpop.permute.xlu0 %4691
    %4693 = vset.pattern.permute.xlu0 5
    %4694 = vperm.xlu0 %4693, %v181
    %v4695 = vpop.permute.xlu0 %4694
    %4696 = vset.pattern.permute.xlu0 5
    %4697 = vperm.xlu0 %4696, %v182
    %v4698 = vpop.permute.xlu0 %4697
    %4699 = vset.pattern.permute.xlu0 5
    %4700 = vperm.xlu0 %4699, %v183
    %v4701 = vpop.permute.xlu0 %4700
    %4702 = vset.pattern.permute.xlu0 5
    %4703 = vperm.xlu0 %4702, %v184
    %v4704 = vpop.permute.xlu0 %4703
    %4705 = vset.pattern.permute.xlu0 5
    %4706 = vperm.xlu0 %4705, %v185
    %v4707 = vpop.permute.xlu0 %4706
    %4708 = vset.pattern.permute.xlu0 5
    %4709 = vperm.xlu0 %4708, %v186
    %v4710 = vpop.permute.xlu0 %4709
    %4711 = vset.pattern.permute.xlu0 5
    %4712 = vperm.xlu0 %4711, %v187
    %v4713 = vpop.permute.xlu0 %4712
    %4714 = vset.pattern.permute.xlu0 5
    %4715 = vperm.xlu0 %4714, %v188
    %v4716 = vpop.permute.xlu0 %4715
    %4717 = vset.pattern.permute.xlu0 5
    %4718 = vperm.xlu0 %4717, %v189
    %v4719 = vpop.permute.xlu0 %4718
    %4720 = vset.pattern.permute.xlu0 5
    %4721 = vperm.xlu0 %4720, %v190
    %v4722 = vpop.permute.xlu0 %4721
    %4723 = vset.pattern.permute.xlu0 5
    %4724 = vperm.xlu0 %4723, %v191
    %v4725 = vpop.permute.xlu0 %4724
    %4726 = vset.pattern.permute.xlu0 5
    %4727 = vperm.xlu0 %4726, %v192
    %v4728 = vpop.permute.xlu0 %4727
    %4729 = vset.pattern.permute.xlu0 5
    %4730 = vperm.xlu0 %4729, %v193
    %v4731 = vpop.permute.xlu0 %4730
    %v4732 = vrot.slane %v4542, 7
    %v4733 = vrot.slane %v4545, 7
    %v4734 = vsel %vm1502, %v4732, %v4733
    %v4735 = vrot.slane %v4548, 7
    %v4736 = vsel %vm1502, %v4733, %v4735
    %v4737 = vrot.slane %v4551, 7
    %v4738 = vsel %vm1502, %v4735, %v4737
    %v4739 = vrot.slane %v4554, 7
    %v4740 = vsel %vm1502, %v4737, %v4739
    %v4741 = vrot.slane %v4557, 7
    %v4742 = vsel %vm1502, %v4739, %v4741
    %v4743 = vrot.slane %v4560, 7
    %v4744 = vsel %vm1502, %v4741, %v4743
    %v4745 = vrot.slane %v4563, 7
    %v4746 = vsel %vm1502, %v4743, %v4745
    %v4747 = vrot.slane %v4566, 7
    %v4748 = vsel %vm1502, %v4745, %v4747
    %v4749 = vrot.slane %v4569, 7
    %v4750 = vsel %vm1502, %v4747, %v4749
    %v4751 = vrot.slane %v4572, 7
    %v4752 = vsel %vm1502, %v4749, %v4751
    %v4753 = vrot.slane %v4575, 7
    %v4754 = vsel %vm1502, %v4751, %v4753
    %v4755 = vrot.slane %v4578, 7
    %v4756 = vsel %vm1502, %v4753, %v4755
    %v4757 = vrot.slane %v4581, 7
    %v4758 = vsel %vm1502, %v4755, %v4757
    %v4759 = vrot.slane %v4584, 7
    %v4760 = vsel %vm1502, %v4757, %v4759
    %v4761 = vrot.slane %v4587, 7
    %v4762 = vsel %vm1502, %v4759, %v4761
    %v4763 = vrot.slane %v4590, 7
    %v4764 = vsel %vm1502, %v4761, %v4763
    %v4765 = vrot.slane %v4593, 7
    %v4766 = vsel %vm1502, %v4763, %v4765
    %v4767 = vrot.slane %v4596, 7
    %v4768 = vsel %vm1502, %v4765, %v4767
    %v4769 = vrot.slane %v4599, 7
    %v4770 = vsel %vm1502, %v4767, %v4769
    %v4771 = vrot.slane %v4602, 7
    %v4772 = vsel %vm1502, %v4769, %v4771
    %v4773 = vrot.slane %v4605, 7
    %v4774 = vsel %vm1502, %v4771, %v4773
    %v4775 = vrot.slane %v4608, 7
    %v4776 = vsel %vm1502, %v4773, %v4775
    %v4777 = vrot.slane %v4611, 7
    %v4778 = vsel %vm1502, %v4775, %v4777
    %v4779 = vrot.slane %v4614, 7
    %v4780 = vsel %vm1502, %v4777, %v4779
    %v4781 = vrot.slane %v4617, 7
    %v4782 = vsel %vm1502, %v4779, %v4781
    %v4783 = vrot.slane %v4620, 7
    %v4784 = vsel %vm1502, %v4781, %v4783
    %v4785 = vrot.slane %v4623, 7
    %v4786 = vsel %vm1502, %v4783, %v4785
    %v4787 = vrot.slane %v4626, 7
    %v4788 = vsel %vm1502, %v4785, %v4787
    %v4789 = vrot.slane %v4629, 7
    %v4790 = vsel %vm1502, %v4787, %v4789
    %v4791 = vrot.slane %v4632, 7
    %v4792 = vsel %vm1502, %v4789, %v4791
    %v4793 = vrot.slane %v4635, 7
    %v4794 = vsel %vm1502, %v4791, %v4793
    %v4795 = vrot.slane %v4638, 7
    %v4796 = vsel %vm1502, %v4793, %v4795
    %v4797 = vrot.slane %v4641, 7
    %v4798 = vsel %vm1502, %v4795, %v4797
    %v4799 = vrot.slane %v4644, 7
    %v4800 = vsel %vm1502, %v4797, %v4799
    %v4801 = vrot.slane %v4647, 7
    %v4802 = vsel %vm1502, %v4799, %v4801
    %v4803 = vrot.slane %v4650, 7
    %v4804 = vsel %vm1502, %v4801, %v4803
    %v4805 = vrot.slane %v4653, 7
    %v4806 = vsel %vm1502, %v4803, %v4805
    %v4807 = vrot.slane %v4656, 7
    %v4808 = vsel %vm1502, %v4805, %v4807
    %v4809 = vrot.slane %v4659, 7
    %v4810 = vsel %vm1502, %v4807, %v4809
    %v4811 = vrot.slane %v4662, 7
    %v4812 = vsel %vm1502, %v4809, %v4811
    %v4813 = vrot.slane %v4665, 7
    %v4814 = vsel %vm1502, %v4811, %v4813
    %v4815 = vrot.slane %v4668, 7
    %v4816 = vsel %vm1502, %v4813, %v4815
    %v4817 = vrot.slane %v4671, 7
    %v4818 = vsel %vm1502, %v4815, %v4817
    %v4819 = vrot.slane %v4674, 7
    %v4820 = vsel %vm1502, %v4817, %v4819
    %v4821 = vrot.slane %v4677, 7
    %v4822 = vsel %vm1502, %v4819, %v4821
    %v4823 = vrot.slane %v4680, 7
    %v4824 = vsel %vm1502, %v4821, %v4823
    %v4825 = vrot.slane %v4683, 7
    %v4826 = vsel %vm1502, %v4823, %v4825
    %v4827 = vrot.slane %v4686, 7
    %v4828 = vsel %vm1502, %v4825, %v4827
    %v4829 = vrot.slane %v4689, 7
    %v4830 = vsel %vm1502, %v4827, %v4829
    %v4831 = vrot.slane %v4692, 7
    %v4832 = vsel %vm1502, %v4829, %v4831
    %v4833 = vrot.slane %v4695, 7
    %v4834 = vsel %vm1502, %v4831, %v4833
    %v4835 = vrot.slane %v4698, 7
    %v4836 = vsel %vm1502, %v4833, %v4835
    %v4837 = vrot.slane %v4701, 7
    %v4838 = vsel %vm1502, %v4835, %v4837
    %v4839 = vrot.slane %v4704, 7
    %v4840 = vsel %vm1502, %v4837, %v4839
    %v4841 = vrot.slane %v4707, 7
    %v4842 = vsel %vm1502, %v4839, %v4841
    %v4843 = vrot.slane %v4710, 7
    %v4844 = vsel %vm1502, %v4841, %v4843
    %v4845 = vrot.slane %v4713, 7
    %v4846 = vsel %vm1502, %v4843, %v4845
    %v4847 = vrot.slane %v4716, 7
    %v4848 = vsel %vm1502, %v4845, %v4847
    %v4849 = vrot.slane %v4719, 7
    %v4850 = vsel %vm1502, %v4847, %v4849
    %v4851 = vrot.slane %v4722, 7
    %v4852 = vsel %vm1502, %v4849, %v4851
    %v4853 = vrot.slane %v4725, 7
    %v4854 = vsel %vm1502, %v4851, %v4853
    %v4855 = vrot.slane %v4728, 7
    %v4856 = vsel %vm1502, %v4853, %v4855
    %v4857 = vrot.slane %v4731, 7
    %v4858 = vsel %vm1502, %v4855, %v4857
    %v4924 = vmul.f32 %v66, %v4732
    %v4925 = vmul.f32 %v67, %v4734
    %v4926 = vmul.f32 %v68, %v4736
    %v4927 = vmul.f32 %v69, %v4738
    %v4928 = vmul.f32 %v70, %v4740
    %v4929 = vmul.f32 %v71, %v4742
    %v4930 = vmul.f32 %v72, %v4744
    %v4931 = vmul.f32 %v73, %v4746
    %v4932 = vmul.f32 %v74, %v4748
    %v4933 = vmul.f32 %v75, %v4750
    %v4934 = vmul.f32 %v76, %v4752
    %v4935 = vmul.f32 %v77, %v4754
    %v4936 = vmul.f32 %v78, %v4756
    %v4937 = vmul.f32 %v79, %v4758
    %v4938 = vmul.f32 %v80, %v4760
    %v4939 = vmul.f32 %v81, %v4762
    %v4940 = vmul.f32 %v82, %v4764
    %v4941 = vmul.f32 %v83, %v4766
    %v4942 = vmul.f32 %v84, %v4768
    %v4943 = vmul.f32 %v85, %v4770
    %v4944 = vmul.f32 %v86, %v4772
    %v4945 = vmul.f32 %v87, %v4774
    %v4946 = vmul.f32 %v88, %v4776
    %v4947 = vmul.f32 %v89, %v4778
    %v4948 = vmul.f32 %v90, %v4780
    %v4949 = vmul.f32 %v91, %v4782
    %v4950 = vmul.f32 %v92, %v4784
    %v4951 = vmul.f32 %v93, %v4786
    %v4952 = vmul.f32 %v94, %v4788
    %v4953 = vmul.f32 %v95, %v4790
    %v4954 = vmul.f32 %v96, %v4792
    %v4955 = vmul.f32 %v97, %v4794
    %v4956 = vmul.f32 %v98, %v4796
    %v4957 = vmul.f32 %v99, %v4798
    %v4958 = vmul.f32 %v100, %v4800
    %v4959 = vmul.f32 %v101, %v4802
    %v4960 = vmul.f32 %v102, %v4804
    %v4961 = vmul.f32 %v103, %v4806
    %v4962 = vmul.f32 %v104, %v4808
    %v4963 = vmul.f32 %v105, %v4810
    %v4964 = vmul.f32 %v106, %v4812
    %v4965 = vmul.f32 %v107, %v4814
    %v4966 = vmul.f32 %v108, %v4816
    %v4967 = vmul.f32 %v109, %v4818
    %v4968 = vmul.f32 %v110, %v4820
    %v4969 = vmul.f32 %v111, %v4822
    %v4970 = vmul.f32 %v112, %v4824
    %v4971 = vmul.f32 %v113, %v4826
    %v4972 = vmul.f32 %v114, %v4828
    %v4973 = vmul.f32 %v115, %v4830
    %v4974 = vmul.f32 %v116, %v4832
    %v4975 = vmul.f32 %v117, %v4834
    %v4976 = vmul.f32 %v118, %v4836
    %v4977 = vmul.f32 %v119, %v4838
    %v4978 = vmul.f32 %v120, %v4840
    %v4979 = vmul.f32 %v121, %v4842
    %v4980 = vmul.f32 %v122, %v4844
    %v4981 = vmul.f32 %v123, %v4846
    %v4982 = vmul.f32 %v124, %v4848
    %v4983 = vmul.f32 %v125, %v4850
    %v4984 = vmul.f32 %v126, %v4852
    %v4985 = vmul.f32 %v127, %v4854
    %v4986 = vmul.f32 %v128, %v4856
    %v4987 = vmul.f32 %v129, %v4858
    %v4988 = vmul.f32 %v4857, 0.0
    %s4989 = scalar_lea.vmem %s1, 20
    %v4990 = vld [vmem:[%s4989] sm:$0x7]
    %v5056 = vrot.slane %v4924, 1
    %v5057 = vrot.slane %v4925, 1
    %v5058 = vsel %vm450, %v5056, %v5057
    %v5059 = vrot.slane %v4926, 1
    %v5060 = vsel %vm450, %v5057, %v5059
    %v5061 = vrot.slane %v4927, 1
    %v5062 = vsel %vm450, %v5059, %v5061
    %v5063 = vrot.slane %v4928, 1
    %v5064 = vsel %vm450, %v5061, %v5063
    %v5065 = vrot.slane %v4929, 1
    %v5066 = vsel %vm450, %v5063, %v5065
    %v5067 = vrot.slane %v4930, 1
    %v5068 = vsel %vm450, %v5065, %v5067
    %v5069 = vrot.slane %v4931, 1
    %v5070 = vsel %vm450, %v5067, %v5069
    %v5071 = vrot.slane %v4932, 1
    %v5072 = vsel %vm450, %v5069, %v5071
    %v5073 = vrot.slane %v4933, 1
    %v5074 = vsel %vm450, %v5071, %v5073
    %v5075 = vrot.slane %v4934, 1
    %v5076 = vsel %vm450, %v5073, %v5075
    %v5077 = vrot.slane %v4935, 1
    %v5078 = vsel %vm450, %v5075, %v5077
    %v5079 = vrot.slane %v4936, 1
    %v5080 = vsel %vm450, %v5077, %v5079
    %v5081 = vrot.slane %v4937, 1
    %v5082 = vsel %vm450, %v5079, %v5081
    %v5083 = vrot.slane %v4938, 1
    %v5084 = vsel %vm450, %v5081, %v5083
    %v5085 = vrot.slane %v4939, 1
    %v5086 = vsel %vm450, %v5083, %v5085
    %v5087 = vrot.slane %v4940, 1
    %v5088 = vsel %vm450, %v5085, %v5087
    %v5089 = vrot.slane %v4941, 1
    %v5090 = vsel %vm450, %v5087, %v5089
    %v5091 = vrot.slane %v4942, 1
    %v5092 = vsel %vm450, %v5089, %v5091
    %v5093 = vrot.slane %v4943, 1
    %v5094 = vsel %vm450, %v5091, %v5093
    %v5095 = vrot.slane %v4944, 1
    %v5096 = vsel %vm450, %v5093, %v5095
    %v5097 = vrot.slane %v4945, 1
    %v5098 = vsel %vm450, %v5095, %v5097
    %v5099 = vrot.slane %v4946, 1
    %v5100 = vsel %vm450, %v5097, %v5099
    %v5101 = vrot.slane %v4947, 1
    %v5102 = vsel %vm450, %v5099, %v5101
    %v5103 = vrot.slane %v4948, 1
    %v5104 = vsel %vm450, %v5101, %v5103
    %v5105 = vrot.slane %v4949, 1
    %v5106 = vsel %vm450, %v5103, %v5105
    %v5107 = vrot.slane %v4950, 1
    %v5108 = vsel %vm450, %v5105, %v5107
    %v5109 = vrot.slane %v4951, 1
    %v5110 = vsel %vm450, %v5107, %v5109
    %v5111 = vrot.slane %v4952, 1
    %v5112 = vsel %vm450, %v5109, %v5111
    %v5113 = vrot.slane %v4953, 1
    %v5114 = vsel %vm450, %v5111, %v5113
    %v5115 = vrot.slane %v4954, 1
    %v5116 = vsel %vm450, %v5113, %v5115
    %v5117 = vrot.slane %v4955, 1
    %v5118 = vsel %vm450, %v5115, %v5117
    %v5119 = vrot.slane %v4956, 1
    %v5120 = vsel %vm450, %v5117, %v5119
    %v5121 = vrot.slane %v4957, 1
    %v5122 = vsel %vm450, %v5119, %v5121
    %v5123 = vrot.slane %v4958, 1
    %v5124 = vsel %vm450, %v5121, %v5123
    %v5125 = vrot.slane %v4959, 1
    %v5126 = vsel %vm450, %v5123, %v5125
    %v5127 = vrot.slane %v4960, 1
    %v5128 = vsel %vm450, %v5125, %v5127
    %v5129 = vrot.slane %v4961, 1
    %v5130 = vsel %vm450, %v5127, %v5129
    %v5131 = vrot.slane %v4962, 1
    %v5132 = vsel %vm450, %v5129, %v5131
    %v5133 = vrot.slane %v4963, 1
    %v5134 = vsel %vm450, %v5131, %v5133
    %v5135 = vrot.slane %v4964, 1
    %v5136 = vsel %vm450, %v5133, %v5135
    %v5137 = vrot.slane %v4965, 1
    %v5138 = vsel %vm450, %v5135, %v5137
    %v5139 = vrot.slane %v4966, 1
    %v5140 = vsel %vm450, %v5137, %v5139
    %v5141 = vrot.slane %v4967, 1
    %v5142 = vsel %vm450, %v5139, %v5141
    %v5143 = vrot.slane %v4968, 1
    %v5144 = vsel %vm450, %v5141, %v5143
    %v5145 = vrot.slane %v4969, 1
    %v5146 = vsel %vm450, %v5143, %v5145
    %v5147 = vrot.slane %v4970, 1
    %v5148 = vsel %vm450, %v5145, %v5147
    %v5149 = vrot.slane %v4971, 1
    %v5150 = vsel %vm450, %v5147, %v5149
    %v5151 = vrot.slane %v4972, 1
    %v5152 = vsel %vm450, %v5149, %v5151
    %v5153 = vrot.slane %v4973, 1
    %v5154 = vsel %vm450, %v5151, %v5153
    %v5155 = vrot.slane %v4974, 1
    %v5156 = vsel %vm450, %v5153, %v5155
    %v5157 = vrot.slane %v4975, 1
    %v5158 = vsel %vm450, %v5155, %v5157
    %v5159 = vrot.slane %v4976, 1
    %v5160 = vsel %vm450, %v5157, %v5159
    %v5161 = vrot.slane %v4977, 1
    %v5162 = vsel %vm450, %v5159, %v5161
    %v5163 = vrot.slane %v4978, 1
    %v5164 = vsel %vm450, %v5161, %v5163
    %v5165 = vrot.slane %v4979, 1
    %v5166 = vsel %vm450, %v5163, %v5165
    %v5167 = vrot.slane %v4980, 1
    %v5168 = vsel %vm450, %v5165, %v5167
    %v5169 = vrot.slane %v4981, 1
    %v5170 = vsel %vm450, %v5167, %v5169
    %v5171 = vrot.slane %v4982, 1
    %v5172 = vsel %vm450, %v5169, %v5171
    %v5173 = vrot.slane %v4983, 1
    %v5174 = vsel %vm450, %v5171, %v5173
    %v5175 = vrot.slane %v4984, 1
    %v5176 = vsel %vm450, %v5173, %v5175
    %v5177 = vrot.slane %v4985, 1
    %v5178 = vsel %vm450, %v5175, %v5177
    %v5179 = vrot.slane %v4986, 1
    %v5180 = vsel %vm450, %v5177, %v5179
    %v5181 = vrot.slane %v4987, 1
    %v5182 = vsel %vm450, %v5179, %v5181
    %v5183 = vrot.slane %v4988, 1
    %v5184 = vsel %vm450, %v5181, %v5183
    %v5185 = vsel %vm1031, %v5058, 0
    %v5187 = vsel %vm1031, %v5060, 0
    %v5189 = vsel %vm1031, %v5062, 0
    %v5191 = vsel %vm1031, %v5064, 0
    %v5193 = vsel %vm1031, %v5066, 0
    %v5195 = vsel %vm1031, %v5068, 0
    %v5197 = vsel %vm1031, %v5070, 0
    %v5199 = vsel %vm1031, %v5072, 0
    %v5201 = vsel %vm1031, %v5074, 0
    %v5203 = vsel %vm1031, %v5076, 0
    %v5205 = vsel %vm1031, %v5078, 0
    %v5207 = vsel %vm1031, %v5080, 0
    %v5209 = vsel %vm1031, %v5082, 0
    %v5211 = vsel %vm1031, %v5084, 0
    %v5213 = vsel %vm1031, %v5086, 0
    %v5215 = vsel %vm1031, %v5088, 0
    %v5217 = vsel %vm1031, %v5090, 0
    %v5219 = vsel %vm1031, %v5092, 0
    %v5221 = vsel %vm1031, %v5094, 0
    %v5223 = vsel %vm1031, %v5096, 0
    %v5225 = vsel %vm1031, %v5098, 0
    %v5227 = vsel %vm1031, %v5100, 0
    %v5229 = vsel %vm1031, %v5102, 0
    %v5231 = vsel %vm1031, %v5104, 0
    %v5233 = vsel %vm1031, %v5106, 0
    %v5235 = vsel %vm1031, %v5108, 0
    %v5237 = vsel %vm1031, %v5110, 0
    %v5239 = vsel %vm1031, %v5112, 0
    %v5241 = vsel %vm1031, %v5114, 0
    %v5243 = vsel %vm1031, %v5116, 0
    %v5245 = vsel %vm1031, %v5118, 0
    %v5247 = vsel %vm1031, %v5120, 0
    %v5249 = vsel %vm1031, %v5122, 0
    %v5251 = vsel %vm1031, %v5124, 0
    %v5253 = vsel %vm1031, %v5126, 0
    %v5255 = vsel %vm1031, %v5128, 0
    %v5257 = vsel %vm1031, %v5130, 0
    %v5259 = vsel %vm1031, %v5132, 0
    %v5261 = vsel %vm1031, %v5134, 0
    %v5263 = vsel %vm1031, %v5136, 0
    %v5265 = vsel %vm1031, %v5138, 0
    %v5267 = vsel %vm1031, %v5140, 0
    %v5269 = vsel %vm1031, %v5142, 0
    %v5271 = vsel %vm1031, %v5144, 0
    %v5273 = vsel %vm1031, %v5146, 0
    %v5275 = vsel %vm1031, %v5148, 0
    %v5277 = vsel %vm1031, %v5150, 0
    %v5279 = vsel %vm1031, %v5152, 0
    %v5281 = vsel %vm1031, %v5154, 0
    %v5283 = vsel %vm1031, %v5156, 0
    %v5285 = vsel %vm1031, %v5158, 0
    %v5287 = vsel %vm1031, %v5160, 0
    %v5289 = vsel %vm1031, %v5162, 0
    %v5291 = vsel %vm1031, %v5164, 0
    %v5293 = vsel %vm1031, %v5166, 0
    %v5295 = vsel %vm1031, %v5168, 0
    %v5297 = vsel %vm1031, %v5170, 0
    %v5299 = vsel %vm1031, %v5172, 0
    %v5301 = vsel %vm1031, %v5174, 0
    %v5303 = vsel %vm1031, %v5176, 0
    %v5305 = vsel %vm1031, %v5178, 0
    %v5307 = vsel %vm1031, %v5180, 0
    %v5309 = vsel %vm1031, %v5182, 0
    %v5311 = vsel %vm1031, %v5184, 0
    %v5314 = vsel %vm1224, %v4990, 0
    %5316 = vmatpush.msra.mxu0 0.0
    %5317 = vmatpush.msra.mxu0 0.0
    %5318 = vmatpush.msra.mxu0 0.0
    %5319 = vmatpush.msra.mxu0 0.0
    %5320 = vmatpush.msra.mxu0 0.0
    %5321 = vmatpush.msra.mxu0 0.0
    %5322 = vmatpush.msra.mxu0 0.0
    %5323 = vmatpush.msra.mxu0 0.0
    %5324 = vmatpush.msra.mxu0 0.0
    %5325 = vmatpush.msra.mxu0 0.0
    %5326 = vmatpush.msra.mxu0 0.0
    %5327 = vmatpush.msra.mxu0 0.0
    %5328 = vmatpush.msra.mxu0 0.0
    %5329 = vmatpush.msra.mxu0 0.0
    %5330 = vmatpush.msra.mxu0 0.0
    %5331 = vmatpush.msra.mxu0 %v5314
    %5332 = vmatmul.f32.gmra.mxu0 %v5185
    %v5333 = vpop.f32.mrf.mxu0
    %v5334 = vadd.f32 0.0, %v5333
    %5335 = vmatmul.f32.gmra.mxu0 %v5187
    %v5336 = vpop.f32.mrf.mxu0
    %v5337 = vadd.f32 0.0, %v5336
    %5338 = vmatmul.f32.gmra.mxu0 %v5189
    %v5339 = vpop.f32.mrf.mxu0
    %v5340 = vadd.f32 0.0, %v5339
    %5341 = vmatmul.f32.gmra.mxu0 %v5191
    %v5342 = vpop.f32.mrf.mxu0
    %v5343 = vadd.f32 0.0, %v5342
    %5344 = vmatmul.f32.gmra.mxu0 %v5193
    %v5345 = vpop.f32.mrf.mxu0
    %v5346 = vadd.f32 0.0, %v5345
    %5347 = vmatmul.f32.gmra.mxu0 %v5195
    %v5348 = vpop.f32.mrf.mxu0
    %v5349 = vadd.f32 0.0, %v5348
    %5350 = vmatmul.f32.gmra.mxu0 %v5197
    %v5351 = vpop.f32.mrf.mxu0
    %v5352 = vadd.f32 0.0, %v5351
    %5353 = vmatmul.f32.gmra.mxu0 %v5199
    %v5354 = vpop.f32.mrf.mxu0
    %v5355 = vadd.f32 0.0, %v5354
    %5356 = vmatmul.f32.gmra.mxu0 %v5201
    %v5357 = vpop.f32.mrf.mxu0
    %v5358 = vadd.f32 0.0, %v5357
    %5359 = vmatmul.f32.gmra.mxu0 %v5203
    %v5360 = vpop.f32.mrf.mxu0
    %v5361 = vadd.f32 0.0, %v5360
    %5362 = vmatmul.f32.gmra.mxu0 %v5205
    %v5363 = vpop.f32.mrf.mxu0
    %v5364 = vadd.f32 0.0, %v5363
    %5365 = vmatmul.f32.gmra.mxu0 %v5207
    %v5366 = vpop.f32.mrf.mxu0
    %v5367 = vadd.f32 0.0, %v5366
    %5368 = vmatmul.f32.gmra.mxu0 %v5209
    %v5369 = vpop.f32.mrf.mxu0
    %v5370 = vadd.f32 0.0, %v5369
    %5371 = vmatmul.f32.gmra.mxu0 %v5211
    %v5372 = vpop.f32.mrf.mxu0
    %v5373 = vadd.f32 0.0, %v5372
    %5374 = vmatmul.f32.gmra.mxu0 %v5213
    %v5375 = vpop.f32.mrf.mxu0
    %v5376 = vadd.f32 0.0, %v5375
    %5377 = vmatmul.f32.gmra.mxu0 %v5215
    %v5378 = vpop.f32.mrf.mxu0
    %v5379 = vadd.f32 0.0, %v5378
    %5380 = vmatmul.f32.gmra.mxu0 %v5217
    %v5381 = vpop.f32.mrf.mxu0
    %v5382 = vadd.f32 0.0, %v5381
    %5383 = vmatmul.f32.gmra.mxu0 %v5219
    %v5384 = vpop.f32.mrf.mxu0
    %v5385 = vadd.f32 0.0, %v5384
    %5386 = vmatmul.f32.gmra.mxu0 %v5221
    %v5387 = vpop.f32.mrf.mxu0
    %v5388 = vadd.f32 0.0, %v5387
    %5389 = vmatmul.f32.gmra.mxu0 %v5223
    %v5390 = vpop.f32.mrf.mxu0
    %v5391 = vadd.f32 0.0, %v5390
    %5392 = vmatmul.f32.gmra.mxu0 %v5225
    %v5393 = vpop.f32.mrf.mxu0
    %v5394 = vadd.f32 0.0, %v5393
    %5395 = vmatmul.f32.gmra.mxu0 %v5227
    %v5396 = vpop.f32.mrf.mxu0
    %v5397 = vadd.f32 0.0, %v5396
    %5398 = vmatmul.f32.gmra.mxu0 %v5229
    %v5399 = vpop.f32.mrf.mxu0
    %v5400 = vadd.f32 0.0, %v5399
    %5401 = vmatmul.f32.gmra.mxu0 %v5231
    %v5402 = vpop.f32.mrf.mxu0
    %v5403 = vadd.f32 0.0, %v5402
    %5404 = vmatmul.f32.gmra.mxu0 %v5233
    %v5405 = vpop.f32.mrf.mxu0
    %v5406 = vadd.f32 0.0, %v5405
    %5407 = vmatmul.f32.gmra.mxu0 %v5235
    %v5408 = vpop.f32.mrf.mxu0
    %v5409 = vadd.f32 0.0, %v5408
    %5410 = vmatmul.f32.gmra.mxu0 %v5237
    %v5411 = vpop.f32.mrf.mxu0
    %v5412 = vadd.f32 0.0, %v5411
    %5413 = vmatmul.f32.gmra.mxu0 %v5239
    %v5414 = vpop.f32.mrf.mxu0
    %v5415 = vadd.f32 0.0, %v5414
    %5416 = vmatmul.f32.gmra.mxu0 %v5241
    %v5417 = vpop.f32.mrf.mxu0
    %v5418 = vadd.f32 0.0, %v5417
    %5419 = vmatmul.f32.gmra.mxu0 %v5243
    %v5420 = vpop.f32.mrf.mxu0
    %v5421 = vadd.f32 0.0, %v5420
    %5422 = vmatmul.f32.gmra.mxu0 %v5245
    %v5423 = vpop.f32.mrf.mxu0
    %v5424 = vadd.f32 0.0, %v5423
    %5425 = vmatmul.f32.gmra.mxu0 %v5247
    %v5426 = vpop.f32.mrf.mxu0
    %v5427 = vadd.f32 0.0, %v5426
    %5428 = vmatmul.f32.gmra.mxu0 %v5249
    %v5429 = vpop.f32.mrf.mxu0
    %v5430 = vadd.f32 0.0, %v5429
    %5431 = vmatmul.f32.gmra.mxu0 %v5251
    %v5432 = vpop.f32.mrf.mxu0
    %v5433 = vadd.f32 0.0, %v5432
    %5434 = vmatmul.f32.gmra.mxu0 %v5253
    %v5435 = vpop.f32.mrf.mxu0
    %v5436 = vadd.f32 0.0, %v5435
    %5437 = vmatmul.f32.gmra.mxu0 %v5255
    %v5438 = vpop.f32.mrf.mxu0
    %v5439 = vadd.f32 0.0, %v5438
    %5440 = vmatmul.f32.gmra.mxu0 %v5257
    %v5441 = vpop.f32.mrf.mxu0
    %v5442 = vadd.f32 0.0, %v5441
    %5443 = vmatmul.f32.gmra.mxu0 %v5259
    %v5444 = vpop.f32.mrf.mxu0
    %v5445 = vadd.f32 0.0, %v5444
    %5446 = vmatmul.f32.gmra.mxu0 %v5261
    %v5447 = vpop.f32.mrf.mxu0
    %v5448 = vadd.f32 0.0, %v5447
    %5449 = vmatmul.f32.gmra.mxu0 %v5263
    %v5450 = vpop.f32.mrf.mxu0
    %v5451 = vadd.f32 0.0, %v5450
    %5452 = vmatmul.f32.gmra.mxu0 %v5265
    %v5453 = vpop.f32.mrf.mxu0
    %v5454 = vadd.f32 0.0, %v5453
    %5455 = vmatmul.f32.gmra.mxu0 %v5267
    %v5456 = vpop.f32.mrf.mxu0
    %v5457 = vadd.f32 0.0, %v5456
    %5458 = vmatmul.f32.gmra.mxu0 %v5269
    %v5459 = vpop.f32.mrf.mxu0
    %v5460 = vadd.f32 0.0, %v5459
    %5461 = vmatmul.f32.gmra.mxu0 %v5271
    %v5462 = vpop.f32.mrf.mxu0
    %v5463 = vadd.f32 0.0, %v5462
    %5464 = vmatmul.f32.gmra.mxu0 %v5273
    %v5465 = vpop.f32.mrf.mxu0
    %v5466 = vadd.f32 0.0, %v5465
    %5467 = vmatmul.f32.gmra.mxu0 %v5275
    %v5468 = vpop.f32.mrf.mxu0
    %v5469 = vadd.f32 0.0, %v5468
    %5470 = vmatmul.f32.gmra.mxu0 %v5277
    %v5471 = vpop.f32.mrf.mxu0
    %v5472 = vadd.f32 0.0, %v5471
    %5473 = vmatmul.f32.gmra.mxu0 %v5279
    %v5474 = vpop.f32.mrf.mxu0
    %v5475 = vadd.f32 0.0, %v5474
    %5476 = vmatmul.f32.gmra.mxu0 %v5281
    %v5477 = vpop.f32.mrf.mxu0
    %v5478 = vadd.f32 0.0, %v5477
    %5479 = vmatmul.f32.gmra.mxu0 %v5283
    %v5480 = vpop.f32.mrf.mxu0
    %v5481 = vadd.f32 0.0, %v5480
    %5482 = vmatmul.f32.gmra.mxu0 %v5285
    %v5483 = vpop.f32.mrf.mxu0
    %v5484 = vadd.f32 0.0, %v5483
    %5485 = vmatmul.f32.gmra.mxu0 %v5287
    %v5486 = vpop.f32.mrf.mxu0
    %v5487 = vadd.f32 0.0, %v5486
    %5488 = vmatmul.f32.gmra.mxu0 %v5289
    %v5489 = vpop.f32.mrf.mxu0
    %v5490 = vadd.f32 0.0, %v5489
    %5491 = vmatmul.f32.gmra.mxu0 %v5291
    %v5492 = vpop.f32.mrf.mxu0
    %v5493 = vadd.f32 0.0, %v5492
    %5494 = vmatmul.f32.gmra.mxu0 %v5293
    %v5495 = vpop.f32.mrf.mxu0
    %v5496 = vadd.f32 0.0, %v5495
    %5497 = vmatmul.f32.gmra.mxu0 %v5295
    %v5498 = vpop.f32.mrf.mxu0
    %v5499 = vadd.f32 0.0, %v5498
    %5500 = vmatmul.f32.gmra.mxu0 %v5297
    %v5501 = vpop.f32.mrf.mxu0
    %v5502 = vadd.f32 0.0, %v5501
    %5503 = vmatmul.f32.gmra.mxu0 %v5299
    %v5504 = vpop.f32.mrf.mxu0
    %v5505 = vadd.f32 0.0, %v5504
    %5506 = vmatmul.f32.gmra.mxu0 %v5301
    %v5507 = vpop.f32.mrf.mxu0
    %v5508 = vadd.f32 0.0, %v5507
    %5509 = vmatmul.f32.gmra.mxu0 %v5303
    %v5510 = vpop.f32.mrf.mxu0
    %v5511 = vadd.f32 0.0, %v5510
    %5512 = vmatmul.f32.gmra.mxu0 %v5305
    %v5513 = vpop.f32.mrf.mxu0
    %v5514 = vadd.f32 0.0, %v5513
    %5515 = vmatmul.f32.gmra.mxu0 %v5307
    %v5516 = vpop.f32.mrf.mxu0
    %v5517 = vadd.f32 0.0, %v5516
    %5518 = vmatmul.f32.gmra.mxu0 %v5309
    %v5519 = vpop.f32.mrf.mxu0
    %v5520 = vadd.f32 0.0, %v5519
    %5521 = vmatmul.f32.gmra.mxu0 %v5311
    %v5522 = vpop.f32.mrf.mxu0
    %v5523 = vadd.f32 0.0, %v5522
    %5524 = vdwg.mxu0
    %v5525 = vadd.f32 %v4476, %v5334
    %v5526 = vadd.f32 %v4477, %v5337
    %v5527 = vadd.f32 %v4478, %v5340
    %v5528 = vadd.f32 %v4479, %v5343
    %v5529 = vadd.f32 %v4480, %v5346
    %v5530 = vadd.f32 %v4481, %v5349
    %v5531 = vadd.f32 %v4482, %v5352
    %v5532 = vadd.f32 %v4483, %v5355
    %v5533 = vadd.f32 %v4484, %v5358
    %v5534 = vadd.f32 %v4485, %v5361
    %v5535 = vadd.f32 %v4486, %v5364
    %v5536 = vadd.f32 %v4487, %v5367
    %v5537 = vadd.f32 %v4488, %v5370
    %v5538 = vadd.f32 %v4489, %v5373
    %v5539 = vadd.f32 %v4490, %v5376
    %v5540 = vadd.f32 %v4491, %v5379
    %v5541 = vadd.f32 %v4492, %v5382
    %v5542 = vadd.f32 %v4493, %v5385
    %v5543 = vadd.f32 %v4494, %v5388
    %v5544 = vadd.f32 %v4495, %v5391
    %v5545 = vadd.f32 %v4496, %v5394
    %v5546 = vadd.f32 %v4497, %v5397
    %v5547 = vadd.f32 %v4498, %v5400
    %v5548 = vadd.f32 %v4499, %v5403
    %v5549 = vadd.f32 %v4500, %v5406
    %v5550 = vadd.f32 %v4501, %v5409
    %v5551 = vadd.f32 %v4502, %v5412
    %v5552 = vadd.f32 %v4503, %v5415
    %v5553 = vadd.f32 %v4504, %v5418
    %v5554 = vadd.f32 %v4505, %v5421
    %v5555 = vadd.f32 %v4506, %v5424
    %v5556 = vadd.f32 %v4507, %v5427
    %v5557 = vadd.f32 %v4508, %v5430
    %v5558 = vadd.f32 %v4509, %v5433
    %v5559 = vadd.f32 %v4510, %v5436
    %v5560 = vadd.f32 %v4511, %v5439
    %v5561 = vadd.f32 %v4512, %v5442
    %v5562 = vadd.f32 %v4513, %v5445
    %v5563 = vadd.f32 %v4514, %v5448
    %v5564 = vadd.f32 %v4515, %v5451
    %v5565 = vadd.f32 %v4516, %v5454
    %v5566 = vadd.f32 %v4517, %v5457
    %v5567 = vadd.f32 %v4518, %v5460
    %v5568 = vadd.f32 %v4519, %v5463
    %v5569 = vadd.f32 %v4520, %v5466
    %v5570 = vadd.f32 %v4521, %v5469
    %v5571 = vadd.f32 %v4522, %v5472
    %v5572 = vadd.f32 %v4523, %v5475
    %v5573 = vadd.f32 %v4524, %v5478
    %v5574 = vadd.f32 %v4525, %v5481
    %v5575 = vadd.f32 %v4526, %v5484
    %v5576 = vadd.f32 %v4527, %v5487
    %v5577 = vadd.f32 %v4528, %v5490
    %v5578 = vadd.f32 %v4529, %v5493
    %v5579 = vadd.f32 %v4530, %v5496
    %v5580 = vadd.f32 %v4531, %v5499
    %v5581 = vadd.f32 %v4532, %v5502
    %v5582 = vadd.f32 %v4533, %v5505
    %v5583 = vadd.f32 %v4534, %v5508
    %v5584 = vadd.f32 %v4535, %v5511
    %v5585 = vadd.f32 %v4536, %v5514
    %v5586 = vadd.f32 %v4537, %v5517
    %v5587 = vadd.f32 %v4538, %v5520
    %v5588 = vadd.f32 %v4539, %v5523
    %5589 = vset.pattern.permute.xlu0 6
    %5590 = vperm.xlu0 %5589, %v130
    %v5591 = vpop.permute.xlu0 %5590
    %5592 = vset.pattern.permute.xlu0 6
    %5593 = vperm.xlu0 %5592, %v131
    %v5594 = vpop.permute.xlu0 %5593
    %5595 = vset.pattern.permute.xlu0 6
    %5596 = vperm.xlu0 %5595, %v132
    %v5597 = vpop.permute.xlu0 %5596
    %5598 = vset.pattern.permute.xlu0 6
    %5599 = vperm.xlu0 %5598, %v133
    %v5600 = vpop.permute.xlu0 %5599
    %5601 = vset.pattern.permute.xlu0 6
    %5602 = vperm.xlu0 %5601, %v134
    %v5603 = vpop.permute.xlu0 %5602
    %5604 = vset.pattern.permute.xlu0 6
    %5605 = vperm.xlu0 %5604, %v135
    %v5606 = vpop.permute.xlu0 %5605
    %5607 = vset.pattern.permute.xlu0 6
    %5608 = vperm.xlu0 %5607, %v136
    %v5609 = vpop.permute.xlu0 %5608
    %5610 = vset.pattern.permute.xlu0 6
    %5611 = vperm.xlu0 %5610, %v137
    %v5612 = vpop.permute.xlu0 %5611
    %5613 = vset.pattern.permute.xlu0 6
    %5614 = vperm.xlu0 %5613, %v138
    %v5615 = vpop.permute.xlu0 %5614
    %5616 = vset.pattern.permute.xlu0 6
    %5617 = vperm.xlu0 %5616, %v139
    %v5618 = vpop.permute.xlu0 %5617
    %5619 = vset.pattern.permute.xlu0 6
    %5620 = vperm.xlu0 %5619, %v140
    %v5621 = vpop.permute.xlu0 %5620
    %5622 = vset.pattern.permute.xlu0 6
    %5623 = vperm.xlu0 %5622, %v141
    %v5624 = vpop.permute.xlu0 %5623
    %5625 = vset.pattern.permute.xlu0 6
    %5626 = vperm.xlu0 %5625, %v142
    %v5627 = vpop.permute.xlu0 %5626
    %5628 = vset.pattern.permute.xlu0 6
    %5629 = vperm.xlu0 %5628, %v143
    %v5630 = vpop.permute.xlu0 %5629
    %5631 = vset.pattern.permute.xlu0 6
    %5632 = vperm.xlu0 %5631, %v144
    %v5633 = vpop.permute.xlu0 %5632
    %5634 = vset.pattern.permute.xlu0 6
    %5635 = vperm.xlu0 %5634, %v145
    %v5636 = vpop.permute.xlu0 %5635
    %5637 = vset.pattern.permute.xlu0 6
    %5638 = vperm.xlu0 %5637, %v146
    %v5639 = vpop.permute.xlu0 %5638
    %5640 = vset.pattern.permute.xlu0 6
    %5641 = vperm.xlu0 %5640, %v147
    %v5642 = vpop.permute.xlu0 %5641
    %5643 = vset.pattern.permute.xlu0 6
    %5644 = vperm.xlu0 %5643, %v148
    %v5645 = vpop.permute.xlu0 %5644
    %5646 = vset.pattern.permute.xlu0 6
    %5647 = vperm.xlu0 %5646, %v149
    %v5648 = vpop.permute.xlu0 %5647
    %5649 = vset.pattern.permute.xlu0 6
    %5650 = vperm.xlu0 %5649, %v150
    %v5651 = vpop.permute.xlu0 %5650
    %5652 = vset.pattern.permute.xlu0 6
    %5653 = vperm.xlu0 %5652, %v151
    %v5654 = vpop.permute.xlu0 %5653
    %5655 = vset.pattern.permute.xlu0 6
    %5656 = vperm.xlu0 %5655, %v152
    %v5657 = vpop.permute.xlu0 %5656
    %5658 = vset.pattern.permute.xlu0 6
    %5659 = vperm.xlu0 %5658, %v153
    %v5660 = vpop.permute.xlu0 %5659
    %5661 = vset.pattern.permute.xlu0 6
    %5662 = vperm.xlu0 %5661, %v154
    %v5663 = vpop.permute.xlu0 %5662
    %5664 = vset.pattern.permute.xlu0 6
    %5665 = vperm.xlu0 %5664, %v155
    %v5666 = vpop.permute.xlu0 %5665
    %5667 = vset.pattern.permute.xlu0 6
    %5668 = vperm.xlu0 %5667, %v156
    %v5669 = vpop.permute.xlu0 %5668
    %5670 = vset.pattern.permute.xlu0 6
    %5671 = vperm.xlu0 %5670, %v157
    %v5672 = vpop.permute.xlu0 %5671
    %5673 = vset.pattern.permute.xlu0 6
    %5674 = vperm.xlu0 %5673, %v158
    %v5675 = vpop.permute.xlu0 %5674
    %5676 = vset.pattern.permute.xlu0 6
    %5677 = vperm.xlu0 %5676, %v159
    %v5678 = vpop.permute.xlu0 %5677
    %5679 = vset.pattern.permute.xlu0 6
    %5680 = vperm.xlu0 %5679, %v160
    %v5681 = vpop.permute.xlu0 %5680
    %5682 = vset.pattern.permute.xlu0 6
    %5683 = vperm.xlu0 %5682, %v161
    %v5684 = vpop.permute.xlu0 %5683
    %5685 = vset.pattern.permute.xlu0 6
    %5686 = vperm.xlu0 %5685, %v162
    %v5687 = vpop.permute.xlu0 %5686
    %5688 = vset.pattern.permute.xlu0 6
    %5689 = vperm.xlu0 %5688, %v163
    %v5690 = vpop.permute.xlu0 %5689
    %5691 = vset.pattern.permute.xlu0 6
    %5692 = vperm.xlu0 %5691, %v164
    %v5693 = vpop.permute.xlu0 %5692
    %5694 = vset.pattern.permute.xlu0 6
    %5695 = vperm.xlu0 %5694, %v165
    %v5696 = vpop.permute.xlu0 %5695
    %5697 = vset.pattern.permute.xlu0 6
    %5698 = vperm.xlu0 %5697, %v166
    %v5699 = vpop.permute.xlu0 %5698
    %5700 = vset.pattern.permute.xlu0 6
    %5701 = vperm.xlu0 %5700, %v167
    %v5702 = vpop.permute.xlu0 %5701
    %5703 = vset.pattern.permute.xlu0 6
    %5704 = vperm.xlu0 %5703, %v168
    %v5705 = vpop.permute.xlu0 %5704
    %5706 = vset.pattern.permute.xlu0 6
    %5707 = vperm.xlu0 %5706, %v169
    %v5708 = vpop.permute.xlu0 %5707
    %5709 = vset.pattern.permute.xlu0 6
    %5710 = vperm.xlu0 %5709, %v170
    %v5711 = vpop.permute.xlu0 %5710
    %5712 = vset.pattern.permute.xlu0 6
    %5713 = vperm.xlu0 %5712, %v171
    %v5714 = vpop.permute.xlu0 %5713
    %5715 = vset.pattern.permute.xlu0 6
    %5716 = vperm.xlu0 %5715, %v172
    %v5717 = vpop.permute.xlu0 %5716
    %5718 = vset.pattern.permute.xlu0 6
    %5719 = vperm.xlu0 %5718, %v173
    %v5720 = vpop.permute.xlu0 %5719
    %5721 = vset.pattern.permute.xlu0 6
    %5722 = vperm.xlu0 %5721, %v174
    %v5723 = vpop.permute.xlu0 %5722
    %5724 = vset.pattern.permute.xlu0 6
    %5725 = vperm.xlu0 %5724, %v175
    %v5726 = vpop.permute.xlu0 %5725
    %5727 = vset.pattern.permute.xlu0 6
    %5728 = vperm.xlu0 %5727, %v176
    %v5729 = vpop.permute.xlu0 %5728
    %5730 = vset.pattern.permute.xlu0 6
    %5731 = vperm.xlu0 %5730, %v177
    %v5732 = vpop.permute.xlu0 %5731
    %5733 = vset.pattern.permute.xlu0 6
    %5734 = vperm.xlu0 %5733, %v178
    %v5735 = vpop.permute.xlu0 %5734
    %5736 = vset.pattern.permute.xlu0 6
    %5737 = vperm.xlu0 %5736, %v179
    %v5738 = vpop.permute.xlu0 %5737
    %5739 = vset.pattern.permute.xlu0 6
    %5740 = vperm.xlu0 %5739, %v180
    %v5741 = vpop.permute.xlu0 %5740
    %5742 = vset.pattern.permute.xlu0 6
    %5743 = vperm.xlu0 %5742, %v181
    %v5744 = vpop.permute.xlu0 %5743
    %5745 = vset.pattern.permute.xlu0 6
    %5746 = vperm.xlu0 %5745, %v182
    %v5747 = vpop.permute.xlu0 %5746
    %5748 = vset.pattern.permute.xlu0 6
    %5749 = vperm.xlu0 %5748, %v183
    %v5750 = vpop.permute.xlu0 %5749
    %5751 = vset.pattern.permute.xlu0 6
    %5752 = vperm.xlu0 %5751, %v184
    %v5753 = vpop.permute.xlu0 %5752
    %5754 = vset.pattern.permute.xlu0 6
    %5755 = vperm.xlu0 %5754, %v185
    %v5756 = vpop.permute.xlu0 %5755
    %5757 = vset.pattern.permute.xlu0 6
    %5758 = vperm.xlu0 %5757, %v186
    %v5759 = vpop.permute.xlu0 %5758
    %5760 = vset.pattern.permute.xlu0 6
    %5761 = vperm.xlu0 %5760, %v187
    %v5762 = vpop.permute.xlu0 %5761
    %5763 = vset.pattern.permute.xlu0 6
    %5764 = vperm.xlu0 %5763, %v188
    %v5765 = vpop.permute.xlu0 %5764
    %5766 = vset.pattern.permute.xlu0 6
    %5767 = vperm.xlu0 %5766, %v189
    %v5768 = vpop.permute.xlu0 %5767
    %5769 = vset.pattern.permute.xlu0 6
    %5770 = vperm.xlu0 %5769, %v190
    %v5771 = vpop.permute.xlu0 %5770
    %5772 = vset.pattern.permute.xlu0 6
    %5773 = vperm.xlu0 %5772, %v191
    %v5774 = vpop.permute.xlu0 %5773
    %5775 = vset.pattern.permute.xlu0 6
    %5776 = vperm.xlu0 %5775, %v192
    %v5777 = vpop.permute.xlu0 %5776
    %5778 = vset.pattern.permute.xlu0 6
    %5779 = vperm.xlu0 %5778, %v193
    %v5780 = vpop.permute.xlu0 %5779
    %v5781 = vrot.slane %v5591, 1
    %v5782 = vrot.slane %v5594, 1
    %v5783 = vsel %vm450, %v5781, %v5782
    %v5784 = vrot.slane %v5597, 1
    %v5785 = vsel %vm450, %v5782, %v5784
    %v5786 = vrot.slane %v5600, 1
    %v5787 = vsel %vm450, %v5784, %v5786
    %v5788 = vrot.slane %v5603, 1
    %v5789 = vsel %vm450, %v5786, %v5788
    %v5790 = vrot.slane %v5606, 1
    %v5791 = vsel %vm450, %v5788, %v5790
    %v5792 = vrot.slane %v5609, 1
    %v5793 = vsel %vm450, %v5790, %v5792
    %v5794 = vrot.slane %v5612, 1
    %v5795 = vsel %vm450, %v5792, %v5794
    %v5796 = vrot.slane %v5615, 1
    %v5797 = vsel %vm450, %v5794, %v5796
    %v5798 = vrot.slane %v5618, 1
    %v5799 = vsel %vm450, %v5796, %v5798
    %v5800 = vrot.slane %v5621, 1
    %v5801 = vsel %vm450, %v5798, %v5800
    %v5802 = vrot.slane %v5624, 1
    %v5803 = vsel %vm450, %v5800, %v5802
    %v5804 = vrot.slane %v5627, 1
    %v5805 = vsel %vm450, %v5802, %v5804
    %v5806 = vrot.slane %v5630, 1
    %v5807 = vsel %vm450, %v5804, %v5806
    %v5808 = vrot.slane %v5633, 1
    %v5809 = vsel %vm450, %v5806, %v5808
    %v5810 = vrot.slane %v5636, 1
    %v5811 = vsel %vm450, %v5808, %v5810
    %v5812 = vrot.slane %v5639, 1
    %v5813 = vsel %vm450, %v5810, %v5812
    %v5814 = vrot.slane %v5642, 1
    %v5815 = vsel %vm450, %v5812, %v5814
    %v5816 = vrot.slane %v5645, 1
    %v5817 = vsel %vm450, %v5814, %v5816
    %v5818 = vrot.slane %v5648, 1
    %v5819 = vsel %vm450, %v5816, %v5818
    %v5820 = vrot.slane %v5651, 1
    %v5821 = vsel %vm450, %v5818, %v5820
    %v5822 = vrot.slane %v5654, 1
    %v5823 = vsel %vm450, %v5820, %v5822
    %v5824 = vrot.slane %v5657, 1
    %v5825 = vsel %vm450, %v5822, %v5824
    %v5826 = vrot.slane %v5660, 1
    %v5827 = vsel %vm450, %v5824, %v5826
    %v5828 = vrot.slane %v5663, 1
    %v5829 = vsel %vm450, %v5826, %v5828
    %v5830 = vrot.slane %v5666, 1
    %v5831 = vsel %vm450, %v5828, %v5830
    %v5832 = vrot.slane %v5669, 1
    %v5833 = vsel %vm450, %v5830, %v5832
    %v5834 = vrot.slane %v5672, 1
    %v5835 = vsel %vm450, %v5832, %v5834
    %v5836 = vrot.slane %v5675, 1
    %v5837 = vsel %vm450, %v5834, %v5836
    %v5838 = vrot.slane %v5678, 1
    %v5839 = vsel %vm450, %v5836, %v5838
    %v5840 = vrot.slane %v5681, 1
    %v5841 = vsel %vm450, %v5838, %v5840
    %v5842 = vrot.slane %v5684, 1
    %v5843 = vsel %vm450, %v5840, %v5842
    %v5844 = vrot.slane %v5687, 1
    %v5845 = vsel %vm450, %v5842, %v5844
    %v5846 = vrot.slane %v5690, 1
    %v5847 = vsel %vm450, %v5844, %v5846
    %v5848 = vrot.slane %v5693, 1
    %v5849 = vsel %vm450, %v5846, %v5848
    %v5850 = vrot.slane %v5696, 1
    %v5851 = vsel %vm450, %v5848, %v5850
    %v5852 = vrot.slane %v5699, 1
    %v5853 = vsel %vm450, %v5850, %v5852
    %v5854 = vrot.slane %v5702, 1
    %v5855 = vsel %vm450, %v5852, %v5854
    %v5856 = vrot.slane %v5705, 1
    %v5857 = vsel %vm450, %v5854, %v5856
    %v5858 = vrot.slane %v5708, 1
    %v5859 = vsel %vm450, %v5856, %v5858
    %v5860 = vrot.slane %v5711, 1
    %v5861 = vsel %vm450, %v5858, %v5860
    %v5862 = vrot.slane %v5714, 1
    %v5863 = vsel %vm450, %v5860, %v5862
    %v5864 = vrot.slane %v5717, 1
    %v5865 = vsel %vm450, %v5862, %v5864
    %v5866 = vrot.slane %v5720, 1
    %v5867 = vsel %vm450, %v5864, %v5866
    %v5868 = vrot.slane %v5723, 1
    %v5869 = vsel %vm450, %v5866, %v5868
    %v5870 = vrot.slane %v5726, 1
    %v5871 = vsel %vm450, %v5868, %v5870
    %v5872 = vrot.slane %v5729, 1
    %v5873 = vsel %vm450, %v5870, %v5872
    %v5874 = vrot.slane %v5732, 1
    %v5875 = vsel %vm450, %v5872, %v5874
    %v5876 = vrot.slane %v5735, 1
    %v5877 = vsel %vm450, %v5874, %v5876
    %v5878 = vrot.slane %v5738, 1
    %v5879 = vsel %vm450, %v5876, %v5878
    %v5880 = vrot.slane %v5741, 1
    %v5881 = vsel %vm450, %v5878, %v5880
    %v5882 = vrot.slane %v5744, 1
    %v5883 = vsel %vm450, %v5880, %v5882
    %v5884 = vrot.slane %v5747, 1
    %v5885 = vsel %vm450, %v5882, %v5884
    %v5886 = vrot.slane %v5750, 1
    %v5887 = vsel %vm450, %v5884, %v5886
    %v5888 = vrot.slane %v5753, 1
    %v5889 = vsel %vm450, %v5886, %v5888
    %v5890 = vrot.slane %v5756, 1
    %v5891 = vsel %vm450, %v5888, %v5890
    %v5892 = vrot.slane %v5759, 1
    %v5893 = vsel %vm450, %v5890, %v5892
    %v5894 = vrot.slane %v5762, 1
    %v5895 = vsel %vm450, %v5892, %v5894
    %v5896 = vrot.slane %v5765, 1
    %v5897 = vsel %vm450, %v5894, %v5896
    %v5898 = vrot.slane %v5768, 1
    %v5899 = vsel %vm450, %v5896, %v5898
    %v5900 = vrot.slane %v5771, 1
    %v5901 = vsel %vm450, %v5898, %v5900
    %v5902 = vrot.slane %v5774, 1
    %v5903 = vsel %vm450, %v5900, %v5902
    %v5904 = vrot.slane %v5777, 1
    %v5905 = vsel %vm450, %v5902, %v5904
    %v5906 = vrot.slane %v5780, 1
    %v5907 = vsel %vm450, %v5904, %v5906
    %v5973 = vmul.f32 %v67, %v5781
    %v5974 = vmul.f32 %v68, %v5783
    %v5975 = vmul.f32 %v69, %v5785
    %v5976 = vmul.f32 %v70, %v5787
    %v5977 = vmul.f32 %v71, %v5789
    %v5978 = vmul.f32 %v72, %v5791
    %v5979 = vmul.f32 %v73, %v5793
    %v5980 = vmul.f32 %v74, %v5795
    %v5981 = vmul.f32 %v75, %v5797
    %v5982 = vmul.f32 %v76, %v5799
    %v5983 = vmul.f32 %v77, %v5801
    %v5984 = vmul.f32 %v78, %v5803
    %v5985 = vmul.f32 %v79, %v5805
    %v5986 = vmul.f32 %v80, %v5807
    %v5987 = vmul.f32 %v81, %v5809
    %v5988 = vmul.f32 %v82, %v5811
    %v5989 = vmul.f32 %v83, %v5813
    %v5990 = vmul.f32 %v84, %v5815
    %v5991 = vmul.f32 %v85, %v5817
    %v5992 = vmul.f32 %v86, %v5819
    %v5993 = vmul.f32 %v87, %v5821
    %v5994 = vmul.f32 %v88, %v5823
    %v5995 = vmul.f32 %v89, %v5825
    %v5996 = vmul.f32 %v90, %v5827
    %v5997 = vmul.f32 %v91, %v5829
    %v5998 = vmul.f32 %v92, %v5831
    %v5999 = vmul.f32 %v93, %v5833
    %v6000 = vmul.f32 %v94, %v5835
    %v6001 = vmul.f32 %v95, %v5837
    %v6002 = vmul.f32 %v96, %v5839
    %v6003 = vmul.f32 %v97, %v5841
    %v6004 = vmul.f32 %v98, %v5843
    %v6005 = vmul.f32 %v99, %v5845
    %v6006 = vmul.f32 %v100, %v5847
    %v6007 = vmul.f32 %v101, %v5849
    %v6008 = vmul.f32 %v102, %v5851
    %v6009 = vmul.f32 %v103, %v5853
    %v6010 = vmul.f32 %v104, %v5855
    %v6011 = vmul.f32 %v105, %v5857
    %v6012 = vmul.f32 %v106, %v5859
    %v6013 = vmul.f32 %v107, %v5861
    %v6014 = vmul.f32 %v108, %v5863
    %v6015 = vmul.f32 %v109, %v5865
    %v6016 = vmul.f32 %v110, %v5867
    %v6017 = vmul.f32 %v111, %v5869
    %v6018 = vmul.f32 %v112, %v5871
    %v6019 = vmul.f32 %v113, %v5873
    %v6020 = vmul.f32 %v114, %v5875
    %v6021 = vmul.f32 %v115, %v5877
    %v6022 = vmul.f32 %v116, %v5879
    %v6023 = vmul.f32 %v117, %v5881
    %v6024 = vmul.f32 %v118, %v5883
    %v6025 = vmul.f32 %v119, %v5885
    %v6026 = vmul.f32 %v120, %v5887
    %v6027 = vmul.f32 %v121, %v5889
    %v6028 = vmul.f32 %v122, %v5891
    %v6029 = vmul.f32 %v123, %v5893
    %v6030 = vmul.f32 %v124, %v5895
    %v6031 = vmul.f32 %v125, %v5897
    %v6032 = vmul.f32 %v126, %v5899
    %v6033 = vmul.f32 %v127, %v5901
    %v6034 = vmul.f32 %v128, %v5903
    %v6035 = vmul.f32 %v129, %v5905
    %v6036 = vmul.f32 %v5907, 0.0
    %v6037 = vmul.f32 %v5906, 0.0
    %s6038 = scalar_lea.vmem %s1, 24
    %v6039 = vld [vmem:[%s6038] sm:$0x7]
    %v6105 = vrot.slane %v5973, 7
    %v6106 = vrot.slane %v5974, 7
    %v6107 = vsel %vm1502, %v6105, %v6106
    %v6108 = vrot.slane %v5975, 7
    %v6109 = vsel %vm1502, %v6106, %v6108
    %v6110 = vrot.slane %v5976, 7
    %v6111 = vsel %vm1502, %v6108, %v6110
    %v6112 = vrot.slane %v5977, 7
    %v6113 = vsel %vm1502, %v6110, %v6112
    %v6114 = vrot.slane %v5978, 7
    %v6115 = vsel %vm1502, %v6112, %v6114
    %v6116 = vrot.slane %v5979, 7
    %v6117 = vsel %vm1502, %v6114, %v6116
    %v6118 = vrot.slane %v5980, 7
    %v6119 = vsel %vm1502, %v6116, %v6118
    %v6120 = vrot.slane %v5981, 7
    %v6121 = vsel %vm1502, %v6118, %v6120
    %v6122 = vrot.slane %v5982, 7
    %v6123 = vsel %vm1502, %v6120, %v6122
    %v6124 = vrot.slane %v5983, 7
    %v6125 = vsel %vm1502, %v6122, %v6124
    %v6126 = vrot.slane %v5984, 7
    %v6127 = vsel %vm1502, %v6124, %v6126
    %v6128 = vrot.slane %v5985, 7
    %v6129 = vsel %vm1502, %v6126, %v6128
    %v6130 = vrot.slane %v5986, 7
    %v6131 = vsel %vm1502, %v6128, %v6130
    %v6132 = vrot.slane %v5987, 7
    %v6133 = vsel %vm1502, %v6130, %v6132
    %v6134 = vrot.slane %v5988, 7
    %v6135 = vsel %vm1502, %v6132, %v6134
    %v6136 = vrot.slane %v5989, 7
    %v6137 = vsel %vm1502, %v6134, %v6136
    %v6138 = vrot.slane %v5990, 7
    %v6139 = vsel %vm1502, %v6136, %v6138
    %v6140 = vrot.slane %v5991, 7
    %v6141 = vsel %vm1502, %v6138, %v6140
    %v6142 = vrot.slane %v5992, 7
    %v6143 = vsel %vm1502, %v6140, %v6142
    %v6144 = vrot.slane %v5993, 7
    %v6145 = vsel %vm1502, %v6142, %v6144
    %v6146 = vrot.slane %v5994, 7
    %v6147 = vsel %vm1502, %v6144, %v6146
    %v6148 = vrot.slane %v5995, 7
    %v6149 = vsel %vm1502, %v6146, %v6148
    %v6150 = vrot.slane %v5996, 7
    %v6151 = vsel %vm1502, %v6148, %v6150
    %v6152 = vrot.slane %v5997, 7
    %v6153 = vsel %vm1502, %v6150, %v6152
    %v6154 = vrot.slane %v5998, 7
    %v6155 = vsel %vm1502, %v6152, %v6154
    %v6156 = vrot.slane %v5999, 7
    %v6157 = vsel %vm1502, %v6154, %v6156
    %v6158 = vrot.slane %v6000, 7
    %v6159 = vsel %vm1502, %v6156, %v6158
    %v6160 = vrot.slane %v6001, 7
    %v6161 = vsel %vm1502, %v6158, %v6160
    %v6162 = vrot.slane %v6002, 7
    %v6163 = vsel %vm1502, %v6160, %v6162
    %v6164 = vrot.slane %v6003, 7
    %v6165 = vsel %vm1502, %v6162, %v6164
    %v6166 = vrot.slane %v6004, 7
    %v6167 = vsel %vm1502, %v6164, %v6166
    %v6168 = vrot.slane %v6005, 7
    %v6169 = vsel %vm1502, %v6166, %v6168
    %v6170 = vrot.slane %v6006, 7
    %v6171 = vsel %vm1502, %v6168, %v6170
    %v6172 = vrot.slane %v6007, 7
    %v6173 = vsel %vm1502, %v6170, %v6172
    %v6174 = vrot.slane %v6008, 7
    %v6175 = vsel %vm1502, %v6172, %v6174
    %v6176 = vrot.slane %v6009, 7
    %v6177 = vsel %vm1502, %v6174, %v6176
    %v6178 = vrot.slane %v6010, 7
    %v6179 = vsel %vm1502, %v6176, %v6178
    %v6180 = vrot.slane %v6011, 7
    %v6181 = vsel %vm1502, %v6178, %v6180
    %v6182 = vrot.slane %v6012, 7
    %v6183 = vsel %vm1502, %v6180, %v6182
    %v6184 = vrot.slane %v6013, 7
    %v6185 = vsel %vm1502, %v6182, %v6184
    %v6186 = vrot.slane %v6014, 7
    %v6187 = vsel %vm1502, %v6184, %v6186
    %v6188 = vrot.slane %v6015, 7
    %v6189 = vsel %vm1502, %v6186, %v6188
    %v6190 = vrot.slane %v6016, 7
    %v6191 = vsel %vm1502, %v6188, %v6190
    %v6192 = vrot.slane %v6017, 7
    %v6193 = vsel %vm1502, %v6190, %v6192
    %v6194 = vrot.slane %v6018, 7
    %v6195 = vsel %vm1502, %v6192, %v6194
    %v6196 = vrot.slane %v6019, 7
    %v6197 = vsel %vm1502, %v6194, %v6196
    %v6198 = vrot.slane %v6020, 7
    %v6199 = vsel %vm1502, %v6196, %v6198
    %v6200 = vrot.slane %v6021, 7
    %v6201 = vsel %vm1502, %v6198, %v6200
    %v6202 = vrot.slane %v6022, 7
    %v6203 = vsel %vm1502, %v6200, %v6202
    %v6204 = vrot.slane %v6023, 7
    %v6205 = vsel %vm1502, %v6202, %v6204
    %v6206 = vrot.slane %v6024, 7
    %v6207 = vsel %vm1502, %v6204, %v6206
    %v6208 = vrot.slane %v6025, 7
    %v6209 = vsel %vm1502, %v6206, %v6208
    %v6210 = vrot.slane %v6026, 7
    %v6211 = vsel %vm1502, %v6208, %v6210
    %v6212 = vrot.slane %v6027, 7
    %v6213 = vsel %vm1502, %v6210, %v6212
    %v6214 = vrot.slane %v6028, 7
    %v6215 = vsel %vm1502, %v6212, %v6214
    %v6216 = vrot.slane %v6029, 7
    %v6217 = vsel %vm1502, %v6214, %v6216
    %v6218 = vrot.slane %v6030, 7
    %v6219 = vsel %vm1502, %v6216, %v6218
    %v6220 = vrot.slane %v6031, 7
    %v6221 = vsel %vm1502, %v6218, %v6220
    %v6222 = vrot.slane %v6032, 7
    %v6223 = vsel %vm1502, %v6220, %v6222
    %v6224 = vrot.slane %v6033, 7
    %v6225 = vsel %vm1502, %v6222, %v6224
    %v6226 = vrot.slane %v6034, 7
    %v6227 = vsel %vm1502, %v6224, %v6226
    %v6228 = vrot.slane %v6035, 7
    %v6229 = vsel %vm1502, %v6226, %v6228
    %v6230 = vrot.slane %v6036, 7
    %v6231 = vsel %vm1502, %v6228, %v6230
    %v6232 = vrot.slane %v6037, 7
    %v6233 = vsel %vm1502, %v6230, %v6232
    %v6234 = vsel %vm1031, %v6107, 0
    %v6236 = vsel %vm1031, %v6109, 0
    %v6238 = vsel %vm1031, %v6111, 0
    %v6240 = vsel %vm1031, %v6113, 0
    %v6242 = vsel %vm1031, %v6115, 0
    %v6244 = vsel %vm1031, %v6117, 0
    %v6246 = vsel %vm1031, %v6119, 0
    %v6248 = vsel %vm1031, %v6121, 0
    %v6250 = vsel %vm1031, %v6123, 0
    %v6252 = vsel %vm1031, %v6125, 0
    %v6254 = vsel %vm1031, %v6127, 0
    %v6256 = vsel %vm1031, %v6129, 0
    %v6258 = vsel %vm1031, %v6131, 0
    %v6260 = vsel %vm1031, %v6133, 0
    %v6262 = vsel %vm1031, %v6135, 0
    %v6264 = vsel %vm1031, %v6137, 0
    %v6266 = vsel %vm1031, %v6139, 0
    %v6268 = vsel %vm1031, %v6141, 0
    %v6270 = vsel %vm1031, %v6143, 0
    %v6272 = vsel %vm1031, %v6145, 0
    %v6274 = vsel %vm1031, %v6147, 0
    %v6276 = vsel %vm1031, %v6149, 0
    %v6278 = vsel %vm1031, %v6151, 0
    %v6280 = vsel %vm1031, %v6153, 0
    %v6282 = vsel %vm1031, %v6155, 0
    %v6284 = vsel %vm1031, %v6157, 0
    %v6286 = vsel %vm1031, %v6159, 0
    %v6288 = vsel %vm1031, %v6161, 0
    %v6290 = vsel %vm1031, %v6163, 0
    %v6292 = vsel %vm1031, %v6165, 0
    %v6294 = vsel %vm1031, %v6167, 0
    %v6296 = vsel %vm1031, %v6169, 0
    %v6298 = vsel %vm1031, %v6171, 0
    %v6300 = vsel %vm1031, %v6173, 0
    %v6302 = vsel %vm1031, %v6175, 0
    %v6304 = vsel %vm1031, %v6177, 0
    %v6306 = vsel %vm1031, %v6179, 0
    %v6308 = vsel %vm1031, %v6181, 0
    %v6310 = vsel %vm1031, %v6183, 0
    %v6312 = vsel %vm1031, %v6185, 0
    %v6314 = vsel %vm1031, %v6187, 0
    %v6316 = vsel %vm1031, %v6189, 0
    %v6318 = vsel %vm1031, %v6191, 0
    %v6320 = vsel %vm1031, %v6193, 0
    %v6322 = vsel %vm1031, %v6195, 0
    %v6324 = vsel %vm1031, %v6197, 0
    %v6326 = vsel %vm1031, %v6199, 0
    %v6328 = vsel %vm1031, %v6201, 0
    %v6330 = vsel %vm1031, %v6203, 0
    %v6332 = vsel %vm1031, %v6205, 0
    %v6334 = vsel %vm1031, %v6207, 0
    %v6336 = vsel %vm1031, %v6209, 0
    %v6338 = vsel %vm1031, %v6211, 0
    %v6340 = vsel %vm1031, %v6213, 0
    %v6342 = vsel %vm1031, %v6215, 0
    %v6344 = vsel %vm1031, %v6217, 0
    %v6346 = vsel %vm1031, %v6219, 0
    %v6348 = vsel %vm1031, %v6221, 0
    %v6350 = vsel %vm1031, %v6223, 0
    %v6352 = vsel %vm1031, %v6225, 0
    %v6354 = vsel %vm1031, %v6227, 0
    %v6356 = vsel %vm1031, %v6229, 0
    %v6358 = vsel %vm1031, %v6231, 0
    %v6360 = vsel %vm1031, %v6233, 0
    %v6363 = vsel %vm1224, %v6039, 0
    %6365 = vmatpush.msra.mxu0 0.0
    %6366 = vmatpush.msra.mxu0 0.0
    %6367 = vmatpush.msra.mxu0 0.0
    %6368 = vmatpush.msra.mxu0 0.0
    %6369 = vmatpush.msra.mxu0 0.0
    %6370 = vmatpush.msra.mxu0 0.0
    %6371 = vmatpush.msra.mxu0 0.0
    %6372 = vmatpush.msra.mxu0 0.0
    %6373 = vmatpush.msra.mxu0 0.0
    %6374 = vmatpush.msra.mxu0 0.0
    %6375 = vmatpush.msra.mxu0 0.0
    %6376 = vmatpush.msra.mxu0 0.0
    %6377 = vmatpush.msra.mxu0 0.0
    %6378 = vmatpush.msra.mxu0 0.0
    %6379 = vmatpush.msra.mxu0 0.0
    %6380 = vmatpush.msra.mxu0 %v6363
    %6381 = vmatmul.f32.gmra.mxu0 %v6234
    %v6382 = vpop.f32.mrf.mxu0
    %v6383 = vadd.f32 0.0, %v6382
    %6384 = vmatmul.f32.gmra.mxu0 %v6236
    %v6385 = vpop.f32.mrf.mxu0
    %v6386 = vadd.f32 0.0, %v6385
    %6387 = vmatmul.f32.gmra.mxu0 %v6238
    %v6388 = vpop.f32.mrf.mxu0
    %v6389 = vadd.f32 0.0, %v6388
    %6390 = vmatmul.f32.gmra.mxu0 %v6240
    %v6391 = vpop.f32.mrf.mxu0
    %v6392 = vadd.f32 0.0, %v6391
    %6393 = vmatmul.f32.gmra.mxu0 %v6242
    %v6394 = vpop.f32.mrf.mxu0
    %v6395 = vadd.f32 0.0, %v6394
    %6396 = vmatmul.f32.gmra.mxu0 %v6244
    %v6397 = vpop.f32.mrf.mxu0
    %v6398 = vadd.f32 0.0, %v6397
    %6399 = vmatmul.f32.gmra.mxu0 %v6246
    %v6400 = vpop.f32.mrf.mxu0
    %v6401 = vadd.f32 0.0, %v6400
    %6402 = vmatmul.f32.gmra.mxu0 %v6248
    %v6403 = vpop.f32.mrf.mxu0
    %v6404 = vadd.f32 0.0, %v6403
    %6405 = vmatmul.f32.gmra.mxu0 %v6250
    %v6406 = vpop.f32.mrf.mxu0
    %v6407 = vadd.f32 0.0, %v6406
    %6408 = vmatmul.f32.gmra.mxu0 %v6252
    %v6409 = vpop.f32.mrf.mxu0
    %v6410 = vadd.f32 0.0, %v6409
    %6411 = vmatmul.f32.gmra.mxu0 %v6254
    %v6412 = vpop.f32.mrf.mxu0
    %v6413 = vadd.f32 0.0, %v6412
    %6414 = vmatmul.f32.gmra.mxu0 %v6256
    %v6415 = vpop.f32.mrf.mxu0
    %v6416 = vadd.f32 0.0, %v6415
    %6417 = vmatmul.f32.gmra.mxu0 %v6258
    %v6418 = vpop.f32.mrf.mxu0
    %v6419 = vadd.f32 0.0, %v6418
    %6420 = vmatmul.f32.gmra.mxu0 %v6260
    %v6421 = vpop.f32.mrf.mxu0
    %v6422 = vadd.f32 0.0, %v6421
    %6423 = vmatmul.f32.gmra.mxu0 %v6262
    %v6424 = vpop.f32.mrf.mxu0
    %v6425 = vadd.f32 0.0, %v6424
    %6426 = vmatmul.f32.gmra.mxu0 %v6264
    %v6427 = vpop.f32.mrf.mxu0
    %v6428 = vadd.f32 0.0, %v6427
    %6429 = vmatmul.f32.gmra.mxu0 %v6266
    %v6430 = vpop.f32.mrf.mxu0
    %v6431 = vadd.f32 0.0, %v6430
    %6432 = vmatmul.f32.gmra.mxu0 %v6268
    %v6433 = vpop.f32.mrf.mxu0
    %v6434 = vadd.f32 0.0, %v6433
    %6435 = vmatmul.f32.gmra.mxu0 %v6270
    %v6436 = vpop.f32.mrf.mxu0
    %v6437 = vadd.f32 0.0, %v6436
    %6438 = vmatmul.f32.gmra.mxu0 %v6272
    %v6439 = vpop.f32.mrf.mxu0
    %v6440 = vadd.f32 0.0, %v6439
    %6441 = vmatmul.f32.gmra.mxu0 %v6274
    %v6442 = vpop.f32.mrf.mxu0
    %v6443 = vadd.f32 0.0, %v6442
    %6444 = vmatmul.f32.gmra.mxu0 %v6276
    %v6445 = vpop.f32.mrf.mxu0
    %v6446 = vadd.f32 0.0, %v6445
    %6447 = vmatmul.f32.gmra.mxu0 %v6278
    %v6448 = vpop.f32.mrf.mxu0
    %v6449 = vadd.f32 0.0, %v6448
    %6450 = vmatmul.f32.gmra.mxu0 %v6280
    %v6451 = vpop.f32.mrf.mxu0
    %v6452 = vadd.f32 0.0, %v6451
    %6453 = vmatmul.f32.gmra.mxu0 %v6282
    %v6454 = vpop.f32.mrf.mxu0
    %v6455 = vadd.f32 0.0, %v6454
    %6456 = vmatmul.f32.gmra.mxu0 %v6284
    %v6457 = vpop.f32.mrf.mxu0
    %v6458 = vadd.f32 0.0, %v6457
    %6459 = vmatmul.f32.gmra.mxu0 %v6286
    %v6460 = vpop.f32.mrf.mxu0
    %v6461 = vadd.f32 0.0, %v6460
    %6462 = vmatmul.f32.gmra.mxu0 %v6288
    %v6463 = vpop.f32.mrf.mxu0
    %v6464 = vadd.f32 0.0, %v6463
    %6465 = vmatmul.f32.gmra.mxu0 %v6290
    %v6466 = vpop.f32.mrf.mxu0
    %v6467 = vadd.f32 0.0, %v6466
    %6468 = vmatmul.f32.gmra.mxu0 %v6292
    %v6469 = vpop.f32.mrf.mxu0
    %v6470 = vadd.f32 0.0, %v6469
    %6471 = vmatmul.f32.gmra.mxu0 %v6294
    %v6472 = vpop.f32.mrf.mxu0
    %v6473 = vadd.f32 0.0, %v6472
    %6474 = vmatmul.f32.gmra.mxu0 %v6296
    %v6475 = vpop.f32.mrf.mxu0
    %v6476 = vadd.f32 0.0, %v6475
    %6477 = vmatmul.f32.gmra.mxu0 %v6298
    %v6478 = vpop.f32.mrf.mxu0
    %v6479 = vadd.f32 0.0, %v6478
    %6480 = vmatmul.f32.gmra.mxu0 %v6300
    %v6481 = vpop.f32.mrf.mxu0
    %v6482 = vadd.f32 0.0, %v6481
    %6483 = vmatmul.f32.gmra.mxu0 %v6302
    %v6484 = vpop.f32.mrf.mxu0
    %v6485 = vadd.f32 0.0, %v6484
    %6486 = vmatmul.f32.gmra.mxu0 %v6304
    %v6487 = vpop.f32.mrf.mxu0
    %v6488 = vadd.f32 0.0, %v6487
    %6489 = vmatmul.f32.gmra.mxu0 %v6306
    %v6490 = vpop.f32.mrf.mxu0
    %v6491 = vadd.f32 0.0, %v6490
    %6492 = vmatmul.f32.gmra.mxu0 %v6308
    %v6493 = vpop.f32.mrf.mxu0
    %v6494 = vadd.f32 0.0, %v6493
    %6495 = vmatmul.f32.gmra.mxu0 %v6310
    %v6496 = vpop.f32.mrf.mxu0
    %v6497 = vadd.f32 0.0, %v6496
    %6498 = vmatmul.f32.gmra.mxu0 %v6312
    %v6499 = vpop.f32.mrf.mxu0
    %v6500 = vadd.f32 0.0, %v6499
    %6501 = vmatmul.f32.gmra.mxu0 %v6314
    %v6502 = vpop.f32.mrf.mxu0
    %v6503 = vadd.f32 0.0, %v6502
    %6504 = vmatmul.f32.gmra.mxu0 %v6316
    %v6505 = vpop.f32.mrf.mxu0
    %v6506 = vadd.f32 0.0, %v6505
    %6507 = vmatmul.f32.gmra.mxu0 %v6318
    %v6508 = vpop.f32.mrf.mxu0
    %v6509 = vadd.f32 0.0, %v6508
    %6510 = vmatmul.f32.gmra.mxu0 %v6320
    %v6511 = vpop.f32.mrf.mxu0
    %v6512 = vadd.f32 0.0, %v6511
    %6513 = vmatmul.f32.gmra.mxu0 %v6322
    %v6514 = vpop.f32.mrf.mxu0
    %v6515 = vadd.f32 0.0, %v6514
    %6516 = vmatmul.f32.gmra.mxu0 %v6324
    %v6517 = vpop.f32.mrf.mxu0
    %v6518 = vadd.f32 0.0, %v6517
    %6519 = vmatmul.f32.gmra.mxu0 %v6326
    %v6520 = vpop.f32.mrf.mxu0
    %v6521 = vadd.f32 0.0, %v6520
    %6522 = vmatmul.f32.gmra.mxu0 %v6328
    %v6523 = vpop.f32.mrf.mxu0
    %v6524 = vadd.f32 0.0, %v6523
    %6525 = vmatmul.f32.gmra.mxu0 %v6330
    %v6526 = vpop.f32.mrf.mxu0
    %v6527 = vadd.f32 0.0, %v6526
    %6528 = vmatmul.f32.gmra.mxu0 %v6332
    %v6529 = vpop.f32.mrf.mxu0
    %v6530 = vadd.f32 0.0, %v6529
    %6531 = vmatmul.f32.gmra.mxu0 %v6334
    %v6532 = vpop.f32.mrf.mxu0
    %v6533 = vadd.f32 0.0, %v6532
    %6534 = vmatmul.f32.gmra.mxu0 %v6336
    %v6535 = vpop.f32.mrf.mxu0
    %v6536 = vadd.f32 0.0, %v6535
    %6537 = vmatmul.f32.gmra.mxu0 %v6338
    %v6538 = vpop.f32.mrf.mxu0
    %v6539 = vadd.f32 0.0, %v6538
    %6540 = vmatmul.f32.gmra.mxu0 %v6340
    %v6541 = vpop.f32.mrf.mxu0
    %v6542 = vadd.f32 0.0, %v6541
    %6543 = vmatmul.f32.gmra.mxu0 %v6342
    %v6544 = vpop.f32.mrf.mxu0
    %v6545 = vadd.f32 0.0, %v6544
    %6546 = vmatmul.f32.gmra.mxu0 %v6344
    %v6547 = vpop.f32.mrf.mxu0
    %v6548 = vadd.f32 0.0, %v6547
    %6549 = vmatmul.f32.gmra.mxu0 %v6346
    %v6550 = vpop.f32.mrf.mxu0
    %v6551 = vadd.f32 0.0, %v6550
    %6552 = vmatmul.f32.gmra.mxu0 %v6348
    %v6553 = vpop.f32.mrf.mxu0
    %v6554 = vadd.f32 0.0, %v6553
    %6555 = vmatmul.f32.gmra.mxu0 %v6350
    %v6556 = vpop.f32.mrf.mxu0
    %v6557 = vadd.f32 0.0, %v6556
    %6558 = vmatmul.f32.gmra.mxu0 %v6352
    %v6559 = vpop.f32.mrf.mxu0
    %v6560 = vadd.f32 0.0, %v6559
    %6561 = vmatmul.f32.gmra.mxu0 %v6354
    %v6562 = vpop.f32.mrf.mxu0
    %v6563 = vadd.f32 0.0, %v6562
    %6564 = vmatmul.f32.gmra.mxu0 %v6356
    %v6565 = vpop.f32.mrf.mxu0
    %v6566 = vadd.f32 0.0, %v6565
    %6567 = vmatmul.f32.gmra.mxu0 %v6358
    %v6568 = vpop.f32.mrf.mxu0
    %v6569 = vadd.f32 0.0, %v6568
    %6570 = vmatmul.f32.gmra.mxu0 %v6360
    %v6571 = vpop.f32.mrf.mxu0
    %v6572 = vadd.f32 0.0, %v6571
    %6573 = vdwg.mxu0
    %v6574 = vadd.f32 %v5525, %v6383
    %v6575 = vadd.f32 %v5526, %v6386
    %v6576 = vadd.f32 %v5527, %v6389
    %v6577 = vadd.f32 %v5528, %v6392
    %v6578 = vadd.f32 %v5529, %v6395
    %v6579 = vadd.f32 %v5530, %v6398
    %v6580 = vadd.f32 %v5531, %v6401
    %v6581 = vadd.f32 %v5532, %v6404
    %v6582 = vadd.f32 %v5533, %v6407
    %v6583 = vadd.f32 %v5534, %v6410
    %v6584 = vadd.f32 %v5535, %v6413
    %v6585 = vadd.f32 %v5536, %v6416
    %v6586 = vadd.f32 %v5537, %v6419
    %v6587 = vadd.f32 %v5538, %v6422
    %v6588 = vadd.f32 %v5539, %v6425
    %v6589 = vadd.f32 %v5540, %v6428
    %v6590 = vadd.f32 %v5541, %v6431
    %v6591 = vadd.f32 %v5542, %v6434
    %v6592 = vadd.f32 %v5543, %v6437
    %v6593 = vadd.f32 %v5544, %v6440
    %v6594 = vadd.f32 %v5545, %v6443
    %v6595 = vadd.f32 %v5546, %v6446
    %v6596 = vadd.f32 %v5547, %v6449
    %v6597 = vadd.f32 %v5548, %v6452
    %v6598 = vadd.f32 %v5549, %v6455
    %v6599 = vadd.f32 %v5550, %v6458
    %v6600 = vadd.f32 %v5551, %v6461
    %v6601 = vadd.f32 %v5552, %v6464
    %v6602 = vadd.f32 %v5553, %v6467
    %v6603 = vadd.f32 %v5554, %v6470
    %v6604 = vadd.f32 %v5555, %v6473
    %v6605 = vadd.f32 %v5556, %v6476
    %v6606 = vadd.f32 %v5557, %v6479
    %v6607 = vadd.f32 %v5558, %v6482
    %v6608 = vadd.f32 %v5559, %v6485
    %v6609 = vadd.f32 %v5560, %v6488
    %v6610 = vadd.f32 %v5561, %v6491
    %v6611 = vadd.f32 %v5562, %v6494
    %v6612 = vadd.f32 %v5563, %v6497
    %v6613 = vadd.f32 %v5564, %v6500
    %v6614 = vadd.f32 %v5565, %v6503
    %v6615 = vadd.f32 %v5566, %v6506
    %v6616 = vadd.f32 %v5567, %v6509
    %v6617 = vadd.f32 %v5568, %v6512
    %v6618 = vadd.f32 %v5569, %v6515
    %v6619 = vadd.f32 %v5570, %v6518
    %v6620 = vadd.f32 %v5571, %v6521
    %v6621 = vadd.f32 %v5572, %v6524
    %v6622 = vadd.f32 %v5573, %v6527
    %v6623 = vadd.f32 %v5574, %v6530
    %v6624 = vadd.f32 %v5575, %v6533
    %v6625 = vadd.f32 %v5576, %v6536
    %v6626 = vadd.f32 %v5577, %v6539
    %v6627 = vadd.f32 %v5578, %v6542
    %v6628 = vadd.f32 %v5579, %v6545
    %v6629 = vadd.f32 %v5580, %v6548
    %v6630 = vadd.f32 %v5581, %v6551
    %v6631 = vadd.f32 %v5582, %v6554
    %v6632 = vadd.f32 %v5583, %v6557
    %v6633 = vadd.f32 %v5584, %v6560
    %v6634 = vadd.f32 %v5585, %v6563
    %v6635 = vadd.f32 %v5586, %v6566
    %v6636 = vadd.f32 %v5587, %v6569
    %v6637 = vadd.f32 %v5588, %v6572
    %6638 = vset.pattern.permute.xlu0 7
    %6639 = vperm.xlu0 %6638, %v130
    %v6640 = vpop.permute.xlu0 %6639
    %6642 = vset.pattern.permute.xlu0 7
    %6643 = vperm.xlu0 %6642, %v131
    %v6644 = vpop.permute.xlu0 %6643
    %6646 = vset.pattern.permute.xlu0 7
    %6647 = vperm.xlu0 %6646, %v132
    %v6648 = vpop.permute.xlu0 %6647
    %6650 = vset.pattern.permute.xlu0 7
    %6651 = vperm.xlu0 %6650, %v133
    %v6652 = vpop.permute.xlu0 %6651
    %6654 = vset.pattern.permute.xlu0 7
    %6655 = vperm.xlu0 %6654, %v134
    %v6656 = vpop.permute.xlu0 %6655
    %6658 = vset.pattern.permute.xlu0 7
    %6659 = vperm.xlu0 %6658, %v135
    %v6660 = vpop.permute.xlu0 %6659
    %6662 = vset.pattern.permute.xlu0 7
    %6663 = vperm.xlu0 %6662, %v136
    %v6664 = vpop.permute.xlu0 %6663
    %6666 = vset.pattern.permute.xlu0 7
    %6667 = vperm.xlu0 %6666, %v137
    %v6668 = vpop.permute.xlu0 %6667
    %6670 = vset.pattern.permute.xlu0 7
    %6671 = vperm.xlu0 %6670, %v138
    %v6672 = vpop.permute.xlu0 %6671
    %6674 = vset.pattern.permute.xlu0 7
    %6675 = vperm.xlu0 %6674, %v139
    %v6676 = vpop.permute.xlu0 %6675
    %6678 = vset.pattern.permute.xlu0 7
    %6679 = vperm.xlu0 %6678, %v140
    %v6680 = vpop.permute.xlu0 %6679
    %6682 = vset.pattern.permute.xlu0 7
    %6683 = vperm.xlu0 %6682, %v141
    %v6684 = vpop.permute.xlu0 %6683
    %6686 = vset.pattern.permute.xlu0 7
    %6687 = vperm.xlu0 %6686, %v142
    %v6688 = vpop.permute.xlu0 %6687
    %6690 = vset.pattern.permute.xlu0 7
    %6691 = vperm.xlu0 %6690, %v143
    %v6692 = vpop.permute.xlu0 %6691
    %6694 = vset.pattern.permute.xlu0 7
    %6695 = vperm.xlu0 %6694, %v144
    %v6696 = vpop.permute.xlu0 %6695
    %6698 = vset.pattern.permute.xlu0 7
    %6699 = vperm.xlu0 %6698, %v145
    %v6700 = vpop.permute.xlu0 %6699
    %6702 = vset.pattern.permute.xlu0 7
    %6703 = vperm.xlu0 %6702, %v146
    %v6704 = vpop.permute.xlu0 %6703
    %6706 = vset.pattern.permute.xlu0 7
    %6707 = vperm.xlu0 %6706, %v147
    %v6708 = vpop.permute.xlu0 %6707
    %6710 = vset.pattern.permute.xlu0 7
    %6711 = vperm.xlu0 %6710, %v148
    %v6712 = vpop.permute.xlu0 %6711
    %6714 = vset.pattern.permute.xlu0 7
    %6715 = vperm.xlu0 %6714, %v149
    %v6716 = vpop.permute.xlu0 %6715
    %6718 = vset.pattern.permute.xlu0 7
    %6719 = vperm.xlu0 %6718, %v150
    %v6720 = vpop.permute.xlu0 %6719
    %6722 = vset.pattern.permute.xlu0 7
    %6723 = vperm.xlu0 %6722, %v151
    %v6724 = vpop.permute.xlu0 %6723
    %6726 = vset.pattern.permute.xlu0 7
    %6727 = vperm.xlu0 %6726, %v152
    %v6728 = vpop.permute.xlu0 %6727
    %6730 = vset.pattern.permute.xlu0 7
    %6731 = vperm.xlu0 %6730, %v153
    %v6732 = vpop.permute.xlu0 %6731
    %6734 = vset.pattern.permute.xlu0 7
    %6735 = vperm.xlu0 %6734, %v154
    %v6736 = vpop.permute.xlu0 %6735
    %6738 = vset.pattern.permute.xlu0 7
    %6739 = vperm.xlu0 %6738, %v155
    %v6740 = vpop.permute.xlu0 %6739
    %6742 = vset.pattern.permute.xlu0 7
    %6743 = vperm.xlu0 %6742, %v156
    %v6744 = vpop.permute.xlu0 %6743
    %6746 = vset.pattern.permute.xlu0 7
    %6747 = vperm.xlu0 %6746, %v157
    %v6748 = vpop.permute.xlu0 %6747
    %6750 = vset.pattern.permute.xlu0 7
    %6751 = vperm.xlu0 %6750, %v158
    %v6752 = vpop.permute.xlu0 %6751
    %6754 = vset.pattern.permute.xlu0 7
    %6755 = vperm.xlu0 %6754, %v159
    %v6756 = vpop.permute.xlu0 %6755
    %6758 = vset.pattern.permute.xlu0 7
    %6759 = vperm.xlu0 %6758, %v160
    %v6760 = vpop.permute.xlu0 %6759
    %6762 = vset.pattern.permute.xlu0 7
    %6763 = vperm.xlu0 %6762, %v161
    %v6764 = vpop.permute.xlu0 %6763
    %6766 = vset.pattern.permute.xlu0 7
    %6767 = vperm.xlu0 %6766, %v162
    %v6768 = vpop.permute.xlu0 %6767
    %6770 = vset.pattern.permute.xlu0 7
    %6771 = vperm.xlu0 %6770, %v163
    %v6772 = vpop.permute.xlu0 %6771
    %6774 = vset.pattern.permute.xlu0 7
    %6775 = vperm.xlu0 %6774, %v164
    %v6776 = vpop.permute.xlu0 %6775
    %6778 = vset.pattern.permute.xlu0 7
    %6779 = vperm.xlu0 %6778, %v165
    %v6780 = vpop.permute.xlu0 %6779
    %6782 = vset.pattern.permute.xlu0 7
    %6783 = vperm.xlu0 %6782, %v166
    %v6784 = vpop.permute.xlu0 %6783
    %6786 = vset.pattern.permute.xlu0 7
    %6787 = vperm.xlu0 %6786, %v167
    %v6788 = vpop.permute.xlu0 %6787
    %6790 = vset.pattern.permute.xlu0 7
    %6791 = vperm.xlu0 %6790, %v168
    %v6792 = vpop.permute.xlu0 %6791
    %6794 = vset.pattern.permute.xlu0 7
    %6795 = vperm.xlu0 %6794, %v169
    %v6796 = vpop.permute.xlu0 %6795
    %6798 = vset.pattern.permute.xlu0 7
    %6799 = vperm.xlu0 %6798, %v170
    %v6800 = vpop.permute.xlu0 %6799
    %6802 = vset.pattern.permute.xlu0 7
    %6803 = vperm.xlu0 %6802, %v171
    %v6804 = vpop.permute.xlu0 %6803
    %6806 = vset.pattern.permute.xlu0 7
    %6807 = vperm.xlu0 %6806, %v172
    %v6808 = vpop.permute.xlu0 %6807
    %6810 = vset.pattern.permute.xlu0 7
    %6811 = vperm.xlu0 %6810, %v173
    %v6812 = vpop.permute.xlu0 %6811
    %6814 = vset.pattern.permute.xlu0 7
    %6815 = vperm.xlu0 %6814, %v174
    %v6816 = vpop.permute.xlu0 %6815
    %6818 = vset.pattern.permute.xlu0 7
    %6819 = vperm.xlu0 %6818, %v175
    %v6820 = vpop.permute.xlu0 %6819
    %6822 = vset.pattern.permute.xlu0 7
    %6823 = vperm.xlu0 %6822, %v176
    %v6824 = vpop.permute.xlu0 %6823
    %6826 = vset.pattern.permute.xlu0 7
    %6827 = vperm.xlu0 %6826, %v177
    %v6828 = vpop.permute.xlu0 %6827
    %6830 = vset.pattern.permute.xlu0 7
    %6831 = vperm.xlu0 %6830, %v178
    %v6832 = vpop.permute.xlu0 %6831
    %6834 = vset.pattern.permute.xlu0 7
    %6835 = vperm.xlu0 %6834, %v179
    %v6836 = vpop.permute.xlu0 %6835
    %6838 = vset.pattern.permute.xlu0 7
    %6839 = vperm.xlu0 %6838, %v180
    %v6840 = vpop.permute.xlu0 %6839
    %6842 = vset.pattern.permute.xlu0 7
    %6843 = vperm.xlu0 %6842, %v181
    %v6844 = vpop.permute.xlu0 %6843
    %6846 = vset.pattern.permute.xlu0 7
    %6847 = vperm.xlu0 %6846, %v182
    %v6848 = vpop.permute.xlu0 %6847
    %6850 = vset.pattern.permute.xlu0 7
    %6851 = vperm.xlu0 %6850, %v183
    %v6852 = vpop.permute.xlu0 %6851
    %6854 = vset.pattern.permute.xlu0 7
    %6855 = vperm.xlu0 %6854, %v184
    %v6856 = vpop.permute.xlu0 %6855
    %6858 = vset.pattern.permute.xlu0 7
    %6859 = vperm.xlu0 %6858, %v185
    %v6860 = vpop.permute.xlu0 %6859
    %6862 = vset.pattern.permute.xlu0 7
    %6863 = vperm.xlu0 %6862, %v186
    %v6864 = vpop.permute.xlu0 %6863
    %6866 = vset.pattern.permute.xlu0 7
    %6867 = vperm.xlu0 %6866, %v187
    %v6868 = vpop.permute.xlu0 %6867
    %6870 = vset.pattern.permute.xlu0 7
    %6871 = vperm.xlu0 %6870, %v188
    %v6872 = vpop.permute.xlu0 %6871
    %6874 = vset.pattern.permute.xlu0 7
    %6875 = vperm.xlu0 %6874, %v189
    %v6876 = vpop.permute.xlu0 %6875
    %6878 = vset.pattern.permute.xlu0 7
    %6879 = vperm.xlu0 %6878, %v190
    %v6880 = vpop.permute.xlu0 %6879
    %6882 = vset.pattern.permute.xlu0 7
    %6883 = vperm.xlu0 %6882, %v191
    %v6884 = vpop.permute.xlu0 %6883
    %6886 = vset.pattern.permute.xlu0 7
    %6887 = vperm.xlu0 %6886, %v192
    %v6888 = vpop.permute.xlu0 %6887
    %6890 = vset.pattern.permute.xlu0 7
    %6891 = vperm.xlu0 %6890, %v193
    %v6892 = vpop.permute.xlu0 %6891
    %v6894 = vmul.f32 %v68, %v6640
    %v6895 = vmul.f32 %v69, %v6644
    %v6896 = vmul.f32 %v70, %v6648
    %v6897 = vmul.f32 %v71, %v6652
    %v6898 = vmul.f32 %v72, %v6656
    %v6899 = vmul.f32 %v73, %v6660
    %v6900 = vmul.f32 %v74, %v6664
    %v6901 = vmul.f32 %v75, %v6668
    %v6902 = vmul.f32 %v76, %v6672
    %v6903 = vmul.f32 %v77, %v6676
    %v6904 = vmul.f32 %v78, %v6680
    %v6905 = vmul.f32 %v79, %v6684
    %v6906 = vmul.f32 %v80, %v6688
    %v6907 = vmul.f32 %v81, %v6692
    %v6908 = vmul.f32 %v82, %v6696
    %v6909 = vmul.f32 %v83, %v6700
    %v6910 = vmul.f32 %v84, %v6704
    %v6911 = vmul.f32 %v85, %v6708
    %v6912 = vmul.f32 %v86, %v6712
    %v6913 = vmul.f32 %v87, %v6716
    %v6914 = vmul.f32 %v88, %v6720
    %v6915 = vmul.f32 %v89, %v6724
    %v6916 = vmul.f32 %v90, %v6728
    %v6917 = vmul.f32 %v91, %v6732
    %v6918 = vmul.f32 %v92, %v6736
    %v6919 = vmul.f32 %v93, %v6740
    %v6920 = vmul.f32 %v94, %v6744
    %v6921 = vmul.f32 %v95, %v6748
    %v6922 = vmul.f32 %v96, %v6752
    %v6923 = vmul.f32 %v97, %v6756
    %v6924 = vmul.f32 %v98, %v6760
    %v6925 = vmul.f32 %v99, %v6764
    %v6926 = vmul.f32 %v100, %v6768
    %v6927 = vmul.f32 %v101, %v6772
    %v6928 = vmul.f32 %v102, %v6776
    %v6929 = vmul.f32 %v103, %v6780
    %v6930 = vmul.f32 %v104, %v6784
    %v6931 = vmul.f32 %v105, %v6788
    %v6932 = vmul.f32 %v106, %v6792
    %v6933 = vmul.f32 %v107, %v6796
    %v6934 = vmul.f32 %v108, %v6800
    %v6935 = vmul.f32 %v109, %v6804
    %v6936 = vmul.f32 %v110, %v6808
    %v6937 = vmul.f32 %v111, %v6812
    %v6938 = vmul.f32 %v112, %v6816
    %v6939 = vmul.f32 %v113, %v6820
    %v6940 = vmul.f32 %v114, %v6824
    %v6941 = vmul.f32 %v115, %v6828
    %v6942 = vmul.f32 %v116, %v6832
    %v6943 = vmul.f32 %v117, %v6836
    %v6944 = vmul.f32 %v118, %v6840
    %v6945 = vmul.f32 %v119, %v6844
    %v6946 = vmul.f32 %v120, %v6848
    %v6947 = vmul.f32 %v121, %v6852
    %v6948 = vmul.f32 %v122, %v6856
    %v6949 = vmul.f32 %v123, %v6860
    %v6950 = vmul.f32 %v124, %v6864
    %v6951 = vmul.f32 %v125, %v6868
    %v6952 = vmul.f32 %v126, %v6872
    %v6953 = vmul.f32 %v127, %v6876
    %v6954 = vmul.f32 %v128, %v6880
    %v6955 = vmul.f32 %v129, %v6884
    %v6956 = vmul.f32 %v6888, 0.0
    %v6957 = vmul.f32 %v6892, 0.0
    %s6958 = scalar_lea.vmem %s1, 28
    %v6959 = vld [vmem:[%s6958] sm:$0x7]
    %v6961 = vsel %vm1031, %v6894, 0
    %v6964 = vsel %vm1031, %v6895, 0
    %v6967 = vsel %vm1031, %v6896, 0
    %v6970 = vsel %vm1031, %v6897, 0
    %v6973 = vsel %vm1031, %v6898, 0
    %v6976 = vsel %vm1031, %v6899, 0
    %v6979 = vsel %vm1031, %v6900, 0
    %v6982 = vsel %vm1031, %v6901, 0
    %v6985 = vsel %vm1031, %v6902, 0
    %v6988 = vsel %vm1031, %v6903, 0
    %v6991 = vsel %vm1031, %v6904, 0
    %v6994 = vsel %vm1031, %v6905, 0
    %v6997 = vsel %vm1031, %v6906, 0
    %v7000 = vsel %vm1031, %v6907, 0
    %v7003 = vsel %vm1031, %v6908, 0
    %v7006 = vsel %vm1031, %v6909, 0
    %v7009 = vsel %vm1031, %v6910, 0
    %v7012 = vsel %vm1031, %v6911, 0
    %v7015 = vsel %vm1031, %v6912, 0
    %v7018 = vsel %vm1031, %v6913, 0
    %v7021 = vsel %vm1031, %v6914, 0
    %v7024 = vsel %vm1031, %v6915, 0
    %v7027 = vsel %vm1031, %v6916, 0
    %v7030 = vsel %vm1031, %v6917, 0
    %v7033 = vsel %vm1031, %v6918, 0
    %v7036 = vsel %vm1031, %v6919, 0
    %v7039 = vsel %vm1031, %v6920, 0
    %v7042 = vsel %vm1031, %v6921, 0
    %v7045 = vsel %vm1031, %v6922, 0
    %v7048 = vsel %vm1031, %v6923, 0
    %v7051 = vsel %vm1031, %v6924, 0
    %v7054 = vsel %vm1031, %v6925, 0
    %v7057 = vsel %vm1031, %v6926, 0
    %v7060 = vsel %vm1031, %v6927, 0
    %v7063 = vsel %vm1031, %v6928, 0
    %v7066 = vsel %vm1031, %v6929, 0
    %v7069 = vsel %vm1031, %v6930, 0
    %v7072 = vsel %vm1031, %v6931, 0
    %v7075 = vsel %vm1031, %v6932, 0
    %v7078 = vsel %vm1031, %v6933, 0
    %v7081 = vsel %vm1031, %v6934, 0
    %v7084 = vsel %vm1031, %v6935, 0
    %v7087 = vsel %vm1031, %v6936, 0
    %v7090 = vsel %vm1031, %v6937, 0
    %v7093 = vsel %vm1031, %v6938, 0
    %v7096 = vsel %vm1031, %v6939, 0
    %v7099 = vsel %vm1031, %v6940, 0
    %v7102 = vsel %vm1031, %v6941, 0
    %v7105 = vsel %vm1031, %v6942, 0
    %v7108 = vsel %vm1031, %v6943, 0
    %v7111 = vsel %vm1031, %v6944, 0
    %v7114 = vsel %vm1031, %v6945, 0
    %v7117 = vsel %vm1031, %v6946, 0
    %v7120 = vsel %vm1031, %v6947, 0
    %v7123 = vsel %vm1031, %v6948, 0
    %v7126 = vsel %vm1031, %v6949, 0
    %v7129 = vsel %vm1031, %v6950, 0
    %v7132 = vsel %vm1031, %v6951, 0
    %v7135 = vsel %vm1031, %v6952, 0
    %v7138 = vsel %vm1031, %v6953, 0
    %v7141 = vsel %vm1031, %v6954, 0
    %v7144 = vsel %vm1031, %v6955, 0
    %v7147 = vsel %vm1031, %v6956, 0
    %v7150 = vsel %vm1031, %v6957, 0
    %v7153 = vsel %vm1224, %v6959, 0
    %7155 = vmatpush.msra.mxu0 0.0
    %7156 = vmatpush.msra.mxu0 0.0
    %7157 = vmatpush.msra.mxu0 0.0
    %7158 = vmatpush.msra.mxu0 0.0
    %7159 = vmatpush.msra.mxu0 0.0
    %7160 = vmatpush.msra.mxu0 0.0
    %7161 = vmatpush.msra.mxu0 0.0
    %7162 = vmatpush.msra.mxu0 0.0
    %7163 = vmatpush.msra.mxu0 0.0
    %7164 = vmatpush.msra.mxu0 0.0
    %7165 = vmatpush.msra.mxu0 0.0
    %7166 = vmatpush.msra.mxu0 0.0
    %7167 = vmatpush.msra.mxu0 0.0
    %7168 = vmatpush.msra.mxu0 0.0
    %7169 = vmatpush.msra.mxu0 0.0
    %7170 = vmatpush.msra.mxu0 %v7153
    %7171 = vmatmul.f32.gmra.mxu0 %v6961
    %v7172 = vpop.f32.mrf.mxu0
    %v7173 = vadd.f32 0.0, %v7172
    %7174 = vmatmul.f32.gmra.mxu0 %v6964
    %v7175 = vpop.f32.mrf.mxu0
    %v7176 = vadd.f32 0.0, %v7175
    %7177 = vmatmul.f32.gmra.mxu0 %v6967
    %v7178 = vpop.f32.mrf.mxu0
    %v7179 = vadd.f32 0.0, %v7178
    %7180 = vmatmul.f32.gmra.mxu0 %v6970
    %v7181 = vpop.f32.mrf.mxu0
    %v7182 = vadd.f32 0.0, %v7181
    %7183 = vmatmul.f32.gmra.mxu0 %v6973
    %v7184 = vpop.f32.mrf.mxu0
    %v7185 = vadd.f32 0.0, %v7184
    %7186 = vmatmul.f32.gmra.mxu0 %v6976
    %v7187 = vpop.f32.mrf.mxu0
    %v7188 = vadd.f32 0.0, %v7187
    %7189 = vmatmul.f32.gmra.mxu0 %v6979
    %v7190 = vpop.f32.mrf.mxu0
    %v7191 = vadd.f32 0.0, %v7190
    %7192 = vmatmul.f32.gmra.mxu0 %v6982
    %v7193 = vpop.f32.mrf.mxu0
    %v7194 = vadd.f32 0.0, %v7193
    %7195 = vmatmul.f32.gmra.mxu0 %v6985
    %v7196 = vpop.f32.mrf.mxu0
    %v7197 = vadd.f32 0.0, %v7196
    %7198 = vmatmul.f32.gmra.mxu0 %v6988
    %v7199 = vpop.f32.mrf.mxu0
    %v7200 = vadd.f32 0.0, %v7199
    %7201 = vmatmul.f32.gmra.mxu0 %v6991
    %v7202 = vpop.f32.mrf.mxu0
    %v7203 = vadd.f32 0.0, %v7202
    %7204 = vmatmul.f32.gmra.mxu0 %v6994
    %v7205 = vpop.f32.mrf.mxu0
    %v7206 = vadd.f32 0.0, %v7205
    %7207 = vmatmul.f32.gmra.mxu0 %v6997
    %v7208 = vpop.f32.mrf.mxu0
    %v7209 = vadd.f32 0.0, %v7208
    %7210 = vmatmul.f32.gmra.mxu0 %v7000
    %v7211 = vpop.f32.mrf.mxu0
    %v7212 = vadd.f32 0.0, %v7211
    %7213 = vmatmul.f32.gmra.mxu0 %v7003
    %v7214 = vpop.f32.mrf.mxu0
    %v7215 = vadd.f32 0.0, %v7214
    %7216 = vmatmul.f32.gmra.mxu0 %v7006
    %v7217 = vpop.f32.mrf.mxu0
    %v7218 = vadd.f32 0.0, %v7217
    %7219 = vmatmul.f32.gmra.mxu0 %v7009
    %v7220 = vpop.f32.mrf.mxu0
    %v7221 = vadd.f32 0.0, %v7220
    %7222 = vmatmul.f32.gmra.mxu0 %v7012
    %v7223 = vpop.f32.mrf.mxu0
    %v7224 = vadd.f32 0.0, %v7223
    %7225 = vmatmul.f32.gmra.mxu0 %v7015
    %v7226 = vpop.f32.mrf.mxu0
    %v7227 = vadd.f32 0.0, %v7226
    %7228 = vmatmul.f32.gmra.mxu0 %v7018
    %v7229 = vpop.f32.mrf.mxu0
    %v7230 = vadd.f32 0.0, %v7229
    %7231 = vmatmul.f32.gmra.mxu0 %v7021
    %v7232 = vpop.f32.mrf.mxu0
    %v7233 = vadd.f32 0.0, %v7232
    %7234 = vmatmul.f32.gmra.mxu0 %v7024
    %v7235 = vpop.f32.mrf.mxu0
    %v7236 = vadd.f32 0.0, %v7235
    %7237 = vmatmul.f32.gmra.mxu0 %v7027
    %v7238 = vpop.f32.mrf.mxu0
    %v7239 = vadd.f32 0.0, %v7238
    %7240 = vmatmul.f32.gmra.mxu0 %v7030
    %v7241 = vpop.f32.mrf.mxu0
    %v7242 = vadd.f32 0.0, %v7241
    %7243 = vmatmul.f32.gmra.mxu0 %v7033
    %v7244 = vpop.f32.mrf.mxu0
    %v7245 = vadd.f32 0.0, %v7244
    %7246 = vmatmul.f32.gmra.mxu0 %v7036
    %v7247 = vpop.f32.mrf.mxu0
    %v7248 = vadd.f32 0.0, %v7247
    %7249 = vmatmul.f32.gmra.mxu0 %v7039
    %v7250 = vpop.f32.mrf.mxu0
    %v7251 = vadd.f32 0.0, %v7250
    %7252 = vmatmul.f32.gmra.mxu0 %v7042
    %v7253 = vpop.f32.mrf.mxu0
    %v7254 = vadd.f32 0.0, %v7253
    %7255 = vmatmul.f32.gmra.mxu0 %v7045
    %v7256 = vpop.f32.mrf.mxu0
    %v7257 = vadd.f32 0.0, %v7256
    %7258 = vmatmul.f32.gmra.mxu0 %v7048
    %v7259 = vpop.f32.mrf.mxu0
    %v7260 = vadd.f32 0.0, %v7259
    %7261 = vmatmul.f32.gmra.mxu0 %v7051
    %v7262 = vpop.f32.mrf.mxu0
    %v7263 = vadd.f32 0.0, %v7262
    %7264 = vmatmul.f32.gmra.mxu0 %v7054
    %v7265 = vpop.f32.mrf.mxu0
    %v7266 = vadd.f32 0.0, %v7265
    %7267 = vmatmul.f32.gmra.mxu0 %v7057
    %v7268 = vpop.f32.mrf.mxu0
    %v7269 = vadd.f32 0.0, %v7268
    %7270 = vmatmul.f32.gmra.mxu0 %v7060
    %v7271 = vpop.f32.mrf.mxu0
    %v7272 = vadd.f32 0.0, %v7271
    %7273 = vmatmul.f32.gmra.mxu0 %v7063
    %v7274 = vpop.f32.mrf.mxu0
    %v7275 = vadd.f32 0.0, %v7274
    %7276 = vmatmul.f32.gmra.mxu0 %v7066
    %v7277 = vpop.f32.mrf.mxu0
    %v7278 = vadd.f32 0.0, %v7277
    %7279 = vmatmul.f32.gmra.mxu0 %v7069
    %v7280 = vpop.f32.mrf.mxu0
    %v7281 = vadd.f32 0.0, %v7280
    %7282 = vmatmul.f32.gmra.mxu0 %v7072
    %v7283 = vpop.f32.mrf.mxu0
    %v7284 = vadd.f32 0.0, %v7283
    %7285 = vmatmul.f32.gmra.mxu0 %v7075
    %v7286 = vpop.f32.mrf.mxu0
    %v7287 = vadd.f32 0.0, %v7286
    %7288 = vmatmul.f32.gmra.mxu0 %v7078
    %v7289 = vpop.f32.mrf.mxu0
    %v7290 = vadd.f32 0.0, %v7289
    %7291 = vmatmul.f32.gmra.mxu0 %v7081
    %v7292 = vpop.f32.mrf.mxu0
    %v7293 = vadd.f32 0.0, %v7292
    %7294 = vmatmul.f32.gmra.mxu0 %v7084
    %v7295 = vpop.f32.mrf.mxu0
    %v7296 = vadd.f32 0.0, %v7295
    %7297 = vmatmul.f32.gmra.mxu0 %v7087
    %v7298 = vpop.f32.mrf.mxu0
    %v7299 = vadd.f32 0.0, %v7298
    %7300 = vmatmul.f32.gmra.mxu0 %v7090
    %v7301 = vpop.f32.mrf.mxu0
    %v7302 = vadd.f32 0.0, %v7301
    %7303 = vmatmul.f32.gmra.mxu0 %v7093
    %v7304 = vpop.f32.mrf.mxu0
    %v7305 = vadd.f32 0.0, %v7304
    %7306 = vmatmul.f32.gmra.mxu0 %v7096
    %v7307 = vpop.f32.mrf.mxu0
    %v7308 = vadd.f32 0.0, %v7307
    %7309 = vmatmul.f32.gmra.mxu0 %v7099
    %v7310 = vpop.f32.mrf.mxu0
    %v7311 = vadd.f32 0.0, %v7310
    %7312 = vmatmul.f32.gmra.mxu0 %v7102
    %v7313 = vpop.f32.mrf.mxu0
    %v7314 = vadd.f32 0.0, %v7313
    %7315 = vmatmul.f32.gmra.mxu0 %v7105
    %v7316 = vpop.f32.mrf.mxu0
    %v7317 = vadd.f32 0.0, %v7316
    %7318 = vmatmul.f32.gmra.mxu0 %v7108
    %v7319 = vpop.f32.mrf.mxu0
    %v7320 = vadd.f32 0.0, %v7319
    %7321 = vmatmul.f32.gmra.mxu0 %v7111
    %v7322 = vpop.f32.mrf.mxu0
    %v7323 = vadd.f32 0.0, %v7322
    %7324 = vmatmul.f32.gmra.mxu0 %v7114
    %v7325 = vpop.f32.mrf.mxu0
    %v7326 = vadd.f32 0.0, %v7325
    %7327 = vmatmul.f32.gmra.mxu0 %v7117
    %v7328 = vpop.f32.mrf.mxu0
    %v7329 = vadd.f32 0.0, %v7328
    %7330 = vmatmul.f32.gmra.mxu0 %v7120
    %v7331 = vpop.f32.mrf.mxu0
    %v7332 = vadd.f32 0.0, %v7331
    %7333 = vmatmul.f32.gmra.mxu0 %v7123
    %v7334 = vpop.f32.mrf.mxu0
    %v7335 = vadd.f32 0.0, %v7334
    %7336 = vmatmul.f32.gmra.mxu0 %v7126
    %v7337 = vpop.f32.mrf.mxu0
    %v7338 = vadd.f32 0.0, %v7337
    %7339 = vmatmul.f32.gmra.mxu0 %v7129
    %v7340 = vpop.f32.mrf.mxu0
    %v7341 = vadd.f32 0.0, %v7340
    %7342 = vmatmul.f32.gmra.mxu0 %v7132
    %v7343 = vpop.f32.mrf.mxu0
    %v7344 = vadd.f32 0.0, %v7343
    %7345 = vmatmul.f32.gmra.mxu0 %v7135
    %v7346 = vpop.f32.mrf.mxu0
    %v7347 = vadd.f32 0.0, %v7346
    %7348 = vmatmul.f32.gmra.mxu0 %v7138
    %v7349 = vpop.f32.mrf.mxu0
    %v7350 = vadd.f32 0.0, %v7349
    %7351 = vmatmul.f32.gmra.mxu0 %v7141
    %v7352 = vpop.f32.mrf.mxu0
    %v7353 = vadd.f32 0.0, %v7352
    %7354 = vmatmul.f32.gmra.mxu0 %v7144
    %v7355 = vpop.f32.mrf.mxu0
    %v7356 = vadd.f32 0.0, %v7355
    %7357 = vmatmul.f32.gmra.mxu0 %v7147
    %v7358 = vpop.f32.mrf.mxu0
    %v7359 = vadd.f32 0.0, %v7358
    %7360 = vmatmul.f32.gmra.mxu0 %v7150
    %v7361 = vpop.f32.mrf.mxu0
    %v7362 = vadd.f32 0.0, %v7361
    %7363 = vdwg.mxu0
    %v7364 = vadd.f32 %v6574, %v7173
    %v7365 = vadd.f32 %v6575, %v7176
    %v7366 = vadd.f32 %v6576, %v7179
    %v7367 = vadd.f32 %v6577, %v7182
    %v7368 = vadd.f32 %v6578, %v7185
    %v7369 = vadd.f32 %v6579, %v7188
    %v7370 = vadd.f32 %v6580, %v7191
    %v7371 = vadd.f32 %v6581, %v7194
    %v7372 = vadd.f32 %v6582, %v7197
    %v7373 = vadd.f32 %v6583, %v7200
    %v7374 = vadd.f32 %v6584, %v7203
    %v7375 = vadd.f32 %v6585, %v7206
    %v7376 = vadd.f32 %v6586, %v7209
    %v7377 = vadd.f32 %v6587, %v7212
    %v7378 = vadd.f32 %v6588, %v7215
    %v7379 = vadd.f32 %v6589, %v7218
    %v7380 = vadd.f32 %v6590, %v7221
    %v7381 = vadd.f32 %v6591, %v7224
    %v7382 = vadd.f32 %v6592, %v7227
    %v7383 = vadd.f32 %v6593, %v7230
    %v7384 = vadd.f32 %v6594, %v7233
    %v7385 = vadd.f32 %v6595, %v7236
    %v7386 = vadd.f32 %v6596, %v7239
    %v7387 = vadd.f32 %v6597, %v7242
    %v7388 = vadd.f32 %v6598, %v7245
    %v7389 = vadd.f32 %v6599, %v7248
    %v7390 = vadd.f32 %v6600, %v7251
    %v7391 = vadd.f32 %v6601, %v7254
    %v7392 = vadd.f32 %v6602, %v7257
    %v7393 = vadd.f32 %v6603, %v7260
    %v7394 = vadd.f32 %v6604, %v7263
    %v7395 = vadd.f32 %v6605, %v7266
    %v7396 = vadd.f32 %v6606, %v7269
    %v7397 = vadd.f32 %v6607, %v7272
    %v7398 = vadd.f32 %v6608, %v7275
    %v7399 = vadd.f32 %v6609, %v7278
    %v7400 = vadd.f32 %v6610, %v7281
    %v7401 = vadd.f32 %v6611, %v7284
    %v7402 = vadd.f32 %v6612, %v7287
    %v7403 = vadd.f32 %v6613, %v7290
    %v7404 = vadd.f32 %v6614, %v7293
    %v7405 = vadd.f32 %v6615, %v7296
    %v7406 = vadd.f32 %v6616, %v7299
    %v7407 = vadd.f32 %v6617, %v7302
    %v7408 = vadd.f32 %v6618, %v7305
    %v7409 = vadd.f32 %v6619, %v7308
    %v7410 = vadd.f32 %v6620, %v7311
    %v7411 = vadd.f32 %v6621, %v7314
    %v7412 = vadd.f32 %v6622, %v7317
    %v7413 = vadd.f32 %v6623, %v7320
    %v7414 = vadd.f32 %v6624, %v7323
    %v7415 = vadd.f32 %v6625, %v7326
    %v7416 = vadd.f32 %v6626, %v7329
    %v7417 = vadd.f32 %v6627, %v7332
    %v7418 = vadd.f32 %v6628, %v7335
    %v7419 = vadd.f32 %v6629, %v7338
    %v7420 = vadd.f32 %v6630, %v7341
    %v7421 = vadd.f32 %v6631, %v7344
    %v7422 = vadd.f32 %v6632, %v7347
    %v7423 = vadd.f32 %v6633, %v7350
    %v7424 = vadd.f32 %v6634, %v7353
    %v7425 = vadd.f32 %v6635, %v7356
    %v7426 = vadd.f32 %v6636, %v7359
    %v7427 = vadd.f32 %v6637, %v7362
    %7428 = vset.pattern.permute.xlu0 8
    %7429 = vperm.xlu0 %7428, %v130
    %v7430 = vpop.permute.xlu0 %7429
    %7431 = vset.pattern.permute.xlu0 8
    %7432 = vperm.xlu0 %7431, %v131
    %v7433 = vpop.permute.xlu0 %7432
    %7434 = vset.pattern.permute.xlu0 8
    %7435 = vperm.xlu0 %7434, %v132
    %v7436 = vpop.permute.xlu0 %7435
    %7437 = vset.pattern.permute.xlu0 8
    %7438 = vperm.xlu0 %7437, %v133
    %v7439 = vpop.permute.xlu0 %7438
    %7440 = vset.pattern.permute.xlu0 8
    %7441 = vperm.xlu0 %7440, %v134
    %v7442 = vpop.permute.xlu0 %7441
    %7443 = vset.pattern.permute.xlu0 8
    %7444 = vperm.xlu0 %7443, %v135
    %v7445 = vpop.permute.xlu0 %7444
    %7446 = vset.pattern.permute.xlu0 8
    %7447 = vperm.xlu0 %7446, %v136
    %v7448 = vpop.permute.xlu0 %7447
    %7449 = vset.pattern.permute.xlu0 8
    %7450 = vperm.xlu0 %7449, %v137
    %v7451 = vpop.permute.xlu0 %7450
    %7452 = vset.pattern.permute.xlu0 8
    %7453 = vperm.xlu0 %7452, %v138
    %v7454 = vpop.permute.xlu0 %7453
    %7455 = vset.pattern.permute.xlu0 8
    %7456 = vperm.xlu0 %7455, %v139
    %v7457 = vpop.permute.xlu0 %7456
    %7458 = vset.pattern.permute.xlu0 8
    %7459 = vperm.xlu0 %7458, %v140
    %v7460 = vpop.permute.xlu0 %7459
    %7461 = vset.pattern.permute.xlu0 8
    %7462 = vperm.xlu0 %7461, %v141
    %v7463 = vpop.permute.xlu0 %7462
    %7464 = vset.pattern.permute.xlu0 8
    %7465 = vperm.xlu0 %7464, %v142
    %v7466 = vpop.permute.xlu0 %7465
    %7467 = vset.pattern.permute.xlu0 8
    %7468 = vperm.xlu0 %7467, %v143
    %v7469 = vpop.permute.xlu0 %7468
    %7470 = vset.pattern.permute.xlu0 8
    %7471 = vperm.xlu0 %7470, %v144
    %v7472 = vpop.permute.xlu0 %7471
    %7473 = vset.pattern.permute.xlu0 8
    %7474 = vperm.xlu0 %7473, %v145
    %v7475 = vpop.permute.xlu0 %7474
    %7476 = vset.pattern.permute.xlu0 8
    %7477 = vperm.xlu0 %7476, %v146
    %v7478 = vpop.permute.xlu0 %7477
    %7479 = vset.pattern.permute.xlu0 8
    %7480 = vperm.xlu0 %7479, %v147
    %v7481 = vpop.permute.xlu0 %7480
    %7482 = vset.pattern.permute.xlu0 8
    %7483 = vperm.xlu0 %7482, %v148
    %v7484 = vpop.permute.xlu0 %7483
    %7485 = vset.pattern.permute.xlu0 8
    %7486 = vperm.xlu0 %7485, %v149
    %v7487 = vpop.permute.xlu0 %7486
    %7488 = vset.pattern.permute.xlu0 8
    %7489 = vperm.xlu0 %7488, %v150
    %v7490 = vpop.permute.xlu0 %7489
    %7491 = vset.pattern.permute.xlu0 8
    %7492 = vperm.xlu0 %7491, %v151
    %v7493 = vpop.permute.xlu0 %7492
    %7494 = vset.pattern.permute.xlu0 8
    %7495 = vperm.xlu0 %7494, %v152
    %v7496 = vpop.permute.xlu0 %7495
    %7497 = vset.pattern.permute.xlu0 8
    %7498 = vperm.xlu0 %7497, %v153
    %v7499 = vpop.permute.xlu0 %7498
    %7500 = vset.pattern.permute.xlu0 8
    %7501 = vperm.xlu0 %7500, %v154
    %v7502 = vpop.permute.xlu0 %7501
    %7503 = vset.pattern.permute.xlu0 8
    %7504 = vperm.xlu0 %7503, %v155
    %v7505 = vpop.permute.xlu0 %7504
    %7506 = vset.pattern.permute.xlu0 8
    %7507 = vperm.xlu0 %7506, %v156
    %v7508 = vpop.permute.xlu0 %7507
    %7509 = vset.pattern.permute.xlu0 8
    %7510 = vperm.xlu0 %7509, %v157
    %v7511 = vpop.permute.xlu0 %7510
    %7512 = vset.pattern.permute.xlu0 8
    %7513 = vperm.xlu0 %7512, %v158
    %v7514 = vpop.permute.xlu0 %7513
    %7515 = vset.pattern.permute.xlu0 8
    %7516 = vperm.xlu0 %7515, %v159
    %v7517 = vpop.permute.xlu0 %7516
    %7518 = vset.pattern.permute.xlu0 8
    %7519 = vperm.xlu0 %7518, %v160
    %v7520 = vpop.permute.xlu0 %7519
    %7521 = vset.pattern.permute.xlu0 8
    %7522 = vperm.xlu0 %7521, %v161
    %v7523 = vpop.permute.xlu0 %7522
    %7524 = vset.pattern.permute.xlu0 8
    %7525 = vperm.xlu0 %7524, %v162
    %v7526 = vpop.permute.xlu0 %7525
    %7527 = vset.pattern.permute.xlu0 8
    %7528 = vperm.xlu0 %7527, %v163
    %v7529 = vpop.permute.xlu0 %7528
    %7530 = vset.pattern.permute.xlu0 8
    %7531 = vperm.xlu0 %7530, %v164
    %v7532 = vpop.permute.xlu0 %7531
    %7533 = vset.pattern.permute.xlu0 8
    %7534 = vperm.xlu0 %7533, %v165
    %v7535 = vpop.permute.xlu0 %7534
    %7536 = vset.pattern.permute.xlu0 8
    %7537 = vperm.xlu0 %7536, %v166
    %v7538 = vpop.permute.xlu0 %7537
    %7539 = vset.pattern.permute.xlu0 8
    %7540 = vperm.xlu0 %7539, %v167
    %v7541 = vpop.permute.xlu0 %7540
    %7542 = vset.pattern.permute.xlu0 8
    %7543 = vperm.xlu0 %7542, %v168
    %v7544 = vpop.permute.xlu0 %7543
    %7545 = vset.pattern.permute.xlu0 8
    %7546 = vperm.xlu0 %7545, %v169
    %v7547 = vpop.permute.xlu0 %7546
    %7548 = vset.pattern.permute.xlu0 8
    %7549 = vperm.xlu0 %7548, %v170
    %v7550 = vpop.permute.xlu0 %7549
    %7551 = vset.pattern.permute.xlu0 8
    %7552 = vperm.xlu0 %7551, %v171
    %v7553 = vpop.permute.xlu0 %7552
    %7554 = vset.pattern.permute.xlu0 8
    %7555 = vperm.xlu0 %7554, %v172
    %v7556 = vpop.permute.xlu0 %7555
    %7557 = vset.pattern.permute.xlu0 8
    %7558 = vperm.xlu0 %7557, %v173
    %v7559 = vpop.permute.xlu0 %7558
    %7560 = vset.pattern.permute.xlu0 8
    %7561 = vperm.xlu0 %7560, %v174
    %v7562 = vpop.permute.xlu0 %7561
    %7563 = vset.pattern.permute.xlu0 8
    %7564 = vperm.xlu0 %7563, %v175
    %v7565 = vpop.permute.xlu0 %7564
    %7566 = vset.pattern.permute.xlu0 8
    %7567 = vperm.xlu0 %7566, %v176
    %v7568 = vpop.permute.xlu0 %7567
    %7569 = vset.pattern.permute.xlu0 8
    %7570 = vperm.xlu0 %7569, %v177
    %v7571 = vpop.permute.xlu0 %7570
    %7572 = vset.pattern.permute.xlu0 8
    %7573 = vperm.xlu0 %7572, %v178
    %v7574 = vpop.permute.xlu0 %7573
    %7575 = vset.pattern.permute.xlu0 8
    %7576 = vperm.xlu0 %7575, %v179
    %v7577 = vpop.permute.xlu0 %7576
    %7578 = vset.pattern.permute.xlu0 8
    %7579 = vperm.xlu0 %7578, %v180
    %v7580 = vpop.permute.xlu0 %7579
    %7581 = vset.pattern.permute.xlu0 8
    %7582 = vperm.xlu0 %7581, %v181
    %v7583 = vpop.permute.xlu0 %7582
    %7584 = vset.pattern.permute.xlu0 8
    %7585 = vperm.xlu0 %7584, %v182
    %v7586 = vpop.permute.xlu0 %7585
    %7587 = vset.pattern.permute.xlu0 8
    %7588 = vperm.xlu0 %7587, %v183
    %v7589 = vpop.permute.xlu0 %7588
    %7590 = vset.pattern.permute.xlu0 8
    %7591 = vperm.xlu0 %7590, %v184
    %v7592 = vpop.permute.xlu0 %7591
    %7593 = vset.pattern.permute.xlu0 8
    %7594 = vperm.xlu0 %7593, %v185
    %v7595 = vpop.permute.xlu0 %7594
    %7596 = vset.pattern.permute.xlu0 8
    %7597 = vperm.xlu0 %7596, %v186
    %v7598 = vpop.permute.xlu0 %7597
    %7599 = vset.pattern.permute.xlu0 8
    %7600 = vperm.xlu0 %7599, %v187
    %v7601 = vpop.permute.xlu0 %7600
    %7602 = vset.pattern.permute.xlu0 8
    %7603 = vperm.xlu0 %7602, %v188
    %v7604 = vpop.permute.xlu0 %7603
    %7605 = vset.pattern.permute.xlu0 8
    %7606 = vperm.xlu0 %7605, %v189
    %v7607 = vpop.permute.xlu0 %7606
    %7608 = vset.pattern.permute.xlu0 8
    %7609 = vperm.xlu0 %7608, %v190
    %v7610 = vpop.permute.xlu0 %7609
    %7611 = vset.pattern.permute.xlu0 8
    %7612 = vperm.xlu0 %7611, %v191
    %v7613 = vpop.permute.xlu0 %7612
    %7614 = vset.pattern.permute.xlu0 8
    %7615 = vperm.xlu0 %7614, %v192
    %v7616 = vpop.permute.xlu0 %7615
    %7617 = vset.pattern.permute.xlu0 8
    %7618 = vperm.xlu0 %7617, %v193
    %v7619 = vpop.permute.xlu0 %7618
    %v7620 = vrot.slane %v7430, 7
    %v7621 = vrot.slane %v7433, 7
    %v7622 = vsel %vm1502, %v7620, %v7621
    %v7623 = vrot.slane %v7436, 7
    %v7624 = vsel %vm1502, %v7621, %v7623
    %v7625 = vrot.slane %v7439, 7
    %v7626 = vsel %vm1502, %v7623, %v7625
    %v7627 = vrot.slane %v7442, 7
    %v7628 = vsel %vm1502, %v7625, %v7627
    %v7629 = vrot.slane %v7445, 7
    %v7630 = vsel %vm1502, %v7627, %v7629
    %v7631 = vrot.slane %v7448, 7
    %v7632 = vsel %vm1502, %v7629, %v7631
    %v7633 = vrot.slane %v7451, 7
    %v7634 = vsel %vm1502, %v7631, %v7633
    %v7635 = vrot.slane %v7454, 7
    %v7636 = vsel %vm1502, %v7633, %v7635
    %v7637 = vrot.slane %v7457, 7
    %v7638 = vsel %vm1502, %v7635, %v7637
    %v7639 = vrot.slane %v7460, 7
    %v7640 = vsel %vm1502, %v7637, %v7639
    %v7641 = vrot.slane %v7463, 7
    %v7642 = vsel %vm1502, %v7639, %v7641
    %v7643 = vrot.slane %v7466, 7
    %v7644 = vsel %vm1502, %v7641, %v7643
    %v7645 = vrot.slane %v7469, 7
    %v7646 = vsel %vm1502, %v7643, %v7645
    %v7647 = vrot.slane %v7472, 7
    %v7648 = vsel %vm1502, %v7645, %v7647
    %v7649 = vrot.slane %v7475, 7
    %v7650 = vsel %vm1502, %v7647, %v7649
    %v7651 = vrot.slane %v7478, 7
    %v7652 = vsel %vm1502, %v7649, %v7651
    %v7653 = vrot.slane %v7481, 7
    %v7654 = vsel %vm1502, %v7651, %v7653
    %v7655 = vrot.slane %v7484, 7
    %v7656 = vsel %vm1502, %v7653, %v7655
    %v7657 = vrot.slane %v7487, 7
    %v7658 = vsel %vm1502, %v7655, %v7657
    %v7659 = vrot.slane %v7490, 7
    %v7660 = vsel %vm1502, %v7657, %v7659
    %v7661 = vrot.slane %v7493, 7
    %v7662 = vsel %vm1502, %v7659, %v7661
    %v7663 = vrot.slane %v7496, 7
    %v7664 = vsel %vm1502, %v7661, %v7663
    %v7665 = vrot.slane %v7499, 7
    %v7666 = vsel %vm1502, %v7663, %v7665
    %v7667 = vrot.slane %v7502, 7
    %v7668 = vsel %vm1502, %v7665, %v7667
    %v7669 = vrot.slane %v7505, 7
    %v7670 = vsel %vm1502, %v7667, %v7669
    %v7671 = vrot.slane %v7508, 7
    %v7672 = vsel %vm1502, %v7669, %v7671
    %v7673 = vrot.slane %v7511, 7
    %v7674 = vsel %vm1502, %v7671, %v7673
    %v7675 = vrot.slane %v7514, 7
    %v7676 = vsel %vm1502, %v7673, %v7675
    %v7677 = vrot.slane %v7517, 7
    %v7678 = vsel %vm1502, %v7675, %v7677
    %v7679 = vrot.slane %v7520, 7
    %v7680 = vsel %vm1502, %v7677, %v7679
    %v7681 = vrot.slane %v7523, 7
    %v7682 = vsel %vm1502, %v7679, %v7681
    %v7683 = vrot.slane %v7526, 7
    %v7684 = vsel %vm1502, %v7681, %v7683
    %v7685 = vrot.slane %v7529, 7
    %v7686 = vsel %vm1502, %v7683, %v7685
    %v7687 = vrot.slane %v7532, 7
    %v7688 = vsel %vm1502, %v7685, %v7687
    %v7689 = vrot.slane %v7535, 7
    %v7690 = vsel %vm1502, %v7687, %v7689
    %v7691 = vrot.slane %v7538, 7
    %v7692 = vsel %vm1502, %v7689, %v7691
    %v7693 = vrot.slane %v7541, 7
    %v7694 = vsel %vm1502, %v7691, %v7693
    %v7695 = vrot.slane %v7544, 7
    %v7696 = vsel %vm1502, %v7693, %v7695
    %v7697 = vrot.slane %v7547, 7
    %v7698 = vsel %vm1502, %v7695, %v7697
    %v7699 = vrot.slane %v7550, 7
    %v7700 = vsel %vm1502, %v7697, %v7699
    %v7701 = vrot.slane %v7553, 7
    %v7702 = vsel %vm1502, %v7699, %v7701
    %v7703 = vrot.slane %v7556, 7
    %v7704 = vsel %vm1502, %v7701, %v7703
    %v7705 = vrot.slane %v7559, 7
    %v7706 = vsel %vm1502, %v7703, %v7705
    %v7707 = vrot.slane %v7562, 7
    %v7708 = vsel %vm1502, %v7705, %v7707
    %v7709 = vrot.slane %v7565, 7
    %v7710 = vsel %vm1502, %v7707, %v7709
    %v7711 = vrot.slane %v7568, 7
    %v7712 = vsel %vm1502, %v7709, %v7711
    %v7713 = vrot.slane %v7571, 7
    %v7714 = vsel %vm1502, %v7711, %v7713
    %v7715 = vrot.slane %v7574, 7
    %v7716 = vsel %vm1502, %v7713, %v7715
    %v7717 = vrot.slane %v7577, 7
    %v7718 = vsel %vm1502, %v7715, %v7717
    %v7719 = vrot.slane %v7580, 7
    %v7720 = vsel %vm1502, %v7717, %v7719
    %v7721 = vrot.slane %v7583, 7
    %v7722 = vsel %vm1502, %v7719, %v7721
    %v7723 = vrot.slane %v7586, 7
    %v7724 = vsel %vm1502, %v7721, %v7723
    %v7725 = vrot.slane %v7589, 7
    %v7726 = vsel %vm1502, %v7723, %v7725
    %v7727 = vrot.slane %v7592, 7
    %v7728 = vsel %vm1502, %v7725, %v7727
    %v7729 = vrot.slane %v7595, 7
    %v7730 = vsel %vm1502, %v7727, %v7729
    %v7731 = vrot.slane %v7598, 7
    %v7732 = vsel %vm1502, %v7729, %v7731
    %v7733 = vrot.slane %v7601, 7
    %v7734 = vsel %vm1502, %v7731, %v7733
    %v7735 = vrot.slane %v7604, 7
    %v7736 = vsel %vm1502, %v7733, %v7735
    %v7737 = vrot.slane %v7607, 7
    %v7738 = vsel %vm1502, %v7735, %v7737
    %v7739 = vrot.slane %v7610, 7
    %v7740 = vsel %vm1502, %v7737, %v7739
    %v7741 = vrot.slane %v7613, 7
    %v7742 = vsel %vm1502, %v7739, %v7741
    %v7743 = vrot.slane %v7616, 7
    %v7744 = vsel %vm1502, %v7741, %v7743
    %v7745 = vrot.slane %v7619, 7
    %v7746 = vsel %vm1502, %v7743, %v7745
    %v7812 = vmul.f32 %v68, %v7620
    %v7813 = vmul.f32 %v69, %v7622
    %v7814 = vmul.f32 %v70, %v7624
    %v7815 = vmul.f32 %v71, %v7626
    %v7816 = vmul.f32 %v72, %v7628
    %v7817 = vmul.f32 %v73, %v7630
    %v7818 = vmul.f32 %v74, %v7632
    %v7819 = vmul.f32 %v75, %v7634
    %v7820 = vmul.f32 %v76, %v7636
    %v7821 = vmul.f32 %v77, %v7638
    %v7822 = vmul.f32 %v78, %v7640
    %v7823 = vmul.f32 %v79, %v7642
    %v7824 = vmul.f32 %v80, %v7644
    %v7825 = vmul.f32 %v81, %v7646
    %v7826 = vmul.f32 %v82, %v7648
    %v7827 = vmul.f32 %v83, %v7650
    %v7828 = vmul.f32 %v84, %v7652
    %v7829 = vmul.f32 %v85, %v7654
    %v7830 = vmul.f32 %v86, %v7656
    %v7831 = vmul.f32 %v87, %v7658
    %v7832 = vmul.f32 %v88, %v7660
    %v7833 = vmul.f32 %v89, %v7662
    %v7834 = vmul.f32 %v90, %v7664
    %v7835 = vmul.f32 %v91, %v7666
    %v7836 = vmul.f32 %v92, %v7668
    %v7837 = vmul.f32 %v93, %v7670
    %v7838 = vmul.f32 %v94, %v7672
    %v7839 = vmul.f32 %v95, %v7674
    %v7840 = vmul.f32 %v96, %v7676
    %v7841 = vmul.f32 %v97, %v7678
    %v7842 = vmul.f32 %v98, %v7680
    %v7843 = vmul.f32 %v99, %v7682
    %v7844 = vmul.f32 %v100, %v7684
    %v7845 = vmul.f32 %v101, %v7686
    %v7846 = vmul.f32 %v102, %v7688
    %v7847 = vmul.f32 %v103, %v7690
    %v7848 = vmul.f32 %v104, %v7692
    %v7849 = vmul.f32 %v105, %v7694
    %v7850 = vmul.f32 %v106, %v7696
    %v7851 = vmul.f32 %v107, %v7698
    %v7852 = vmul.f32 %v108, %v7700
    %v7853 = vmul.f32 %v109, %v7702
    %v7854 = vmul.f32 %v110, %v7704
    %v7855 = vmul.f32 %v111, %v7706
    %v7856 = vmul.f32 %v112, %v7708
    %v7857 = vmul.f32 %v113, %v7710
    %v7858 = vmul.f32 %v114, %v7712
    %v7859 = vmul.f32 %v115, %v7714
    %v7860 = vmul.f32 %v116, %v7716
    %v7861 = vmul.f32 %v117, %v7718
    %v7862 = vmul.f32 %v118, %v7720
    %v7863 = vmul.f32 %v119, %v7722
    %v7864 = vmul.f32 %v120, %v7724
    %v7865 = vmul.f32 %v121, %v7726
    %v7866 = vmul.f32 %v122, %v7728
    %v7867 = vmul.f32 %v123, %v7730
    %v7868 = vmul.f32 %v124, %v7732
    %v7869 = vmul.f32 %v125, %v7734
    %v7870 = vmul.f32 %v126, %v7736
    %v7871 = vmul.f32 %v127, %v7738
    %v7872 = vmul.f32 %v128, %v7740
    %v7873 = vmul.f32 %v129, %v7742
    %v7874 = vmul.f32 %v7744, 0.0
    %v7875 = vmul.f32 %v7746, 0.0
    %v7876 = vmul.f32 %v7745, 0.0
    %s7877 = scalar_lea.vmem %s1, 32
    %v7878 = vld [vmem:[%s7877] sm:$0x7]
    %v7944 = vrot.slane %v7812, 1
    %v7945 = vrot.slane %v7813, 1
    %v7946 = vsel %vm450, %v7944, %v7945
    %v7947 = vrot.slane %v7814, 1
    %v7948 = vsel %vm450, %v7945, %v7947
    %v7949 = vrot.slane %v7815, 1
    %v7950 = vsel %vm450, %v7947, %v7949
    %v7951 = vrot.slane %v7816, 1
    %v7952 = vsel %vm450, %v7949, %v7951
    %v7953 = vrot.slane %v7817, 1
    %v7954 = vsel %vm450, %v7951, %v7953
    %v7955 = vrot.slane %v7818, 1
    %v7956 = vsel %vm450, %v7953, %v7955
    %v7957 = vrot.slane %v7819, 1
    %v7958 = vsel %vm450, %v7955, %v7957
    %v7959 = vrot.slane %v7820, 1
    %v7960 = vsel %vm450, %v7957, %v7959
    %v7961 = vrot.slane %v7821, 1
    %v7962 = vsel %vm450, %v7959, %v7961
    %v7963 = vrot.slane %v7822, 1
    %v7964 = vsel %vm450, %v7961, %v7963
    %v7965 = vrot.slane %v7823, 1
    %v7966 = vsel %vm450, %v7963, %v7965
    %v7967 = vrot.slane %v7824, 1
    %v7968 = vsel %vm450, %v7965, %v7967
    %v7969 = vrot.slane %v7825, 1
    %v7970 = vsel %vm450, %v7967, %v7969
    %v7971 = vrot.slane %v7826, 1
    %v7972 = vsel %vm450, %v7969, %v7971
    %v7973 = vrot.slane %v7827, 1
    %v7974 = vsel %vm450, %v7971, %v7973
    %v7975 = vrot.slane %v7828, 1
    %v7976 = vsel %vm450, %v7973, %v7975
    %v7977 = vrot.slane %v7829, 1
    %v7978 = vsel %vm450, %v7975, %v7977
    %v7979 = vrot.slane %v7830, 1
    %v7980 = vsel %vm450, %v7977, %v7979
    %v7981 = vrot.slane %v7831, 1
    %v7982 = vsel %vm450, %v7979, %v7981
    %v7983 = vrot.slane %v7832, 1
    %v7984 = vsel %vm450, %v7981, %v7983
    %v7985 = vrot.slane %v7833, 1
    %v7986 = vsel %vm450, %v7983, %v7985
    %v7987 = vrot.slane %v7834, 1
    %v7988 = vsel %vm450, %v7985, %v7987
    %v7989 = vrot.slane %v7835, 1
    %v7990 = vsel %vm450, %v7987, %v7989
    %v7991 = vrot.slane %v7836, 1
    %v7992 = vsel %vm450, %v7989, %v7991
    %v7993 = vrot.slane %v7837, 1
    %v7994 = vsel %vm450, %v7991, %v7993
    %v7995 = vrot.slane %v7838, 1
    %v7996 = vsel %vm450, %v7993, %v7995
    %v7997 = vrot.slane %v7839, 1
    %v7998 = vsel %vm450, %v7995, %v7997
    %v7999 = vrot.slane %v7840, 1
    %v8000 = vsel %vm450, %v7997, %v7999
    %v8001 = vrot.slane %v7841, 1
    %v8002 = vsel %vm450, %v7999, %v8001
    %v8003 = vrot.slane %v7842, 1
    %v8004 = vsel %vm450, %v8001, %v8003
    %v8005 = vrot.slane %v7843, 1
    %v8006 = vsel %vm450, %v8003, %v8005
    %v8007 = vrot.slane %v7844, 1
    %v8008 = vsel %vm450, %v8005, %v8007
    %v8009 = vrot.slane %v7845, 1
    %v8010 = vsel %vm450, %v8007, %v8009
    %v8011 = vrot.slane %v7846, 1
    %v8012 = vsel %vm450, %v8009, %v8011
    %v8013 = vrot.slane %v7847, 1
    %v8014 = vsel %vm450, %v8011, %v8013
    %v8015 = vrot.slane %v7848, 1
    %v8016 = vsel %vm450, %v8013, %v8015
    %v8017 = vrot.slane %v7849, 1
    %v8018 = vsel %vm450, %v8015, %v8017
    %v8019 = vrot.slane %v7850, 1
    %v8020 = vsel %vm450, %v8017, %v8019
    %v8021 = vrot.slane %v7851, 1
    %v8022 = vsel %vm450, %v8019, %v8021
    %v8023 = vrot.slane %v7852, 1
    %v8024 = vsel %vm450, %v8021, %v8023
    %v8025 = vrot.slane %v7853, 1
    %v8026 = vsel %vm450, %v8023, %v8025
    %v8027 = vrot.slane %v7854, 1
    %v8028 = vsel %vm450, %v8025, %v8027
    %v8029 = vrot.slane %v7855, 1
    %v8030 = vsel %vm450, %v8027, %v8029
    %v8031 = vrot.slane %v7856, 1
    %v8032 = vsel %vm450, %v8029, %v8031
    %v8033 = vrot.slane %v7857, 1
    %v8034 = vsel %vm450, %v8031, %v8033
    %v8035 = vrot.slane %v7858, 1
    %v8036 = vsel %vm450, %v8033, %v8035
    %v8037 = vrot.slane %v7859, 1
    %v8038 = vsel %vm450, %v8035, %v8037
    %v8039 = vrot.slane %v7860, 1
    %v8040 = vsel %vm450, %v8037, %v8039
    %v8041 = vrot.slane %v7861, 1
    %v8042 = vsel %vm450, %v8039, %v8041
    %v8043 = vrot.slane %v7862, 1
    %v8044 = vsel %vm450, %v8041, %v8043
    %v8045 = vrot.slane %v7863, 1
    %v8046 = vsel %vm450, %v8043, %v8045
    %v8047 = vrot.slane %v7864, 1
    %v8048 = vsel %vm450, %v8045, %v8047
    %v8049 = vrot.slane %v7865, 1
    %v8050 = vsel %vm450, %v8047, %v8049
    %v8051 = vrot.slane %v7866, 1
    %v8052 = vsel %vm450, %v8049, %v8051
    %v8053 = vrot.slane %v7867, 1
    %v8054 = vsel %vm450, %v8051, %v8053
    %v8055 = vrot.slane %v7868, 1
    %v8056 = vsel %vm450, %v8053, %v8055
    %v8057 = vrot.slane %v7869, 1
    %v8058 = vsel %vm450, %v8055, %v8057
    %v8059 = vrot.slane %v7870, 1
    %v8060 = vsel %vm450, %v8057, %v8059
    %v8061 = vrot.slane %v7871, 1
    %v8062 = vsel %vm450, %v8059, %v8061
    %v8063 = vrot.slane %v7872, 1
    %v8064 = vsel %vm450, %v8061, %v8063
    %v8065 = vrot.slane %v7873, 1
    %v8066 = vsel %vm450, %v8063, %v8065
    %v8067 = vrot.slane %v7874, 1
    %v8068 = vsel %vm450, %v8065, %v8067
    %v8069 = vrot.slane %v7875, 1
    %v8070 = vsel %vm450, %v8067, %v8069
    %v8071 = vrot.slane %v7876, 1
    %v8072 = vsel %vm450, %v8069, %v8071
    %v8073 = vsel %vm1031, %v7946, 0
    %v8075 = vsel %vm1031, %v7948, 0
    %v8077 = vsel %vm1031, %v7950, 0
    %v8079 = vsel %vm1031, %v7952, 0
    %v8081 = vsel %vm1031, %v7954, 0
    %v8083 = vsel %vm1031, %v7956, 0
    %v8085 = vsel %vm1031, %v7958, 0
    %v8087 = vsel %vm1031, %v7960, 0
    %v8089 = vsel %vm1031, %v7962, 0
    %v8091 = vsel %vm1031, %v7964, 0
    %v8093 = vsel %vm1031, %v7966, 0
    %v8095 = vsel %vm1031, %v7968, 0
    %v8097 = vsel %vm1031, %v7970, 0
    %v8099 = vsel %vm1031, %v7972, 0
    %v8101 = vsel %vm1031, %v7974, 0
    %v8103 = vsel %vm1031, %v7976, 0
    %v8105 = vsel %vm1031, %v7978, 0
    %v8107 = vsel %vm1031, %v7980, 0
    %v8109 = vsel %vm1031, %v7982, 0
    %v8111 = vsel %vm1031, %v7984, 0
    %v8113 = vsel %vm1031, %v7986, 0
    %v8115 = vsel %vm1031, %v7988, 0
    %v8117 = vsel %vm1031, %v7990, 0
    %v8119 = vsel %vm1031, %v7992, 0
    %v8121 = vsel %vm1031, %v7994, 0
    %v8123 = vsel %vm1031, %v7996, 0
    %v8125 = vsel %vm1031, %v7998, 0
    %v8127 = vsel %vm1031, %v8000, 0
    %v8129 = vsel %vm1031, %v8002, 0
    %v8131 = vsel %vm1031, %v8004, 0
    %v8133 = vsel %vm1031, %v8006, 0
    %v8135 = vsel %vm1031, %v8008, 0
    %v8137 = vsel %vm1031, %v8010, 0
    %v8139 = vsel %vm1031, %v8012, 0
    %v8141 = vsel %vm1031, %v8014, 0
    %v8143 = vsel %vm1031, %v8016, 0
    %v8145 = vsel %vm1031, %v8018, 0
    %v8147 = vsel %vm1031, %v8020, 0
    %v8149 = vsel %vm1031, %v8022, 0
    %v8151 = vsel %vm1031, %v8024, 0
    %v8153 = vsel %vm1031, %v8026, 0
    %v8155 = vsel %vm1031, %v8028, 0
    %v8157 = vsel %vm1031, %v8030, 0
    %v8159 = vsel %vm1031, %v8032, 0
    %v8161 = vsel %vm1031, %v8034, 0
    %v8163 = vsel %vm1031, %v8036, 0
    %v8165 = vsel %vm1031, %v8038, 0
    %v8167 = vsel %vm1031, %v8040, 0
    %v8169 = vsel %vm1031, %v8042, 0
    %v8171 = vsel %vm1031, %v8044, 0
    %v8173 = vsel %vm1031, %v8046, 0
    %v8175 = vsel %vm1031, %v8048, 0
    %v8177 = vsel %vm1031, %v8050, 0
    %v8179 = vsel %vm1031, %v8052, 0
    %v8181 = vsel %vm1031, %v8054, 0
    %v8183 = vsel %vm1031, %v8056, 0
    %v8185 = vsel %vm1031, %v8058, 0
    %v8187 = vsel %vm1031, %v8060, 0
    %v8189 = vsel %vm1031, %v8062, 0
    %v8191 = vsel %vm1031, %v8064, 0
    %v8193 = vsel %vm1031, %v8066, 0
    %v8195 = vsel %vm1031, %v8068, 0
    %v8197 = vsel %vm1031, %v8070, 0
    %v8199 = vsel %vm1031, %v8072, 0
    %v8202 = vsel %vm1224, %v7878, 0
    %8204 = vmatpush.msra.mxu0 0.0
    %8205 = vmatpush.msra.mxu0 0.0
    %8206 = vmatpush.msra.mxu0 0.0
    %8207 = vmatpush.msra.mxu0 0.0
    %8208 = vmatpush.msra.mxu0 0.0
    %8209 = vmatpush.msra.mxu0 0.0
    %8210 = vmatpush.msra.mxu0 0.0
    %8211 = vmatpush.msra.mxu0 0.0
    %8212 = vmatpush.msra.mxu0 0.0
    %8213 = vmatpush.msra.mxu0 0.0
    %8214 = vmatpush.msra.mxu0 0.0
    %8215 = vmatpush.msra.mxu0 0.0
    %8216 = vmatpush.msra.mxu0 0.0
    %8217 = vmatpush.msra.mxu0 0.0
    %8218 = vmatpush.msra.mxu0 0.0
    %8219 = vmatpush.msra.mxu0 %v8202
    %8220 = vmatmul.f32.gmra.mxu0 %v8073
    %v8221 = vpop.f32.mrf.mxu0
    %v8222 = vadd.f32 0.0, %v8221
    %8223 = vmatmul.f32.gmra.mxu0 %v8075
    %v8224 = vpop.f32.mrf.mxu0
    %v8225 = vadd.f32 0.0, %v8224
    %8226 = vmatmul.f32.gmra.mxu0 %v8077
    %v8227 = vpop.f32.mrf.mxu0
    %v8228 = vadd.f32 0.0, %v8227
    %8229 = vmatmul.f32.gmra.mxu0 %v8079
    %v8230 = vpop.f32.mrf.mxu0
    %v8231 = vadd.f32 0.0, %v8230
    %8232 = vmatmul.f32.gmra.mxu0 %v8081
    %v8233 = vpop.f32.mrf.mxu0
    %v8234 = vadd.f32 0.0, %v8233
    %8235 = vmatmul.f32.gmra.mxu0 %v8083
    %v8236 = vpop.f32.mrf.mxu0
    %v8237 = vadd.f32 0.0, %v8236
    %8238 = vmatmul.f32.gmra.mxu0 %v8085
    %v8239 = vpop.f32.mrf.mxu0
    %v8240 = vadd.f32 0.0, %v8239
    %8241 = vmatmul.f32.gmra.mxu0 %v8087
    %v8242 = vpop.f32.mrf.mxu0
    %v8243 = vadd.f32 0.0, %v8242
    %8244 = vmatmul.f32.gmra.mxu0 %v8089
    %v8245 = vpop.f32.mrf.mxu0
    %v8246 = vadd.f32 0.0, %v8245
    %8247 = vmatmul.f32.gmra.mxu0 %v8091
    %v8248 = vpop.f32.mrf.mxu0
    %v8249 = vadd.f32 0.0, %v8248
    %8250 = vmatmul.f32.gmra.mxu0 %v8093
    %v8251 = vpop.f32.mrf.mxu0
    %v8252 = vadd.f32 0.0, %v8251
    %8253 = vmatmul.f32.gmra.mxu0 %v8095
    %v8254 = vpop.f32.mrf.mxu0
    %v8255 = vadd.f32 0.0, %v8254
    %8256 = vmatmul.f32.gmra.mxu0 %v8097
    %v8257 = vpop.f32.mrf.mxu0
    %v8258 = vadd.f32 0.0, %v8257
    %8259 = vmatmul.f32.gmra.mxu0 %v8099
    %v8260 = vpop.f32.mrf.mxu0
    %v8261 = vadd.f32 0.0, %v8260
    %8262 = vmatmul.f32.gmra.mxu0 %v8101
    %v8263 = vpop.f32.mrf.mxu0
    %v8264 = vadd.f32 0.0, %v8263
    %8265 = vmatmul.f32.gmra.mxu0 %v8103
    %v8266 = vpop.f32.mrf.mxu0
    %v8267 = vadd.f32 0.0, %v8266
    %8268 = vmatmul.f32.gmra.mxu0 %v8105
    %v8269 = vpop.f32.mrf.mxu0
    %v8270 = vadd.f32 0.0, %v8269
    %8271 = vmatmul.f32.gmra.mxu0 %v8107
    %v8272 = vpop.f32.mrf.mxu0
    %v8273 = vadd.f32 0.0, %v8272
    %8274 = vmatmul.f32.gmra.mxu0 %v8109
    %v8275 = vpop.f32.mrf.mxu0
    %v8276 = vadd.f32 0.0, %v8275
    %8277 = vmatmul.f32.gmra.mxu0 %v8111
    %v8278 = vpop.f32.mrf.mxu0
    %v8279 = vadd.f32 0.0, %v8278
    %8280 = vmatmul.f32.gmra.mxu0 %v8113
    %v8281 = vpop.f32.mrf.mxu0
    %v8282 = vadd.f32 0.0, %v8281
    %8283 = vmatmul.f32.gmra.mxu0 %v8115
    %v8284 = vpop.f32.mrf.mxu0
    %v8285 = vadd.f32 0.0, %v8284
    %8286 = vmatmul.f32.gmra.mxu0 %v8117
    %v8287 = vpop.f32.mrf.mxu0
    %v8288 = vadd.f32 0.0, %v8287
    %8289 = vmatmul.f32.gmra.mxu0 %v8119
    %v8290 = vpop.f32.mrf.mxu0
    %v8291 = vadd.f32 0.0, %v8290
    %8292 = vmatmul.f32.gmra.mxu0 %v8121
    %v8293 = vpop.f32.mrf.mxu0
    %v8294 = vadd.f32 0.0, %v8293
    %8295 = vmatmul.f32.gmra.mxu0 %v8123
    %v8296 = vpop.f32.mrf.mxu0
    %v8297 = vadd.f32 0.0, %v8296
    %8298 = vmatmul.f32.gmra.mxu0 %v8125
    %v8299 = vpop.f32.mrf.mxu0
    %v8300 = vadd.f32 0.0, %v8299
    %8301 = vmatmul.f32.gmra.mxu0 %v8127
    %v8302 = vpop.f32.mrf.mxu0
    %v8303 = vadd.f32 0.0, %v8302
    %8304 = vmatmul.f32.gmra.mxu0 %v8129
    %v8305 = vpop.f32.mrf.mxu0
    %v8306 = vadd.f32 0.0, %v8305
    %8307 = vmatmul.f32.gmra.mxu0 %v8131
    %v8308 = vpop.f32.mrf.mxu0
    %v8309 = vadd.f32 0.0, %v8308
    %8310 = vmatmul.f32.gmra.mxu0 %v8133
    %v8311 = vpop.f32.mrf.mxu0
    %v8312 = vadd.f32 0.0, %v8311
    %8313 = vmatmul.f32.gmra.mxu0 %v8135
    %v8314 = vpop.f32.mrf.mxu0
    %v8315 = vadd.f32 0.0, %v8314
    %8316 = vmatmul.f32.gmra.mxu0 %v8137
    %v8317 = vpop.f32.mrf.mxu0
    %v8318 = vadd.f32 0.0, %v8317
    %8319 = vmatmul.f32.gmra.mxu0 %v8139
    %v8320 = vpop.f32.mrf.mxu0
    %v8321 = vadd.f32 0.0, %v8320
    %8322 = vmatmul.f32.gmra.mxu0 %v8141
    %v8323 = vpop.f32.mrf.mxu0
    %v8324 = vadd.f32 0.0, %v8323
    %8325 = vmatmul.f32.gmra.mxu0 %v8143
    %v8326 = vpop.f32.mrf.mxu0
    %v8327 = vadd.f32 0.0, %v8326
    %8328 = vmatmul.f32.gmra.mxu0 %v8145
    %v8329 = vpop.f32.mrf.mxu0
    %v8330 = vadd.f32 0.0, %v8329
    %8331 = vmatmul.f32.gmra.mxu0 %v8147
    %v8332 = vpop.f32.mrf.mxu0
    %v8333 = vadd.f32 0.0, %v8332
    %8334 = vmatmul.f32.gmra.mxu0 %v8149
    %v8335 = vpop.f32.mrf.mxu0
    %v8336 = vadd.f32 0.0, %v8335
    %8337 = vmatmul.f32.gmra.mxu0 %v8151
    %v8338 = vpop.f32.mrf.mxu0
    %v8339 = vadd.f32 0.0, %v8338
    %8340 = vmatmul.f32.gmra.mxu0 %v8153
    %v8341 = vpop.f32.mrf.mxu0
    %v8342 = vadd.f32 0.0, %v8341
    %8343 = vmatmul.f32.gmra.mxu0 %v8155
    %v8344 = vpop.f32.mrf.mxu0
    %v8345 = vadd.f32 0.0, %v8344
    %8346 = vmatmul.f32.gmra.mxu0 %v8157
    %v8347 = vpop.f32.mrf.mxu0
    %v8348 = vadd.f32 0.0, %v8347
    %8349 = vmatmul.f32.gmra.mxu0 %v8159
    %v8350 = vpop.f32.mrf.mxu0
    %v8351 = vadd.f32 0.0, %v8350
    %8352 = vmatmul.f32.gmra.mxu0 %v8161
    %v8353 = vpop.f32.mrf.mxu0
    %v8354 = vadd.f32 0.0, %v8353
    %8355 = vmatmul.f32.gmra.mxu0 %v8163
    %v8356 = vpop.f32.mrf.mxu0
    %v8357 = vadd.f32 0.0, %v8356
    %8358 = vmatmul.f32.gmra.mxu0 %v8165
    %v8359 = vpop.f32.mrf.mxu0
    %v8360 = vadd.f32 0.0, %v8359
    %8361 = vmatmul.f32.gmra.mxu0 %v8167
    %v8362 = vpop.f32.mrf.mxu0
    %v8363 = vadd.f32 0.0, %v8362
    %8364 = vmatmul.f32.gmra.mxu0 %v8169
    %v8365 = vpop.f32.mrf.mxu0
    %v8366 = vadd.f32 0.0, %v8365
    %8367 = vmatmul.f32.gmra.mxu0 %v8171
    %v8368 = vpop.f32.mrf.mxu0
    %v8369 = vadd.f32 0.0, %v8368
    %8370 = vmatmul.f32.gmra.mxu0 %v8173
    %v8371 = vpop.f32.mrf.mxu0
    %v8372 = vadd.f32 0.0, %v8371
    %8373 = vmatmul.f32.gmra.mxu0 %v8175
    %v8374 = vpop.f32.mrf.mxu0
    %v8375 = vadd.f32 0.0, %v8374
    %8376 = vmatmul.f32.gmra.mxu0 %v8177
    %v8377 = vpop.f32.mrf.mxu0
    %v8378 = vadd.f32 0.0, %v8377
    %8379 = vmatmul.f32.gmra.mxu0 %v8179
    %v8380 = vpop.f32.mrf.mxu0
    %v8381 = vadd.f32 0.0, %v8380
    %8382 = vmatmul.f32.gmra.mxu0 %v8181
    %v8383 = vpop.f32.mrf.mxu0
    %v8384 = vadd.f32 0.0, %v8383
    %8385 = vmatmul.f32.gmra.mxu0 %v8183
    %v8386 = vpop.f32.mrf.mxu0
    %v8387 = vadd.f32 0.0, %v8386
    %8388 = vmatmul.f32.gmra.mxu0 %v8185
    %v8389 = vpop.f32.mrf.mxu0
    %v8390 = vadd.f32 0.0, %v8389
    %8391 = vmatmul.f32.gmra.mxu0 %v8187
    %v8392 = vpop.f32.mrf.mxu0
    %v8393 = vadd.f32 0.0, %v8392
    %8394 = vmatmul.f32.gmra.mxu0 %v8189
    %v8395 = vpop.f32.mrf.mxu0
    %v8396 = vadd.f32 0.0, %v8395
    %8397 = vmatmul.f32.gmra.mxu0 %v8191
    %v8398 = vpop.f32.mrf.mxu0
    %v8399 = vadd.f32 0.0, %v8398
    %8400 = vmatmul.f32.gmra.mxu0 %v8193
    %v8401 = vpop.f32.mrf.mxu0
    %v8402 = vadd.f32 0.0, %v8401
    %8403 = vmatmul.f32.gmra.mxu0 %v8195
    %v8404 = vpop.f32.mrf.mxu0
    %v8405 = vadd.f32 0.0, %v8404
    %8406 = vmatmul.f32.gmra.mxu0 %v8197
    %v8407 = vpop.f32.mrf.mxu0
    %v8408 = vadd.f32 0.0, %v8407
    %8409 = vmatmul.f32.gmra.mxu0 %v8199
    %v8410 = vpop.f32.mrf.mxu0
    %v8411 = vadd.f32 0.0, %v8410
    %8412 = vdwg.mxu0
    %v8413 = vadd.f32 %v7364, %v8222
    %v8414 = vadd.f32 %v7365, %v8225
    %v8415 = vadd.f32 %v7366, %v8228
    %v8416 = vadd.f32 %v7367, %v8231
    %v8417 = vadd.f32 %v7368, %v8234
    %v8418 = vadd.f32 %v7369, %v8237
    %v8419 = vadd.f32 %v7370, %v8240
    %v8420 = vadd.f32 %v7371, %v8243
    %v8421 = vadd.f32 %v7372, %v8246
    %v8422 = vadd.f32 %v7373, %v8249
    %v8423 = vadd.f32 %v7374, %v8252
    %v8424 = vadd.f32 %v7375, %v8255
    %v8425 = vadd.f32 %v7376, %v8258
    %v8426 = vadd.f32 %v7377, %v8261
    %v8427 = vadd.f32 %v7378, %v8264
    %v8428 = vadd.f32 %v7379, %v8267
    %v8429 = vadd.f32 %v7380, %v8270
    %v8430 = vadd.f32 %v7381, %v8273
    %v8431 = vadd.f32 %v7382, %v8276
    %v8432 = vadd.f32 %v7383, %v8279
    %v8433 = vadd.f32 %v7384, %v8282
    %v8434 = vadd.f32 %v7385, %v8285
    %v8435 = vadd.f32 %v7386, %v8288
    %v8436 = vadd.f32 %v7387, %v8291
    %v8437 = vadd.f32 %v7388, %v8294
    %v8438 = vadd.f32 %v7389, %v8297
    %v8439 = vadd.f32 %v7390, %v8300
    %v8440 = vadd.f32 %v7391, %v8303
    %v8441 = vadd.f32 %v7392, %v8306
    %v8442 = vadd.f32 %v7393, %v8309
    %v8443 = vadd.f32 %v7394, %v8312
    %v8444 = vadd.f32 %v7395, %v8315
    %v8445 = vadd.f32 %v7396, %v8318
    %v8446 = vadd.f32 %v7397, %v8321
    %v8447 = vadd.f32 %v7398, %v8324
    %v8448 = vadd.f32 %v7399, %v8327
    %v8449 = vadd.f32 %v7400, %v8330
    %v8450 = vadd.f32 %v7401, %v8333
    %v8451 = vadd.f32 %v7402, %v8336
    %v8452 = vadd.f32 %v7403, %v8339
    %v8453 = vadd.f32 %v7404, %v8342
    %v8454 = vadd.f32 %v7405, %v8345
    %v8455 = vadd.f32 %v7406, %v8348
    %v8456 = vadd.f32 %v7407, %v8351
    %v8457 = vadd.f32 %v7408, %v8354
    %v8458 = vadd.f32 %v7409, %v8357
    %v8459 = vadd.f32 %v7410, %v8360
    %v8460 = vadd.f32 %v7411, %v8363
    %v8461 = vadd.f32 %v7412, %v8366
    %v8462 = vadd.f32 %v7413, %v8369
    %v8463 = vadd.f32 %v7414, %v8372
    %v8464 = vadd.f32 %v7415, %v8375
    %v8465 = vadd.f32 %v7416, %v8378
    %v8466 = vadd.f32 %v7417, %v8381
    %v8467 = vadd.f32 %v7418, %v8384
    %v8468 = vadd.f32 %v7419, %v8387
    %v8469 = vadd.f32 %v7420, %v8390
    %v8470 = vadd.f32 %v7421, %v8393
    %v8471 = vadd.f32 %v7422, %v8396
    %v8472 = vadd.f32 %v7423, %v8399
    %v8473 = vadd.f32 %v7424, %v8402
    %v8474 = vadd.f32 %v7425, %v8405
    %v8475 = vadd.f32 %v7426, %v8408
    %v8476 = vadd.f32 %v7427, %v8411
    %v8477 = vld [vmem:[%s2] sm:$0x1]
    %v8479 = vperm.slane %v8477, 0
    %v8481 = vadd.f32 %v8413, %v8479
    %v8482 = vadd.f32 %v8414, %v8479
    %v8483 = vadd.f32 %v8415, %v8479
    %v8484 = vadd.f32 %v8416, %v8479
    %v8485 = vadd.f32 %v8417, %v8479
    %v8486 = vadd.f32 %v8418, %v8479
    %v8487 = vadd.f32 %v8419, %v8479
    %v8488 = vadd.f32 %v8420, %v8479
    %v8489 = vadd.f32 %v8421, %v8479
    %v8490 = vadd.f32 %v8422, %v8479
    %v8491 = vadd.f32 %v8423, %v8479
    %v8492 = vadd.f32 %v8424, %v8479
    %v8493 = vadd.f32 %v8425, %v8479
    %v8494 = vadd.f32 %v8426, %v8479
    %v8495 = vadd.f32 %v8427, %v8479
    %v8496 = vadd.f32 %v8428, %v8479
    %v8497 = vadd.f32 %v8429, %v8479
    %v8498 = vadd.f32 %v8430, %v8479
    %v8499 = vadd.f32 %v8431, %v8479
    %v8500 = vadd.f32 %v8432, %v8479
    %v8501 = vadd.f32 %v8433, %v8479
    %v8502 = vadd.f32 %v8434, %v8479
    %v8503 = vadd.f32 %v8435, %v8479
    %v8504 = vadd.f32 %v8436, %v8479
    %v8505 = vadd.f32 %v8437, %v8479
    %v8506 = vadd.f32 %v8438, %v8479
    %v8507 = vadd.f32 %v8439, %v8479
    %v8508 = vadd.f32 %v8440, %v8479
    %v8509 = vadd.f32 %v8441, %v8479
    %v8510 = vadd.f32 %v8442, %v8479
    %v8511 = vadd.f32 %v8443, %v8479
    %v8512 = vadd.f32 %v8444, %v8479
    %v8513 = vadd.f32 %v8445, %v8479
    %v8514 = vadd.f32 %v8446, %v8479
    %v8515 = vadd.f32 %v8447, %v8479
    %v8516 = vadd.f32 %v8448, %v8479
    %v8517 = vadd.f32 %v8449, %v8479
    %v8518 = vadd.f32 %v8450, %v8479
    %v8519 = vadd.f32 %v8451, %v8479
    %v8520 = vadd.f32 %v8452, %v8479
    %v8521 = vadd.f32 %v8453, %v8479
    %v8522 = vadd.f32 %v8454, %v8479
    %v8523 = vadd.f32 %v8455, %v8479
    %v8524 = vadd.f32 %v8456, %v8479
    %v8525 = vadd.f32 %v8457, %v8479
    %v8526 = vadd.f32 %v8458, %v8479
    %v8527 = vadd.f32 %v8459, %v8479
    %v8528 = vadd.f32 %v8460, %v8479
    %v8529 = vadd.f32 %v8461, %v8479
    %v8530 = vadd.f32 %v8462, %v8479
    %v8531 = vadd.f32 %v8463, %v8479
    %v8532 = vadd.f32 %v8464, %v8479
    %v8533 = vadd.f32 %v8465, %v8479
    %v8534 = vadd.f32 %v8466, %v8479
    %v8535 = vadd.f32 %v8467, %v8479
    %v8536 = vadd.f32 %v8468, %v8479
    %v8537 = vadd.f32 %v8469, %v8479
    %v8538 = vadd.f32 %v8470, %v8479
    %v8539 = vadd.f32 %v8471, %v8479
    %v8540 = vadd.f32 %v8472, %v8479
    %v8541 = vadd.f32 %v8473, %v8479
    %v8542 = vadd.f32 %v8474, %v8479
    %v8543 = vadd.f32 %v8475, %v8479
    %v8544 = vadd.f32 %v8476, %v8479
    %v8545 = vmax.f32 %v8481, 0.0
    %v8546 = vmax.f32 %v8482, 0.0
    %v8547 = vmax.f32 %v8483, 0.0
    %v8548 = vmax.f32 %v8484, 0.0
    %v8549 = vmax.f32 %v8485, 0.0
    %v8550 = vmax.f32 %v8486, 0.0
    %v8551 = vmax.f32 %v8487, 0.0
    %v8552 = vmax.f32 %v8488, 0.0
    %v8553 = vmax.f32 %v8489, 0.0
    %v8554 = vmax.f32 %v8490, 0.0
    %v8555 = vmax.f32 %v8491, 0.0
    %v8556 = vmax.f32 %v8492, 0.0
    %v8557 = vmax.f32 %v8493, 0.0
    %v8558 = vmax.f32 %v8494, 0.0
    %v8559 = vmax.f32 %v8495, 0.0
    %v8560 = vmax.f32 %v8496, 0.0
    %v8561 = vmax.f32 %v8497, 0.0
    %v8562 = vmax.f32 %v8498, 0.0
    %v8563 = vmax.f32 %v8499, 0.0
    %v8564 = vmax.f32 %v8500, 0.0
    %v8565 = vmax.f32 %v8501, 0.0
    %v8566 = vmax.f32 %v8502, 0.0
    %v8567 = vmax.f32 %v8503, 0.0
    %v8568 = vmax.f32 %v8504, 0.0
    %v8569 = vmax.f32 %v8505, 0.0
    %v8570 = vmax.f32 %v8506, 0.0
    %v8571 = vmax.f32 %v8507, 0.0
    %v8572 = vmax.f32 %v8508, 0.0
    %v8573 = vmax.f32 %v8509, 0.0
    %v8574 = vmax.f32 %v8510, 0.0
    %v8575 = vmax.f32 %v8511, 0.0
    %v8576 = vmax.f32 %v8512, 0.0
    %v8577 = vmax.f32 %v8513, 0.0
    %v8578 = vmax.f32 %v8514, 0.0
    %v8579 = vmax.f32 %v8515, 0.0
    %v8580 = vmax.f32 %v8516, 0.0
    %v8581 = vmax.f32 %v8517, 0.0
    %v8582 = vmax.f32 %v8518, 0.0
    %v8583 = vmax.f32 %v8519, 0.0
    %v8584 = vmax.f32 %v8520, 0.0
    %v8585 = vmax.f32 %v8521, 0.0
    %v8586 = vmax.f32 %v8522, 0.0
    %v8587 = vmax.f32 %v8523, 0.0
    %v8588 = vmax.f32 %v8524, 0.0
    %v8589 = vmax.f32 %v8525, 0.0
    %v8590 = vmax.f32 %v8526, 0.0
    %v8591 = vmax.f32 %v8527, 0.0
    %v8592 = vmax.f32 %v8528, 0.0
    %v8593 = vmax.f32 %v8529, 0.0
    %v8594 = vmax.f32 %v8530, 0.0
    %v8595 = vmax.f32 %v8531, 0.0
    %v8596 = vmax.f32 %v8532, 0.0
    %v8597 = vmax.f32 %v8533, 0.0
    %v8598 = vmax.f32 %v8534, 0.0
    %v8599 = vmax.f32 %v8535, 0.0
    %v8600 = vmax.f32 %v8536, 0.0
    %v8601 = vmax.f32 %v8537, 0.0
    %v8602 = vmax.f32 %v8538, 0.0
    %v8603 = vmax.f32 %v8539, 0.0
    %v8604 = vmax.f32 %v8540, 0.0
    %v8605 = vmax.f32 %v8541, 0.0
    %v8606 = vmax.f32 %v8542, 0.0
    %v8607 = vmax.f32 %v8543, 0.0
    %v8608 = vmax.f32 %v8544, 0.0
    %v8674 = vrot.slane %v8545, 1
    %v8675 = vrot.slane %v8546, 1
    %v8676 = vsel %vm450, %v8674, %v8675
    %v8677 = vrot.slane %v8547, 1
    %v8678 = vsel %vm450, %v8675, %v8677
    %v8679 = vrot.slane %v8548, 1
    %v8680 = vsel %vm450, %v8677, %v8679
    %v8681 = vrot.slane %v8549, 1
    %v8682 = vsel %vm450, %v8679, %v8681
    %v8683 = vrot.slane %v8550, 1
    %v8684 = vsel %vm450, %v8681, %v8683
    %v8685 = vrot.slane %v8551, 1
    %v8686 = vsel %vm450, %v8683, %v8685
    %v8687 = vrot.slane %v8552, 1
    %v8688 = vsel %vm450, %v8685, %v8687
    %v8689 = vrot.slane %v8553, 1
    %v8690 = vsel %vm450, %v8687, %v8689
    %v8691 = vrot.slane %v8554, 1
    %v8692 = vsel %vm450, %v8689, %v8691
    %v8693 = vrot.slane %v8555, 1
    %v8694 = vsel %vm450, %v8691, %v8693
    %v8695 = vrot.slane %v8556, 1
    %v8696 = vsel %vm450, %v8693, %v8695
    %v8697 = vrot.slane %v8557, 1
    %v8698 = vsel %vm450, %v8695, %v8697
    %v8699 = vrot.slane %v8558, 1
    %v8700 = vsel %vm450, %v8697, %v8699
    %v8701 = vrot.slane %v8559, 1
    %v8702 = vsel %vm450, %v8699, %v8701
    %v8703 = vrot.slane %v8560, 1
    %v8704 = vsel %vm450, %v8701, %v8703
    %v8705 = vrot.slane %v8561, 1
    %v8706 = vsel %vm450, %v8703, %v8705
    %v8707 = vrot.slane %v8562, 1
    %v8708 = vsel %vm450, %v8705, %v8707
    %v8709 = vrot.slane %v8563, 1
    %v8710 = vsel %vm450, %v8707, %v8709
    %v8711 = vrot.slane %v8564, 1
    %v8712 = vsel %vm450, %v8709, %v8711
    %v8713 = vrot.slane %v8565, 1
    %v8714 = vsel %vm450, %v8711, %v8713
    %v8715 = vrot.slane %v8566, 1
    %v8716 = vsel %vm450, %v8713, %v8715
    %v8717 = vrot.slane %v8567, 1
    %v8718 = vsel %vm450, %v8715, %v8717
    %v8719 = vrot.slane %v8568, 1
    %v8720 = vsel %vm450, %v8717, %v8719
    %v8721 = vrot.slane %v8569, 1
    %v8722 = vsel %vm450, %v8719, %v8721
    %v8723 = vrot.slane %v8570, 1
    %v8724 = vsel %vm450, %v8721, %v8723
    %v8725 = vrot.slane %v8571, 1
    %v8726 = vsel %vm450, %v8723, %v8725
    %v8727 = vrot.slane %v8572, 1
    %v8728 = vsel %vm450, %v8725, %v8727
    %v8729 = vrot.slane %v8573, 1
    %v8730 = vsel %vm450, %v8727, %v8729
    %v8731 = vrot.slane %v8574, 1
    %v8732 = vsel %vm450, %v8729, %v8731
    %v8733 = vrot.slane %v8575, 1
    %v8734 = vsel %vm450, %v8731, %v8733
    %v8735 = vrot.slane %v8576, 1
    %v8736 = vsel %vm450, %v8733, %v8735
    %v8737 = vrot.slane %v8577, 1
    %v8738 = vsel %vm450, %v8735, %v8737
    %v8739 = vrot.slane %v8578, 1
    %v8740 = vsel %vm450, %v8737, %v8739
    %v8741 = vrot.slane %v8579, 1
    %v8742 = vsel %vm450, %v8739, %v8741
    %v8743 = vrot.slane %v8580, 1
    %v8744 = vsel %vm450, %v8741, %v8743
    %v8745 = vrot.slane %v8581, 1
    %v8746 = vsel %vm450, %v8743, %v8745
    %v8747 = vrot.slane %v8582, 1
    %v8748 = vsel %vm450, %v8745, %v8747
    %v8749 = vrot.slane %v8583, 1
    %v8750 = vsel %vm450, %v8747, %v8749
    %v8751 = vrot.slane %v8584, 1
    %v8752 = vsel %vm450, %v8749, %v8751
    %v8753 = vrot.slane %v8585, 1
    %v8754 = vsel %vm450, %v8751, %v8753
    %v8755 = vrot.slane %v8586, 1
    %v8756 = vsel %vm450, %v8753, %v8755
    %v8757 = vrot.slane %v8587, 1
    %v8758 = vsel %vm450, %v8755, %v8757
    %v8759 = vrot.slane %v8588, 1
    %v8760 = vsel %vm450, %v8757, %v8759
    %v8761 = vrot.slane %v8589, 1
    %v8762 = vsel %vm450, %v8759, %v8761
    %v8763 = vrot.slane %v8590, 1
    %v8764 = vsel %vm450, %v8761, %v8763
    %v8765 = vrot.slane %v8591, 1
    %v8766 = vsel %vm450, %v8763, %v8765
    %v8767 = vrot.slane %v8592, 1
    %v8768 = vsel %vm450, %v8765, %v8767
    %v8769 = vrot.slane %v8593, 1
    %v8770 = vsel %vm450, %v8767, %v8769
    %v8771 = vrot.slane %v8594, 1
    %v8772 = vsel %vm450, %v8769, %v8771
    %v8773 = vrot.slane %v8595, 1
    %v8774 = vsel %vm450, %v8771, %v8773
    %v8775 = vrot.slane %v8596, 1
    %v8776 = vsel %vm450, %v8773, %v8775
    %v8777 = vrot.slane %v8597, 1
    %v8778 = vsel %vm450, %v8775, %v8777
    %v8779 = vrot.slane %v8598, 1
    %v8780 = vsel %vm450, %v8777, %v8779
    %v8781 = vrot.slane %v8599, 1
    %v8782 = vsel %vm450, %v8779, %v8781
    %v8783 = vrot.slane %v8600, 1
    %v8784 = vsel %vm450, %v8781, %v8783
    %v8785 = vrot.slane %v8601, 1
    %v8786 = vsel %vm450, %v8783, %v8785
    %v8787 = vrot.slane %v8602, 1
    %v8788 = vsel %vm450, %v8785, %v8787
    %v8789 = vrot.slane %v8603, 1
    %v8790 = vsel %vm450, %v8787, %v8789
    %v8791 = vrot.slane %v8604, 1
    %v8792 = vsel %vm450, %v8789, %v8791
    %v8793 = vrot.slane %v8605, 1
    %v8794 = vsel %vm450, %v8791, %v8793
    %v8795 = vrot.slane %v8606, 1
    %v8796 = vsel %vm450, %v8793, %v8795
    %v8797 = vrot.slane %v8607, 1
    %v8798 = vsel %vm450, %v8795, %v8797
    %v8799 = vrot.slane %v8608, 1
    %v8800 = vsel %vm450, %v8797, %v8799
    %v8801 = vrot.slane 0.0, 1
    %v8802 = vsel %vm450, %v8799, %v8801
    %v8867 = vmax.f32 %v8545, %v8676
    %v8868 = vmax.f32 %v8546, %v8678
    %v8869 = vmax.f32 %v8547, %v8680
    %v8870 = vmax.f32 %v8548, %v8682
    %v8871 = vmax.f32 %v8549, %v8684
    %v8872 = vmax.f32 %v8550, %v8686
    %v8873 = vmax.f32 %v8551, %v8688
    %v8874 = vmax.f32 %v8552, %v8690
    %v8875 = vmax.f32 %v8553, %v8692
    %v8876 = vmax.f32 %v8554, %v8694
    %v8877 = vmax.f32 %v8555, %v8696
    %v8878 = vmax.f32 %v8556, %v8698
    %v8879 = vmax.f32 %v8557, %v8700
    %v8880 = vmax.f32 %v8558, %v8702
    %v8881 = vmax.f32 %v8559, %v8704
    %v8882 = vmax.f32 %v8560, %v8706
    %v8883 = vmax.f32 %v8561, %v8708
    %v8884 = vmax.f32 %v8562, %v8710
    %v8885 = vmax.f32 %v8563, %v8712
    %v8886 = vmax.f32 %v8564, %v8714
    %v8887 = vmax.f32 %v8565, %v8716
    %v8888 = vmax.f32 %v8566, %v8718
    %v8889 = vmax.f32 %v8567, %v8720
    %v8890 = vmax.f32 %v8568, %v8722
    %v8891 = vmax.f32 %v8569, %v8724
    %v8892 = vmax.f32 %v8570, %v8726
    %v8893 = vmax.f32 %v8571, %v8728
    %v8894 = vmax.f32 %v8572, %v8730
    %v8895 = vmax.f32 %v8573, %v8732
    %v8896 = vmax.f32 %v8574, %v8734
    %v8897 = vmax.f32 %v8575, %v8736
    %v8898 = vmax.f32 %v8576, %v8738
    %v8899 = vmax.f32 %v8577, %v8740
    %v8900 = vmax.f32 %v8578, %v8742
    %v8901 = vmax.f32 %v8579, %v8744
    %v8902 = vmax.f32 %v8580, %v8746
    %v8903 = vmax.f32 %v8581, %v8748
    %v8904 = vmax.f32 %v8582, %v8750
    %v8905 = vmax.f32 %v8583, %v8752
    %v8906 = vmax.f32 %v8584, %v8754
    %v8907 = vmax.f32 %v8585, %v8756
    %v8908 = vmax.f32 %v8586, %v8758
    %v8909 = vmax.f32 %v8587, %v8760
    %v8910 = vmax.f32 %v8588, %v8762
    %v8911 = vmax.f32 %v8589, %v8764
    %v8912 = vmax.f32 %v8590, %v8766
    %v8913 = vmax.f32 %v8591, %v8768
    %v8914 = vmax.f32 %v8592, %v8770
    %v8915 = vmax.f32 %v8593, %v8772
    %v8916 = vmax.f32 %v8594, %v8774
    %v8917 = vmax.f32 %v8595, %v8776
    %v8918 = vmax.f32 %v8596, %v8778
    %v8919 = vmax.f32 %v8597, %v8780
    %v8920 = vmax.f32 %v8598, %v8782
    %v8921 = vmax.f32 %v8599, %v8784
    %v8922 = vmax.f32 %v8600, %v8786
    %v8923 = vmax.f32 %v8601, %v8788
    %v8924 = vmax.f32 %v8602, %v8790
    %v8925 = vmax.f32 %v8603, %v8792
    %v8926 = vmax.f32 %v8604, %v8794
    %v8927 = vmax.f32 %v8605, %v8796
    %v8928 = vmax.f32 %v8606, %v8798
    %v8929 = vmax.f32 %v8607, %v8800
    %v8930 = vmax.f32 %v8608, %v8802
    %v8931 = vmax.f32 %v8867, %v8869
    %v8932 = vmax.f32 %v8868, %v8870
    %v8933 = vmax.f32 %v8869, %v8871
    %v8934 = vmax.f32 %v8870, %v8872
    %v8935 = vmax.f32 %v8871, %v8873
    %v8936 = vmax.f32 %v8872, %v8874
    %v8937 = vmax.f32 %v8873, %v8875
    %v8938 = vmax.f32 %v8874, %v8876
    %v8939 = vmax.f32 %v8875, %v8877
    %v8940 = vmax.f32 %v8876, %v8878
    %v8941 = vmax.f32 %v8877, %v8879
    %v8942 = vmax.f32 %v8878, %v8880
    %v8943 = vmax.f32 %v8879, %v8881
    %v8944 = vmax.f32 %v8880, %v8882
    %v8945 = vmax.f32 %v8881, %v8883
    %v8946 = vmax.f32 %v8882, %v8884
    %v8947 = vmax.f32 %v8883, %v8885
    %v8948 = vmax.f32 %v8884, %v8886
    %v8949 = vmax.f32 %v8885, %v8887
    %v8950 = vmax.f32 %v8886, %v8888
    %v8951 = vmax.f32 %v8887, %v8889
    %v8952 = vmax.f32 %v8888, %v8890
    %v8953 = vmax.f32 %v8889, %v8891
    %v8954 = vmax.f32 %v8890, %v8892
    %v8955 = vmax.f32 %v8891, %v8893
    %v8956 = vmax.f32 %v8892, %v8894
    %v8957 = vmax.f32 %v8893, %v8895
    %v8958 = vmax.f32 %v8894, %v8896
    %v8959 = vmax.f32 %v8895, %v8897
    %v8960 = vmax.f32 %v8896, %v8898
    %v8961 = vmax.f32 %v8897, %v8899
    %v8962 = vmax.f32 %v8898, %v8900
    %v8963 = vmax.f32 %v8899, %v8901
    %v8964 = vmax.f32 %v8900, %v8902
    %v8965 = vmax.f32 %v8901, %v8903
    %v8966 = vmax.f32 %v8902, %v8904
    %v8967 = vmax.f32 %v8903, %v8905
    %v8968 = vmax.f32 %v8904, %v8906
    %v8969 = vmax.f32 %v8905, %v8907
    %v8970 = vmax.f32 %v8906, %v8908
    %v8971 = vmax.f32 %v8907, %v8909
    %v8972 = vmax.f32 %v8908, %v8910
    %v8973 = vmax.f32 %v8909, %v8911
    %v8974 = vmax.f32 %v8910, %v8912
    %v8975 = vmax.f32 %v8911, %v8913
    %v8976 = vmax.f32 %v8912, %v8914
    %v8977 = vmax.f32 %v8913, %v8915
    %v8978 = vmax.f32 %v8914, %v8916
    %v8979 = vmax.f32 %v8915, %v8917
    %v8980 = vmax.f32 %v8916, %v8918
    %v8981 = vmax.f32 %v8917, %v8919
    %v8982 = vmax.f32 %v8918, %v8920
    %v8983 = vmax.f32 %v8919, %v8921
    %v8984 = vmax.f32 %v8920, %v8922
    %v8985 = vmax.f32 %v8921, %v8923
    %v8986 = vmax.f32 %v8922, %v8924
    %v8987 = vmax.f32 %v8923, %v8925
    %v8988 = vmax.f32 %v8924, %v8926
    %v8989 = vmax.f32 %v8925, %v8927
    %v8990 = vmax.f32 %v8926, %v8928
    %v8991 = vmax.f32 %v8927, %v8929
    %v8992 = vmax.f32 %v8928, %v8930
    %v8993 = vmax.f32 %v8929, 0.0
    %v8994 = vmax.f32 %v8930, 0.0
    %v8995 = vld [vmem:[%s4] sm:$0xff]
    %v8996 = vld [vmem:[%s4 + $0x8] sm:$0xff]
    %v8997 = vld [vmem:[%s4 + $0x10] sm:$0xff]
    %v8998 = vld [vmem:[%s4 + $0x18] sm:$0xff]
    %v8999 = vld [vmem:[%s4 + $0x20] sm:$0xff]
    %v9000 = vld [vmem:[%s4 + $0x28] sm:$0xff]
    %v9001 = vld [vmem:[%s4 + $0x30] sm:$0xff]
    %v9002 = vld [vmem:[%s4 + $0x38] sm:$0xff]
    %v9003 = vld [vmem:[%s4 + $0x40] sm:$0xff]
    %v9004 = vld [vmem:[%s4 + $0x48] sm:$0xff]
    %v9005 = vld [vmem:[%s4 + $0x50] sm:$0xff]
    %v9006 = vld [vmem:[%s4 + $0x58] sm:$0xff]
    %v9007 = vld [vmem:[%s4 + $0x60] sm:$0xff]
    %v9008 = vld [vmem:[%s4 + $0x68] sm:$0xff]
    %v9009 = vld [vmem:[%s4 + $0x70] sm:$0xff]
    %v9010 = vld [vmem:[%s4 + $0x78] sm:$0xff]
    %v9011 = vld [vmem:[%s4 + $0x80] sm:$0xff]
    %v9012 = vld [vmem:[%s4 + $0x88] sm:$0xff]
    %v9013 = vld [vmem:[%s4 + $0x90] sm:$0xff]
    %v9014 = vld [vmem:[%s4 + $0x98] sm:$0xff]
    %v9015 = vld [vmem:[%s4 + $0xa0] sm:$0xff]
    %v9016 = vld [vmem:[%s4 + $0xa8] sm:$0xff]
    %v9017 = vld [vmem:[%s4 + $0xb0] sm:$0xff]
    %v9018 = vld [vmem:[%s4 + $0xb8] sm:$0xff]
    %v9019 = vld [vmem:[%s4 + $0xc0] sm:$0xff]
    %v9020 = vld [vmem:[%s4 + $0xc8] sm:$0xff]
    %v9021 = vld [vmem:[%s4 + $0xd0] sm:$0xff]
    %v9022 = vld [vmem:[%s4 + $0xd8] sm:$0xff]
    %v9023 = vld [vmem:[%s4 + $0xe0] sm:$0xff]
    %v9024 = vld [vmem:[%s4 + $0xe8] sm:$0xff]
    %v9025 = vld [vmem:[%s4 + $0xf0] sm:$0xff]
    %v9026 = vld [vmem:[%s4 + $0xf8] sm:$0xff]
    %v9027 = vld [vmem:[%s4 + $0x100] sm:$0xff]
    %v9028 = vld [vmem:[%s4 + $0x108] sm:$0xff]
    %v9029 = vld [vmem:[%s4 + $0x110] sm:$0xff]
    %v9030 = vld [vmem:[%s4 + $0x118] sm:$0xff]
    %v9031 = vld [vmem:[%s4 + $0x120] sm:$0xff]
    %v9032 = vld [vmem:[%s4 + $0x128] sm:$0xff]
    %v9033 = vld [vmem:[%s4 + $0x130] sm:$0xff]
    %v9034 = vld [vmem:[%s4 + $0x138] sm:$0xff]
    %v9035 = vld [vmem:[%s4 + $0x140] sm:$0xff]
    %v9036 = vld [vmem:[%s4 + $0x148] sm:$0xff]
    %v9037 = vld [vmem:[%s4 + $0x150] sm:$0xff]
    %v9038 = vld [vmem:[%s4 + $0x158] sm:$0xff]
    %v9039 = vld [vmem:[%s4 + $0x160] sm:$0xff]
    %v9040 = vld [vmem:[%s4 + $0x168] sm:$0xff]
    %v9041 = vld [vmem:[%s4 + $0x170] sm:$0xff]
    %v9042 = vld [vmem:[%s4 + $0x178] sm:$0xff]
    %v9043 = vld [vmem:[%s4 + $0x180] sm:$0xff]
    %v9044 = vld [vmem:[%s4 + $0x188] sm:$0xff]
    %v9045 = vld [vmem:[%s4 + $0x190] sm:$0xff]
    %v9046 = vld [vmem:[%s4 + $0x198] sm:$0xff]
    %v9047 = vld [vmem:[%s4 + $0x1a0] sm:$0xff]
    %v9048 = vld [vmem:[%s4 + $0x1a8] sm:$0xff]
    %v9049 = vld [vmem:[%s4 + $0x1b0] sm:$0xff]
    %v9050 = vld [vmem:[%s4 + $0x1b8] sm:$0xff]
    %v9051 = vld [vmem:[%s4 + $0x1c0] sm:$0xff]
    %v9052 = vld [vmem:[%s4 + $0x1c8] sm:$0xff]
    %v9053 = vld [vmem:[%s4 + $0x1d0] sm:$0xff]
    %v9054 = vld [vmem:[%s4 + $0x1d8] sm:$0xff]
    %v9055 = vld [vmem:[%s4 + $0x1e0] sm:$0xff]
    %v9056 = vld [vmem:[%s4 + $0x1e8] sm:$0xff]
    %v9057 = vld [vmem:[%s4 + $0x1f0] sm:$0xff]
    %v9058 = vld [vmem:[%s4 + $0x1f8] sm:$0xff]
    %9059 = vmatpush.msra.mxu0 %v8946
    %9060 = vmatpush.msra.mxu0 %v8945
    %9061 = vmatpush.msra.mxu0 %v8944
    %9062 = vmatpush.msra.mxu0 %v8943
    %9063 = vmatpush.msra.mxu0 %v8942
    %9064 = vmatpush.msra.mxu0 %v8941
    %9065 = vmatpush.msra.mxu0 %v8940
    %9066 = vmatpush.msra.mxu0 %v8939
    %9067 = vmatpush.msra.mxu0 %v8938
    %9068 = vmatpush.msra.mxu0 %v8937
    %9069 = vmatpush.msra.mxu0 %v8936
    %9070 = vmatpush.msra.mxu0 %v8935
    %9071 = vmatpush.msra.mxu0 %v8934
    %9072 = vmatpush.msra.mxu0 %v8933
    %9073 = vmatpush.msra.mxu0 %v8932
    %9074 = vmatpush.msra.mxu0 %v8931
    %9075 = vmatmul.f32.gmra.mxu0 %v8995
    %v9076 = vpop.f32.mrf.mxu0
    %v9077 = vadd.f32 0.0, %v9076
    %9078 = vmatmul.f32.gmra.mxu0 %v8999
    %v9079 = vpop.f32.mrf.mxu0
    %v9080 = vadd.f32 0.0, %v9079
    %9081 = vmatmul.f32.gmra.mxu0 %v9003
    %v9082 = vpop.f32.mrf.mxu0
    %v9083 = vadd.f32 0.0, %v9082
    %9084 = vmatmul.f32.gmra.mxu0 %v9007
    %v9085 = vpop.f32.mrf.mxu0
    %v9086 = vadd.f32 0.0, %v9085
    %9087 = vmatmul.f32.gmra.mxu0 %v9011
    %v9088 = vpop.f32.mrf.mxu0
    %v9089 = vadd.f32 0.0, %v9088
    %9090 = vmatmul.f32.gmra.mxu0 %v9015
    %v9091 = vpop.f32.mrf.mxu0
    %v9092 = vadd.f32 0.0, %v9091
    %9093 = vmatmul.f32.gmra.mxu0 %v9019
    %v9094 = vpop.f32.mrf.mxu0
    %v9095 = vadd.f32 0.0, %v9094
    %9096 = vmatmul.f32.gmra.mxu0 %v9023
    %v9097 = vpop.f32.mrf.mxu0
    %v9098 = vadd.f32 0.0, %v9097
    %9099 = vmatmul.f32.gmra.mxu0 %v9027
    %v9100 = vpop.f32.mrf.mxu0
    %v9101 = vadd.f32 0.0, %v9100
    %9102 = vmatmul.f32.gmra.mxu0 %v9031
    %v9103 = vpop.f32.mrf.mxu0
    %v9104 = vadd.f32 0.0, %v9103
    %9105 = vmatmul.f32.gmra.mxu0 %v9035
    %v9106 = vpop.f32.mrf.mxu0
    %v9107 = vadd.f32 0.0, %v9106
    %9108 = vmatmul.f32.gmra.mxu0 %v9039
    %v9109 = vpop.f32.mrf.mxu0
    %v9110 = vadd.f32 0.0, %v9109
    %9111 = vmatmul.f32.gmra.mxu0 %v9043
    %v9112 = vpop.f32.mrf.mxu0
    %v9113 = vadd.f32 0.0, %v9112
    %9114 = vmatmul.f32.gmra.mxu0 %v9047
    %v9115 = vpop.f32.mrf.mxu0
    %v9116 = vadd.f32 0.0, %v9115
    %9117 = vmatmul.f32.gmra.mxu0 %v9051
    %v9118 = vpop.f32.mrf.mxu0
    %v9119 = vadd.f32 0.0, %v9118
    %9120 = vmatmul.f32.gmra.mxu0 %v9055
    %v9121 = vpop.f32.mrf.mxu0
    %v9122 = vadd.f32 0.0, %v9121
    %9123 = vdwg.mxu0
    %9124 = vmatpush.msra.mxu0 %v8962
    %9125 = vmatpush.msra.mxu0 %v8961
    %9126 = vmatpush.msra.mxu0 %v8960
    %9127 = vmatpush.msra.mxu0 %v8959
    %9128 = vmatpush.msra.mxu0 %v8958
    %9129 = vmatpush.msra.mxu0 %v8957
    %9130 = vmatpush.msra.mxu0 %v8956
    %9131 = vmatpush.msra.mxu0 %v8955
    %9132 = vmatpush.msra.mxu0 %v8954
    %9133 = vmatpush.msra.mxu0 %v8953
    %9134 = vmatpush.msra.mxu0 %v8952
    %9135 = vmatpush.msra.mxu0 %v8951
    %9136 = vmatpush.msra.mxu0 %v8950
    %9137 = vmatpush.msra.mxu0 %v8949
    %9138 = vmatpush.msra.mxu0 %v8948
    %9139 = vmatpush.msra.mxu0 %v8947
    %9140 = vmatmul.f32.gmra.mxu0 %v8996
    %v9141 = vpop.f32.mrf.mxu0
    %v9142 = vadd.f32 %v9077, %v9141
    %9143 = vmatmul.f32.gmra.mxu0 %v9000
    %v9144 = vpop.f32.mrf.mxu0
    %v9145 = vadd.f32 %v9080, %v9144
    %9146 = vmatmul.f32.gmra.mxu0 %v9004
    %v9147 = vpop.f32.mrf.mxu0
    %v9148 = vadd.f32 %v9083, %v9147
    %9149 = vmatmul.f32.gmra.mxu0 %v9008
    %v9150 = vpop.f32.mrf.mxu0
    %v9151 = vadd.f32 %v9086, %v9150
    %9152 = vmatmul.f32.gmra.mxu0 %v9012
    %v9153 = vpop.f32.mrf.mxu0
    %v9154 = vadd.f32 %v9089, %v9153
    %9155 = vmatmul.f32.gmra.mxu0 %v9016
    %v9156 = vpop.f32.mrf.mxu0
    %v9157 = vadd.f32 %v9092, %v9156
    %9158 = vmatmul.f32.gmra.mxu0 %v9020
    %v9159 = vpop.f32.mrf.mxu0
    %v9160 = vadd.f32 %v9095, %v9159
    %9161 = vmatmul.f32.gmra.mxu0 %v9024
    %v9162 = vpop.f32.mrf.mxu0
    %v9163 = vadd.f32 %v9098, %v9162
    %9164 = vmatmul.f32.gmra.mxu0 %v9028
    %v9165 = vpop.f32.mrf.mxu0
    %v9166 = vadd.f32 %v9101, %v9165
    %9167 = vmatmul.f32.gmra.mxu0 %v9032
    %v9168 = vpop.f32.mrf.mxu0
    %v9169 = vadd.f32 %v9104, %v9168
    %9170 = vmatmul.f32.gmra.mxu0 %v9036
    %v9171 = vpop.f32.mrf.mxu0
    %v9172 = vadd.f32 %v9107, %v9171
    %9173 = vmatmul.f32.gmra.mxu0 %v9040
    %v9174 = vpop.f32.mrf.mxu0
    %v9175 = vadd.f32 %v9110, %v9174
    %9176 = vmatmul.f32.gmra.mxu0 %v9044
    %v9177 = vpop.f32.mrf.mxu0
    %v9178 = vadd.f32 %v9113, %v9177
    %9179 = vmatmul.f32.gmra.mxu0 %v9048
    %v9180 = vpop.f32.mrf.mxu0
    %v9181 = vadd.f32 %v9116, %v9180
    %9182 = vmatmul.f32.gmra.mxu0 %v9052
    %v9183 = vpop.f32.mrf.mxu0
    %v9184 = vadd.f32 %v9119, %v9183
    %9185 = vmatmul.f32.gmra.mxu0 %v9056
    %v9186 = vpop.f32.mrf.mxu0
    %v9187 = vadd.f32 %v9122, %v9186
    %9188 = vdwg.mxu0
    %9189 = vmatpush.msra.mxu0 %v8978
    %9190 = vmatpush.msra.mxu0 %v8977
    %9191 = vmatpush.msra.mxu0 %v8976
    %9192 = vmatpush.msra.mxu0 %v8975
    %9193 = vmatpush.msra.mxu0 %v8974
    %9194 = vmatpush.msra.mxu0 %v8973
    %9195 = vmatpush.msra.mxu0 %v8972
    %9196 = vmatpush.msra.mxu0 %v8971
    %9197 = vmatpush.msra.mxu0 %v8970
    %9198 = vmatpush.msra.mxu0 %v8969
    %9199 = vmatpush.msra.mxu0 %v8968
    %9200 = vmatpush.msra.mxu0 %v8967
    %9201 = vmatpush.msra.mxu0 %v8966
    %9202 = vmatpush.msra.mxu0 %v8965
    %9203 = vmatpush.msra.mxu0 %v8964
    %9204 = vmatpush.msra.mxu0 %v8963
    %9205 = vmatmul.f32.gmra.mxu0 %v8997
    %v9206 = vpop.f32.mrf.mxu0
    %v9207 = vadd.f32 %v9142, %v9206
    %9208 = vmatmul.f32.gmra.mxu0 %v9001
    %v9209 = vpop.f32.mrf.mxu0
    %v9210 = vadd.f32 %v9145, %v9209
    %9211 = vmatmul.f32.gmra.mxu0 %v9005
    %v9212 = vpop.f32.mrf.mxu0
    %v9213 = vadd.f32 %v9148, %v9212
    %9214 = vmatmul.f32.gmra.mxu0 %v9009
    %v9215 = vpop.f32.mrf.mxu0
    %v9216 = vadd.f32 %v9151, %v9215
    %9217 = vmatmul.f32.gmra.mxu0 %v9013
    %v9218 = vpop.f32.mrf.mxu0
    %v9219 = vadd.f32 %v9154, %v9218
    %9220 = vmatmul.f32.gmra.mxu0 %v9017
    %v9221 = vpop.f32.mrf.mxu0
    %v9222 = vadd.f32 %v9157, %v9221
    %9223 = vmatmul.f32.gmra.mxu0 %v9021
    %v9224 = vpop.f32.mrf.mxu0
    %v9225 = vadd.f32 %v9160, %v9224
    %9226 = vmatmul.f32.gmra.mxu0 %v9025
    %v9227 = vpop.f32.mrf.mxu0
    %v9228 = vadd.f32 %v9163, %v9227
    %9229 = vmatmul.f32.gmra.mxu0 %v9029
    %v9230 = vpop.f32.mrf.mxu0
    %v9231 = vadd.f32 %v9166, %v9230
    %9232 = vmatmul.f32.gmra.mxu0 %v9033
    %v9233 = vpop.f32.mrf.mxu0
    %v9234 = vadd.f32 %v9169, %v9233
    %9235 = vmatmul.f32.gmra.mxu0 %v9037
    %v9236 = vpop.f32.mrf.mxu0
    %v9237 = vadd.f32 %v9172, %v9236
    %9238 = vmatmul.f32.gmra.mxu0 %v9041
    %v9239 = vpop.f32.mrf.mxu0
    %v9240 = vadd.f32 %v9175, %v9239
    %9241 = vmatmul.f32.gmra.mxu0 %v9045
    %v9242 = vpop.f32.mrf.mxu0
    %v9243 = vadd.f32 %v9178, %v9242
    %9244 = vmatmul.f32.gmra.mxu0 %v9049
    %v9245 = vpop.f32.mrf.mxu0
    %v9246 = vadd.f32 %v9181, %v9245
    %9247 = vmatmul.f32.gmra.mxu0 %v9053
    %v9248 = vpop.f32.mrf.mxu0
    %v9249 = vadd.f32 %v9184, %v9248
    %9250 = vmatmul.f32.gmra.mxu0 %v9057
    %v9251 = vpop.f32.mrf.mxu0
    %v9252 = vadd.f32 %v9187, %v9251
    %9253 = vdwg.mxu0
    %9254 = vmatpush.msra.mxu0 %v8994
    %9255 = vmatpush.msra.mxu0 %v8993
    %9256 = vmatpush.msra.mxu0 %v8992
    %9257 = vmatpush.msra.mxu0 %v8991
    %9258 = vmatpush.msra.mxu0 %v8990
    %9259 = vmatpush.msra.mxu0 %v8989
    %9260 = vmatpush.msra.mxu0 %v8988
    %9261 = vmatpush.msra.mxu0 %v8987
    %9262 = vmatpush.msra.mxu0 %v8986
    %9263 = vmatpush.msra.mxu0 %v8985
    %9264 = vmatpush.msra.mxu0 %v8984
    %9265 = vmatpush.msra.mxu0 %v8983
    %9266 = vmatpush.msra.mxu0 %v8982
    %9267 = vmatpush.msra.mxu0 %v8981
    %9268 = vmatpush.msra.mxu0 %v8980
    %9269 = vmatpush.msra.mxu0 %v8979
    %9270 = vmatmul.f32.gmra.mxu0 %v8998
    %v9271 = vpop.f32.mrf.mxu0
    %v9272 = vadd.f32 %v9207, %v9271
    %9273 = vmatmul.f32.gmra.mxu0 %v9002
    %v9274 = vpop.f32.mrf.mxu0
    %v9275 = vadd.f32 %v9210, %v9274
    %9276 = vmatmul.f32.gmra.mxu0 %v9006
    %v9277 = vpop.f32.mrf.mxu0
    %v9278 = vadd.f32 %v9213, %v9277
    %9279 = vmatmul.f32.gmra.mxu0 %v9010
    %v9280 = vpop.f32.mrf.mxu0
    %v9281 = vadd.f32 %v9216, %v9280
    %9282 = vmatmul.f32.gmra.mxu0 %v9014
    %v9283 = vpop.f32.mrf.mxu0
    %v9284 = vadd.f32 %v9219, %v9283
    %9285 = vmatmul.f32.gmra.mxu0 %v9018
    %v9286 = vpop.f32.mrf.mxu0
    %v9287 = vadd.f32 %v9222, %v9286
    %9288 = vmatmul.f32.gmra.mxu0 %v9022
    %v9289 = vpop.f32.mrf.mxu0
    %v9290 = vadd.f32 %v9225, %v9289
    %9291 = vmatmul.f32.gmra.mxu0 %v9026
    %v9292 = vpop.f32.mrf.mxu0
    %v9293 = vadd.f32 %v9228, %v9292
    %9294 = vmatmul.f32.gmra.mxu0 %v9030
    %v9295 = vpop.f32.mrf.mxu0
    %v9296 = vadd.f32 %v9231, %v9295
    %9297 = vmatmul.f32.gmra.mxu0 %v9034
    %v9298 = vpop.f32.mrf.mxu0
    %v9299 = vadd.f32 %v9234, %v9298
    %9300 = vmatmul.f32.gmra.mxu0 %v9038
    %v9301 = vpop.f32.mrf.mxu0
    %v9302 = vadd.f32 %v9237, %v9301
    %9303 = vmatmul.f32.gmra.mxu0 %v9042
    %v9304 = vpop.f32.mrf.mxu0
    %v9305 = vadd.f32 %v9240, %v9304
    %9306 = vmatmul.f32.gmra.mxu0 %v9046
    %v9307 = vpop.f32.mrf.mxu0
    %v9308 = vadd.f32 %v9243, %v9307
    %9309 = vmatmul.f32.gmra.mxu0 %v9050
    %v9310 = vpop.f32.mrf.mxu0
    %v9311 = vadd.f32 %v9246, %v9310
    %9312 = vmatmul.f32.gmra.mxu0 %v9054
    %v9313 = vpop.f32.mrf.mxu0
    %v9314 = vadd.f32 %v9249, %v9313
    %9315 = vmatmul.f32.gmra.mxu0 %v9058
    %v9316 = vpop.f32.mrf.mxu0
    %v9317 = vadd.f32 %v9252, %v9316
    %9318 = vdwg.mxu0
    %v9319 = vld [vmem:[%s7] sm:$0xff]
    %v9320 = vld [vmem:[%s7 + $0x8] sm:$0xff]
    %v9321 = vld [vmem:[%s7 + $0x10] sm:$0xff]
    %v9322 = vld [vmem:[%s7 + $0x18] sm:$0xff]
    %v9323 = vld [vmem:[%s7 + $0x20] sm:$0xff]
    %v9324 = vld [vmem:[%s7 + $0x28] sm:$0xff]
    %v9325 = vld [vmem:[%s7 + $0x30] sm:$0xff]
    %v9326 = vld [vmem:[%s7 + $0x38] sm:$0xff]
    %v9327 = vld [vmem:[%s7 + $0x40] sm:$0xff]
    %v9328 = vld [vmem:[%s7 + $0x48] sm:$0xff]
    %v9329 = vld [vmem:[%s7 + $0x50] sm:$0xff]
    %v9330 = vld [vmem:[%s7 + $0x58] sm:$0xff]
    %v9331 = vld [vmem:[%s7 + $0x60] sm:$0xff]
    %v9332 = vld [vmem:[%s7 + $0x68] sm:$0xff]
    %v9333 = vld [vmem:[%s7 + $0x70] sm:$0xff]
    %v9334 = vld [vmem:[%s7 + $0x78] sm:$0xff]
    %9336 = vset.pattern.permute.xlu0 0
    %9337 = vperm.xlu0 %9336, %v9319
    %v9338 = vpop.permute.xlu0 %9337
    %9340 = vset.pattern.permute.xlu0 0
    %9341 = vperm.xlu0 %9340, %v9320
    %v9342 = vpop.permute.xlu0 %9341
    %9344 = vset.pattern.permute.xlu0 0
    %9345 = vperm.xlu0 %9344, %v9321
    %v9346 = vpop.permute.xlu0 %9345
    %9348 = vset.pattern.permute.xlu0 0
    %9349 = vperm.xlu0 %9348, %v9322
    %v9350 = vpop.permute.xlu0 %9349
    %9352 = vset.pattern.permute.xlu0 0
    %9353 = vperm.xlu0 %9352, %v9323
    %v9354 = vpop.permute.xlu0 %9353
    %9356 = vset.pattern.permute.xlu0 0
    %9357 = vperm.xlu0 %9356, %v9324
    %v9358 = vpop.permute.xlu0 %9357
    %9360 = vset.pattern.permute.xlu0 0
    %9361 = vperm.xlu0 %9360, %v9325
    %v9362 = vpop.permute.xlu0 %9361
    %9364 = vset.pattern.permute.xlu0 0
    %9365 = vperm.xlu0 %9364, %v9326
    %v9366 = vpop.permute.xlu0 %9365
    %9368 = vset.pattern.permute.xlu0 0
    %9369 = vperm.xlu0 %9368, %v9327
    %v9370 = vpop.permute.xlu0 %9369
    %9372 = vset.pattern.permute.xlu0 0
    %9373 = vperm.xlu0 %9372, %v9328
    %v9374 = vpop.permute.xlu0 %9373
    %9376 = vset.pattern.permute.xlu0 0
    %9377 = vperm.xlu0 %9376, %v9329
    %v9378 = vpop.permute.xlu0 %9377
    %9380 = vset.pattern.permute.xlu0 0
    %9381 = vperm.xlu0 %9380, %v9330
    %v9382 = vpop.permute.xlu0 %9381
    %9384 = vset.pattern.permute.xlu0 0
    %9385 = vperm.xlu0 %9384, %v9331
    %v9386 = vpop.permute.xlu0 %9385
    %9388 = vset.pattern.permute.xlu0 0
    %9389 = vperm.xlu0 %9388, %v9332
    %v9390 = vpop.permute.xlu0 %9389
    %9392 = vset.pattern.permute.xlu0 0
    %9393 = vperm.xlu0 %9392, %v9333
    %v9394 = vpop.permute.xlu0 %9393
    %9396 = vset.pattern.permute.xlu0 0
    %9397 = vperm.xlu0 %9396, %v9334
    %v9398 = vpop.permute.xlu0 %9397
    %v9399 = vrot.slane %v9338, 1
    %v9400 = vrot.slane %v9342, 1
    %v9401 = vsel %vm450, %v9399, %v9400
    %v9402 = vrot.slane %v9346, 1
    %v9403 = vsel %vm450, %v9400, %v9402
    %v9404 = vrot.slane %v9350, 1
    %v9405 = vsel %vm450, %v9402, %v9404
    %v9406 = vrot.slane %v9354, 1
    %v9407 = vsel %vm450, %v9404, %v9406
    %v9408 = vrot.slane %v9358, 1
    %v9409 = vsel %vm450, %v9406, %v9408
    %v9410 = vrot.slane %v9362, 1
    %v9411 = vsel %vm450, %v9408, %v9410
    %v9412 = vrot.slane %v9366, 1
    %v9413 = vsel %vm450, %v9410, %v9412
    %v9414 = vrot.slane %v9370, 1
    %v9415 = vsel %vm450, %v9412, %v9414
    %v9416 = vrot.slane %v9374, 1
    %v9417 = vsel %vm450, %v9414, %v9416
    %v9418 = vrot.slane %v9378, 1
    %v9419 = vsel %vm450, %v9416, %v9418
    %v9420 = vrot.slane %v9382, 1
    %v9421 = vsel %vm450, %v9418, %v9420
    %v9422 = vrot.slane %v9386, 1
    %v9423 = vsel %vm450, %v9420, %v9422
    %v9424 = vrot.slane %v9390, 1
    %v9425 = vsel %vm450, %v9422, %v9424
    %v9426 = vrot.slane %v9394, 1
    %v9427 = vsel %vm450, %v9424, %v9426
    %v9428 = vrot.slane %v9398, 1
    %v9429 = vsel %vm450, %v9426, %v9428
    %v9447 = vmul.f32 %v9399, 0.0
    %v9448 = vmul.f32 %v9401, 0.0
    %v9449 = vmul.f32 %v9272, %v9403
    %v9450 = vmul.f32 %v9275, %v9405
    %v9451 = vmul.f32 %v9278, %v9407
    %v9452 = vmul.f32 %v9281, %v9409
    %v9453 = vmul.f32 %v9284, %v9411
    %v9454 = vmul.f32 %v9287, %v9413
    %v9455 = vmul.f32 %v9290, %v9415
    %v9456 = vmul.f32 %v9293, %v9417
    %v9457 = vmul.f32 %v9296, %v9419
    %v9458 = vmul.f32 %v9299, %v9421
    %v9459 = vmul.f32 %v9302, %v9423
    %v9460 = vmul.f32 %v9305, %v9425
    %v9461 = vmul.f32 %v9308, %v9427
    %v9462 = vmul.f32 %v9311, %v9429
    %v9463 = vmul.f32 %v9314, %v9428
    %v9464 = vld [vmem:[%s5] sm:$0xff]
    %9465 = vset.pattern.permute.xlu0 1
    %9466 = vperm.xlu0 %9465, %v9319
    %v9467 = vpop.permute.xlu0 %9466
    %9469 = vset.pattern.permute.xlu0 1
    %9470 = vperm.xlu0 %9469, %v9320
    %v9471 = vpop.permute.xlu0 %9470
    %9473 = vset.pattern.permute.xlu0 1
    %9474 = vperm.xlu0 %9473, %v9321
    %v9475 = vpop.permute.xlu0 %9474
    %9477 = vset.pattern.permute.xlu0 1
    %9478 = vperm.xlu0 %9477, %v9322
    %v9479 = vpop.permute.xlu0 %9478
    %9481 = vset.pattern.permute.xlu0 1
    %9482 = vperm.xlu0 %9481, %v9323
    %v9483 = vpop.permute.xlu0 %9482
    %9485 = vset.pattern.permute.xlu0 1
    %9486 = vperm.xlu0 %9485, %v9324
    %v9487 = vpop.permute.xlu0 %9486
    %9489 = vset.pattern.permute.xlu0 1
    %9490 = vperm.xlu0 %9489, %v9325
    %v9491 = vpop.permute.xlu0 %9490
    %9493 = vset.pattern.permute.xlu0 1
    %9494 = vperm.xlu0 %9493, %v9326
    %v9495 = vpop.permute.xlu0 %9494
    %9497 = vset.pattern.permute.xlu0 1
    %9498 = vperm.xlu0 %9497, %v9327
    %v9499 = vpop.permute.xlu0 %9498
    %9501 = vset.pattern.permute.xlu0 1
    %9502 = vperm.xlu0 %9501, %v9328
    %v9503 = vpop.permute.xlu0 %9502
    %9505 = vset.pattern.permute.xlu0 1
    %9506 = vperm.xlu0 %9505, %v9329
    %v9507 = vpop.permute.xlu0 %9506
    %9509 = vset.pattern.permute.xlu0 1
    %9510 = vperm.xlu0 %9509, %v9330
    %v9511 = vpop.permute.xlu0 %9510
    %9513 = vset.pattern.permute.xlu0 1
    %9514 = vperm.xlu0 %9513, %v9331
    %v9515 = vpop.permute.xlu0 %9514
    %9517 = vset.pattern.permute.xlu0 1
    %9518 = vperm.xlu0 %9517, %v9332
    %v9519 = vpop.permute.xlu0 %9518
    %9521 = vset.pattern.permute.xlu0 1
    %9522 = vperm.xlu0 %9521, %v9333
    %v9523 = vpop.permute.xlu0 %9522
    %9525 = vset.pattern.permute.xlu0 1
    %9526 = vperm.xlu0 %9525, %v9334
    %v9527 = vpop.permute.xlu0 %9526
    %v9529 = vmul.f32 %v9467, 0.0
    %v9530 = vmul.f32 %v9272, %v9471
    %v9531 = vmul.f32 %v9275, %v9475
    %v9532 = vmul.f32 %v9278, %v9479
    %v9533 = vmul.f32 %v9281, %v9483
    %v9534 = vmul.f32 %v9284, %v9487
    %v9535 = vmul.f32 %v9287, %v9491
    %v9536 = vmul.f32 %v9290, %v9495
    %v9537 = vmul.f32 %v9293, %v9499
    %v9538 = vmul.f32 %v9296, %v9503
    %v9539 = vmul.f32 %v9299, %v9507
    %v9540 = vmul.f32 %v9302, %v9511
    %v9541 = vmul.f32 %v9305, %v9515
    %v9542 = vmul.f32 %v9308, %v9519
    %v9543 = vmul.f32 %v9311, %v9523
    %v9544 = vmul.f32 %v9314, %v9527
    %s9545 = scalar_lea.vmem %s5, 8
    %v9546 = vld [vmem:[%s9545] sm:$0xff]
    %vm9547 = vcmask 64512
    %v9549 = vsel %vm9547, %v9529, 0
    %v9552 = vsel %vm9547, %v9530, 0
    %v9555 = vsel %vm9547, %v9531, 0
    %v9558 = vsel %vm9547, %v9532, 0
    %v9561 = vsel %vm9547, %v9533, 0
    %v9564 = vsel %vm9547, %v9534, 0
    %v9567 = vsel %vm9547, %v9535, 0
    %v9570 = vsel %vm9547, %v9536, 0
    %v9573 = vsel %vm9547, %v9537, 0
    %v9576 = vsel %vm9547, %v9538, 0
    %v9579 = vsel %vm9547, %v9539, 0
    %v9582 = vsel %vm9547, %v9540, 0
    %v9585 = vsel %vm9547, %v9541, 0
    %v9588 = vsel %vm9547, %v9542, 0
    %v9591 = vsel %vm9547, %v9543, 0
    %v9594 = vsel %vm9547, %v9544, 0
    %9596 = vmatpush.msra.mxu0 0.0
    %9597 = vmatpush.msra.mxu0 0.0
    %9598 = vmatpush.msra.mxu0 0.0
    %9599 = vmatpush.msra.mxu0 0.0
    %9600 = vmatpush.msra.mxu0 0.0
    %9601 = vmatpush.msra.mxu0 0.0
    %9602 = vmatpush.msra.mxu0 0.0
    %9603 = vmatpush.msra.mxu0 0.0
    %9604 = vmatpush.msra.mxu0 0.0
    %9605 = vmatpush.msra.mxu0 0.0
    %9606 = vmatpush.msra.mxu0 0.0
    %9607 = vmatpush.msra.mxu0 0.0
    %9608 = vmatpush.msra.mxu0 0.0
    %9609 = vmatpush.msra.mxu0 0.0
    %9610 = vmatpush.msra.mxu0 0.0
    %9611 = vmatpush.msra.mxu0 %v9546
    %9612 = vmatmul.f32.gmra.mxu0 %v9549
    %v9613 = vpop.f32.mrf.mxu0
    %v9614 = vadd.f32 0.0, %v9613
    %9615 = vmatmul.f32.gmra.mxu0 %v9552
    %v9616 = vpop.f32.mrf.mxu0
    %v9617 = vadd.f32 0.0, %v9616
    %9618 = vmatmul.f32.gmra.mxu0 %v9555
    %v9619 = vpop.f32.mrf.mxu0
    %v9620 = vadd.f32 0.0, %v9619
    %9621 = vmatmul.f32.gmra.mxu0 %v9558
    %v9622 = vpop.f32.mrf.mxu0
    %v9623 = vadd.f32 0.0, %v9622
    %9624 = vmatmul.f32.gmra.mxu0 %v9561
    %v9625 = vpop.f32.mrf.mxu0
    %v9626 = vadd.f32 0.0, %v9625
    %9627 = vmatmul.f32.gmra.mxu0 %v9564
    %v9628 = vpop.f32.mrf.mxu0
    %v9629 = vadd.f32 0.0, %v9628
    %9630 = vmatmul.f32.gmra.mxu0 %v9567
    %v9631 = vpop.f32.mrf.mxu0
    %v9632 = vadd.f32 0.0, %v9631
    %9633 = vmatmul.f32.gmra.mxu0 %v9570
    %v9634 = vpop.f32.mrf.mxu0
    %v9635 = vadd.f32 0.0, %v9634
    %9636 = vmatmul.f32.gmra.mxu0 %v9573
    %v9637 = vpop.f32.mrf.mxu0
    %v9638 = vadd.f32 0.0, %v9637
    %9639 = vmatmul.f32.gmra.mxu0 %v9576
    %v9640 = vpop.f32.mrf.mxu0
    %v9641 = vadd.f32 0.0, %v9640
    %9642 = vmatmul.f32.gmra.mxu0 %v9579
    %v9643 = vpop.f32.mrf.mxu0
    %v9644 = vadd.f32 0.0, %v9643
    %9645 = vmatmul.f32.gmra.mxu0 %v9582
    %v9646 = vpop.f32.mrf.mxu0
    %v9647 = vadd.f32 0.0, %v9646
    %9648 = vmatmul.f32.gmra.mxu0 %v9585
    %v9649 = vpop.f32.mrf.mxu0
    %v9650 = vadd.f32 0.0, %v9649
    %9651 = vmatmul.f32.gmra.mxu0 %v9588
    %v9652 = vpop.f32.mrf.mxu0
    %v9653 = vadd.f32 0.0, %v9652
    %9654 = vmatmul.f32.gmra.mxu0 %v9591
    %v9655 = vpop.f32.mrf.mxu0
    %v9656 = vadd.f32 0.0, %v9655
    %9657 = vmatmul.f32.gmra.mxu0 %v9594
    %v9658 = vpop.f32.mrf.mxu0
    %v9659 = vadd.f32 0.0, %v9658
    %9660 = vdwg.mxu0
    %v9678 = vrot.slane %v9447, 7
    %v9679 = vrot.slane %v9448, 7
    %v9680 = vsel %vm1502, %v9678, %v9679
    %v9681 = vrot.slane %v9449, 7
    %v9682 = vsel %vm1502, %v9679, %v9681
    %v9683 = vrot.slane %v9450, 7
    %v9684 = vsel %vm1502, %v9681, %v9683
    %v9685 = vrot.slane %v9451, 7
    %v9686 = vsel %vm1502, %v9683, %v9685
    %v9687 = vrot.slane %v9452, 7
    %v9688 = vsel %vm1502, %v9685, %v9687
    %v9689 = vrot.slane %v9453, 7
    %v9690 = vsel %vm1502, %v9687, %v9689
    %v9691 = vrot.slane %v9454, 7
    %v9692 = vsel %vm1502, %v9689, %v9691
    %v9693 = vrot.slane %v9455, 7
    %v9694 = vsel %vm1502, %v9691, %v9693
    %v9695 = vrot.slane %v9456, 7
    %v9696 = vsel %vm1502, %v9693, %v9695
    %v9697 = vrot.slane %v9457, 7
    %v9698 = vsel %vm1502, %v9695, %v9697
    %v9699 = vrot.slane %v9458, 7
    %v9700 = vsel %vm1502, %v9697, %v9699
    %v9701 = vrot.slane %v9459, 7
    %v9702 = vsel %vm1502, %v9699, %v9701
    %v9703 = vrot.slane %v9460, 7
    %v9704 = vsel %vm1502, %v9701, %v9703
    %v9705 = vrot.slane %v9461, 7
    %v9706 = vsel %vm1502, %v9703, %v9705
    %v9707 = vrot.slane %v9462, 7
    %v9708 = vsel %vm1502, %v9705, %v9707
    %v9709 = vrot.slane %v9463, 7
    %v9710 = vsel %vm1502, %v9707, %v9709
    %v9711 = vsel %vm9547, %v9680, 0
    %v9713 = vsel %vm9547, %v9682, 0
    %v9715 = vsel %vm9547, %v9684, 0
    %v9717 = vsel %vm9547, %v9686, 0
    %v9719 = vsel %vm9547, %v9688, 0
    %v9721 = vsel %vm9547, %v9690, 0
    %v9723 = vsel %vm9547, %v9692, 0
    %v9725 = vsel %vm9547, %v9694, 0
    %v9727 = vsel %vm9547, %v9696, 0
    %v9729 = vsel %vm9547, %v9698, 0
    %v9731 = vsel %vm9547, %v9700, 0
    %v9733 = vsel %vm9547, %v9702, 0
    %v9735 = vsel %vm9547, %v9704, 0
    %v9737 = vsel %vm9547, %v9706, 0
    %v9739 = vsel %vm9547, %v9708, 0
    %v9741 = vsel %vm9547, %v9710, 0
    %9743 = vmatpush.msra.mxu0 0.0
    %9744 = vmatpush.msra.mxu0 0.0
    %9745 = vmatpush.msra.mxu0 0.0
    %9746 = vmatpush.msra.mxu0 0.0
    %9747 = vmatpush.msra.mxu0 0.0
    %9748 = vmatpush.msra.mxu0 0.0
    %9749 = vmatpush.msra.mxu0 0.0
    %9750 = vmatpush.msra.mxu0 0.0
    %9751 = vmatpush.msra.mxu0 0.0
    %9752 = vmatpush.msra.mxu0 0.0
    %9753 = vmatpush.msra.mxu0 0.0
    %9754 = vmatpush.msra.mxu0 0.0
    %9755 = vmatpush.msra.mxu0 0.0
    %9756 = vmatpush.msra.mxu0 0.0
    %9757 = vmatpush.msra.mxu0 0.0
    %9758 = vmatpush.msra.mxu0 %v9464
    %9759 = vmatmul.f32.gmra.mxu0 %v9711
    %v9760 = vpop.f32.mrf.mxu0
    %v9761 = vadd.f32 %v9614, %v9760
    %9762 = vmatmul.f32.gmra.mxu0 %v9713
    %v9763 = vpop.f32.mrf.mxu0
    %v9764 = vadd.f32 %v9617, %v9763
    %9765 = vmatmul.f32.gmra.mxu0 %v9715
    %v9766 = vpop.f32.mrf.mxu0
    %v9767 = vadd.f32 %v9620, %v9766
    %9768 = vmatmul.f32.gmra.mxu0 %v9717
    %v9769 = vpop.f32.mrf.mxu0
    %v9770 = vadd.f32 %v9623, %v9769
    %9771 = vmatmul.f32.gmra.mxu0 %v9719
    %v9772 = vpop.f32.mrf.mxu0
    %v9773 = vadd.f32 %v9626, %v9772
    %9774 = vmatmul.f32.gmra.mxu0 %v9721
    %v9775 = vpop.f32.mrf.mxu0
    %v9776 = vadd.f32 %v9629, %v9775
    %9777 = vmatmul.f32.gmra.mxu0 %v9723
    %v9778 = vpop.f32.mrf.mxu0
    %v9779 = vadd.f32 %v9632, %v9778
    %9780 = vmatmul.f32.gmra.mxu0 %v9725
    %v9781 = vpop.f32.mrf.mxu0
    %v9782 = vadd.f32 %v9635, %v9781
    %9783 = vmatmul.f32.gmra.mxu0 %v9727
    %v9784 = vpop.f32.mrf.mxu0
    %v9785 = vadd.f32 %v9638, %v9784
    %9786 = vmatmul.f32.gmra.mxu0 %v9729
    %v9787 = vpop.f32.mrf.mxu0
    %v9788 = vadd.f32 %v9641, %v9787
    %9789 = vmatmul.f32.gmra.mxu0 %v9731
    %v9790 = vpop.f32.mrf.mxu0
    %v9791 = vadd.f32 %v9644, %v9790
    %9792 = vmatmul.f32.gmra.mxu0 %v9733
    %v9793 = vpop.f32.mrf.mxu0
    %v9794 = vadd.f32 %v9647, %v9793
    %9795 = vmatmul.f32.gmra.mxu0 %v9735
    %v9796 = vpop.f32.mrf.mxu0
    %v9797 = vadd.f32 %v9650, %v9796
    %9798 = vmatmul.f32.gmra.mxu0 %v9737
    %v9799 = vpop.f32.mrf.mxu0
    %v9800 = vadd.f32 %v9653, %v9799
    %9801 = vmatmul.f32.gmra.mxu0 %v9739
    %v9802 = vpop.f32.mrf.mxu0
    %v9803 = vadd.f32 %v9656, %v9802
    %9804 = vmatmul.f32.gmra.mxu0 %v9741
    %v9805 = vpop.f32.mrf.mxu0
    %v9806 = vadd.f32 %v9659, %v9805
    %9807 = vdwg.mxu0
    %9808 = vset.pattern.permute.xlu0 2
    %9809 = vperm.xlu0 %9808, %v9319
    %v9810 = vpop.permute.xlu0 %9809
    %9811 = vset.pattern.permute.xlu0 2
    %9812 = vperm.xlu0 %9811, %v9320
    %v9813 = vpop.permute.xlu0 %9812
    %9814 = vset.pattern.permute.xlu0 2
    %9815 = vperm.xlu0 %9814, %v9321
    %v9816 = vpop.permute.xlu0 %9815
    %9817 = vset.pattern.permute.xlu0 2
    %9818 = vperm.xlu0 %9817, %v9322
    %v9819 = vpop.permute.xlu0 %9818
    %9820 = vset.pattern.permute.xlu0 2
    %9821 = vperm.xlu0 %9820, %v9323
    %v9822 = vpop.permute.xlu0 %9821
    %9823 = vset.pattern.permute.xlu0 2
    %9824 = vperm.xlu0 %9823, %v9324
    %v9825 = vpop.permute.xlu0 %9824
    %9826 = vset.pattern.permute.xlu0 2
    %9827 = vperm.xlu0 %9826, %v9325
    %v9828 = vpop.permute.xlu0 %9827
    %9829 = vset.pattern.permute.xlu0 2
    %9830 = vperm.xlu0 %9829, %v9326
    %v9831 = vpop.permute.xlu0 %9830
    %9832 = vset.pattern.permute.xlu0 2
    %9833 = vperm.xlu0 %9832, %v9327
    %v9834 = vpop.permute.xlu0 %9833
    %9835 = vset.pattern.permute.xlu0 2
    %9836 = vperm.xlu0 %9835, %v9328
    %v9837 = vpop.permute.xlu0 %9836
    %9838 = vset.pattern.permute.xlu0 2
    %9839 = vperm.xlu0 %9838, %v9329
    %v9840 = vpop.permute.xlu0 %9839
    %9841 = vset.pattern.permute.xlu0 2
    %9842 = vperm.xlu0 %9841, %v9330
    %v9843 = vpop.permute.xlu0 %9842
    %9844 = vset.pattern.permute.xlu0 2
    %9845 = vperm.xlu0 %9844, %v9331
    %v9846 = vpop.permute.xlu0 %9845
    %9847 = vset.pattern.permute.xlu0 2
    %9848 = vperm.xlu0 %9847, %v9332
    %v9849 = vpop.permute.xlu0 %9848
    %9850 = vset.pattern.permute.xlu0 2
    %9851 = vperm.xlu0 %9850, %v9333
    %v9852 = vpop.permute.xlu0 %9851
    %9853 = vset.pattern.permute.xlu0 2
    %9854 = vperm.xlu0 %9853, %v9334
    %v9855 = vpop.permute.xlu0 %9854
    %v9856 = vrot.slane %v9810, 7
    %v9857 = vrot.slane %v9813, 7
    %v9858 = vsel %vm1502, %v9856, %v9857
    %v9859 = vrot.slane %v9816, 7
    %v9860 = vsel %vm1502, %v9857, %v9859
    %v9861 = vrot.slane %v9819, 7
    %v9862 = vsel %vm1502, %v9859, %v9861
    %v9863 = vrot.slane %v9822, 7
    %v9864 = vsel %vm1502, %v9861, %v9863
    %v9865 = vrot.slane %v9825, 7
    %v9866 = vsel %vm1502, %v9863, %v9865
    %v9867 = vrot.slane %v9828, 7
    %v9868 = vsel %vm1502, %v9865, %v9867
    %v9869 = vrot.slane %v9831, 7
    %v9870 = vsel %vm1502, %v9867, %v9869
    %v9871 = vrot.slane %v9834, 7
    %v9872 = vsel %vm1502, %v9869, %v9871
    %v9873 = vrot.slane %v9837, 7
    %v9874 = vsel %vm1502, %v9871, %v9873
    %v9875 = vrot.slane %v9840, 7
    %v9876 = vsel %vm1502, %v9873, %v9875
    %v9877 = vrot.slane %v9843, 7
    %v9878 = vsel %vm1502, %v9875, %v9877
    %v9879 = vrot.slane %v9846, 7
    %v9880 = vsel %vm1502, %v9877, %v9879
    %v9881 = vrot.slane %v9849, 7
    %v9882 = vsel %vm1502, %v9879, %v9881
    %v9883 = vrot.slane %v9852, 7
    %v9884 = vsel %vm1502, %v9881, %v9883
    %v9885 = vrot.slane %v9855, 7
    %v9886 = vsel %vm1502, %v9883, %v9885
    %v9904 = vmul.f32 %v9856, 0.0
    %v9905 = vmul.f32 %v9272, %v9858
    %v9906 = vmul.f32 %v9275, %v9860
    %v9907 = vmul.f32 %v9278, %v9862
    %v9908 = vmul.f32 %v9281, %v9864
    %v9909 = vmul.f32 %v9284, %v9866
    %v9910 = vmul.f32 %v9287, %v9868
    %v9911 = vmul.f32 %v9290, %v9870
    %v9912 = vmul.f32 %v9293, %v9872
    %v9913 = vmul.f32 %v9296, %v9874
    %v9914 = vmul.f32 %v9299, %v9876
    %v9915 = vmul.f32 %v9302, %v9878
    %v9916 = vmul.f32 %v9305, %v9880
    %v9917 = vmul.f32 %v9308, %v9882
    %v9918 = vmul.f32 %v9311, %v9884
    %v9919 = vmul.f32 %v9314, %v9886
    %v9920 = vmul.f32 %v9317, %v9885
    %s9921 = scalar_lea.vmem %s5, 16
    %v9922 = vld [vmem:[%s9921] sm:$0xff]
    %v9940 = vrot.slane %v9904, 1
    %v9941 = vrot.slane %v9905, 1
    %v9942 = vsel %vm450, %v9940, %v9941
    %v9943 = vrot.slane %v9906, 1
    %v9944 = vsel %vm450, %v9941, %v9943
    %v9945 = vrot.slane %v9907, 1
    %v9946 = vsel %vm450, %v9943, %v9945
    %v9947 = vrot.slane %v9908, 1
    %v9948 = vsel %vm450, %v9945, %v9947
    %v9949 = vrot.slane %v9909, 1
    %v9950 = vsel %vm450, %v9947, %v9949
    %v9951 = vrot.slane %v9910, 1
    %v9952 = vsel %vm450, %v9949, %v9951
    %v9953 = vrot.slane %v9911, 1
    %v9954 = vsel %vm450, %v9951, %v9953
    %v9955 = vrot.slane %v9912, 1
    %v9956 = vsel %vm450, %v9953, %v9955
    %v9957 = vrot.slane %v9913, 1
    %v9958 = vsel %vm450, %v9955, %v9957
    %v9959 = vrot.slane %v9914, 1
    %v9960 = vsel %vm450, %v9957, %v9959
    %v9961 = vrot.slane %v9915, 1
    %v9962 = vsel %vm450, %v9959, %v9961
    %v9963 = vrot.slane %v9916, 1
    %v9964 = vsel %vm450, %v9961, %v9963
    %v9965 = vrot.slane %v9917, 1
    %v9966 = vsel %vm450, %v9963, %v9965
    %v9967 = vrot.slane %v9918, 1
    %v9968 = vsel %vm450, %v9965, %v9967
    %v9969 = vrot.slane %v9919, 1
    %v9970 = vsel %vm450, %v9967, %v9969
    %v9971 = vrot.slane %v9920, 1
    %v9972 = vsel %vm450, %v9969, %v9971
    %v9973 = vsel %vm9547, %v9942, 0
    %v9975 = vsel %vm9547, %v9944, 0
    %v9977 = vsel %vm9547, %v9946, 0
    %v9979 = vsel %vm9547, %v9948, 0
    %v9981 = vsel %vm9547, %v9950, 0
    %v9983 = vsel %vm9547, %v9952, 0
    %v9985 = vsel %vm9547, %v9954, 0
    %v9987 = vsel %vm9547, %v9956, 0
    %v9989 = vsel %vm9547, %v9958, 0
    %v9991 = vsel %vm9547, %v9960, 0
    %v9993 = vsel %vm9547, %v9962, 0
    %v9995 = vsel %vm9547, %v9964, 0
    %v9997 = vsel %vm9547, %v9966, 0
    %v9999 = vsel %vm9547, %v9968, 0
    %v10001 = vsel %vm9547, %v9970, 0
    %v10003 = vsel %vm9547, %v9972, 0
    %10005 = vmatpush.msra.mxu0 0.0
    %10006 = vmatpush.msra.mxu0 0.0
    %10007 = vmatpush.msra.mxu0 0.0
    %10008 = vmatpush.msra.mxu0 0.0
    %10009 = vmatpush.msra.mxu0 0.0
    %10010 = vmatpush.msra.mxu0 0.0
    %10011 = vmatpush.msra.mxu0 0.0
    %10012 = vmatpush.msra.mxu0 0.0
    %10013 = vmatpush.msra.mxu0 0.0
    %10014 = vmatpush.msra.mxu0 0.0
    %10015 = vmatpush.msra.mxu0 0.0
    %10016 = vmatpush.msra.mxu0 0.0
    %10017 = vmatpush.msra.mxu0 0.0
    %10018 = vmatpush.msra.mxu0 0.0
    %10019 = vmatpush.msra.mxu0 0.0
    %10020 = vmatpush.msra.mxu0 %v9922
    %10021 = vmatmul.f32.gmra.mxu0 %v9973
    %v10022 = vpop.f32.mrf.mxu0
    %v10023 = vadd.f32 0.0, %v10022
    %10024 = vmatmul.f32.gmra.mxu0 %v9975
    %v10025 = vpop.f32.mrf.mxu0
    %v10026 = vadd.f32 0.0, %v10025
    %10027 = vmatmul.f32.gmra.mxu0 %v9977
    %v10028 = vpop.f32.mrf.mxu0
    %v10029 = vadd.f32 0.0, %v10028
    %10030 = vmatmul.f32.gmra.mxu0 %v9979
    %v10031 = vpop.f32.mrf.mxu0
    %v10032 = vadd.f32 0.0, %v10031
    %10033 = vmatmul.f32.gmra.mxu0 %v9981
    %v10034 = vpop.f32.mrf.mxu0
    %v10035 = vadd.f32 0.0, %v10034
    %10036 = vmatmul.f32.gmra.mxu0 %v9983
    %v10037 = vpop.f32.mrf.mxu0
    %v10038 = vadd.f32 0.0, %v10037
    %10039 = vmatmul.f32.gmra.mxu0 %v9985
    %v10040 = vpop.f32.mrf.mxu0
    %v10041 = vadd.f32 0.0, %v10040
    %10042 = vmatmul.f32.gmra.mxu0 %v9987
    %v10043 = vpop.f32.mrf.mxu0
    %v10044 = vadd.f32 0.0, %v10043
    %10045 = vmatmul.f32.gmra.mxu0 %v9989
    %v10046 = vpop.f32.mrf.mxu0
    %v10047 = vadd.f32 0.0, %v10046
    %10048 = vmatmul.f32.gmra.mxu0 %v9991
    %v10049 = vpop.f32.mrf.mxu0
    %v10050 = vadd.f32 0.0, %v10049
    %10051 = vmatmul.f32.gmra.mxu0 %v9993
    %v10052 = vpop.f32.mrf.mxu0
    %v10053 = vadd.f32 0.0, %v10052
    %10054 = vmatmul.f32.gmra.mxu0 %v9995
    %v10055 = vpop.f32.mrf.mxu0
    %v10056 = vadd.f32 0.0, %v10055
    %10057 = vmatmul.f32.gmra.mxu0 %v9997
    %v10058 = vpop.f32.mrf.mxu0
    %v10059 = vadd.f32 0.0, %v10058
    %10060 = vmatmul.f32.gmra.mxu0 %v9999
    %v10061 = vpop.f32.mrf.mxu0
    %v10062 = vadd.f32 0.0, %v10061
    %10063 = vmatmul.f32.gmra.mxu0 %v10001
    %v10064 = vpop.f32.mrf.mxu0
    %v10065 = vadd.f32 0.0, %v10064
    %10066 = vmatmul.f32.gmra.mxu0 %v10003
    %v10067 = vpop.f32.mrf.mxu0
    %v10068 = vadd.f32 0.0, %v10067
    %10069 = vdwg.mxu0
    %v10070 = vadd.f32 %v9761, %v10023
    %v10071 = vadd.f32 %v9764, %v10026
    %v10072 = vadd.f32 %v9767, %v10029
    %v10073 = vadd.f32 %v9770, %v10032
    %v10074 = vadd.f32 %v9773, %v10035
    %v10075 = vadd.f32 %v9776, %v10038
    %v10076 = vadd.f32 %v9779, %v10041
    %v10077 = vadd.f32 %v9782, %v10044
    %v10078 = vadd.f32 %v9785, %v10047
    %v10079 = vadd.f32 %v9788, %v10050
    %v10080 = vadd.f32 %v9791, %v10053
    %v10081 = vadd.f32 %v9794, %v10056
    %v10082 = vadd.f32 %v9797, %v10059
    %v10083 = vadd.f32 %v9800, %v10062
    %v10084 = vadd.f32 %v9803, %v10065
    %v10085 = vadd.f32 %v9806, %v10068
    %10086 = vset.pattern.permute.xlu0 3
    %10087 = vperm.xlu0 %10086, %v9319
    %v10088 = vpop.permute.xlu0 %10087
    %10089 = vset.pattern.permute.xlu0 3
    %10090 = vperm.xlu0 %10089, %v9320
    %v10091 = vpop.permute.xlu0 %10090
    %10092 = vset.pattern.permute.xlu0 3
    %10093 = vperm.xlu0 %10092, %v9321
    %v10094 = vpop.permute.xlu0 %10093
    %10095 = vset.pattern.permute.xlu0 3
    %10096 = vperm.xlu0 %10095, %v9322
    %v10097 = vpop.permute.xlu0 %10096
    %10098 = vset.pattern.permute.xlu0 3
    %10099 = vperm.xlu0 %10098, %v9323
    %v10100 = vpop.permute.xlu0 %10099
    %10101 = vset.pattern.permute.xlu0 3
    %10102 = vperm.xlu0 %10101, %v9324
    %v10103 = vpop.permute.xlu0 %10102
    %10104 = vset.pattern.permute.xlu0 3
    %10105 = vperm.xlu0 %10104, %v9325
    %v10106 = vpop.permute.xlu0 %10105
    %10107 = vset.pattern.permute.xlu0 3
    %10108 = vperm.xlu0 %10107, %v9326
    %v10109 = vpop.permute.xlu0 %10108
    %10110 = vset.pattern.permute.xlu0 3
    %10111 = vperm.xlu0 %10110, %v9327
    %v10112 = vpop.permute.xlu0 %10111
    %10113 = vset.pattern.permute.xlu0 3
    %10114 = vperm.xlu0 %10113, %v9328
    %v10115 = vpop.permute.xlu0 %10114
    %10116 = vset.pattern.permute.xlu0 3
    %10117 = vperm.xlu0 %10116, %v9329
    %v10118 = vpop.permute.xlu0 %10117
    %10119 = vset.pattern.permute.xlu0 3
    %10120 = vperm.xlu0 %10119, %v9330
    %v10121 = vpop.permute.xlu0 %10120
    %10122 = vset.pattern.permute.xlu0 3
    %10123 = vperm.xlu0 %10122, %v9331
    %v10124 = vpop.permute.xlu0 %10123
    %10125 = vset.pattern.permute.xlu0 3
    %10126 = vperm.xlu0 %10125, %v9332
    %v10127 = vpop.permute.xlu0 %10126
    %10128 = vset.pattern.permute.xlu0 3
    %10129 = vperm.xlu0 %10128, %v9333
    %v10130 = vpop.permute.xlu0 %10129
    %10131 = vset.pattern.permute.xlu0 3
    %10132 = vperm.xlu0 %10131, %v9334
    %v10133 = vpop.permute.xlu0 %10132
    %v10134 = vrot.slane %v10088, 1
    %v10135 = vrot.slane %v10091, 1
    %v10136 = vsel %vm450, %v10134, %v10135
    %v10137 = vrot.slane %v10094, 1
    %v10138 = vsel %vm450, %v10135, %v10137
    %v10139 = vrot.slane %v10097, 1
    %v10140 = vsel %vm450, %v10137, %v10139
    %v10141 = vrot.slane %v10100, 1
    %v10142 = vsel %vm450, %v10139, %v10141
    %v10143 = vrot.slane %v10103, 1
    %v10144 = vsel %vm450, %v10141, %v10143
    %v10145 = vrot.slane %v10106, 1
    %v10146 = vsel %vm450, %v10143, %v10145
    %v10147 = vrot.slane %v10109, 1
    %v10148 = vsel %vm450, %v10145, %v10147
    %v10149 = vrot.slane %v10112, 1
    %v10150 = vsel %vm450, %v10147, %v10149
    %v10151 = vrot.slane %v10115, 1
    %v10152 = vsel %vm450, %v10149, %v10151
    %v10153 = vrot.slane %v10118, 1
    %v10154 = vsel %vm450, %v10151, %v10153
    %v10155 = vrot.slane %v10121, 1
    %v10156 = vsel %vm450, %v10153, %v10155
    %v10157 = vrot.slane %v10124, 1
    %v10158 = vsel %vm450, %v10155, %v10157
    %v10159 = vrot.slane %v10127, 1
    %v10160 = vsel %vm450, %v10157, %v10159
    %v10161 = vrot.slane %v10130, 1
    %v10162 = vsel %vm450, %v10159, %v10161
    %v10163 = vrot.slane %v10133, 1
    %v10164 = vsel %vm450, %v10161, %v10163
    %v10182 = vmul.f32 %v10134, 0.0
    %v10183 = vmul.f32 %v9272, %v10136
    %v10184 = vmul.f32 %v9275, %v10138
    %v10185 = vmul.f32 %v9278, %v10140
    %v10186 = vmul.f32 %v9281, %v10142
    %v10187 = vmul.f32 %v9284, %v10144
    %v10188 = vmul.f32 %v9287, %v10146
    %v10189 = vmul.f32 %v9290, %v10148
    %v10190 = vmul.f32 %v9293, %v10150
    %v10191 = vmul.f32 %v9296, %v10152
    %v10192 = vmul.f32 %v9299, %v10154
    %v10193 = vmul.f32 %v9302, %v10156
    %v10194 = vmul.f32 %v9305, %v10158
    %v10195 = vmul.f32 %v9308, %v10160
    %v10196 = vmul.f32 %v9311, %v10162
    %v10197 = vmul.f32 %v9314, %v10164
    %v10198 = vmul.f32 %v9317, %v10163
    %s10199 = scalar_lea.vmem %s5, 24
    %v10200 = vld [vmem:[%s10199] sm:$0xff]
    %v10218 = vrot.slane %v10182, 7
    %v10219 = vrot.slane %v10183, 7
    %v10220 = vsel %vm1502, %v10218, %v10219
    %v10221 = vrot.slane %v10184, 7
    %v10222 = vsel %vm1502, %v10219, %v10221
    %v10223 = vrot.slane %v10185, 7
    %v10224 = vsel %vm1502, %v10221, %v10223
    %v10225 = vrot.slane %v10186, 7
    %v10226 = vsel %vm1502, %v10223, %v10225
    %v10227 = vrot.slane %v10187, 7
    %v10228 = vsel %vm1502, %v10225, %v10227
    %v10229 = vrot.slane %v10188, 7
    %v10230 = vsel %vm1502, %v10227, %v10229
    %v10231 = vrot.slane %v10189, 7
    %v10232 = vsel %vm1502, %v10229, %v10231
    %v10233 = vrot.slane %v10190, 7
    %v10234 = vsel %vm1502, %v10231, %v10233
    %v10235 = vrot.slane %v10191, 7
    %v10236 = vsel %vm1502, %v10233, %v10235
    %v10237 = vrot.slane %v10192, 7
    %v10238 = vsel %vm1502, %v10235, %v10237
    %v10239 = vrot.slane %v10193, 7
    %v10240 = vsel %vm1502, %v10237, %v10239
    %v10241 = vrot.slane %v10194, 7
    %v10242 = vsel %vm1502, %v10239, %v10241
    %v10243 = vrot.slane %v10195, 7
    %v10244 = vsel %vm1502, %v10241, %v10243
    %v10245 = vrot.slane %v10196, 7
    %v10246 = vsel %vm1502, %v10243, %v10245
    %v10247 = vrot.slane %v10197, 7
    %v10248 = vsel %vm1502, %v10245, %v10247
    %v10249 = vrot.slane %v10198, 7
    %v10250 = vsel %vm1502, %v10247, %v10249
    %v10251 = vsel %vm9547, %v10220, 0
    %v10253 = vsel %vm9547, %v10222, 0
    %v10255 = vsel %vm9547, %v10224, 0
    %v10257 = vsel %vm9547, %v10226, 0
    %v10259 = vsel %vm9547, %v10228, 0
    %v10261 = vsel %vm9547, %v10230, 0
    %v10263 = vsel %vm9547, %v10232, 0
    %v10265 = vsel %vm9547, %v10234, 0
    %v10267 = vsel %vm9547, %v10236, 0
    %v10269 = vsel %vm9547, %v10238, 0
    %v10271 = vsel %vm9547, %v10240, 0
    %v10273 = vsel %vm9547, %v10242, 0
    %v10275 = vsel %vm9547, %v10244, 0
    %v10277 = vsel %vm9547, %v10246, 0
    %v10279 = vsel %vm9547, %v10248, 0
    %v10281 = vsel %vm9547, %v10250, 0
    %10283 = vmatpush.msra.mxu0 0.0
    %10284 = vmatpush.msra.mxu0 0.0
    %10285 = vmatpush.msra.mxu0 0.0
    %10286 = vmatpush.msra.mxu0 0.0
    %10287 = vmatpush.msra.mxu0 0.0
    %10288 = vmatpush.msra.mxu0 0.0
    %10289 = vmatpush.msra.mxu0 0.0
    %10290 = vmatpush.msra.mxu0 0.0
    %10291 = vmatpush.msra.mxu0 0.0
    %10292 = vmatpush.msra.mxu0 0.0
    %10293 = vmatpush.msra.mxu0 0.0
    %10294 = vmatpush.msra.mxu0 0.0
    %10295 = vmatpush.msra.mxu0 0.0
    %10296 = vmatpush.msra.mxu0 0.0
    %10297 = vmatpush.msra.mxu0 0.0
    %10298 = vmatpush.msra.mxu0 %v10200
    %10299 = vmatmul.f32.gmra.mxu0 %v10251
    %v10300 = vpop.f32.mrf.mxu0
    %v10301 = vadd.f32 0.0, %v10300
    %10302 = vmatmul.f32.gmra.mxu0 %v10253
    %v10303 = vpop.f32.mrf.mxu0
    %v10304 = vadd.f32 0.0, %v10303
    %10305 = vmatmul.f32.gmra.mxu0 %v10255
    %v10306 = vpop.f32.mrf.mxu0
    %v10307 = vadd.f32 0.0, %v10306
    %10308 = vmatmul.f32.gmra.mxu0 %v10257
    %v10309 = vpop.f32.mrf.mxu0
    %v10310 = vadd.f32 0.0, %v10309
    %10311 = vmatmul.f32.gmra.mxu0 %v10259
    %v10312 = vpop.f32.mrf.mxu0
    %v10313 = vadd.f32 0.0, %v10312
    %10314 = vmatmul.f32.gmra.mxu0 %v10261
    %v10315 = vpop.f32.mrf.mxu0
    %v10316 = vadd.f32 0.0, %v10315
    %10317 = vmatmul.f32.gmra.mxu0 %v10263
    %v10318 = vpop.f32.mrf.mxu0
    %v10319 = vadd.f32 0.0, %v10318
    %10320 = vmatmul.f32.gmra.mxu0 %v10265
    %v10321 = vpop.f32.mrf.mxu0
    %v10322 = vadd.f32 0.0, %v10321
    %10323 = vmatmul.f32.gmra.mxu0 %v10267
    %v10324 = vpop.f32.mrf.mxu0
    %v10325 = vadd.f32 0.0, %v10324
    %10326 = vmatmul.f32.gmra.mxu0 %v10269
    %v10327 = vpop.f32.mrf.mxu0
    %v10328 = vadd.f32 0.0, %v10327
    %10329 = vmatmul.f32.gmra.mxu0 %v10271
    %v10330 = vpop.f32.mrf.mxu0
    %v10331 = vadd.f32 0.0, %v10330
    %10332 = vmatmul.f32.gmra.mxu0 %v10273
    %v10333 = vpop.f32.mrf.mxu0
    %v10334 = vadd.f32 0.0, %v10333
    %10335 = vmatmul.f32.gmra.mxu0 %v10275
    %v10336 = vpop.f32.mrf.mxu0
    %v10337 = vadd.f32 0.0, %v10336
    %10338 = vmatmul.f32.gmra.mxu0 %v10277
    %v10339 = vpop.f32.mrf.mxu0
    %v10340 = vadd.f32 0.0, %v10339
    %10341 = vmatmul.f32.gmra.mxu0 %v10279
    %v10342 = vpop.f32.mrf.mxu0
    %v10343 = vadd.f32 0.0, %v10342
    %10344 = vmatmul.f32.gmra.mxu0 %v10281
    %v10345 = vpop.f32.mrf.mxu0
    %v10346 = vadd.f32 0.0, %v10345
    %10347 = vdwg.mxu0
    %v10348 = vadd.f32 %v10070, %v10301
    %v10349 = vadd.f32 %v10071, %v10304
    %v10350 = vadd.f32 %v10072, %v10307
    %v10351 = vadd.f32 %v10073, %v10310
    %v10352 = vadd.f32 %v10074, %v10313
    %v10353 = vadd.f32 %v10075, %v10316
    %v10354 = vadd.f32 %v10076, %v10319
    %v10355 = vadd.f32 %v10077, %v10322
    %v10356 = vadd.f32 %v10078, %v10325
    %v10357 = vadd.f32 %v10079, %v10328
    %v10358 = vadd.f32 %v10080, %v10331
    %v10359 = vadd.f32 %v10081, %v10334
    %v10360 = vadd.f32 %v10082, %v10337
    %v10361 = vadd.f32 %v10083, %v10340
    %v10362 = vadd.f32 %v10084, %v10343
    %v10363 = vadd.f32 %v10085, %v10346
    %s10364 = scalar_lea.vmem %s5, 32
    %v10365 = vld [vmem:[%s10364] sm:$0xff]
    %v10367 = vsel %vm9547, %v9272, 0
    %v10370 = vsel %vm9547, %v9275, 0
    %v10373 = vsel %vm9547, %v9278, 0
    %v10376 = vsel %vm9547, %v9281, 0
    %v10379 = vsel %vm9547, %v9284, 0
    %v10382 = vsel %vm9547, %v9287, 0
    %v10385 = vsel %vm9547, %v9290, 0
    %v10388 = vsel %vm9547, %v9293, 0
    %v10391 = vsel %vm9547, %v9296, 0
    %v10394 = vsel %vm9547, %v9299, 0
    %v10397 = vsel %vm9547, %v9302, 0
    %v10400 = vsel %vm9547, %v9305, 0
    %v10403 = vsel %vm9547, %v9308, 0
    %v10406 = vsel %vm9547, %v9311, 0
    %v10409 = vsel %vm9547, %v9314, 0
    %v10412 = vsel %vm9547, %v9317, 0
    %10414 = vmatpush.msra.mxu0 0.0
    %10415 = vmatpush.msra.mxu0 0.0
    %10416 = vmatpush.msra.mxu0 0.0
    %10417 = vmatpush.msra.mxu0 0.0
    %10418 = vmatpush.msra.mxu0 0.0
    %10419 = vmatpush.msra.mxu0 0.0
    %10420 = vmatpush.msra.mxu0 0.0
    %10421 = vmatpush.msra.mxu0 0.0
    %10422 = vmatpush.msra.mxu0 0.0
    %10423 = vmatpush.msra.mxu0 0.0
    %10424 = vmatpush.msra.mxu0 0.0
    %10425 = vmatpush.msra.mxu0 0.0
    %10426 = vmatpush.msra.mxu0 0.0
    %10427 = vmatpush.msra.mxu0 0.0
    %10428 = vmatpush.msra.mxu0 0.0
    %10429 = vmatpush.msra.mxu0 %v10365
    %10430 = vmatmul.f32.gmra.mxu0 %v10367
    %v10431 = vpop.f32.mrf.mxu0
    %v10432 = vadd.f32 0.0, %v10431
    %10433 = vmatmul.f32.gmra.mxu0 %v10370
    %v10434 = vpop.f32.mrf.mxu0
    %v10435 = vadd.f32 0.0, %v10434
    %10436 = vmatmul.f32.gmra.mxu0 %v10373
    %v10437 = vpop.f32.mrf.mxu0
    %v10438 = vadd.f32 0.0, %v10437
    %10439 = vmatmul.f32.gmra.mxu0 %v10376
    %v10440 = vpop.f32.mrf.mxu0
    %v10441 = vadd.f32 0.0, %v10440
    %10442 = vmatmul.f32.gmra.mxu0 %v10379
    %v10443 = vpop.f32.mrf.mxu0
    %v10444 = vadd.f32 0.0, %v10443
    %10445 = vmatmul.f32.gmra.mxu0 %v10382
    %v10446 = vpop.f32.mrf.mxu0
    %v10447 = vadd.f32 0.0, %v10446
    %10448 = vmatmul.f32.gmra.mxu0 %v10385
    %v10449 = vpop.f32.mrf.mxu0
    %v10450 = vadd.f32 0.0, %v10449
    %10451 = vmatmul.f32.gmra.mxu0 %v10388
    %v10452 = vpop.f32.mrf.mxu0
    %v10453 = vadd.f32 0.0, %v10452
    %10454 = vmatmul.f32.gmra.mxu0 %v10391
    %v10455 = vpop.f32.mrf.mxu0
    %v10456 = vadd.f32 0.0, %v10455
    %10457 = vmatmul.f32.gmra.mxu0 %v10394
    %v10458 = vpop.f32.mrf.mxu0
    %v10459 = vadd.f32 0.0, %v10458
    %10460 = vmatmul.f32.gmra.mxu0 %v10397
    %v10461 = vpop.f32.mrf.mxu0
    %v10462 = vadd.f32 0.0, %v10461
    %10463 = vmatmul.f32.gmra.mxu0 %v10400
    %v10464 = vpop.f32.mrf.mxu0
    %v10465 = vadd.f32 0.0, %v10464
    %10466 = vmatmul.f32.gmra.mxu0 %v10403
    %v10467 = vpop.f32.mrf.mxu0
    %v10468 = vadd.f32 0.0, %v10467
    %10469 = vmatmul.f32.gmra.mxu0 %v10406
    %v10470 = vpop.f32.mrf.mxu0
    %v10471 = vadd.f32 0.0, %v10470
    %10472 = vmatmul.f32.gmra.mxu0 %v10409
    %v10473 = vpop.f32.mrf.mxu0
    %v10474 = vadd.f32 0.0, %v10473
    %10475 = vmatmul.f32.gmra.mxu0 %v10412
    %v10476 = vpop.f32.mrf.mxu0
    %v10477 = vadd.f32 0.0, %v10476
    %10478 = vdwg.mxu0
    %v10479 = vadd.f32 %v10348, %v10432
    %v10480 = vadd.f32 %v10349, %v10435
    %v10481 = vadd.f32 %v10350, %v10438
    %v10482 = vadd.f32 %v10351, %v10441
    %v10483 = vadd.f32 %v10352, %v10444
    %v10484 = vadd.f32 %v10353, %v10447
    %v10485 = vadd.f32 %v10354, %v10450
    %v10486 = vadd.f32 %v10355, %v10453
    %v10487 = vadd.f32 %v10356, %v10456
    %v10488 = vadd.f32 %v10357, %v10459
    %v10489 = vadd.f32 %v10358, %v10462
    %v10490 = vadd.f32 %v10359, %v10465
    %v10491 = vadd.f32 %v10360, %v10468
    %v10492 = vadd.f32 %v10361, %v10471
    %v10493 = vadd.f32 %v10362, %v10474
    %v10494 = vadd.f32 %v10363, %v10477
    %10495 = vset.pattern.permute.xlu0 5
    %10496 = vperm.xlu0 %10495, %v9319
    %v10497 = vpop.permute.xlu0 %10496
    %10498 = vset.pattern.permute.xlu0 5
    %10499 = vperm.xlu0 %10498, %v9320
    %v10500 = vpop.permute.xlu0 %10499
    %10501 = vset.pattern.permute.xlu0 5
    %10502 = vperm.xlu0 %10501, %v9321
    %v10503 = vpop.permute.xlu0 %10502
    %10504 = vset.pattern.permute.xlu0 5
    %10505 = vperm.xlu0 %10504, %v9322
    %v10506 = vpop.permute.xlu0 %10505
    %10507 = vset.pattern.permute.xlu0 5
    %10508 = vperm.xlu0 %10507, %v9323
    %v10509 = vpop.permute.xlu0 %10508
    %10510 = vset.pattern.permute.xlu0 5
    %10511 = vperm.xlu0 %10510, %v9324
    %v10512 = vpop.permute.xlu0 %10511
    %10513 = vset.pattern.permute.xlu0 5
    %10514 = vperm.xlu0 %10513, %v9325
    %v10515 = vpop.permute.xlu0 %10514
    %10516 = vset.pattern.permute.xlu0 5
    %10517 = vperm.xlu0 %10516, %v9326
    %v10518 = vpop.permute.xlu0 %10517
    %10519 = vset.pattern.permute.xlu0 5
    %10520 = vperm.xlu0 %10519, %v9327
    %v10521 = vpop.permute.xlu0 %10520
    %10522 = vset.pattern.permute.xlu0 5
    %10523 = vperm.xlu0 %10522, %v9328
    %v10524 = vpop.permute.xlu0 %10523
    %10525 = vset.pattern.permute.xlu0 5
    %10526 = vperm.xlu0 %10525, %v9329
    %v10527 = vpop.permute.xlu0 %10526
    %10528 = vset.pattern.permute.xlu0 5
    %10529 = vperm.xlu0 %10528, %v9330
    %v10530 = vpop.permute.xlu0 %10529
    %10531 = vset.pattern.permute.xlu0 5
    %10532 = vperm.xlu0 %10531, %v9331
    %v10533 = vpop.permute.xlu0 %10532
    %10534 = vset.pattern.permute.xlu0 5
    %10535 = vperm.xlu0 %10534, %v9332
    %v10536 = vpop.permute.xlu0 %10535
    %10537 = vset.pattern.permute.xlu0 5
    %10538 = vperm.xlu0 %10537, %v9333
    %v10539 = vpop.permute.xlu0 %10538
    %10540 = vset.pattern.permute.xlu0 5
    %10541 = vperm.xlu0 %10540, %v9334
    %v10542 = vpop.permute.xlu0 %10541
    %v10543 = vrot.slane %v10497, 7
    %v10544 = vrot.slane %v10500, 7
    %v10545 = vsel %vm1502, %v10543, %v10544
    %v10546 = vrot.slane %v10503, 7
    %v10547 = vsel %vm1502, %v10544, %v10546
    %v10548 = vrot.slane %v10506, 7
    %v10549 = vsel %vm1502, %v10546, %v10548
    %v10550 = vrot.slane %v10509, 7
    %v10551 = vsel %vm1502, %v10548, %v10550
    %v10552 = vrot.slane %v10512, 7
    %v10553 = vsel %vm1502, %v10550, %v10552
    %v10554 = vrot.slane %v10515, 7
    %v10555 = vsel %vm1502, %v10552, %v10554
    %v10556 = vrot.slane %v10518, 7
    %v10557 = vsel %vm1502, %v10554, %v10556
    %v10558 = vrot.slane %v10521, 7
    %v10559 = vsel %vm1502, %v10556, %v10558
    %v10560 = vrot.slane %v10524, 7
    %v10561 = vsel %vm1502, %v10558, %v10560
    %v10562 = vrot.slane %v10527, 7
    %v10563 = vsel %vm1502, %v10560, %v10562
    %v10564 = vrot.slane %v10530, 7
    %v10565 = vsel %vm1502, %v10562, %v10564
    %v10566 = vrot.slane %v10533, 7
    %v10567 = vsel %vm1502, %v10564, %v10566
    %v10568 = vrot.slane %v10536, 7
    %v10569 = vsel %vm1502, %v10566, %v10568
    %v10570 = vrot.slane %v10539, 7
    %v10571 = vsel %vm1502, %v10568, %v10570
    %v10572 = vrot.slane %v10542, 7
    %v10573 = vsel %vm1502, %v10570, %v10572
    %v10591 = vmul.f32 %v9272, %v10543
    %v10592 = vmul.f32 %v9275, %v10545
    %v10593 = vmul.f32 %v9278, %v10547
    %v10594 = vmul.f32 %v9281, %v10549
    %v10595 = vmul.f32 %v9284, %v10551
    %v10596 = vmul.f32 %v9287, %v10553
    %v10597 = vmul.f32 %v9290, %v10555
    %v10598 = vmul.f32 %v9293, %v10557
    %v10599 = vmul.f32 %v9296, %v10559
    %v10600 = vmul.f32 %v9299, %v10561
    %v10601 = vmul.f32 %v9302, %v10563
    %v10602 = vmul.f32 %v9305, %v10565
    %v10603 = vmul.f32 %v9308, %v10567
    %v10604 = vmul.f32 %v9311, %v10569
    %v10605 = vmul.f32 %v9314, %v10571
    %v10606 = vmul.f32 %v9317, %v10573
    %v10607 = vmul.f32 %v10572, 0.0
    %s10608 = scalar_lea.vmem %s5, 40
    %v10609 = vld [vmem:[%s10608] sm:$0xff]
    %v10627 = vrot.slane %v10591, 1
    %v10628 = vrot.slane %v10592, 1
    %v10629 = vsel %vm450, %v10627, %v10628
    %v10630 = vrot.slane %v10593, 1
    %v10631 = vsel %vm450, %v10628, %v10630
    %v10632 = vrot.slane %v10594, 1
    %v10633 = vsel %vm450, %v10630, %v10632
    %v10634 = vrot.slane %v10595, 1
    %v10635 = vsel %vm450, %v10632, %v10634
    %v10636 = vrot.slane %v10596, 1
    %v10637 = vsel %vm450, %v10634, %v10636
    %v10638 = vrot.slane %v10597, 1
    %v10639 = vsel %vm450, %v10636, %v10638
    %v10640 = vrot.slane %v10598, 1
    %v10641 = vsel %vm450, %v10638, %v10640
    %v10642 = vrot.slane %v10599, 1
    %v10643 = vsel %vm450, %v10640, %v10642
    %v10644 = vrot.slane %v10600, 1
    %v10645 = vsel %vm450, %v10642, %v10644
    %v10646 = vrot.slane %v10601, 1
    %v10647 = vsel %vm450, %v10644, %v10646
    %v10648 = vrot.slane %v10602, 1
    %v10649 = vsel %vm450, %v10646, %v10648
    %v10650 = vrot.slane %v10603, 1
    %v10651 = vsel %vm450, %v10648, %v10650
    %v10652 = vrot.slane %v10604, 1
    %v10653 = vsel %vm450, %v10650, %v10652
    %v10654 = vrot.slane %v10605, 1
    %v10655 = vsel %vm450, %v10652, %v10654
    %v10656 = vrot.slane %v10606, 1
    %v10657 = vsel %vm450, %v10654, %v10656
    %v10658 = vrot.slane %v10607, 1
    %v10659 = vsel %vm450, %v10656, %v10658
    %v10660 = vsel %vm9547, %v10629, 0
    %v10662 = vsel %vm9547, %v10631, 0
    %v10664 = vsel %vm9547, %v10633, 0
    %v10666 = vsel %vm9547, %v10635, 0
    %v10668 = vsel %vm9547, %v10637, 0
    %v10670 = vsel %vm9547, %v10639, 0
    %v10672 = vsel %vm9547, %v10641, 0
    %v10674 = vsel %vm9547, %v10643, 0
    %v10676 = vsel %vm9547, %v10645, 0
    %v10678 = vsel %vm9547, %v10647, 0
    %v10680 = vsel %vm9547, %v10649, 0
    %v10682 = vsel %vm9547, %v10651, 0
    %v10684 = vsel %vm9547, %v10653, 0
    %v10686 = vsel %vm9547, %v10655, 0
    %v10688 = vsel %vm9547, %v10657, 0
    %v10690 = vsel %vm9547, %v10659, 0
    %10692 = vmatpush.msra.mxu0 0.0
    %10693 = vmatpush.msra.mxu0 0.0
    %10694 = vmatpush.msra.mxu0 0.0
    %10695 = vmatpush.msra.mxu0 0.0
    %10696 = vmatpush.msra.mxu0 0.0
    %10697 = vmatpush.msra.mxu0 0.0
    %10698 = vmatpush.msra.mxu0 0.0
    %10699 = vmatpush.msra.mxu0 0.0
    %10700 = vmatpush.msra.mxu0 0.0
    %10701 = vmatpush.msra.mxu0 0.0
    %10702 = vmatpush.msra.mxu0 0.0
    %10703 = vmatpush.msra.mxu0 0.0
    %10704 = vmatpush.msra.mxu0 0.0
    %10705 = vmatpush.msra.mxu0 0.0
    %10706 = vmatpush.msra.mxu0 0.0
    %10707 = vmatpush.msra.mxu0 %v10609
    %10708 = vmatmul.f32.gmra.mxu0 %v10660
    %v10709 = vpop.f32.mrf.mxu0
    %v10710 = vadd.f32 0.0, %v10709
    %10711 = vmatmul.f32.gmra.mxu0 %v10662
    %v10712 = vpop.f32.mrf.mxu0
    %v10713 = vadd.f32 0.0, %v10712
    %10714 = vmatmul.f32.gmra.mxu0 %v10664
    %v10715 = vpop.f32.mrf.mxu0
    %v10716 = vadd.f32 0.0, %v10715
    %10717 = vmatmul.f32.gmra.mxu0 %v10666
    %v10718 = vpop.f32.mrf.mxu0
    %v10719 = vadd.f32 0.0, %v10718
    %10720 = vmatmul.f32.gmra.mxu0 %v10668
    %v10721 = vpop.f32.mrf.mxu0
    %v10722 = vadd.f32 0.0, %v10721
    %10723 = vmatmul.f32.gmra.mxu0 %v10670
    %v10724 = vpop.f32.mrf.mxu0
    %v10725 = vadd.f32 0.0, %v10724
    %10726 = vmatmul.f32.gmra.mxu0 %v10672
    %v10727 = vpop.f32.mrf.mxu0
    %v10728 = vadd.f32 0.0, %v10727
    %10729 = vmatmul.f32.gmra.mxu0 %v10674
    %v10730 = vpop.f32.mrf.mxu0
    %v10731 = vadd.f32 0.0, %v10730
    %10732 = vmatmul.f32.gmra.mxu0 %v10676
    %v10733 = vpop.f32.mrf.mxu0
    %v10734 = vadd.f32 0.0, %v10733
    %10735 = vmatmul.f32.gmra.mxu0 %v10678
    %v10736 = vpop.f32.mrf.mxu0
    %v10737 = vadd.f32 0.0, %v10736
    %10738 = vmatmul.f32.gmra.mxu0 %v10680
    %v10739 = vpop.f32.mrf.mxu0
    %v10740 = vadd.f32 0.0, %v10739
    %10741 = vmatmul.f32.gmra.mxu0 %v10682
    %v10742 = vpop.f32.mrf.mxu0
    %v10743 = vadd.f32 0.0, %v10742
    %10744 = vmatmul.f32.gmra.mxu0 %v10684
    %v10745 = vpop.f32.mrf.mxu0
    %v10746 = vadd.f32 0.0, %v10745
    %10747 = vmatmul.f32.gmra.mxu0 %v10686
    %v10748 = vpop.f32.mrf.mxu0
    %v10749 = vadd.f32 0.0, %v10748
    %10750 = vmatmul.f32.gmra.mxu0 %v10688
    %v10751 = vpop.f32.mrf.mxu0
    %v10752 = vadd.f32 0.0, %v10751
    %10753 = vmatmul.f32.gmra.mxu0 %v10690
    %v10754 = vpop.f32.mrf.mxu0
    %v10755 = vadd.f32 0.0, %v10754
    %10756 = vdwg.mxu0
    %v10757 = vadd.f32 %v10479, %v10710
    %v10758 = vadd.f32 %v10480, %v10713
    %v10759 = vadd.f32 %v10481, %v10716
    %v10760 = vadd.f32 %v10482, %v10719
    %v10761 = vadd.f32 %v10483, %v10722
    %v10762 = vadd.f32 %v10484, %v10725
    %v10763 = vadd.f32 %v10485, %v10728
    %v10764 = vadd.f32 %v10486, %v10731
    %v10765 = vadd.f32 %v10487, %v10734
    %v10766 = vadd.f32 %v10488, %v10737
    %v10767 = vadd.f32 %v10489, %v10740
    %v10768 = vadd.f32 %v10490, %v10743
    %v10769 = vadd.f32 %v10491, %v10746
    %v10770 = vadd.f32 %v10492, %v10749
    %v10771 = vadd.f32 %v10493, %v10752
    %v10772 = vadd.f32 %v10494, %v10755
    %10773 = vset.pattern.permute.xlu0 6
    %10774 = vperm.xlu0 %10773, %v9319
    %v10775 = vpop.permute.xlu0 %10774
    %10776 = vset.pattern.permute.xlu0 6
    %10777 = vperm.xlu0 %10776, %v9320
    %v10778 = vpop.permute.xlu0 %10777
    %10779 = vset.pattern.permute.xlu0 6
    %10780 = vperm.xlu0 %10779, %v9321
    %v10781 = vpop.permute.xlu0 %10780
    %10782 = vset.pattern.permute.xlu0 6
    %10783 = vperm.xlu0 %10782, %v9322
    %v10784 = vpop.permute.xlu0 %10783
    %10785 = vset.pattern.permute.xlu0 6
    %10786 = vperm.xlu0 %10785, %v9323
    %v10787 = vpop.permute.xlu0 %10786
    %10788 = vset.pattern.permute.xlu0 6
    %10789 = vperm.xlu0 %10788, %v9324
    %v10790 = vpop.permute.xlu0 %10789
    %10791 = vset.pattern.permute.xlu0 6
    %10792 = vperm.xlu0 %10791, %v9325
    %v10793 = vpop.permute.xlu0 %10792
    %10794 = vset.pattern.permute.xlu0 6
    %10795 = vperm.xlu0 %10794, %v9326
    %v10796 = vpop.permute.xlu0 %10795
    %10797 = vset.pattern.permute.xlu0 6
    %10798 = vperm.xlu0 %10797, %v9327
    %v10799 = vpop.permute.xlu0 %10798
    %10800 = vset.pattern.permute.xlu0 6
    %10801 = vperm.xlu0 %10800, %v9328
    %v10802 = vpop.permute.xlu0 %10801
    %10803 = vset.pattern.permute.xlu0 6
    %10804 = vperm.xlu0 %10803, %v9329
    %v10805 = vpop.permute.xlu0 %10804
    %10806 = vset.pattern.permute.xlu0 6
    %10807 = vperm.xlu0 %10806, %v9330
    %v10808 = vpop.permute.xlu0 %10807
    %10809 = vset.pattern.permute.xlu0 6
    %10810 = vperm.xlu0 %10809, %v9331
    %v10811 = vpop.permute.xlu0 %10810
    %10812 = vset.pattern.permute.xlu0 6
    %10813 = vperm.xlu0 %10812, %v9332
    %v10814 = vpop.permute.xlu0 %10813
    %10815 = vset.pattern.permute.xlu0 6
    %10816 = vperm.xlu0 %10815, %v9333
    %v10817 = vpop.permute.xlu0 %10816
    %10818 = vset.pattern.permute.xlu0 6
    %10819 = vperm.xlu0 %10818, %v9334
    %v10820 = vpop.permute.xlu0 %10819
    %v10821 = vrot.slane %v10775, 1
    %v10822 = vrot.slane %v10778, 1
    %v10823 = vsel %vm450, %v10821, %v10822
    %v10824 = vrot.slane %v10781, 1
    %v10825 = vsel %vm450, %v10822, %v10824
    %v10826 = vrot.slane %v10784, 1
    %v10827 = vsel %vm450, %v10824, %v10826
    %v10828 = vrot.slane %v10787, 1
    %v10829 = vsel %vm450, %v10826, %v10828
    %v10830 = vrot.slane %v10790, 1
    %v10831 = vsel %vm450, %v10828, %v10830
    %v10832 = vrot.slane %v10793, 1
    %v10833 = vsel %vm450, %v10830, %v10832
    %v10834 = vrot.slane %v10796, 1
    %v10835 = vsel %vm450, %v10832, %v10834
    %v10836 = vrot.slane %v10799, 1
    %v10837 = vsel %vm450, %v10834, %v10836
    %v10838 = vrot.slane %v10802, 1
    %v10839 = vsel %vm450, %v10836, %v10838
    %v10840 = vrot.slane %v10805, 1
    %v10841 = vsel %vm450, %v10838, %v10840
    %v10842 = vrot.slane %v10808, 1
    %v10843 = vsel %vm450, %v10840, %v10842
    %v10844 = vrot.slane %v10811, 1
    %v10845 = vsel %vm450, %v10842, %v10844
    %v10846 = vrot.slane %v10814, 1
    %v10847 = vsel %vm450, %v10844, %v10846
    %v10848 = vrot.slane %v10817, 1
    %v10849 = vsel %vm450, %v10846, %v10848
    %v10850 = vrot.slane %v10820, 1
    %v10851 = vsel %vm450, %v10848, %v10850
    %v10869 = vmul.f32 %v9272, %v10821
    %v10870 = vmul.f32 %v9275, %v10823
    %v10871 = vmul.f32 %v9278, %v10825
    %v10872 = vmul.f32 %v9281, %v10827
    %v10873 = vmul.f32 %v9284, %v10829
    %v10874 = vmul.f32 %v9287, %v10831
    %v10875 = vmul.f32 %v9290, %v10833
    %v10876 = vmul.f32 %v9293, %v10835
    %v10877 = vmul.f32 %v9296, %v10837
    %v10878 = vmul.f32 %v9299, %v10839
    %v10879 = vmul.f32 %v9302, %v10841
    %v10880 = vmul.f32 %v9305, %v10843
    %v10881 = vmul.f32 %v9308, %v10845
    %v10882 = vmul.f32 %v9311, %v10847
    %v10883 = vmul.f32 %v9314, %v10849
    %v10884 = vmul.f32 %v9317, %v10851
    %v10885 = vmul.f32 %v10850, 0.0
    %s10886 = scalar_lea.vmem %s5, 48
    %v10887 = vld [vmem:[%s10886] sm:$0xff]
    %v10905 = vrot.slane %v10869, 7
    %v10906 = vrot.slane %v10870, 7
    %v10907 = vsel %vm1502, %v10905, %v10906
    %v10908 = vrot.slane %v10871, 7
    %v10909 = vsel %vm1502, %v10906, %v10908
    %v10910 = vrot.slane %v10872, 7
    %v10911 = vsel %vm1502, %v10908, %v10910
    %v10912 = vrot.slane %v10873, 7
    %v10913 = vsel %vm1502, %v10910, %v10912
    %v10914 = vrot.slane %v10874, 7
    %v10915 = vsel %vm1502, %v10912, %v10914
    %v10916 = vrot.slane %v10875, 7
    %v10917 = vsel %vm1502, %v10914, %v10916
    %v10918 = vrot.slane %v10876, 7
    %v10919 = vsel %vm1502, %v10916, %v10918
    %v10920 = vrot.slane %v10877, 7
    %v10921 = vsel %vm1502, %v10918, %v10920
    %v10922 = vrot.slane %v10878, 7
    %v10923 = vsel %vm1502, %v10920, %v10922
    %v10924 = vrot.slane %v10879, 7
    %v10925 = vsel %vm1502, %v10922, %v10924
    %v10926 = vrot.slane %v10880, 7
    %v10927 = vsel %vm1502, %v10924, %v10926
    %v10928 = vrot.slane %v10881, 7
    %v10929 = vsel %vm1502, %v10926, %v10928
    %v10930 = vrot.slane %v10882, 7
    %v10931 = vsel %vm1502, %v10928, %v10930
    %v10932 = vrot.slane %v10883, 7
    %v10933 = vsel %vm1502, %v10930, %v10932
    %v10934 = vrot.slane %v10884, 7
    %v10935 = vsel %vm1502, %v10932, %v10934
    %v10936 = vrot.slane %v10885, 7
    %v10937 = vsel %vm1502, %v10934, %v10936
    %v10938 = vsel %vm9547, %v10907, 0
    %v10940 = vsel %vm9547, %v10909, 0
    %v10942 = vsel %vm9547, %v10911, 0
    %v10944 = vsel %vm9547, %v10913, 0
    %v10946 = vsel %vm9547, %v10915, 0
    %v10948 = vsel %vm9547, %v10917, 0
    %v10950 = vsel %vm9547, %v10919, 0
    %v10952 = vsel %vm9547, %v10921, 0
    %v10954 = vsel %vm9547, %v10923, 0
    %v10956 = vsel %vm9547, %v10925, 0
    %v10958 = vsel %vm9547, %v10927, 0
    %v10960 = vsel %vm9547, %v10929, 0
    %v10962 = vsel %vm9547, %v10931, 0
    %v10964 = vsel %vm9547, %v10933, 0
    %v10966 = vsel %vm9547, %v10935, 0
    %v10968 = vsel %vm9547, %v10937, 0
    %10970 = vmatpush.msra.mxu0 0.0
    %10971 = vmatpush.msra.mxu0 0.0
    %10972 = vmatpush.msra.mxu0 0.0
    %10973 = vmatpush.msra.mxu0 0.0
    %10974 = vmatpush.msra.mxu0 0.0
    %10975 = vmatpush.msra.mxu0 0.0
    %10976 = vmatpush.msra.mxu0 0.0
    %10977 = vmatpush.msra.mxu0 0.0
    %10978 = vmatpush.msra.mxu0 0.0
    %10979 = vmatpush.msra.mxu0 0.0
    %10980 = vmatpush.msra.mxu0 0.0
    %10981 = vmatpush.msra.mxu0 0.0
    %10982 = vmatpush.msra.mxu0 0.0
    %10983 = vmatpush.msra.mxu0 0.0
    %10984 = vmatpush.msra.mxu0 0.0
    %10985 = vmatpush.msra.mxu0 %v10887
    %10986 = vmatmul.f32.gmra.mxu0 %v10938
    %v10987 = vpop.f32.mrf.mxu0
    %v10988 = vadd.f32 0.0, %v10987
    %10989 = vmatmul.f32.gmra.mxu0 %v10940
    %v10990 = vpop.f32.mrf.mxu0
    %v10991 = vadd.f32 0.0, %v10990
    %10992 = vmatmul.f32.gmra.mxu0 %v10942
    %v10993 = vpop.f32.mrf.mxu0
    %v10994 = vadd.f32 0.0, %v10993
    %10995 = vmatmul.f32.gmra.mxu0 %v10944
    %v10996 = vpop.f32.mrf.mxu0
    %v10997 = vadd.f32 0.0, %v10996
    %10998 = vmatmul.f32.gmra.mxu0 %v10946
    %v10999 = vpop.f32.mrf.mxu0
    %v11000 = vadd.f32 0.0, %v10999
    %11001 = vmatmul.f32.gmra.mxu0 %v10948
    %v11002 = vpop.f32.mrf.mxu0
    %v11003 = vadd.f32 0.0, %v11002
    %11004 = vmatmul.f32.gmra.mxu0 %v10950
    %v11005 = vpop.f32.mrf.mxu0
    %v11006 = vadd.f32 0.0, %v11005
    %11007 = vmatmul.f32.gmra.mxu0 %v10952
    %v11008 = vpop.f32.mrf.mxu0
    %v11009 = vadd.f32 0.0, %v11008
    %11010 = vmatmul.f32.gmra.mxu0 %v10954
    %v11011 = vpop.f32.mrf.mxu0
    %v11012 = vadd.f32 0.0, %v11011
    %11013 = vmatmul.f32.gmra.mxu0 %v10956
    %v11014 = vpop.f32.mrf.mxu0
    %v11015 = vadd.f32 0.0, %v11014
    %11016 = vmatmul.f32.gmra.mxu0 %v10958
    %v11017 = vpop.f32.mrf.mxu0
    %v11018 = vadd.f32 0.0, %v11017
    %11019 = vmatmul.f32.gmra.mxu0 %v10960
    %v11020 = vpop.f32.mrf.mxu0
    %v11021 = vadd.f32 0.0, %v11020
    %11022 = vmatmul.f32.gmra.mxu0 %v10962
    %v11023 = vpop.f32.mrf.mxu0
    %v11024 = vadd.f32 0.0, %v11023
    %11025 = vmatmul.f32.gmra.mxu0 %v10964
    %v11026 = vpop.f32.mrf.mxu0
    %v11027 = vadd.f32 0.0, %v11026
    %11028 = vmatmul.f32.gmra.mxu0 %v10966
    %v11029 = vpop.f32.mrf.mxu0
    %v11030 = vadd.f32 0.0, %v11029
    %11031 = vmatmul.f32.gmra.mxu0 %v10968
    %v11032 = vpop.f32.mrf.mxu0
    %v11033 = vadd.f32 0.0, %v11032
    %11034 = vdwg.mxu0
    %v11035 = vadd.f32 %v10757, %v10988
    %v11036 = vadd.f32 %v10758, %v10991
    %v11037 = vadd.f32 %v10759, %v10994
    %v11038 = vadd.f32 %v10760, %v10997
    %v11039 = vadd.f32 %v10761, %v11000
    %v11040 = vadd.f32 %v10762, %v11003
    %v11041 = vadd.f32 %v10763, %v11006
    %v11042 = vadd.f32 %v10764, %v11009
    %v11043 = vadd.f32 %v10765, %v11012
    %v11044 = vadd.f32 %v10766, %v11015
    %v11045 = vadd.f32 %v10767, %v11018
    %v11046 = vadd.f32 %v10768, %v11021
    %v11047 = vadd.f32 %v10769, %v11024
    %v11048 = vadd.f32 %v10770, %v11027
    %v11049 = vadd.f32 %v10771, %v11030
    %v11050 = vadd.f32 %v10772, %v11033
    %11051 = vset.pattern.permute.xlu0 7
    %11052 = vperm.xlu0 %11051, %v9319
    %v11053 = vpop.permute.xlu0 %11052
    %11055 = vset.pattern.permute.xlu0 7
    %11056 = vperm.xlu0 %11055, %v9320
    %v11057 = vpop.permute.xlu0 %11056
    %11059 = vset.pattern.permute.xlu0 7
    %11060 = vperm.xlu0 %11059, %v9321
    %v11061 = vpop.permute.xlu0 %11060
    %11063 = vset.pattern.permute.xlu0 7
    %11064 = vperm.xlu0 %11063, %v9322
    %v11065 = vpop.permute.xlu0 %11064
    %11067 = vset.pattern.permute.xlu0 7
    %11068 = vperm.xlu0 %11067, %v9323
    %v11069 = vpop.permute.xlu0 %11068
    %11071 = vset.pattern.permute.xlu0 7
    %11072 = vperm.xlu0 %11071, %v9324
    %v11073 = vpop.permute.xlu0 %11072
    %11075 = vset.pattern.permute.xlu0 7
    %11076 = vperm.xlu0 %11075, %v9325
    %v11077 = vpop.permute.xlu0 %11076
    %11079 = vset.pattern.permute.xlu0 7
    %11080 = vperm.xlu0 %11079, %v9326
    %v11081 = vpop.permute.xlu0 %11080
    %11083 = vset.pattern.permute.xlu0 7
    %11084 = vperm.xlu0 %11083, %v9327
    %v11085 = vpop.permute.xlu0 %11084
    %11087 = vset.pattern.permute.xlu0 7
    %11088 = vperm.xlu0 %11087, %v9328
    %v11089 = vpop.permute.xlu0 %11088
    %11091 = vset.pattern.permute.xlu0 7
    %11092 = vperm.xlu0 %11091, %v9329
    %v11093 = vpop.permute.xlu0 %11092
    %11095 = vset.pattern.permute.xlu0 7
    %11096 = vperm.xlu0 %11095, %v9330
    %v11097 = vpop.permute.xlu0 %11096
    %11099 = vset.pattern.permute.xlu0 7
    %11100 = vperm.xlu0 %11099, %v9331
    %v11101 = vpop.permute.xlu0 %11100
    %11103 = vset.pattern.permute.xlu0 7
    %11104 = vperm.xlu0 %11103, %v9332
    %v11105 = vpop.permute.xlu0 %11104
    %11107 = vset.pattern.permute.xlu0 7
    %11108 = vperm.xlu0 %11107, %v9333
    %v11109 = vpop.permute.xlu0 %11108
    %11111 = vset.pattern.permute.xlu0 7
    %11112 = vperm.xlu0 %11111, %v9334
    %v11113 = vpop.permute.xlu0 %11112
    %v11115 = vmul.f32 %v9275, %v11053
    %v11116 = vmul.f32 %v9278, %v11057
    %v11117 = vmul.f32 %v9281, %v11061
    %v11118 = vmul.f32 %v9284, %v11065
    %v11119 = vmul.f32 %v9287, %v11069
    %v11120 = vmul.f32 %v9290, %v11073
    %v11121 = vmul.f32 %v9293, %v11077
    %v11122 = vmul.f32 %v9296, %v11081
    %v11123 = vmul.f32 %v9299, %v11085
    %v11124 = vmul.f32 %v9302, %v11089
    %v11125 = vmul.f32 %v9305, %v11093
    %v11126 = vmul.f32 %v9308, %v11097
    %v11127 = vmul.f32 %v9311, %v11101
    %v11128 = vmul.f32 %v9314, %v11105
    %v11129 = vmul.f32 %v9317, %v11109
    %v11130 = vmul.f32 %v11113, 0.0
    %s11131 = scalar_lea.vmem %s5, 56
    %v11132 = vld [vmem:[%s11131] sm:$0xff]
    %v11134 = vsel %vm9547, %v11115, 0
    %v11137 = vsel %vm9547, %v11116, 0
    %v11140 = vsel %vm9547, %v11117, 0
    %v11143 = vsel %vm9547, %v11118, 0
    %v11146 = vsel %vm9547, %v11119, 0
    %v11149 = vsel %vm9547, %v11120, 0
    %v11152 = vsel %vm9547, %v11121, 0
    %v11155 = vsel %vm9547, %v11122, 0
    %v11158 = vsel %vm9547, %v11123, 0
    %v11161 = vsel %vm9547, %v11124, 0
    %v11164 = vsel %vm9547, %v11125, 0
    %v11167 = vsel %vm9547, %v11126, 0
    %v11170 = vsel %vm9547, %v11127, 0
    %v11173 = vsel %vm9547, %v11128, 0
    %v11176 = vsel %vm9547, %v11129, 0
    %v11179 = vsel %vm9547, %v11130, 0
    %11181 = vmatpush.msra.mxu0 0.0
    %11182 = vmatpush.msra.mxu0 0.0
    %11183 = vmatpush.msra.mxu0 0.0
    %11184 = vmatpush.msra.mxu0 0.0
    %11185 = vmatpush.msra.mxu0 0.0
    %11186 = vmatpush.msra.mxu0 0.0
    %11187 = vmatpush.msra.mxu0 0.0
    %11188 = vmatpush.msra.mxu0 0.0
    %11189 = vmatpush.msra.mxu0 0.0
    %11190 = vmatpush.msra.mxu0 0.0
    %11191 = vmatpush.msra.mxu0 0.0
    %11192 = vmatpush.msra.mxu0 0.0
    %11193 = vmatpush.msra.mxu0 0.0
    %11194 = vmatpush.msra.mxu0 0.0
    %11195 = vmatpush.msra.mxu0 0.0
    %11196 = vmatpush.msra.mxu0 %v11132
    %11197 = vmatmul.f32.gmra.mxu0 %v11134
    %v11198 = vpop.f32.mrf.mxu0
    %v11199 = vadd.f32 0.0, %v11198
    %11200 = vmatmul.f32.gmra.mxu0 %v11137
    %v11201 = vpop.f32.mrf.mxu0
    %v11202 = vadd.f32 0.0, %v11201
    %11203 = vmatmul.f32.gmra.mxu0 %v11140
    %v11204 = vpop.f32.mrf.mxu0
    %v11205 = vadd.f32 0.0, %v11204
    %11206 = vmatmul.f32.gmra.mxu0 %v11143
    %v11207 = vpop.f32.mrf.mxu0
    %v11208 = vadd.f32 0.0, %v11207
    %11209 = vmatmul.f32.gmra.mxu0 %v11146
    %v11210 = vpop.f32.mrf.mxu0
    %v11211 = vadd.f32 0.0, %v11210
    %11212 = vmatmul.f32.gmra.mxu0 %v11149
    %v11213 = vpop.f32.mrf.mxu0
    %v11214 = vadd.f32 0.0, %v11213
    %11215 = vmatmul.f32.gmra.mxu0 %v11152
    %v11216 = vpop.f32.mrf.mxu0
    %v11217 = vadd.f32 0.0, %v11216
    %11218 = vmatmul.f32.gmra.mxu0 %v11155
    %v11219 = vpop.f32.mrf.mxu0
    %v11220 = vadd.f32 0.0, %v11219
    %11221 = vmatmul.f32.gmra.mxu0 %v11158
    %v11222 = vpop.f32.mrf.mxu0
    %v11223 = vadd.f32 0.0, %v11222
    %11224 = vmatmul.f32.gmra.mxu0 %v11161
    %v11225 = vpop.f32.mrf.mxu0
    %v11226 = vadd.f32 0.0, %v11225
    %11227 = vmatmul.f32.gmra.mxu0 %v11164
    %v11228 = vpop.f32.mrf.mxu0
    %v11229 = vadd.f32 0.0, %v11228
    %11230 = vmatmul.f32.gmra.mxu0 %v11167
    %v11231 = vpop.f32.mrf.mxu0
    %v11232 = vadd.f32 0.0, %v11231
    %11233 = vmatmul.f32.gmra.mxu0 %v11170
    %v11234 = vpop.f32.mrf.mxu0
    %v11235 = vadd.f32 0.0, %v11234
    %11236 = vmatmul.f32.gmra.mxu0 %v11173
    %v11237 = vpop.f32.mrf.mxu0
    %v11238 = vadd.f32 0.0, %v11237
    %11239 = vmatmul.f32.gmra.mxu0 %v11176
    %v11240 = vpop.f32.mrf.mxu0
    %v11241 = vadd.f32 0.0, %v11240
    %11242 = vmatmul.f32.gmra.mxu0 %v11179
    %v11243 = vpop.f32.mrf.mxu0
    %v11244 = vadd.f32 0.0, %v11243
    %11245 = vdwg.mxu0
    %v11246 = vadd.f32 %v11035, %v11199
    %v11247 = vadd.f32 %v11036, %v11202
    %v11248 = vadd.f32 %v11037, %v11205
    %v11249 = vadd.f32 %v11038, %v11208
    %v11250 = vadd.f32 %v11039, %v11211
    %v11251 = vadd.f32 %v11040, %v11214
    %v11252 = vadd.f32 %v11041, %v11217
    %v11253 = vadd.f32 %v11042, %v11220
    %v11254 = vadd.f32 %v11043, %v11223
    %v11255 = vadd.f32 %v11044, %v11226
    %v11256 = vadd.f32 %v11045, %v11229
    %v11257 = vadd.f32 %v11046, %v11232
    %v11258 = vadd.f32 %v11047, %v11235
    %v11259 = vadd.f32 %v11048, %v11238
    %v11260 = vadd.f32 %v11049, %v11241
    %v11261 = vadd.f32 %v11050, %v11244
    %11262 = vset.pattern.permute.xlu0 8
    %11263 = vperm.xlu0 %11262, %v9319
    %v11264 = vpop.permute.xlu0 %11263
    %11265 = vset.pattern.permute.xlu0 8
    %11266 = vperm.xlu0 %11265, %v9320
    %v11267 = vpop.permute.xlu0 %11266
    %11268 = vset.pattern.permute.xlu0 8
    %11269 = vperm.xlu0 %11268, %v9321
    %v11270 = vpop.permute.xlu0 %11269
    %11271 = vset.pattern.permute.xlu0 8
    %11272 = vperm.xlu0 %11271, %v9322
    %v11273 = vpop.permute.xlu0 %11272
    %11274 = vset.pattern.permute.xlu0 8
    %11275 = vperm.xlu0 %11274, %v9323
    %v11276 = vpop.permute.xlu0 %11275
    %11277 = vset.pattern.permute.xlu0 8
    %11278 = vperm.xlu0 %11277, %v9324
    %v11279 = vpop.permute.xlu0 %11278
    %11280 = vset.pattern.permute.xlu0 8
    %11281 = vperm.xlu0 %11280, %v9325
    %v11282 = vpop.permute.xlu0 %11281
    %11283 = vset.pattern.permute.xlu0 8
    %11284 = vperm.xlu0 %11283, %v9326
    %v11285 = vpop.permute.xlu0 %11284
    %11286 = vset.pattern.permute.xlu0 8
    %11287 = vperm.xlu0 %11286, %v9327
    %v11288 = vpop.permute.xlu0 %11287
    %11289 = vset.pattern.permute.xlu0 8
    %11290 = vperm.xlu0 %11289, %v9328
    %v11291 = vpop.permute.xlu0 %11290
    %11292 = vset.pattern.permute.xlu0 8
    %11293 = vperm.xlu0 %11292, %v9329
    %v11294 = vpop.permute.xlu0 %11293
    %11295 = vset.pattern.permute.xlu0 8
    %11296 = vperm.xlu0 %11295, %v9330
    %v11297 = vpop.permute.xlu0 %11296
    %11298 = vset.pattern.permute.xlu0 8
    %11299 = vperm.xlu0 %11298, %v9331
    %v11300 = vpop.permute.xlu0 %11299
    %11301 = vset.pattern.permute.xlu0 8
    %11302 = vperm.xlu0 %11301, %v9332
    %v11303 = vpop.permute.xlu0 %11302
    %11304 = vset.pattern.permute.xlu0 8
    %11305 = vperm.xlu0 %11304, %v9333
    %v11306 = vpop.permute.xlu0 %11305
    %11307 = vset.pattern.permute.xlu0 8
    %11308 = vperm.xlu0 %11307, %v9334
    %v11309 = vpop.permute.xlu0 %11308
    %v11310 = vrot.slane %v11264, 7
    %v11311 = vrot.slane %v11267, 7
    %v11312 = vsel %vm1502, %v11310, %v11311
    %v11313 = vrot.slane %v11270, 7
    %v11314 = vsel %vm1502, %v11311, %v11313
    %v11315 = vrot.slane %v11273, 7
    %v11316 = vsel %vm1502, %v11313, %v11315
    %v11317 = vrot.slane %v11276, 7
    %v11318 = vsel %vm1502, %v11315, %v11317
    %v11319 = vrot.slane %v11279, 7
    %v11320 = vsel %vm1502, %v11317, %v11319
    %v11321 = vrot.slane %v11282, 7
    %v11322 = vsel %vm1502, %v11319, %v11321
    %v11323 = vrot.slane %v11285, 7
    %v11324 = vsel %vm1502, %v11321, %v11323
    %v11325 = vrot.slane %v11288, 7
    %v11326 = vsel %vm1502, %v11323, %v11325
    %v11327 = vrot.slane %v11291, 7
    %v11328 = vsel %vm1502, %v11325, %v11327
    %v11329 = vrot.slane %v11294, 7
    %v11330 = vsel %vm1502, %v11327, %v11329
    %v11331 = vrot.slane %v11297, 7
    %v11332 = vsel %vm1502, %v11329, %v11331
    %v11333 = vrot.slane %v11300, 7
    %v11334 = vsel %vm1502, %v11331, %v11333
    %v11335 = vrot.slane %v11303, 7
    %v11336 = vsel %vm1502, %v11333, %v11335
    %v11337 = vrot.slane %v11306, 7
    %v11338 = vsel %vm1502, %v11335, %v11337
    %v11339 = vrot.slane %v11309, 7
    %v11340 = vsel %vm1502, %v11337, %v11339
    %v11358 = vmul.f32 %v9275, %v11310
    %v11359 = vmul.f32 %v9278, %v11312
    %v11360 = vmul.f32 %v9281, %v11314
    %v11361 = vmul.f32 %v9284, %v11316
    %v11362 = vmul.f32 %v9287, %v11318
    %v11363 = vmul.f32 %v9290, %v11320
    %v11364 = vmul.f32 %v9293, %v11322
    %v11365 = vmul.f32 %v9296, %v11324
    %v11366 = vmul.f32 %v9299, %v11326
    %v11367 = vmul.f32 %v9302, %v11328
    %v11368 = vmul.f32 %v9305, %v11330
    %v11369 = vmul.f32 %v9308, %v11332
    %v11370 = vmul.f32 %v9311, %v11334
    %v11371 = vmul.f32 %v9314, %v11336
    %v11372 = vmul.f32 %v9317, %v11338
    %v11373 = vmul.f32 %v11340, 0.0
    %v11374 = vmul.f32 %v11339, 0.0
    %s11375 = scalar_lea.vmem %s5, 64
    %v11376 = vld [vmem:[%s11375] sm:$0xff]
    %v11394 = vrot.slane %v11358, 1
    %v11395 = vrot.slane %v11359, 1
    %v11396 = vsel %vm450, %v11394, %v11395
    %v11397 = vrot.slane %v11360, 1
    %v11398 = vsel %vm450, %v11395, %v11397
    %v11399 = vrot.slane %v11361, 1
    %v11400 = vsel %vm450, %v11397, %v11399
    %v11401 = vrot.slane %v11362, 1
    %v11402 = vsel %vm450, %v11399, %v11401
    %v11403 = vrot.slane %v11363, 1
    %v11404 = vsel %vm450, %v11401, %v11403
    %v11405 = vrot.slane %v11364, 1
    %v11406 = vsel %vm450, %v11403, %v11405
    %v11407 = vrot.slane %v11365, 1
    %v11408 = vsel %vm450, %v11405, %v11407
    %v11409 = vrot.slane %v11366, 1
    %v11410 = vsel %vm450, %v11407, %v11409
    %v11411 = vrot.slane %v11367, 1
    %v11412 = vsel %vm450, %v11409, %v11411
    %v11413 = vrot.slane %v11368, 1
    %v11414 = vsel %vm450, %v11411, %v11413
    %v11415 = vrot.slane %v11369, 1
    %v11416 = vsel %vm450, %v11413, %v11415
    %v11417 = vrot.slane %v11370, 1
    %v11418 = vsel %vm450, %v11415, %v11417
    %v11419 = vrot.slane %v11371, 1
    %v11420 = vsel %vm450, %v11417, %v11419
    %v11421 = vrot.slane %v11372, 1
    %v11422 = vsel %vm450, %v11419, %v11421
    %v11423 = vrot.slane %v11373, 1
    %v11424 = vsel %vm450, %v11421, %v11423
    %v11425 = vrot.slane %v11374, 1
    %v11426 = vsel %vm450, %v11423, %v11425
    %v11427 = vsel %vm9547, %v11396, 0
    %v11429 = vsel %vm9547, %v11398, 0
    %v11431 = vsel %vm9547, %v11400, 0
    %v11433 = vsel %vm9547, %v11402, 0
    %v11435 = vsel %vm9547, %v11404, 0
    %v11437 = vsel %vm9547, %v11406, 0
    %v11439 = vsel %vm9547, %v11408, 0
    %v11441 = vsel %vm9547, %v11410, 0
    %v11443 = vsel %vm9547, %v11412, 0
    %v11445 = vsel %vm9547, %v11414, 0
    %v11447 = vsel %vm9547, %v11416, 0
    %v11449 = vsel %vm9547, %v11418, 0
    %v11451 = vsel %vm9547, %v11420, 0
    %v11453 = vsel %vm9547, %v11422, 0
    %v11455 = vsel %vm9547, %v11424, 0
    %v11457 = vsel %vm9547, %v11426, 0
    %11459 = vmatpush.msra.mxu0 0.0
    %11460 = vmatpush.msra.mxu0 0.0
    %11461 = vmatpush.msra.mxu0 0.0
    %11462 = vmatpush.msra.mxu0 0.0
    %11463 = vmatpush.msra.mxu0 0.0
    %11464 = vmatpush.msra.mxu0 0.0
    %11465 = vmatpush.msra.mxu0 0.0
    %11466 = vmatpush.msra.mxu0 0.0
    %11467 = vmatpush.msra.mxu0 0.0
    %11468 = vmatpush.msra.mxu0 0.0
    %11469 = vmatpush.msra.mxu0 0.0
    %11470 = vmatpush.msra.mxu0 0.0
    %11471 = vmatpush.msra.mxu0 0.0
    %11472 = vmatpush.msra.mxu0 0.0
    %11473 = vmatpush.msra.mxu0 0.0
    %11474 = vmatpush.msra.mxu0 %v11376
    %11475 = vmatmul.f32.gmra.mxu0 %v11427
    %v11476 = vpop.f32.mrf.mxu0
    %v11477 = vadd.f32 0.0, %v11476
    %11478 = vmatmul.f32.gmra.mxu0 %v11429
    %v11479 = vpop.f32.mrf.mxu0
    %v11480 = vadd.f32 0.0, %v11479
    %11481 = vmatmul.f32.gmra.mxu0 %v11431
    %v11482 = vpop.f32.mrf.mxu0
    %v11483 = vadd.f32 0.0, %v11482
    %11484 = vmatmul.f32.gmra.mxu0 %v11433
    %v11485 = vpop.f32.mrf.mxu0
    %v11486 = vadd.f32 0.0, %v11485
    %11487 = vmatmul.f32.gmra.mxu0 %v11435
    %v11488 = vpop.f32.mrf.mxu0
    %v11489 = vadd.f32 0.0, %v11488
    %11490 = vmatmul.f32.gmra.mxu0 %v11437
    %v11491 = vpop.f32.mrf.mxu0
    %v11492 = vadd.f32 0.0, %v11491
    %11493 = vmatmul.f32.gmra.mxu0 %v11439
    %v11494 = vpop.f32.mrf.mxu0
    %v11495 = vadd.f32 0.0, %v11494
    %11496 = vmatmul.f32.gmra.mxu0 %v11441
    %v11497 = vpop.f32.mrf.mxu0
    %v11498 = vadd.f32 0.0, %v11497
    %11499 = vmatmul.f32.gmra.mxu0 %v11443
    %v11500 = vpop.f32.mrf.mxu0
    %v11501 = vadd.f32 0.0, %v11500
    %11502 = vmatmul.f32.gmra.mxu0 %v11445
    %v11503 = vpop.f32.mrf.mxu0
    %v11504 = vadd.f32 0.0, %v11503
    %11505 = vmatmul.f32.gmra.mxu0 %v11447
    %v11506 = vpop.f32.mrf.mxu0
    %v11507 = vadd.f32 0.0, %v11506
    %11508 = vmatmul.f32.gmra.mxu0 %v11449
    %v11509 = vpop.f32.mrf.mxu0
    %v11510 = vadd.f32 0.0, %v11509
    %11511 = vmatmul.f32.gmra.mxu0 %v11451
    %v11512 = vpop.f32.mrf.mxu0
    %v11513 = vadd.f32 0.0, %v11512
    %11514 = vmatmul.f32.gmra.mxu0 %v11453
    %v11515 = vpop.f32.mrf.mxu0
    %v11516 = vadd.f32 0.0, %v11515
    %11517 = vmatmul.f32.gmra.mxu0 %v11455
    %v11518 = vpop.f32.mrf.mxu0
    %v11519 = vadd.f32 0.0, %v11518
    %11520 = vmatmul.f32.gmra.mxu0 %v11457
    %v11521 = vpop.f32.mrf.mxu0
    %v11522 = vadd.f32 0.0, %v11521
    %11523 = vdwg.mxu0
    %v11524 = vadd.f32 %v11246, %v11477
    %v11525 = vadd.f32 %v11247, %v11480
    %v11526 = vadd.f32 %v11248, %v11483
    %v11527 = vadd.f32 %v11249, %v11486
    %v11528 = vadd.f32 %v11250, %v11489
    %v11529 = vadd.f32 %v11251, %v11492
    %v11530 = vadd.f32 %v11252, %v11495
    %v11531 = vadd.f32 %v11253, %v11498
    %v11532 = vadd.f32 %v11254, %v11501
    %v11533 = vadd.f32 %v11255, %v11504
    %v11534 = vadd.f32 %v11256, %v11507
    %v11535 = vadd.f32 %v11257, %v11510
    %v11536 = vadd.f32 %v11258, %v11513
    %v11537 = vadd.f32 %v11259, %v11516
    %v11538 = vadd.f32 %v11260, %v11519
    %v11539 = vadd.f32 %v11261, %v11522
    %v11540 = vld [vmem:[%s6] sm:$0x1]
    %v11542 = vperm.slane %v11540, 0
    %v11544 = vadd.f32 %v11524, %v11542
    %v11545 = vadd.f32 %v11525, %v11542
    %v11546 = vadd.f32 %v11526, %v11542
    %v11547 = vadd.f32 %v11527, %v11542
    %v11548 = vadd.f32 %v11528, %v11542
    %v11549 = vadd.f32 %v11529, %v11542
    %v11550 = vadd.f32 %v11530, %v11542
    %v11551 = vadd.f32 %v11531, %v11542
    %v11552 = vadd.f32 %v11532, %v11542
    %v11553 = vadd.f32 %v11533, %v11542
    %v11554 = vadd.f32 %v11534, %v11542
    %v11555 = vadd.f32 %v11535, %v11542
    %v11556 = vadd.f32 %v11536, %v11542
    %v11557 = vadd.f32 %v11537, %v11542
    %v11558 = vadd.f32 %v11538, %v11542
    %v11559 = vadd.f32 %v11539, %v11542
    %v11560 = vmax.f32 %v11544, 0.0
    %v11561 = vmax.f32 %v11545, 0.0
    %v11562 = vmax.f32 %v11546, 0.0
    %v11563 = vmax.f32 %v11547, 0.0
    %v11564 = vmax.f32 %v11548, 0.0
    %v11565 = vmax.f32 %v11549, 0.0
    %v11566 = vmax.f32 %v11550, 0.0
    %v11567 = vmax.f32 %v11551, 0.0
    %v11568 = vmax.f32 %v11552, 0.0
    %v11569 = vmax.f32 %v11553, 0.0
    %v11570 = vmax.f32 %v11554, 0.0
    %v11571 = vmax.f32 %v11555, 0.0
    %v11572 = vmax.f32 %v11556, 0.0
    %v11573 = vmax.f32 %v11557, 0.0
    %v11574 = vmax.f32 %v11558, 0.0
    %v11575 = vmax.f32 %v11559, 0.0
    %v11592 = vrot.slane %v11560, 1
    %v11593 = vrot.slane %v11561, 1
    %v11594 = vsel %vm450, %v11592, %v11593
    %v11595 = vrot.slane %v11562, 1
    %v11596 = vsel %vm450, %v11593, %v11595
    %v11597 = vrot.slane %v11563, 1
    %v11598 = vsel %vm450, %v11595, %v11597
    %v11599 = vrot.slane %v11564, 1
    %v11600 = vsel %vm450, %v11597, %v11599
    %v11601 = vrot.slane %v11565, 1
    %v11602 = vsel %vm450, %v11599, %v11601
    %v11603 = vrot.slane %v11566, 1
    %v11604 = vsel %vm450, %v11601, %v11603
    %v11605 = vrot.slane %v11567, 1
    %v11606 = vsel %vm450, %v11603, %v11605
    %v11607 = vrot.slane %v11568, 1
    %v11608 = vsel %vm450, %v11605, %v11607
    %v11609 = vrot.slane %v11569, 1
    %v11610 = vsel %vm450, %v11607, %v11609
    %v11611 = vrot.slane %v11570, 1
    %v11612 = vsel %vm450, %v11609, %v11611
    %v11613 = vrot.slane %v11571, 1
    %v11614 = vsel %vm450, %v11611, %v11613
    %v11615 = vrot.slane %v11572, 1
    %v11616 = vsel %vm450, %v11613, %v11615
    %v11617 = vrot.slane %v11573, 1
    %v11618 = vsel %vm450, %v11615, %v11617
    %v11619 = vrot.slane %v11574, 1
    %v11620 = vsel %vm450, %v11617, %v11619
    %v11621 = vrot.slane %v11575, 1
    %v11622 = vsel %vm450, %v11619, %v11621
    %v11623 = vsel %vm450, %v11621, %v8801
    %v11640 = vmax.f32 %v11560, %v11594
    %v11641 = vmax.f32 %v11561, %v11596
    %v11642 = vmax.f32 %v11562, %v11598
    %v11643 = vmax.f32 %v11563, %v11600
    %v11644 = vmax.f32 %v11564, %v11602
    %v11645 = vmax.f32 %v11565, %v11604
    %v11646 = vmax.f32 %v11566, %v11606
    %v11647 = vmax.f32 %v11567, %v11608
    %v11648 = vmax.f32 %v11568, %v11610
    %v11649 = vmax.f32 %v11569, %v11612
    %v11650 = vmax.f32 %v11570, %v11614
    %v11651 = vmax.f32 %v11571, %v11616
    %v11652 = vmax.f32 %v11572, %v11618
    %v11653 = vmax.f32 %v11573, %v11620
    %v11654 = vmax.f32 %v11574, %v11622
    %v11655 = vmax.f32 %v11575, %v11623
    %v11656 = vmax.f32 %v11640, %v11641
    %v11657 = vmax.f32 %v11641, %v11642
    %v11658 = vmax.f32 %v11642, %v11643
    %v11659 = vmax.f32 %v11643, %v11644
    %v11660 = vmax.f32 %v11644, %v11645
    %v11661 = vmax.f32 %v11645, %v11646
    %v11662 = vmax.f32 %v11646, %v11647
    %v11663 = vmax.f32 %v11647, %v11648
    %v11664 = vmax.f32 %v11648, %v11649
    %v11665 = vmax.f32 %v11649, %v11650
    %v11666 = vmax.f32 %v11650, %v11651
    %v11667 = vmax.f32 %v11651, %v11652
    %v11668 = vmax.f32 %v11652, %v11653
    %v11669 = vmax.f32 %v11653, %v11654
    %v11670 = vmax.f32 %v11654, %v11655
    %v11671 = vmax.f32 %v11655, 0.0
    %v11672 = vld [vmem:[%s8] sm:$0xff]
    %v11673 = vld [vmem:[%s8 + $0x8] sm:$0xff]
    %v11674 = vld [vmem:[%s8 + $0x10] sm:$0xff]
    %v11675 = vld [vmem:[%s8 + $0x18] sm:$0xff]
    %11676 = vmatpush.msra.mxu0 %v11671
    %11677 = vmatpush.msra.mxu0 %v11670
    %11678 = vmatpush.msra.mxu0 %v11669
    %11679 = vmatpush.msra.mxu0 %v11668
    %11680 = vmatpush.msra.mxu0 %v11667
    %11681 = vmatpush.msra.mxu0 %v11666
    %11682 = vmatpush.msra.mxu0 %v11665
    %11683 = vmatpush.msra.mxu0 %v11664
    %11684 = vmatpush.msra.mxu0 %v11663
    %11685 = vmatpush.msra.mxu0 %v11662
    %11686 = vmatpush.msra.mxu0 %v11661
    %11687 = vmatpush.msra.mxu0 %v11660
    %11688 = vmatpush.msra.mxu0 %v11659
    %11689 = vmatpush.msra.mxu0 %v11658
    %11690 = vmatpush.msra.mxu0 %v11657
    %11691 = vmatpush.msra.mxu0 %v11656
    %11692 = vmatmul.f32.gmra.mxu0 %v11672
    %v11693 = vpop.f32.mrf.mxu0
    %v11694 = vadd.f32 0.0, %v11693
    %11695 = vmatmul.f32.gmra.mxu0 %v11673
    %v11696 = vpop.f32.mrf.mxu0
    %v11697 = vadd.f32 0.0, %v11696
    %11698 = vmatmul.f32.gmra.mxu0 %v11674
    %v11699 = vpop.f32.mrf.mxu0
    %v11700 = vadd.f32 0.0, %v11699
    %11701 = vmatmul.f32.gmra.mxu0 %v11675
    %v11702 = vpop.f32.mrf.mxu0
    %v11703 = vadd.f32 0.0, %v11702
    %11704 = vdwg.mxu0
    %v11705 = vld [vmem:[%s11] sm:$0xff]
    %v11706 = vld [vmem:[%s11 + $0x8] sm:$0xff]
    %v11707 = vld [vmem:[%s11 + $0x10] sm:$0xff]
    %v11708 = vld [vmem:[%s11 + $0x18] sm:$0xff]
    %11710 = vset.pattern.permute.xlu0 0
    %11711 = vperm.xlu0 %11710, %v11705
    %v11712 = vpop.permute.xlu0 %11711
    %11714 = vset.pattern.permute.xlu0 0
    %11715 = vperm.xlu0 %11714, %v11706
    %v11716 = vpop.permute.xlu0 %11715
    %11718 = vset.pattern.permute.xlu0 0
    %11719 = vperm.xlu0 %11718, %v11707
    %v11720 = vpop.permute.xlu0 %11719
    %11722 = vset.pattern.permute.xlu0 0
    %11723 = vperm.xlu0 %11722, %v11708
    %v11724 = vpop.permute.xlu0 %11723
    %v11725 = vrot.slane %v11712, 5
    %v11726 = vrot.slane %v11716, 5
    %v11727 = vsel %vm1224, %v11725, %v11726
    %v11728 = vrot.slane %v11720, 5
    %v11729 = vsel %vm1224, %v11726, %v11728
    %v11730 = vrot.slane %v11724, 5
    %v11731 = vsel %vm1224, %v11728, %v11730
    %v11737 = vmul.f32 %v11725, 0.0
    %v11738 = vmul.f32 %v11694, %v11727
    %v11739 = vmul.f32 %v11697, %v11729
    %v11740 = vmul.f32 %v11700, %v11731
    %v11741 = vmul.f32 %v11703, %v11730
    %v11742 = vld [vmem:[%s9] sm:$0xff]
    %v11743 = vld [vmem:[%s9 + $0x8] sm:$0xff]
    %11744 = vset.pattern.permute.xlu0 1
    %11745 = vperm.xlu0 %11744, %v11705
    %v11746 = vpop.permute.xlu0 %11745
    %11747 = vset.pattern.permute.xlu0 1
    %11748 = vperm.xlu0 %11747, %v11706
    %v11749 = vpop.permute.xlu0 %11748
    %11750 = vset.pattern.permute.xlu0 1
    %11751 = vperm.xlu0 %11750, %v11707
    %v11752 = vpop.permute.xlu0 %11751
    %11753 = vset.pattern.permute.xlu0 1
    %11754 = vperm.xlu0 %11753, %v11708
    %v11755 = vpop.permute.xlu0 %11754
    %vm11756 = vcmask 1043456
    %v11757 = vrot.slane %v11746, 4
    %v11758 = vrot.slane %v11749, 4
    %v11759 = vsel %vm11756, %v11757, %v11758
    %v11760 = vrot.slane %v11752, 4
    %v11761 = vsel %vm11756, %v11758, %v11760
    %v11762 = vrot.slane %v11755, 4
    %v11763 = vsel %vm11756, %v11760, %v11762
    %v11769 = vmul.f32 %v11757, 0.0
    %v11770 = vmul.f32 %v11694, %v11759
    %v11771 = vmul.f32 %v11697, %v11761
    %v11772 = vmul.f32 %v11700, %v11763
    %v11773 = vmul.f32 %v11703, %v11762
    %s11774 = scalar_lea.vmem %s9, 16
    %v11775 = vld [vmem:[%s11774] sm:$0xff]
    %v11776 = vld [vmem:[%s11774 + $0x8] sm:$0xff]
    %v11782 = vrot.slane %v11769, 4
    %v11783 = vrot.slane %v11770, 4
    %v11784 = vsel %vm11756, %v11782, %v11783
    %v11785 = vrot.slane %v11771, 4
    %v11786 = vsel %vm11756, %v11783, %v11785
    %v11787 = vrot.slane %v11772, 4
    %v11788 = vsel %vm11756, %v11785, %v11787
    %v11789 = vrot.slane %v11773, 4
    %v11790 = vsel %vm11756, %v11787, %v11789
    %vm11791 = vcmask 130048
    %v11792 = vsel %vm11791, %v11784, 0
    %v11794 = vsel %vm11791, %v11786, 0
    %v11796 = vsel %vm11791, %v11788, 0
    %v11798 = vsel %vm11791, %v11790, 0
    %11800 = vmatpush.msra.mxu0 0.0
    %11801 = vmatpush.msra.mxu0 0.0
    %11802 = vmatpush.msra.mxu0 0.0
    %11803 = vmatpush.msra.mxu0 0.0
    %11804 = vmatpush.msra.mxu0 0.0
    %11805 = vmatpush.msra.mxu0 0.0
    %11806 = vmatpush.msra.mxu0 0.0
    %11807 = vmatpush.msra.mxu0 0.0
    %11808 = vmatpush.msra.mxu0 0.0
    %11809 = vmatpush.msra.mxu0 0.0
    %11810 = vmatpush.msra.mxu0 0.0
    %11811 = vmatpush.msra.mxu0 0.0
    %11812 = vmatpush.msra.mxu0 0.0
    %11813 = vmatpush.msra.mxu0 0.0
    %11814 = vmatpush.msra.mxu0 %v11776
    %11815 = vmatpush.msra.mxu0 %v11775
    %11816 = vmatmul.f32.gmra.mxu0 %v11792
    %v11817 = vpop.f32.mrf.mxu0
    %v11818 = vadd.f32 0.0, %v11817
    %11819 = vmatmul.f32.gmra.mxu0 %v11794
    %v11820 = vpop.f32.mrf.mxu0
    %v11821 = vadd.f32 0.0, %v11820
    %11822 = vmatmul.f32.gmra.mxu0 %v11796
    %v11823 = vpop.f32.mrf.mxu0
    %v11824 = vadd.f32 0.0, %v11823
    %11825 = vmatmul.f32.gmra.mxu0 %v11798
    %v11826 = vpop.f32.mrf.mxu0
    %v11827 = vadd.f32 0.0, %v11826
    %11828 = vdwg.mxu0
    %vm11834 = vcmask 1044480
    %v11835 = vrot.slane %v11737, 3
    %v11836 = vrot.slane %v11738, 3
    %v11837 = vsel %vm11834, %v11835, %v11836
    %v11838 = vrot.slane %v11739, 3
    %v11839 = vsel %vm11834, %v11836, %v11838
    %v11840 = vrot.slane %v11740, 3
    %v11841 = vsel %vm11834, %v11838, %v11840
    %v11842 = vrot.slane %v11741, 3
    %v11843 = vsel %vm11834, %v11840, %v11842
    %v11844 = vsel %vm11791, %v11837, 0
    %v11846 = vsel %vm11791, %v11839, 0
    %v11848 = vsel %vm11791, %v11841, 0
    %v11850 = vsel %vm11791, %v11843, 0
    %11852 = vmatpush.msra.mxu0 0.0
    %11853 = vmatpush.msra.mxu0 0.0
    %11854 = vmatpush.msra.mxu0 0.0
    %11855 = vmatpush.msra.mxu0 0.0
    %11856 = vmatpush.msra.mxu0 0.0
    %11857 = vmatpush.msra.mxu0 0.0
    %11858 = vmatpush.msra.mxu0 0.0
    %11859 = vmatpush.msra.mxu0 0.0
    %11860 = vmatpush.msra.mxu0 0.0
    %11861 = vmatpush.msra.mxu0 0.0
    %11862 = vmatpush.msra.mxu0 0.0
    %11863 = vmatpush.msra.mxu0 0.0
    %11864 = vmatpush.msra.mxu0 0.0
    %11865 = vmatpush.msra.mxu0 0.0
    %11866 = vmatpush.msra.mxu0 %v11743
    %11867 = vmatpush.msra.mxu0 %v11742
    %11868 = vmatmul.f32.gmra.mxu0 %v11844
    %v11869 = vpop.f32.mrf.mxu0
    %v11870 = vadd.f32 %v11818, %v11869
    %11871 = vmatmul.f32.gmra.mxu0 %v11846
    %v11872 = vpop.f32.mrf.mxu0
    %v11873 = vadd.f32 %v11821, %v11872
    %11874 = vmatmul.f32.gmra.mxu0 %v11848
    %v11875 = vpop.f32.mrf.mxu0
    %v11876 = vadd.f32 %v11824, %v11875
    %11877 = vmatmul.f32.gmra.mxu0 %v11850
    %v11878 = vpop.f32.mrf.mxu0
    %v11879 = vadd.f32 %v11827, %v11878
    %11880 = vdwg.mxu0
    %11881 = vset.pattern.permute.xlu0 2
    %11882 = vperm.xlu0 %11881, %v11705
    %v11883 = vpop.permute.xlu0 %11882
    %11884 = vset.pattern.permute.xlu0 2
    %11885 = vperm.xlu0 %11884, %v11706
    %v11886 = vpop.permute.xlu0 %11885
    %11887 = vset.pattern.permute.xlu0 2
    %11888 = vperm.xlu0 %11887, %v11707
    %v11889 = vpop.permute.xlu0 %11888
    %11890 = vset.pattern.permute.xlu0 2
    %11891 = vperm.xlu0 %11890, %v11708
    %v11892 = vpop.permute.xlu0 %11891
    %v11893 = vrot.slane %v11883, 3
    %v11894 = vrot.slane %v11886, 3
    %v11895 = vsel %vm11834, %v11893, %v11894
    %v11896 = vrot.slane %v11889, 3
    %v11897 = vsel %vm11834, %v11894, %v11896
    %v11898 = vrot.slane %v11892, 3
    %v11899 = vsel %vm11834, %v11896, %v11898
    %v11905 = vmul.f32 %v11893, 0.0
    %v11906 = vmul.f32 %v11694, %v11895
    %v11907 = vmul.f32 %v11697, %v11897
    %v11908 = vmul.f32 %v11700, %v11899
    %v11909 = vmul.f32 %v11703, %v11898
    %s11910 = scalar_lea.vmem %s9, 32
    %v11911 = vld [vmem:[%s11910] sm:$0xff]
    %v11912 = vld [vmem:[%s11910 + $0x8] sm:$0xff]
    %v11918 = vrot.slane %v11905, 5
    %v11919 = vrot.slane %v11906, 5
    %v11920 = vsel %vm1224, %v11918, %v11919
    %v11921 = vrot.slane %v11907, 5
    %v11922 = vsel %vm1224, %v11919, %v11921
    %v11923 = vrot.slane %v11908, 5
    %v11924 = vsel %vm1224, %v11921, %v11923
    %v11925 = vrot.slane %v11909, 5
    %v11926 = vsel %vm1224, %v11923, %v11925
    %v11927 = vsel %vm11791, %v11920, 0
    %v11929 = vsel %vm11791, %v11922, 0
    %v11931 = vsel %vm11791, %v11924, 0
    %v11933 = vsel %vm11791, %v11926, 0
    %11935 = vmatpush.msra.mxu0 0.0
    %11936 = vmatpush.msra.mxu0 0.0
    %11937 = vmatpush.msra.mxu0 0.0
    %11938 = vmatpush.msra.mxu0 0.0
    %11939 = vmatpush.msra.mxu0 0.0
    %11940 = vmatpush.msra.mxu0 0.0
    %11941 = vmatpush.msra.mxu0 0.0
    %11942 = vmatpush.msra.mxu0 0.0
    %11943 = vmatpush.msra.mxu0 0.0
    %11944 = vmatpush.msra.mxu0 0.0
    %11945 = vmatpush.msra.mxu0 0.0
    %11946 = vmatpush.msra.mxu0 0.0
    %11947 = vmatpush.msra.mxu0 0.0
    %11948 = vmatpush.msra.mxu0 0.0
    %11949 = vmatpush.msra.mxu0 %v11912
    %11950 = vmatpush.msra.mxu0 %v11911
    %11951 = vmatmul.f32.gmra.mxu0 %v11927
    %v11952 = vpop.f32.mrf.mxu0
    %v11953 = vadd.f32 0.0, %v11952
    %11954 = vmatmul.f32.gmra.mxu0 %v11929
    %v11955 = vpop.f32.mrf.mxu0
    %v11956 = vadd.f32 0.0, %v11955
    %11957 = vmatmul.f32.gmra.mxu0 %v11931
    %v11958 = vpop.f32.mrf.mxu0
    %v11959 = vadd.f32 0.0, %v11958
    %11960 = vmatmul.f32.gmra.mxu0 %v11933
    %v11961 = vpop.f32.mrf.mxu0
    %v11962 = vadd.f32 0.0, %v11961
    %11963 = vdwg.mxu0
    %v11964 = vadd.f32 %v11870, %v11953
    %v11965 = vadd.f32 %v11873, %v11956
    %v11966 = vadd.f32 %v11876, %v11959
    %v11967 = vadd.f32 %v11879, %v11962
    %11968 = vset.pattern.permute.xlu0 3
    %11969 = vperm.xlu0 %11968, %v11705
    %v11970 = vpop.permute.xlu0 %11969
    %11971 = vset.pattern.permute.xlu0 3
    %11972 = vperm.xlu0 %11971, %v11706
    %v11973 = vpop.permute.xlu0 %11972
    %11974 = vset.pattern.permute.xlu0 3
    %11975 = vperm.xlu0 %11974, %v11707
    %v11976 = vpop.permute.xlu0 %11975
    %11977 = vset.pattern.permute.xlu0 3
    %11978 = vperm.xlu0 %11977, %v11708
    %v11979 = vpop.permute.xlu0 %11978
    %v11980 = vrot.slane %v11970, 1
    %v11981 = vrot.slane %v11973, 1
    %v11982 = vsel %vm450, %v11980, %v11981
    %v11983 = vrot.slane %v11976, 1
    %v11984 = vsel %vm450, %v11981, %v11983
    %v11985 = vrot.slane %v11979, 1
    %v11986 = vsel %vm450, %v11983, %v11985
    %v11992 = vmul.f32 %v11980, 0.0
    %v11993 = vmul.f32 %v11694, %v11982
    %v11994 = vmul.f32 %v11697, %v11984
    %v11995 = vmul.f32 %v11700, %v11986
    %v11996 = vmul.f32 %v11703, %v11985
    %s11997 = scalar_lea.vmem %s9, 48
    %v11998 = vld [vmem:[%s11997] sm:$0xff]
    %v11999 = vld [vmem:[%s11997 + $0x8] sm:$0xff]
    %v12005 = vrot.slane %v11992, 7
    %v12006 = vrot.slane %v11993, 7
    %v12007 = vsel %vm1502, %v12005, %v12006
    %v12008 = vrot.slane %v11994, 7
    %v12009 = vsel %vm1502, %v12006, %v12008
    %v12010 = vrot.slane %v11995, 7
    %v12011 = vsel %vm1502, %v12008, %v12010
    %v12012 = vrot.slane %v11996, 7
    %v12013 = vsel %vm1502, %v12010, %v12012
    %v12014 = vsel %vm11791, %v12007, 0
    %v12016 = vsel %vm11791, %v12009, 0
    %v12018 = vsel %vm11791, %v12011, 0
    %v12020 = vsel %vm11791, %v12013, 0
    %12022 = vmatpush.msra.mxu0 0.0
    %12023 = vmatpush.msra.mxu0 0.0
    %12024 = vmatpush.msra.mxu0 0.0
    %12025 = vmatpush.msra.mxu0 0.0
    %12026 = vmatpush.msra.mxu0 0.0
    %12027 = vmatpush.msra.mxu0 0.0
    %12028 = vmatpush.msra.mxu0 0.0
    %12029 = vmatpush.msra.mxu0 0.0
    %12030 = vmatpush.msra.mxu0 0.0
    %12031 = vmatpush.msra.mxu0 0.0
    %12032 = vmatpush.msra.mxu0 0.0
    %12033 = vmatpush.msra.mxu0 0.0
    %12034 = vmatpush.msra.mxu0 0.0
    %12035 = vmatpush.msra.mxu0 0.0
    %12036 = vmatpush.msra.mxu0 %v11999
    %12037 = vmatpush.msra.mxu0 %v11998
    %12038 = vmatmul.f32.gmra.mxu0 %v12014
    %v12039 = vpop.f32.mrf.mxu0
    %v12040 = vadd.f32 0.0, %v12039
    %12041 = vmatmul.f32.gmra.mxu0 %v12016
    %v12042 = vpop.f32.mrf.mxu0
    %v12043 = vadd.f32 0.0, %v12042
    %12044 = vmatmul.f32.gmra.mxu0 %v12018
    %v12045 = vpop.f32.mrf.mxu0
    %v12046 = vadd.f32 0.0, %v12045
    %12047 = vmatmul.f32.gmra.mxu0 %v12020
    %v12048 = vpop.f32.mrf.mxu0
    %v12049 = vadd.f32 0.0, %v12048
    %12050 = vdwg.mxu0
    %v12051 = vadd.f32 %v11964, %v12040
    %v12052 = vadd.f32 %v11965, %v12043
    %v12053 = vadd.f32 %v11966, %v12046
    %v12054 = vadd.f32 %v11967, %v12049
    %s12055 = scalar_lea.vmem %s9, 64
    %v12056 = vld [vmem:[%s12055] sm:$0xff]
    %v12057 = vld [vmem:[%s12055 + $0x8] sm:$0xff]
    %v12059 = vsel %vm11791, %v11694, 0
    %v12062 = vsel %vm11791, %v11697, 0
    %v12065 = vsel %vm11791, %v11700, 0
    %v12068 = vsel %vm11791, %v11703, 0
    %12070 = vmatpush.msra.mxu0 0.0
    %12071 = vmatpush.msra.mxu0 0.0
    %12072 = vmatpush.msra.mxu0 0.0
    %12073 = vmatpush.msra.mxu0 0.0
    %12074 = vmatpush.msra.mxu0 0.0
    %12075 = vmatpush.msra.mxu0 0.0
    %12076 = vmatpush.msra.mxu0 0.0
    %12077 = vmatpush.msra.mxu0 0.0
    %12078 = vmatpush.msra.mxu0 0.0
    %12079 = vmatpush.msra.mxu0 0.0
    %12080 = vmatpush.msra.mxu0 0.0
    %12081 = vmatpush.msra.mxu0 0.0
    %12082 = vmatpush.msra.mxu0 0.0
    %12083 = vmatpush.msra.mxu0 0.0
    %12084 = vmatpush.msra.mxu0 %v12057
    %12085 = vmatpush.msra.mxu0 %v12056
    %12086 = vmatmul.f32.gmra.mxu0 %v12059
    %v12087 = vpop.f32.mrf.mxu0
    %v12088 = vadd.f32 0.0, %v12087
    %12089 = vmatmul.f32.gmra.mxu0 %v12062
    %v12090 = vpop.f32.mrf.mxu0
    %v12091 = vadd.f32 0.0, %v12090
    %12092 = vmatmul.f32.gmra.mxu0 %v12065
    %v12093 = vpop.f32.mrf.mxu0
    %v12094 = vadd.f32 0.0, %v12093
    %12095 = vmatmul.f32.gmra.mxu0 %v12068
    %v12096 = vpop.f32.mrf.mxu0
    %v12097 = vadd.f32 0.0, %v12096
    %12098 = vdwg.mxu0
    %v12099 = vadd.f32 %v12051, %v12088
    %v12100 = vadd.f32 %v12052, %v12091
    %v12101 = vadd.f32 %v12053, %v12094
    %v12102 = vadd.f32 %v12054, %v12097
    %12103 = vset.pattern.permute.xlu0 5
    %12104 = vperm.xlu0 %12103, %v11705
    %v12105 = vpop.permute.xlu0 %12104
    %12106 = vset.pattern.permute.xlu0 5
    %12107 = vperm.xlu0 %12106, %v11706
    %v12108 = vpop.permute.xlu0 %12107
    %12109 = vset.pattern.permute.xlu0 5
    %12110 = vperm.xlu0 %12109, %v11707
    %v12111 = vpop.permute.xlu0 %12110
    %12112 = vset.pattern.permute.xlu0 5
    %12113 = vperm.xlu0 %12112, %v11708
    %v12114 = vpop.permute.xlu0 %12113
    %v12115 = vrot.slane %v12105, 7
    %v12116 = vrot.slane %v12108, 7
    %v12117 = vsel %vm1502, %v12115, %v12116
    %v12118 = vrot.slane %v12111, 7
    %v12119 = vsel %vm1502, %v12116, %v12118
    %v12120 = vrot.slane %v12114, 7
    %v12121 = vsel %vm1502, %v12118, %v12120
    %v12127 = vmul.f32 %v11694, %v12115
    %v12128 = vmul.f32 %v11697, %v12117
    %v12129 = vmul.f32 %v11700, %v12119
    %v12130 = vmul.f32 %v11703, %v12121
    %v12131 = vmul.f32 %v12120, 0.0
    %s12132 = scalar_lea.vmem %s9, 80
    %v12133 = vld [vmem:[%s12132] sm:$0xff]
    %v12134 = vld [vmem:[%s12132 + $0x8] sm:$0xff]
    %v12140 = vrot.slane %v12127, 1
    %v12141 = vrot.slane %v12128, 1
    %v12142 = vsel %vm450, %v12140, %v12141
    %v12143 = vrot.slane %v12129, 1
    %v12144 = vsel %vm450, %v12141, %v12143
    %v12145 = vrot.slane %v12130, 1
    %v12146 = vsel %vm450, %v12143, %v12145
    %v12147 = vrot.slane %v12131, 1
    %v12148 = vsel %vm450, %v12145, %v12147
    %v12149 = vsel %vm11791, %v12142, 0
    %v12151 = vsel %vm11791, %v12144, 0
    %v12153 = vsel %vm11791, %v12146, 0
    %v12155 = vsel %vm11791, %v12148, 0
    %12157 = vmatpush.msra.mxu0 0.0
    %12158 = vmatpush.msra.mxu0 0.0
    %12159 = vmatpush.msra.mxu0 0.0
    %12160 = vmatpush.msra.mxu0 0.0
    %12161 = vmatpush.msra.mxu0 0.0
    %12162 = vmatpush.msra.mxu0 0.0
    %12163 = vmatpush.msra.mxu0 0.0
    %12164 = vmatpush.msra.mxu0 0.0
    %12165 = vmatpush.msra.mxu0 0.0
    %12166 = vmatpush.msra.mxu0 0.0
    %12167 = vmatpush.msra.mxu0 0.0
    %12168 = vmatpush.msra.mxu0 0.0
    %12169 = vmatpush.msra.mxu0 0.0
    %12170 = vmatpush.msra.mxu0 0.0
    %12171 = vmatpush.msra.mxu0 %v12134
    %12172 = vmatpush.msra.mxu0 %v12133
    %12173 = vmatmul.f32.gmra.mxu0 %v12149
    %v12174 = vpop.f32.mrf.mxu0
    %v12175 = vadd.f32 0.0, %v12174
    %12176 = vmatmul.f32.gmra.mxu0 %v12151
    %v12177 = vpop.f32.mrf.mxu0
    %v12178 = vadd.f32 0.0, %v12177
    %12179 = vmatmul.f32.gmra.mxu0 %v12153
    %v12180 = vpop.f32.mrf.mxu0
    %v12181 = vadd.f32 0.0, %v12180
    %12182 = vmatmul.f32.gmra.mxu0 %v12155
    %v12183 = vpop.f32.mrf.mxu0
    %v12184 = vadd.f32 0.0, %v12183
    %12185 = vdwg.mxu0
    %v12186 = vadd.f32 %v12099, %v12175
    %v12187 = vadd.f32 %v12100, %v12178
    %v12188 = vadd.f32 %v12101, %v12181
    %v12189 = vadd.f32 %v12102, %v12184
    %12190 = vset.pattern.permute.xlu0 6
    %12191 = vperm.xlu0 %12190, %v11705
    %v12192 = vpop.permute.xlu0 %12191
    %12193 = vset.pattern.permute.xlu0 6
    %12194 = vperm.xlu0 %12193, %v11706
    %v12195 = vpop.permute.xlu0 %12194
    %12196 = vset.pattern.permute.xlu0 6
    %12197 = vperm.xlu0 %12196, %v11707
    %v12198 = vpop.permute.xlu0 %12197
    %12199 = vset.pattern.permute.xlu0 6
    %12200 = vperm.xlu0 %12199, %v11708
    %v12201 = vpop.permute.xlu0 %12200
    %v12202 = vrot.slane %v12192, 5
    %v12203 = vrot.slane %v12195, 5
    %v12204 = vsel %vm1224, %v12202, %v12203
    %v12205 = vrot.slane %v12198, 5
    %v12206 = vsel %vm1224, %v12203, %v12205
    %v12207 = vrot.slane %v12201, 5
    %v12208 = vsel %vm1224, %v12205, %v12207
    %v12214 = vmul.f32 %v11694, %v12202
    %v12215 = vmul.f32 %v11697, %v12204
    %v12216 = vmul.f32 %v11700, %v12206
    %v12217 = vmul.f32 %v11703, %v12208
    %v12218 = vmul.f32 %v12207, 0.0
    %s12219 = scalar_lea.vmem %s9, 96
    %v12220 = vld [vmem:[%s12219] sm:$0xff]
    %v12221 = vld [vmem:[%s12219 + $0x8] sm:$0xff]
    %v12227 = vrot.slane %v12214, 3
    %v12228 = vrot.slane %v12215, 3
    %v12229 = vsel %vm11834, %v12227, %v12228
    %v12230 = vrot.slane %v12216, 3
    %v12231 = vsel %vm11834, %v12228, %v12230
    %v12232 = vrot.slane %v12217, 3
    %v12233 = vsel %vm11834, %v12230, %v12232
    %v12234 = vrot.slane %v12218, 3
    %v12235 = vsel %vm11834, %v12232, %v12234
    %v12236 = vsel %vm11791, %v12229, 0
    %v12238 = vsel %vm11791, %v12231, 0
    %v12240 = vsel %vm11791, %v12233, 0
    %v12242 = vsel %vm11791, %v12235, 0
    %12244 = vmatpush.msra.mxu0 0.0
    %12245 = vmatpush.msra.mxu0 0.0
    %12246 = vmatpush.msra.mxu0 0.0
    %12247 = vmatpush.msra.mxu0 0.0
    %12248 = vmatpush.msra.mxu0 0.0
    %12249 = vmatpush.msra.mxu0 0.0
    %12250 = vmatpush.msra.mxu0 0.0
    %12251 = vmatpush.msra.mxu0 0.0
    %12252 = vmatpush.msra.mxu0 0.0
    %12253 = vmatpush.msra.mxu0 0.0
    %12254 = vmatpush.msra.mxu0 0.0
    %12255 = vmatpush.msra.mxu0 0.0
    %12256 = vmatpush.msra.mxu0 0.0
    %12257 = vmatpush.msra.mxu0 0.0
    %12258 = vmatpush.msra.mxu0 %v12221
    %12259 = vmatpush.msra.mxu0 %v12220
    %12260 = vmatmul.f32.gmra.mxu0 %v12236
    %v12261 = vpop.f32.mrf.mxu0
    %v12262 = vadd.f32 0.0, %v12261
    %12263 = vmatmul.f32.gmra.mxu0 %v12238
    %v12264 = vpop.f32.mrf.mxu0
    %v12265 = vadd.f32 0.0, %v12264
    %12266 = vmatmul.f32.gmra.mxu0 %v12240
    %v12267 = vpop.f32.mrf.mxu0
    %v12268 = vadd.f32 0.0, %v12267
    %12269 = vmatmul.f32.gmra.mxu0 %v12242
    %v12270 = vpop.f32.mrf.mxu0
    %v12271 = vadd.f32 0.0, %v12270
    %12272 = vdwg.mxu0
    %v12273 = vadd.f32 %v12186, %v12262
    %v12274 = vadd.f32 %v12187, %v12265
    %v12275 = vadd.f32 %v12188, %v12268
    %v12276 = vadd.f32 %v12189, %v12271
    %12277 = vset.pattern.permute.xlu0 7
    %12278 = vperm.xlu0 %12277, %v11705
    %v12279 = vpop.permute.xlu0 %12278
    %12280 = vset.pattern.permute.xlu0 7
    %12281 = vperm.xlu0 %12280, %v11706
    %v12282 = vpop.permute.xlu0 %12281
    %12283 = vset.pattern.permute.xlu0 7
    %12284 = vperm.xlu0 %12283, %v11707
    %v12285 = vpop.permute.xlu0 %12284
    %12286 = vset.pattern.permute.xlu0 7
    %12287 = vperm.xlu0 %12286, %v11708
    %v12288 = vpop.permute.xlu0 %12287
    %v12289 = vrot.slane %v12279, 4
    %v12290 = vrot.slane %v12282, 4
    %v12291 = vsel %vm11756, %v12289, %v12290
    %v12292 = vrot.slane %v12285, 4
    %v12293 = vsel %vm11756, %v12290, %v12292
    %v12294 = vrot.slane %v12288, 4
    %v12295 = vsel %vm11756, %v12292, %v12294
    %v12301 = vmul.f32 %v11694, %v12289
    %v12302 = vmul.f32 %v11697, %v12291
    %v12303 = vmul.f32 %v11700, %v12293
    %v12304 = vmul.f32 %v11703, %v12295
    %v12305 = vmul.f32 %v12294, 0.0
    %s12306 = scalar_lea.vmem %s9, 112
    %v12307 = vld [vmem:[%s12306] sm:$0xff]
    %v12308 = vld [vmem:[%s12306 + $0x8] sm:$0xff]
    %v12314 = vrot.slane %v12301, 4
    %v12315 = vrot.slane %v12302, 4
    %v12316 = vsel %vm11756, %v12314, %v12315
    %v12317 = vrot.slane %v12303, 4
    %v12318 = vsel %vm11756, %v12315, %v12317
    %v12319 = vrot.slane %v12304, 4
    %v12320 = vsel %vm11756, %v12317, %v12319
    %v12321 = vrot.slane %v12305, 4
    %v12322 = vsel %vm11756, %v12319, %v12321
    %v12323 = vsel %vm11791, %v12316, 0
    %v12325 = vsel %vm11791, %v12318, 0
    %v12327 = vsel %vm11791, %v12320, 0
    %v12329 = vsel %vm11791, %v12322, 0
    %12331 = vmatpush.msra.mxu0 0.0
    %12332 = vmatpush.msra.mxu0 0.0
    %12333 = vmatpush.msra.mxu0 0.0
    %12334 = vmatpush.msra.mxu0 0.0
    %12335 = vmatpush.msra.mxu0 0.0
    %12336 = vmatpush.msra.mxu0 0.0
    %12337 = vmatpush.msra.mxu0 0.0
    %12338 = vmatpush.msra.mxu0 0.0
    %12339 = vmatpush.msra.mxu0 0.0
    %12340 = vmatpush.msra.mxu0 0.0
    %12341 = vmatpush.msra.mxu0 0.0
    %12342 = vmatpush.msra.mxu0 0.0
    %12343 = vmatpush.msra.mxu0 0.0
    %12344 = vmatpush.msra.mxu0 0.0
    %12345 = vmatpush.msra.mxu0 %v12308
    %12346 = vmatpush.msra.mxu0 %v12307
    %12347 = vmatmul.f32.gmra.mxu0 %v12323
    %v12348 = vpop.f32.mrf.mxu0
    %v12349 = vadd.f32 0.0, %v12348
    %12350 = vmatmul.f32.gmra.mxu0 %v12325
    %v12351 = vpop.f32.mrf.mxu0
    %v12352 = vadd.f32 0.0, %v12351
    %12353 = vmatmul.f32.gmra.mxu0 %v12327
    %v12354 = vpop.f32.mrf.mxu0
    %v12355 = vadd.f32 0.0, %v12354
    %12356 = vmatmul.f32.gmra.mxu0 %v12329
    %v12357 = vpop.f32.mrf.mxu0
    %v12358 = vadd.f32 0.0, %v12357
    %12359 = vdwg.mxu0
    %v12360 = vadd.f32 %v12273, %v12349
    %v12361 = vadd.f32 %v12274, %v12352
    %v12362 = vadd.f32 %v12275, %v12355
    %v12363 = vadd.f32 %v12276, %v12358
    %12364 = vset.pattern.permute.xlu0 8
    %12365 = vperm.xlu0 %12364, %v11705
    %v12366 = vpop.permute.xlu0 %12365
    %12367 = vset.pattern.permute.xlu0 8
    %12368 = vperm.xlu0 %12367, %v11706
    %v12369 = vpop.permute.xlu0 %12368
    %12370 = vset.pattern.permute.xlu0 8
    %12371 = vperm.xlu0 %12370, %v11707
    %v12372 = vpop.permute.xlu0 %12371
    %12373 = vset.pattern.permute.xlu0 8
    %12374 = vperm.xlu0 %12373, %v11708
    %v12375 = vpop.permute.xlu0 %12374
    %v12376 = vrot.slane %v12366, 3
    %v12377 = vrot.slane %v12369, 3
    %v12378 = vsel %vm11834, %v12376, %v12377
    %v12379 = vrot.slane %v12372, 3
    %v12380 = vsel %vm11834, %v12377, %v12379
    %v12381 = vrot.slane %v12375, 3
    %v12382 = vsel %vm11834, %v12379, %v12381
    %v12388 = vmul.f32 %v11694, %v12376
    %v12389 = vmul.f32 %v11697, %v12378
    %v12390 = vmul.f32 %v11700, %v12380
    %v12391 = vmul.f32 %v11703, %v12382
    %v12392 = vmul.f32 %v12381, 0.0
    %s12393 = scalar_lea.vmem %s9, 128
    %v12394 = vld [vmem:[%s12393] sm:$0xff]
    %v12395 = vld [vmem:[%s12393 + $0x8] sm:$0xff]
    %v12401 = vrot.slane %v12388, 5
    %v12402 = vrot.slane %v12389, 5
    %v12403 = vsel %vm1224, %v12401, %v12402
    %v12404 = vrot.slane %v12390, 5
    %v12405 = vsel %vm1224, %v12402, %v12404
    %v12406 = vrot.slane %v12391, 5
    %v12407 = vsel %vm1224, %v12404, %v12406
    %v12408 = vrot.slane %v12392, 5
    %v12409 = vsel %vm1224, %v12406, %v12408
    %v12410 = vsel %vm11791, %v12403, 0
    %v12412 = vsel %vm11791, %v12405, 0
    %v12414 = vsel %vm11791, %v12407, 0
    %v12416 = vsel %vm11791, %v12409, 0
    %12418 = vmatpush.msra.mxu0 0.0
    %12419 = vmatpush.msra.mxu0 0.0
    %12420 = vmatpush.msra.mxu0 0.0
    %12421 = vmatpush.msra.mxu0 0.0
    %12422 = vmatpush.msra.mxu0 0.0
    %12423 = vmatpush.msra.mxu0 0.0
    %12424 = vmatpush.msra.mxu0 0.0
    %12425 = vmatpush.msra.mxu0 0.0
    %12426 = vmatpush.msra.mxu0 0.0
    %12427 = vmatpush.msra.mxu0 0.0
    %12428 = vmatpush.msra.mxu0 0.0
    %12429 = vmatpush.msra.mxu0 0.0
    %12430 = vmatpush.msra.mxu0 0.0
    %12431 = vmatpush.msra.mxu0 0.0
    %12432 = vmatpush.msra.mxu0 %v12395
    %12433 = vmatpush.msra.mxu0 %v12394
    %12434 = vmatmul.f32.gmra.mxu0 %v12410
    %v12435 = vpop.f32.mrf.mxu0
    %v12436 = vadd.f32 0.0, %v12435
    %12437 = vmatmul.f32.gmra.mxu0 %v12412
    %v12438 = vpop.f32.mrf.mxu0
    %v12439 = vadd.f32 0.0, %v12438
    %12440 = vmatmul.f32.gmra.mxu0 %v12414
    %v12441 = vpop.f32.mrf.mxu0
    %v12442 = vadd.f32 0.0, %v12441
    %12443 = vmatmul.f32.gmra.mxu0 %v12416
    %v12444 = vpop.f32.mrf.mxu0
    %v12445 = vadd.f32 0.0, %v12444
    %12446 = vdwg.mxu0
    %v12447 = vadd.f32 %v12360, %v12436
    %v12448 = vadd.f32 %v12361, %v12439
    %v12449 = vadd.f32 %v12362, %v12442
    %v12450 = vadd.f32 %v12363, %v12445
    %v12451 = vld [vmem:[%s10] sm:$0x1]
    %v12453 = vperm.slane %v12451, 0
    %v12455 = vadd.f32 %v12447, %v12453
    %v12456 = vadd.f32 %v12448, %v12453
    %v12457 = vadd.f32 %v12449, %v12453
    %v12458 = vadd.f32 %v12450, %v12453
    %v12459 = vmax.f32 %v12455, 0.0
    %v12460 = vmax.f32 %v12456, 0.0
    %v12461 = vmax.f32 %v12457, 0.0
    %v12462 = vmax.f32 %v12458, 0.0
    %v12463 = vld [vmem:[%s14] sm:$0xff]
    %v12464 = vld [vmem:[%s14 + $0x8] sm:$0xff]
    %v12465 = vld [vmem:[%s14 + $0x10] sm:$0xff]
    %v12466 = vld [vmem:[%s14 + $0x18] sm:$0xff]
    %12468 = vset.pattern.permute.xlu0 0
    %12469 = vperm.xlu0 %12468, %v12463
    %v12470 = vpop.permute.xlu0 %12469
    %12472 = vset.pattern.permute.xlu0 0
    %12473 = vperm.xlu0 %12472, %v12464
    %v12474 = vpop.permute.xlu0 %12473
    %12476 = vset.pattern.permute.xlu0 0
    %12477 = vperm.xlu0 %12476, %v12465
    %v12478 = vpop.permute.xlu0 %12477
    %12480 = vset.pattern.permute.xlu0 0
    %12481 = vperm.xlu0 %12480, %v12466
    %v12482 = vpop.permute.xlu0 %12481
    %v12483 = vrot.slane %v12470, 5
    %v12484 = vrot.slane %v12474, 5
    %v12485 = vsel %vm1224, %v12483, %v12484
    %v12486 = vrot.slane %v12478, 5
    %v12487 = vsel %vm1224, %v12484, %v12486
    %v12488 = vrot.slane %v12482, 5
    %v12489 = vsel %vm1224, %v12486, %v12488
    %v12495 = vmul.f32 %v12483, 0.0
    %v12496 = vmul.f32 %v12459, %v12485
    %v12497 = vmul.f32 %v12460, %v12487
    %v12498 = vmul.f32 %v12461, %v12489
    %v12499 = vmul.f32 %v12462, %v12488
    %v12500 = vld [vmem:[%s12] sm:$0xff]
    %v12501 = vld [vmem:[%s12 + $0x8] sm:$0xff]
    %v12502 = vld [vmem:[%s12 + $0x10] sm:$0xff]
    %v12503 = vld [vmem:[%s12 + $0x18] sm:$0xff]
    %12504 = vset.pattern.permute.xlu0 1
    %12505 = vperm.xlu0 %12504, %v12463
    %v12506 = vpop.permute.xlu0 %12505
    %12507 = vset.pattern.permute.xlu0 1
    %12508 = vperm.xlu0 %12507, %v12464
    %v12509 = vpop.permute.xlu0 %12508
    %12510 = vset.pattern.permute.xlu0 1
    %12511 = vperm.xlu0 %12510, %v12465
    %v12512 = vpop.permute.xlu0 %12511
    %12513 = vset.pattern.permute.xlu0 1
    %12514 = vperm.xlu0 %12513, %v12466
    %v12515 = vpop.permute.xlu0 %12514
    %v12516 = vrot.slane %v12506, 4
    %v12517 = vrot.slane %v12509, 4
    %v12518 = vsel %vm11756, %v12516, %v12517
    %v12519 = vrot.slane %v12512, 4
    %v12520 = vsel %vm11756, %v12517, %v12519
    %v12521 = vrot.slane %v12515, 4
    %v12522 = vsel %vm11756, %v12519, %v12521
    %v12528 = vmul.f32 %v12516, 0.0
    %v12529 = vmul.f32 %v12459, %v12518
    %v12530 = vmul.f32 %v12460, %v12520
    %v12531 = vmul.f32 %v12461, %v12522
    %v12532 = vmul.f32 %v12462, %v12521
    %s12533 = scalar_lea.vmem %s12, 32
    %v12534 = vld [vmem:[%s12533] sm:$0xff]
    %v12535 = vld [vmem:[%s12533 + $0x8] sm:$0xff]
    %v12536 = vld [vmem:[%s12533 + $0x10] sm:$0xff]
    %v12537 = vld [vmem:[%s12533 + $0x18] sm:$0xff]
    %v12543 = vrot.slane %v12528, 4
    %v12544 = vrot.slane %v12529, 4
    %v12545 = vsel %vm11756, %v12543, %v12544
    %v12546 = vrot.slane %v12530, 4
    %v12547 = vsel %vm11756, %v12544, %v12546
    %v12548 = vrot.slane %v12531, 4
    %v12549 = vsel %vm11756, %v12546, %v12548
    %v12550 = vrot.slane %v12532, 4
    %v12551 = vsel %vm11756, %v12548, %v12550
    %vm12552 = vcmask 261120
    %v12553 = vsel %vm12552, %v12545, 0
    %v12555 = vsel %vm12552, %v12547, 0
    %v12557 = vsel %vm12552, %v12549, 0
    %v12559 = vsel %vm12552, %v12551, 0
    %12561 = vmatpush.msra.mxu0 0.0
    %12562 = vmatpush.msra.mxu0 0.0
    %12563 = vmatpush.msra.mxu0 0.0
    %12564 = vmatpush.msra.mxu0 0.0
    %12565 = vmatpush.msra.mxu0 0.0
    %12566 = vmatpush.msra.mxu0 0.0
    %12567 = vmatpush.msra.mxu0 0.0
    %12568 = vmatpush.msra.mxu0 0.0
    %12569 = vmatpush.msra.mxu0 0.0
    %12570 = vmatpush.msra.mxu0 0.0
    %12571 = vmatpush.msra.mxu0 0.0
    %12572 = vmatpush.msra.mxu0 0.0
    %12573 = vmatpush.msra.mxu0 %v12537
    %12574 = vmatpush.msra.mxu0 %v12536
    %12575 = vmatpush.msra.mxu0 %v12535
    %12576 = vmatpush.msra.mxu0 %v12534
    %12577 = vmatmul.f32.gmra.mxu0 %v12553
    %v12578 = vpop.f32.mrf.mxu0
    %v12579 = vadd.f32 0.0, %v12578
    %12580 = vmatmul.f32.gmra.mxu0 %v12555
    %v12581 = vpop.f32.mrf.mxu0
    %v12582 = vadd.f32 0.0, %v12581
    %12583 = vmatmul.f32.gmra.mxu0 %v12557
    %v12584 = vpop.f32.mrf.mxu0
    %v12585 = vadd.f32 0.0, %v12584
    %12586 = vmatmul.f32.gmra.mxu0 %v12559
    %v12587 = vpop.f32.mrf.mxu0
    %v12588 = vadd.f32 0.0, %v12587
    %12589 = vdwg.mxu0
    %v12595 = vrot.slane %v12495, 3
    %v12596 = vrot.slane %v12496, 3
    %v12597 = vsel %vm11834, %v12595, %v12596
    %v12598 = vrot.slane %v12497, 3
    %v12599 = vsel %vm11834, %v12596, %v12598
    %v12600 = vrot.slane %v12498, 3
    %v12601 = vsel %vm11834, %v12598, %v12600
    %v12602 = vrot.slane %v12499, 3
    %v12603 = vsel %vm11834, %v12600, %v12602
    %v12604 = vsel %vm12552, %v12597, 0
    %v12606 = vsel %vm12552, %v12599, 0
    %v12608 = vsel %vm12552, %v12601, 0
    %v12610 = vsel %vm12552, %v12603, 0
    %12612 = vmatpush.msra.mxu0 0.0
    %12613 = vmatpush.msra.mxu0 0.0
    %12614 = vmatpush.msra.mxu0 0.0
    %12615 = vmatpush.msra.mxu0 0.0
    %12616 = vmatpush.msra.mxu0 0.0
    %12617 = vmatpush.msra.mxu0 0.0
    %12618 = vmatpush.msra.mxu0 0.0
    %12619 = vmatpush.msra.mxu0 0.0
    %12620 = vmatpush.msra.mxu0 0.0
    %12621 = vmatpush.msra.mxu0 0.0
    %12622 = vmatpush.msra.mxu0 0.0
    %12623 = vmatpush.msra.mxu0 0.0
    %12624 = vmatpush.msra.mxu0 %v12503
    %12625 = vmatpush.msra.mxu0 %v12502
    %12626 = vmatpush.msra.mxu0 %v12501
    %12627 = vmatpush.msra.mxu0 %v12500
    %12628 = vmatmul.f32.gmra.mxu0 %v12604
    %v12629 = vpop.f32.mrf.mxu0
    %v12630 = vadd.f32 %v12579, %v12629
    %12631 = vmatmul.f32.gmra.mxu0 %v12606
    %v12632 = vpop.f32.mrf.mxu0
    %v12633 = vadd.f32 %v12582, %v12632
    %12634 = vmatmul.f32.gmra.mxu0 %v12608
    %v12635 = vpop.f32.mrf.mxu0
    %v12636 = vadd.f32 %v12585, %v12635
    %12637 = vmatmul.f32.gmra.mxu0 %v12610
    %v12638 = vpop.f32.mrf.mxu0
    %v12639 = vadd.f32 %v12588, %v12638
    %12640 = vdwg.mxu0
    %12641 = vset.pattern.permute.xlu0 2
    %12642 = vperm.xlu0 %12641, %v12463
    %v12643 = vpop.permute.xlu0 %12642
    %12644 = vset.pattern.permute.xlu0 2
    %12645 = vperm.xlu0 %12644, %v12464
    %v12646 = vpop.permute.xlu0 %12645
    %12647 = vset.pattern.permute.xlu0 2
    %12648 = vperm.xlu0 %12647, %v12465
    %v12649 = vpop.permute.xlu0 %12648
    %12650 = vset.pattern.permute.xlu0 2
    %12651 = vperm.xlu0 %12650, %v12466
    %v12652 = vpop.permute.xlu0 %12651
    %v12653 = vrot.slane %v12643, 3
    %v12654 = vrot.slane %v12646, 3
    %v12655 = vsel %vm11834, %v12653, %v12654
    %v12656 = vrot.slane %v12649, 3
    %v12657 = vsel %vm11834, %v12654, %v12656
    %v12658 = vrot.slane %v12652, 3
    %v12659 = vsel %vm11834, %v12656, %v12658
    %v12665 = vmul.f32 %v12653, 0.0
    %v12666 = vmul.f32 %v12459, %v12655
    %v12667 = vmul.f32 %v12460, %v12657
    %v12668 = vmul.f32 %v12461, %v12659
    %v12669 = vmul.f32 %v12462, %v12658
    %s12670 = scalar_lea.vmem %s12, 64
    %v12671 = vld [vmem:[%s12670] sm:$0xff]
    %v12672 = vld [vmem:[%s12670 + $0x8] sm:$0xff]
    %v12673 = vld [vmem:[%s12670 + $0x10] sm:$0xff]
    %v12674 = vld [vmem:[%s12670 + $0x18] sm:$0xff]
    %v12680 = vrot.slane %v12665, 5
    %v12681 = vrot.slane %v12666, 5
    %v12682 = vsel %vm1224, %v12680, %v12681
    %v12683 = vrot.slane %v12667, 5
    %v12684 = vsel %vm1224, %v12681, %v12683
    %v12685 = vrot.slane %v12668, 5
    %v12686 = vsel %vm1224, %v12683, %v12685
    %v12687 = vrot.slane %v12669, 5
    %v12688 = vsel %vm1224, %v12685, %v12687
    %v12689 = vsel %vm12552, %v12682, 0
    %v12691 = vsel %vm12552, %v12684, 0
    %v12693 = vsel %vm12552, %v12686, 0
    %v12695 = vsel %vm12552, %v12688, 0
    %12697 = vmatpush.msra.mxu0 0.0
    %12698 = vmatpush.msra.mxu0 0.0
    %12699 = vmatpush.msra.mxu0 0.0
    %12700 = vmatpush.msra.mxu0 0.0
    %12701 = vmatpush.msra.mxu0 0.0
    %12702 = vmatpush.msra.mxu0 0.0
    %12703 = vmatpush.msra.mxu0 0.0
    %12704 = vmatpush.msra.mxu0 0.0
    %12705 = vmatpush.msra.mxu0 0.0
    %12706 = vmatpush.msra.mxu0 0.0
    %12707 = vmatpush.msra.mxu0 0.0
    %12708 = vmatpush.msra.mxu0 0.0
    %12709 = vmatpush.msra.mxu0 %v12674
    %12710 = vmatpush.msra.mxu0 %v12673
    %12711 = vmatpush.msra.mxu0 %v12672
    %12712 = vmatpush.msra.mxu0 %v12671
    %12713 = vmatmul.f32.gmra.mxu0 %v12689
    %v12714 = vpop.f32.mrf.mxu0
    %v12715 = vadd.f32 0.0, %v12714
    %12716 = vmatmul.f32.gmra.mxu0 %v12691
    %v12717 = vpop.f32.mrf.mxu0
    %v12718 = vadd.f32 0.0, %v12717
    %12719 = vmatmul.f32.gmra.mxu0 %v12693
    %v12720 = vpop.f32.mrf.mxu0
    %v12721 = vadd.f32 0.0, %v12720
    %12722 = vmatmul.f32.gmra.mxu0 %v12695
    %v12723 = vpop.f32.mrf.mxu0
    %v12724 = vadd.f32 0.0, %v12723
    %12725 = vdwg.mxu0
    %v12726 = vadd.f32 %v12630, %v12715
    %v12727 = vadd.f32 %v12633, %v12718
    %v12728 = vadd.f32 %v12636, %v12721
    %v12729 = vadd.f32 %v12639, %v12724
    %12730 = vset.pattern.permute.xlu0 3
    %12731 = vperm.xlu0 %12730, %v12463
    %v12732 = vpop.permute.xlu0 %12731
    %12733 = vset.pattern.permute.xlu0 3
    %12734 = vperm.xlu0 %12733, %v12464
    %v12735 = vpop.permute.xlu0 %12734
    %12736 = vset.pattern.permute.xlu0 3
    %12737 = vperm.xlu0 %12736, %v12465
    %v12738 = vpop.permute.xlu0 %12737
    %12739 = vset.pattern.permute.xlu0 3
    %12740 = vperm.xlu0 %12739, %v12466
    %v12741 = vpop.permute.xlu0 %12740
    %v12742 = vrot.slane %v12732, 1
    %v12743 = vrot.slane %v12735, 1
    %v12744 = vsel %vm450, %v12742, %v12743
    %v12745 = vrot.slane %v12738, 1
    %v12746 = vsel %vm450, %v12743, %v12745
    %v12747 = vrot.slane %v12741, 1
    %v12748 = vsel %vm450, %v12745, %v12747
    %v12754 = vmul.f32 %v12742, 0.0
    %v12755 = vmul.f32 %v12459, %v12744
    %v12756 = vmul.f32 %v12460, %v12746
    %v12757 = vmul.f32 %v12461, %v12748
    %v12758 = vmul.f32 %v12462, %v12747
    %s12759 = scalar_lea.vmem %s12, 96
    %v12760 = vld [vmem:[%s12759] sm:$0xff]
    %v12761 = vld [vmem:[%s12759 + $0x8] sm:$0xff]
    %v12762 = vld [vmem:[%s12759 + $0x10] sm:$0xff]
    %v12763 = vld [vmem:[%s12759 + $0x18] sm:$0xff]
    %v12769 = vrot.slane %v12754, 7
    %v12770 = vrot.slane %v12755, 7
    %v12771 = vsel %vm1502, %v12769, %v12770
    %v12772 = vrot.slane %v12756, 7
    %v12773 = vsel %vm1502, %v12770, %v12772
    %v12774 = vrot.slane %v12757, 7
    %v12775 = vsel %vm1502, %v12772, %v12774
    %v12776 = vrot.slane %v12758, 7
    %v12777 = vsel %vm1502, %v12774, %v12776
    %v12778 = vsel %vm12552, %v12771, 0
    %v12780 = vsel %vm12552, %v12773, 0
    %v12782 = vsel %vm12552, %v12775, 0
    %v12784 = vsel %vm12552, %v12777, 0
    %12786 = vmatpush.msra.mxu0 0.0
    %12787 = vmatpush.msra.mxu0 0.0
    %12788 = vmatpush.msra.mxu0 0.0
    %12789 = vmatpush.msra.mxu0 0.0
    %12790 = vmatpush.msra.mxu0 0.0
    %12791 = vmatpush.msra.mxu0 0.0
    %12792 = vmatpush.msra.mxu0 0.0
    %12793 = vmatpush.msra.mxu0 0.0
    %12794 = vmatpush.msra.mxu0 0.0
    %12795 = vmatpush.msra.mxu0 0.0
    %12796 = vmatpush.msra.mxu0 0.0
    %12797 = vmatpush.msra.mxu0 0.0
    %12798 = vmatpush.msra.mxu0 %v12763
    %12799 = vmatpush.msra.mxu0 %v12762
    %12800 = vmatpush.msra.mxu0 %v12761
    %12801 = vmatpush.msra.mxu0 %v12760
    %12802 = vmatmul.f32.gmra.mxu0 %v12778
    %v12803 = vpop.f32.mrf.mxu0
    %v12804 = vadd.f32 0.0, %v12803
    %12805 = vmatmul.f32.gmra.mxu0 %v12780
    %v12806 = vpop.f32.mrf.mxu0
    %v12807 = vadd.f32 0.0, %v12806
    %12808 = vmatmul.f32.gmra.mxu0 %v12782
    %v12809 = vpop.f32.mrf.mxu0
    %v12810 = vadd.f32 0.0, %v12809
    %12811 = vmatmul.f32.gmra.mxu0 %v12784
    %v12812 = vpop.f32.mrf.mxu0
    %v12813 = vadd.f32 0.0, %v12812
    %12814 = vdwg.mxu0
    %v12815 = vadd.f32 %v12726, %v12804
    %v12816 = vadd.f32 %v12727, %v12807
    %v12817 = vadd.f32 %v12728, %v12810
    %v12818 = vadd.f32 %v12729, %v12813
    %s12819 = scalar_lea.vmem %s12, 128
    %v12820 = vld [vmem:[%s12819] sm:$0xff]
    %v12821 = vld [vmem:[%s12819 + $0x8] sm:$0xff]
    %v12822 = vld [vmem:[%s12819 + $0x10] sm:$0xff]
    %v12823 = vld [vmem:[%s12819 + $0x18] sm:$0xff]
    %v12825 = vsel %vm12552, %v12459, 0
    %v12828 = vsel %vm12552, %v12460, 0
    %v12831 = vsel %vm12552, %v12461, 0
    %v12834 = vsel %vm12552, %v12462, 0
    %12836 = vmatpush.msra.mxu0 0.0
    %12837 = vmatpush.msra.mxu0 0.0
    %12838 = vmatpush.msra.mxu0 0.0
    %12839 = vmatpush.msra.mxu0 0.0
    %12840 = vmatpush.msra.mxu0 0.0
    %12841 = vmatpush.msra.mxu0 0.0
    %12842 = vmatpush.msra.mxu0 0.0
    %12843 = vmatpush.msra.mxu0 0.0
    %12844 = vmatpush.msra.mxu0 0.0
    %12845 = vmatpush.msra.mxu0 0.0
    %12846 = vmatpush.msra.mxu0 0.0
    %12847 = vmatpush.msra.mxu0 0.0
    %12848 = vmatpush.msra.mxu0 %v12823
    %12849 = vmatpush.msra.mxu0 %v12822
    %12850 = vmatpush.msra.mxu0 %v12821
    %12851 = vmatpush.msra.mxu0 %v12820
    %12852 = vmatmul.f32.gmra.mxu0 %v12825
    %v12853 = vpop.f32.mrf.mxu0
    %v12854 = vadd.f32 0.0, %v12853
    %12855 = vmatmul.f32.gmra.mxu0 %v12828
    %v12856 = vpop.f32.mrf.mxu0
    %v12857 = vadd.f32 0.0, %v12856
    %12858 = vmatmul.f32.gmra.mxu0 %v12831
    %v12859 = vpop.f32.mrf.mxu0
    %v12860 = vadd.f32 0.0, %v12859
    %12861 = vmatmul.f32.gmra.mxu0 %v12834
    %v12862 = vpop.f32.mrf.mxu0
    %v12863 = vadd.f32 0.0, %v12862
    %12864 = vdwg.mxu0
    %v12865 = vadd.f32 %v12815, %v12854
    %v12866 = vadd.f32 %v12816, %v12857
    %v12867 = vadd.f32 %v12817, %v12860
    %v12868 = vadd.f32 %v12818, %v12863
    %12869 = vset.pattern.permute.xlu0 5
    %12870 = vperm.xlu0 %12869, %v12463
    %v12871 = vpop.permute.xlu0 %12870
    %12872 = vset.pattern.permute.xlu0 5
    %12873 = vperm.xlu0 %12872, %v12464
    %v12874 = vpop.permute.xlu0 %12873
    %12875 = vset.pattern.permute.xlu0 5
    %12876 = vperm.xlu0 %12875, %v12465
    %v12877 = vpop.permute.xlu0 %12876
    %12878 = vset.pattern.permute.xlu0 5
    %12879 = vperm.xlu0 %12878, %v12466
    %v12880 = vpop.permute.xlu0 %12879
    %v12881 = vrot.slane %v12871, 7
    %v12882 = vrot.slane %v12874, 7
    %v12883 = vsel %vm1502, %v12881, %v12882
    %v12884 = vrot.slane %v12877, 7
    %v12885 = vsel %vm1502, %v12882, %v12884
    %v12886 = vrot.slane %v12880, 7
    %v12887 = vsel %vm1502, %v12884, %v12886
    %v12893 = vmul.f32 %v12459, %v12881
    %v12894 = vmul.f32 %v12460, %v12883
    %v12895 = vmul.f32 %v12461, %v12885
    %v12896 = vmul.f32 %v12462, %v12887
    %v12897 = vmul.f32 %v12886, 0.0
    %s12898 = scalar_lea.vmem %s12, 160
    %v12899 = vld [vmem:[%s12898] sm:$0xff]
    %v12900 = vld [vmem:[%s12898 + $0x8] sm:$0xff]
    %v12901 = vld [vmem:[%s12898 + $0x10] sm:$0xff]
    %v12902 = vld [vmem:[%s12898 + $0x18] sm:$0xff]
    %v12908 = vrot.slane %v12893, 1
    %v12909 = vrot.slane %v12894, 1
    %v12910 = vsel %vm450, %v12908, %v12909
    %v12911 = vrot.slane %v12895, 1
    %v12912 = vsel %vm450, %v12909, %v12911
    %v12913 = vrot.slane %v12896, 1
    %v12914 = vsel %vm450, %v12911, %v12913
    %v12915 = vrot.slane %v12897, 1
    %v12916 = vsel %vm450, %v12913, %v12915
    %v12917 = vsel %vm12552, %v12910, 0
    %v12919 = vsel %vm12552, %v12912, 0
    %v12921 = vsel %vm12552, %v12914, 0
    %v12923 = vsel %vm12552, %v12916, 0
    %12925 = vmatpush.msra.mxu0 0.0
    %12926 = vmatpush.msra.mxu0 0.0
    %12927 = vmatpush.msra.mxu0 0.0
    %12928 = vmatpush.msra.mxu0 0.0
    %12929 = vmatpush.msra.mxu0 0.0
    %12930 = vmatpush.msra.mxu0 0.0
    %12931 = vmatpush.msra.mxu0 0.0
    %12932 = vmatpush.msra.mxu0 0.0
    %12933 = vmatpush.msra.mxu0 0.0
    %12934 = vmatpush.msra.mxu0 0.0
    %12935 = vmatpush.msra.mxu0 0.0
    %12936 = vmatpush.msra.mxu0 0.0
    %12937 = vmatpush.msra.mxu0 %v12902
    %12938 = vmatpush.msra.mxu0 %v12901
    %12939 = vmatpush.msra.mxu0 %v12900
    %12940 = vmatpush.msra.mxu0 %v12899
    %12941 = vmatmul.f32.gmra.mxu0 %v12917
    %v12942 = vpop.f32.mrf.mxu0
    %v12943 = vadd.f32 0.0, %v12942
    %12944 = vmatmul.f32.gmra.mxu0 %v12919
    %v12945 = vpop.f32.mrf.mxu0
    %v12946 = vadd.f32 0.0, %v12945
    %12947 = vmatmul.f32.gmra.mxu0 %v12921
    %v12948 = vpop.f32.mrf.mxu0
    %v12949 = vadd.f32 0.0, %v12948
    %12950 = vmatmul.f32.gmra.mxu0 %v12923
    %v12951 = vpop.f32.mrf.mxu0
    %v12952 = vadd.f32 0.0, %v12951
    %12953 = vdwg.mxu0
    %v12954 = vadd.f32 %v12865, %v12943
    %v12955 = vadd.f32 %v12866, %v12946
    %v12956 = vadd.f32 %v12867, %v12949
    %v12957 = vadd.f32 %v12868, %v12952
    %12958 = vset.pattern.permute.xlu0 6
    %12959 = vperm.xlu0 %12958, %v12463
    %v12960 = vpop.permute.xlu0 %12959
    %12961 = vset.pattern.permute.xlu0 6
    %12962 = vperm.xlu0 %12961, %v12464
    %v12963 = vpop.permute.xlu0 %12962
    %12964 = vset.pattern.permute.xlu0 6
    %12965 = vperm.xlu0 %12964, %v12465
    %v12966 = vpop.permute.xlu0 %12965
    %12967 = vset.pattern.permute.xlu0 6
    %12968 = vperm.xlu0 %12967, %v12466
    %v12969 = vpop.permute.xlu0 %12968
    %v12970 = vrot.slane %v12960, 5
    %v12971 = vrot.slane %v12963, 5
    %v12972 = vsel %vm1224, %v12970, %v12971
    %v12973 = vrot.slane %v12966, 5
    %v12974 = vsel %vm1224, %v12971, %v12973
    %v12975 = vrot.slane %v12969, 5
    %v12976 = vsel %vm1224, %v12973, %v12975
    %v12982 = vmul.f32 %v12459, %v12970
    %v12983 = vmul.f32 %v12460, %v12972
    %v12984 = vmul.f32 %v12461, %v12974
    %v12985 = vmul.f32 %v12462, %v12976
    %v12986 = vmul.f32 %v12975, 0.0
    %s12987 = scalar_lea.vmem %s12, 192
    %v12988 = vld [vmem:[%s12987] sm:$0xff]
    %v12989 = vld [vmem:[%s12987 + $0x8] sm:$0xff]
    %v12990 = vld [vmem:[%s12987 + $0x10] sm:$0xff]
    %v12991 = vld [vmem:[%s12987 + $0x18] sm:$0xff]
    %v12997 = vrot.slane %v12982, 3
    %v12998 = vrot.slane %v12983, 3
    %v12999 = vsel %vm11834, %v12997, %v12998
    %v13000 = vrot.slane %v12984, 3
    %v13001 = vsel %vm11834, %v12998, %v13000
    %v13002 = vrot.slane %v12985, 3
    %v13003 = vsel %vm11834, %v13000, %v13002
    %v13004 = vrot.slane %v12986, 3
    %v13005 = vsel %vm11834, %v13002, %v13004
    %v13006 = vsel %vm12552, %v12999, 0
    %v13008 = vsel %vm12552, %v13001, 0
    %v13010 = vsel %vm12552, %v13003, 0
    %v13012 = vsel %vm12552, %v13005, 0
    %13014 = vmatpush.msra.mxu0 0.0
    %13015 = vmatpush.msra.mxu0 0.0
    %13016 = vmatpush.msra.mxu0 0.0
    %13017 = vmatpush.msra.mxu0 0.0
    %13018 = vmatpush.msra.mxu0 0.0
    %13019 = vmatpush.msra.mxu0 0.0
    %13020 = vmatpush.msra.mxu0 0.0
    %13021 = vmatpush.msra.mxu0 0.0
    %13022 = vmatpush.msra.mxu0 0.0
    %13023 = vmatpush.msra.mxu0 0.0
    %13024 = vmatpush.msra.mxu0 0.0
    %13025 = vmatpush.msra.mxu0 0.0
    %13026 = vmatpush.msra.mxu0 %v12991
    %13027 = vmatpush.msra.mxu0 %v12990
    %13028 = vmatpush.msra.mxu0 %v12989
    %13029 = vmatpush.msra.mxu0 %v12988
    %13030 = vmatmul.f32.gmra.mxu0 %v13006
    %v13031 = vpop.f32.mrf.mxu0
    %v13032 = vadd.f32 0.0, %v13031
    %13033 = vmatmul.f32.gmra.mxu0 %v13008
    %v13034 = vpop.f32.mrf.mxu0
    %v13035 = vadd.f32 0.0, %v13034
    %13036 = vmatmul.f32.gmra.mxu0 %v13010
    %v13037 = vpop.f32.mrf.mxu0
    %v13038 = vadd.f32 0.0, %v13037
    %13039 = vmatmul.f32.gmra.mxu0 %v13012
    %v13040 = vpop.f32.mrf.mxu0
    %v13041 = vadd.f32 0.0, %v13040
    %13042 = vdwg.mxu0
    %v13043 = vadd.f32 %v12954, %v13032
    %v13044 = vadd.f32 %v12955, %v13035
    %v13045 = vadd.f32 %v12956, %v13038
    %v13046 = vadd.f32 %v12957, %v13041
    %13047 = vset.pattern.permute.xlu0 7
    %13048 = vperm.xlu0 %13047, %v12463
    %v13049 = vpop.permute.xlu0 %13048
    %13050 = vset.pattern.permute.xlu0 7
    %13051 = vperm.xlu0 %13050, %v12464
    %v13052 = vpop.permute.xlu0 %13051
    %13053 = vset.pattern.permute.xlu0 7
    %13054 = vperm.xlu0 %13053, %v12465
    %v13055 = vpop.permute.xlu0 %13054
    %13056 = vset.pattern.permute.xlu0 7
    %13057 = vperm.xlu0 %13056, %v12466
    %v13058 = vpop.permute.xlu0 %13057
    %v13059 = vrot.slane %v13049, 4
    %v13060 = vrot.slane %v13052, 4
    %v13061 = vsel %vm11756, %v13059, %v13060
    %v13062 = vrot.slane %v13055, 4
    %v13063 = vsel %vm11756, %v13060, %v13062
    %v13064 = vrot.slane %v13058, 4
    %v13065 = vsel %vm11756, %v13062, %v13064
    %v13071 = vmul.f32 %v12459, %v13059
    %v13072 = vmul.f32 %v12460, %v13061
    %v13073 = vmul.f32 %v12461, %v13063
    %v13074 = vmul.f32 %v12462, %v13065
    %v13075 = vmul.f32 %v13064, 0.0
    %s13076 = scalar_lea.vmem %s12, 224
    %v13077 = vld [vmem:[%s13076] sm:$0xff]
    %v13078 = vld [vmem:[%s13076 + $0x8] sm:$0xff]
    %v13079 = vld [vmem:[%s13076 + $0x10] sm:$0xff]
    %v13080 = vld [vmem:[%s13076 + $0x18] sm:$0xff]
    %v13086 = vrot.slane %v13071, 4
    %v13087 = vrot.slane %v13072, 4
    %v13088 = vsel %vm11756, %v13086, %v13087
    %v13089 = vrot.slane %v13073, 4
    %v13090 = vsel %vm11756, %v13087, %v13089
    %v13091 = vrot.slane %v13074, 4
    %v13092 = vsel %vm11756, %v13089, %v13091
    %v13093 = vrot.slane %v13075, 4
    %v13094 = vsel %vm11756, %v13091, %v13093
    %v13095 = vsel %vm12552, %v13088, 0
    %v13097 = vsel %vm12552, %v13090, 0
    %v13099 = vsel %vm12552, %v13092, 0
    %v13101 = vsel %vm12552, %v13094, 0
    %13103 = vmatpush.msra.mxu0 0.0
    %13104 = vmatpush.msra.mxu0 0.0
    %13105 = vmatpush.msra.mxu0 0.0
    %13106 = vmatpush.msra.mxu0 0.0
    %13107 = vmatpush.msra.mxu0 0.0
    %13108 = vmatpush.msra.mxu0 0.0
    %13109 = vmatpush.msra.mxu0 0.0
    %13110 = vmatpush.msra.mxu0 0.0
    %13111 = vmatpush.msra.mxu0 0.0
    %13112 = vmatpush.msra.mxu0 0.0
    %13113 = vmatpush.msra.mxu0 0.0
    %13114 = vmatpush.msra.mxu0 0.0
    %13115 = vmatpush.msra.mxu0 %v13080
    %13116 = vmatpush.msra.mxu0 %v13079
    %13117 = vmatpush.msra.mxu0 %v13078
    %13118 = vmatpush.msra.mxu0 %v13077
    %13119 = vmatmul.f32.gmra.mxu0 %v13095
    %v13120 = vpop.f32.mrf.mxu0
    %v13121 = vadd.f32 0.0, %v13120
    %13122 = vmatmul.f32.gmra.mxu0 %v13097
    %v13123 = vpop.f32.mrf.mxu0
    %v13124 = vadd.f32 0.0, %v13123
    %13125 = vmatmul.f32.gmra.mxu0 %v13099
    %v13126 = vpop.f32.mrf.mxu0
    %v13127 = vadd.f32 0.0, %v13126
    %13128 = vmatmul.f32.gmra.mxu0 %v13101
    %v13129 = vpop.f32.mrf.mxu0
    %v13130 = vadd.f32 0.0, %v13129
    %13131 = vdwg.mxu0
    %v13132 = vadd.f32 %v13043, %v13121
    %v13133 = vadd.f32 %v13044, %v13124
    %v13134 = vadd.f32 %v13045, %v13127
    %v13135 = vadd.f32 %v13046, %v13130
    %13136 = vset.pattern.permute.xlu0 8
    %13137 = vperm.xlu0 %13136, %v12463
    %v13138 = vpop.permute.xlu0 %13137
    %13139 = vset.pattern.permute.xlu0 8
    %13140 = vperm.xlu0 %13139, %v12464
    %v13141 = vpop.permute.xlu0 %13140
    %13142 = vset.pattern.permute.xlu0 8
    %13143 = vperm.xlu0 %13142, %v12465
    %v13144 = vpop.permute.xlu0 %13143
    %13145 = vset.pattern.permute.xlu0 8
    %13146 = vperm.xlu0 %13145, %v12466
    %v13147 = vpop.permute.xlu0 %13146
    %v13148 = vrot.slane %v13138, 3
    %v13149 = vrot.slane %v13141, 3
    %v13150 = vsel %vm11834, %v13148, %v13149
    %v13151 = vrot.slane %v13144, 3
    %v13152 = vsel %vm11834, %v13149, %v13151
    %v13153 = vrot.slane %v13147, 3
    %v13154 = vsel %vm11834, %v13151, %v13153
    %v13160 = vmul.f32 %v12459, %v13148
    %v13161 = vmul.f32 %v12460, %v13150
    %v13162 = vmul.f32 %v12461, %v13152
    %v13163 = vmul.f32 %v12462, %v13154
    %v13164 = vmul.f32 %v13153, 0.0
    %s13165 = scalar_lea.vmem %s12, 256
    %v13166 = vld [vmem:[%s13165] sm:$0xff]
    %v13167 = vld [vmem:[%s13165 + $0x8] sm:$0xff]
    %v13168 = vld [vmem:[%s13165 + $0x10] sm:$0xff]
    %v13169 = vld [vmem:[%s13165 + $0x18] sm:$0xff]
    %v13175 = vrot.slane %v13160, 5
    %v13176 = vrot.slane %v13161, 5
    %v13177 = vsel %vm1224, %v13175, %v13176
    %v13178 = vrot.slane %v13162, 5
    %v13179 = vsel %vm1224, %v13176, %v13178
    %v13180 = vrot.slane %v13163, 5
    %v13181 = vsel %vm1224, %v13178, %v13180
    %v13182 = vrot.slane %v13164, 5
    %v13183 = vsel %vm1224, %v13180, %v13182
    %v13184 = vsel %vm12552, %v13177, 0
    %v13186 = vsel %vm12552, %v13179, 0
    %v13188 = vsel %vm12552, %v13181, 0
    %v13190 = vsel %vm12552, %v13183, 0
    %13192 = vmatpush.msra.mxu0 0.0
    %13193 = vmatpush.msra.mxu0 0.0
    %13194 = vmatpush.msra.mxu0 0.0
    %13195 = vmatpush.msra.mxu0 0.0
    %13196 = vmatpush.msra.mxu0 0.0
    %13197 = vmatpush.msra.mxu0 0.0
    %13198 = vmatpush.msra.mxu0 0.0
    %13199 = vmatpush.msra.mxu0 0.0
    %13200 = vmatpush.msra.mxu0 0.0
    %13201 = vmatpush.msra.mxu0 0.0
    %13202 = vmatpush.msra.mxu0 0.0
    %13203 = vmatpush.msra.mxu0 0.0
    %13204 = vmatpush.msra.mxu0 %v13169
    %13205 = vmatpush.msra.mxu0 %v13168
    %13206 = vmatpush.msra.mxu0 %v13167
    %13207 = vmatpush.msra.mxu0 %v13166
    %13208 = vmatmul.f32.gmra.mxu0 %v13184
    %v13209 = vpop.f32.mrf.mxu0
    %v13210 = vadd.f32 0.0, %v13209
    %13211 = vmatmul.f32.gmra.mxu0 %v13186
    %v13212 = vpop.f32.mrf.mxu0
    %v13213 = vadd.f32 0.0, %v13212
    %13214 = vmatmul.f32.gmra.mxu0 %v13188
    %v13215 = vpop.f32.mrf.mxu0
    %v13216 = vadd.f32 0.0, %v13215
    %13217 = vmatmul.f32.gmra.mxu0 %v13190
    %v13218 = vpop.f32.mrf.mxu0
    %v13219 = vadd.f32 0.0, %v13218
    %13220 = vdwg.mxu0
    %v13221 = vadd.f32 %v13132, %v13210
    %v13222 = vadd.f32 %v13133, %v13213
    %v13223 = vadd.f32 %v13134, %v13216
    %v13224 = vadd.f32 %v13135, %v13219
    %v13225 = vld [vmem:[%s13] sm:$0x1]
    %v13227 = vperm.slane %v13225, 0
    %v13229 = vadd.f32 %v13221, %v13227
    %v13230 = vadd.f32 %v13222, %v13227
    %v13231 = vadd.f32 %v13223, %v13227
    %v13232 = vadd.f32 %v13224, %v13227
    %v13233 = vmax.f32 %v13229, 0.0
    %v13234 = vmax.f32 %v13230, 0.0
    %v13235 = vmax.f32 %v13231, 0.0
    %v13236 = vmax.f32 %v13232, 0.0
    %v13241 = vrot.slane %v13233, 1
    %v13242 = vrot.slane %v13234, 1
    %v13243 = vsel %vm450, %v13241, %v13242
    %v13244 = vrot.slane %v13235, 1
    %v13245 = vsel %vm450, %v13242, %v13244
    %v13246 = vrot.slane %v13236, 1
    %v13247 = vsel %vm450, %v13244, %v13246
    %v13248 = vsel %vm450, %v13246, %v8801
    %v13253 = vmax.f32 %v13233, %v13243
    %v13254 = vmax.f32 %v13234, %v13245
    %v13255 = vmax.f32 %v13235, %v13247
    %v13256 = vmax.f32 %v13236, %v13248
    %v13261 = vrot.slane %v13253, 4
    %v13262 = vrot.slane %v13254, 4
    %v13263 = vsel %vm11756, %v13261, %v13262
    %v13264 = vrot.slane %v13255, 4
    %v13265 = vsel %vm11756, %v13262, %v13264
    %v13266 = vrot.slane %v13256, 4
    %v13267 = vsel %vm11756, %v13264, %v13266
    %v13268 = vrot.slane 0.0, 4
    %v13269 = vsel %vm11756, %v13266, %v13268
    %v13274 = vmax.f32 %v13253, %v13263
    %v13275 = vmax.f32 %v13254, %v13265
    %v13276 = vmax.f32 %v13255, %v13267
    %v13277 = vmax.f32 %v13256, %v13269
    %v13278 = vld [vmem:[%s15] sm:$0xff]
    %v13280 = vsel %vm12552, %v13278, 0
    %13282 = vmatpush.msra.mxu0 0.0
    %13283 = vmatpush.msra.mxu0 0.0
    %13284 = vmatpush.msra.mxu0 0.0
    %13285 = vmatpush.msra.mxu0 0.0
    %13286 = vmatpush.msra.mxu0 0.0
    %13287 = vmatpush.msra.mxu0 0.0
    %13288 = vmatpush.msra.mxu0 0.0
    %13289 = vmatpush.msra.mxu0 0.0
    %13290 = vmatpush.msra.mxu0 0.0
    %13291 = vmatpush.msra.mxu0 0.0
    %13292 = vmatpush.msra.mxu0 0.0
    %13293 = vmatpush.msra.mxu0 0.0
    %13294 = vmatpush.msra.mxu0 %v13277
    %13295 = vmatpush.msra.mxu0 %v13276
    %13296 = vmatpush.msra.mxu0 %v13275
    %13297 = vmatpush.msra.mxu0 %v13274
    %13298 = vmatmul.f32.gmra.mxu0 %v13280
    %v13299 = vpop.f32.mrf.mxu0
    %v13300 = vadd.f32 0.0, %v13299
    %13301 = vdwg.mxu0
    %v13302 = vld [vmem:[%s16] sm:$0xff]
    %v13303 = vld [vmem:[%s16 + $0x8] sm:$0xff]
    %v13304 = vld [vmem:[%s16 + $0x10] sm:$0xff]
    %v13305 = vld [vmem:[%s16 + $0x18] sm:$0xff]
    %v13306 = vld [vmem:[%s16 + $0x20] sm:$0xff]
    %v13307 = vld [vmem:[%s16 + $0x28] sm:$0xff]
    %v13308 = vld [vmem:[%s16 + $0x30] sm:$0xff]
    %v13309 = vld [vmem:[%s16 + $0x38] sm:$0xff]
    %v13311 = vrot.slane %v13300, 1
    %v13312 = vsel %vm12552, %v13311, 0
    %13314 = vmatpush.msra.mxu0 0.0
    %13315 = vmatpush.msra.mxu0 0.0
    %13316 = vmatpush.msra.mxu0 0.0
    %13317 = vmatpush.msra.mxu0 0.0
    %13318 = vmatpush.msra.mxu0 0.0
    %13319 = vmatpush.msra.mxu0 0.0
    %13320 = vmatpush.msra.mxu0 0.0
    %13321 = vmatpush.msra.mxu0 0.0
    %13322 = vmatpush.msra.mxu0 0.0
    %13323 = vmatpush.msra.mxu0 0.0
    %13324 = vmatpush.msra.mxu0 0.0
    %13325 = vmatpush.msra.mxu0 0.0
    %13326 = vmatpush.msra.mxu0 %v13309
    %13327 = vmatpush.msra.mxu0 %v13308
    %13328 = vmatpush.msra.mxu0 %v13307
    %13329 = vmatpush.msra.mxu0 %v13306
    %13330 = vmatmul.f32.gmra.mxu0 %v13312
    %v13331 = vpop.f32.mrf.mxu0
    %v13332 = vadd.f32 0.0, %v13331
    %13333 = vdwg.mxu0
    %v13334 = vsel %vm12552, %v13300, 0
    %13336 = vmatpush.msra.mxu0 0.0
    %13337 = vmatpush.msra.mxu0 0.0
    %13338 = vmatpush.msra.mxu0 0.0
    %13339 = vmatpush.msra.mxu0 0.0
    %13340 = vmatpush.msra.mxu0 0.0
    %13341 = vmatpush.msra.mxu0 0.0
    %13342 = vmatpush.msra.mxu0 0.0
    %13343 = vmatpush.msra.mxu0 0.0
    %13344 = vmatpush.msra.mxu0 0.0
    %13345 = vmatpush.msra.mxu0 0.0
    %13346 = vmatpush.msra.mxu0 0.0
    %13347 = vmatpush.msra.mxu0 0.0
    %13348 = vmatpush.msra.mxu0 %v13305
    %13349 = vmatpush.msra.mxu0 %v13304
    %13350 = vmatpush.msra.mxu0 %v13303
    %13351 = vmatpush.msra.mxu0 %v13302
    %13352 = vmatmul.f32.gmra.mxu0 %v13334
    %v13353 = vpop.f32.mrf.mxu0
    %v13354 = vadd.f32 %v13332, %v13353
    %13355 = vdwg.mxu0
    %v13356 = vld [vmem:[%s16 + $0x40] sm:$0xff]
    %v13357 = vld [vmem:[%s16 + $0x48] sm:$0xff]
    %v13358 = vld [vmem:[%s16 + $0x50] sm:$0xff]
    %v13359 = vld [vmem:[%s16 + $0x58] sm:$0xff]
    %v13360 = vrot.slane %v13300, 2
    %v13361 = vsel %vm12552, %v13360, 0
    %13363 = vmatpush.msra.mxu0 0.0
    %13364 = vmatpush.msra.mxu0 0.0
    %13365 = vmatpush.msra.mxu0 0.0
    %13366 = vmatpush.msra.mxu0 0.0
    %13367 = vmatpush.msra.mxu0 0.0
    %13368 = vmatpush.msra.mxu0 0.0
    %13369 = vmatpush.msra.mxu0 0.0
    %13370 = vmatpush.msra.mxu0 0.0
    %13371 = vmatpush.msra.mxu0 0.0
    %13372 = vmatpush.msra.mxu0 0.0
    %13373 = vmatpush.msra.mxu0 0.0
    %13374 = vmatpush.msra.mxu0 0.0
    %13375 = vmatpush.msra.mxu0 %v13359
    %13376 = vmatpush.msra.mxu0 %v13358
    %13377 = vmatpush.msra.mxu0 %v13357
    %13378 = vmatpush.msra.mxu0 %v13356
    %13379 = vmatmul.f32.gmra.mxu0 %v13361
    %v13380 = vpop.f32.mrf.mxu0
    %v13381 = vadd.f32 0.0, %v13380
    %13382 = vdwg.mxu0
    %v13383 = vadd.f32 %v13354, %v13381
    %v13384 = vld [vmem:[%s16 + $0x60] sm:$0xff]
    %v13385 = vld [vmem:[%s16 + $0x68] sm:$0xff]
    %v13386 = vld [vmem:[%s16 + $0x70] sm:$0xff]
    %v13387 = vld [vmem:[%s16 + $0x78] sm:$0xff]
    %v13388 = vrot.slane %v13300, 3
    %v13389 = vsel %vm12552, %v13388, 0
    %13391 = vmatpush.msra.mxu0 0.0
    %13392 = vmatpush.msra.mxu0 0.0
    %13393 = vmatpush.msra.mxu0 0.0
    %13394 = vmatpush.msra.mxu0 0.0
    %13395 = vmatpush.msra.mxu0 0.0
    %13396 = vmatpush.msra.mxu0 0.0
    %13397 = vmatpush.msra.mxu0 0.0
    %13398 = vmatpush.msra.mxu0 0.0
    %13399 = vmatpush.msra.mxu0 0.0
    %13400 = vmatpush.msra.mxu0 0.0
    %13401 = vmatpush.msra.mxu0 0.0
    %13402 = vmatpush.msra.mxu0 0.0
    %13403 = vmatpush.msra.mxu0 %v13387
    %13404 = vmatpush.msra.mxu0 %v13386
    %13405 = vmatpush.msra.mxu0 %v13385
    %13406 = vmatpush.msra.mxu0 %v13384
    %13407 = vmatmul.f32.gmra.mxu0 %v13389
    %v13408 = vpop.f32.mrf.mxu0
    %v13409 = vadd.f32 0.0, %v13408
    %13410 = vdwg.mxu0
    %v13411 = vadd.f32 %v13383, %v13409
    %v13412 = vld [vmem:[%s17] sm:$0x1]
    %v13413 = vadd.f32 %v13411, %v13412
    %v13414 = vmax.f32 %v13413, 0.0
    %v13415 = vld [vmem:[%s18] sm:$0xff]
    %v13416 = vld [vmem:[%s18 + $0x8] sm:$0xff]
    %v13417 = vld [vmem:[%s18 + $0x10] sm:$0xff]
    %v13418 = vld [vmem:[%s18 + $0x18] sm:$0xff]
    %v13419 = vld [vmem:[%s18 + $0x20] sm:$0xff]
    %v13420 = vld [vmem:[%s18 + $0x28] sm:$0xff]
    %v13421 = vld [vmem:[%s18 + $0x30] sm:$0xff]
    %v13422 = vld [vmem:[%s18 + $0x38] sm:$0xff]
    %v13423 = vld [vmem:[%s19] sm:$0x1]
    %vm13424 = vcmask 523264
    %v13426 = vsel %vm13424, %v13414, 0
    %13428 = vmatpush.msra.mxu0 0.0
    %13429 = vmatpush.msra.mxu0 0.0
    %13430 = vmatpush.msra.mxu0 0.0
    %13431 = vmatpush.msra.mxu0 0.0
    %13432 = vmatpush.msra.mxu0 0.0
    %13433 = vmatpush.msra.mxu0 0.0
    %13434 = vmatpush.msra.mxu0 0.0
    %13435 = vmatpush.msra.mxu0 0.0
    %13436 = vmatpush.msra.mxu0 %v13422
    %13437 = vmatpush.msra.mxu0 %v13421
    %13438 = vmatpush.msra.mxu0 %v13420
    %13439 = vmatpush.msra.mxu0 %v13419
    %13440 = vmatpush.msra.mxu0 %v13418
    %13441 = vmatpush.msra.mxu0 %v13417
    %13442 = vmatpush.msra.mxu0 %v13416
    %13443 = vmatpush.msra.mxu0 %v13415
    %13444 = vmatmul.f32.gmra.mxu0 %v13426
    %v13445 = vpop.f32.mrf.mxu0
    %v13446 = vadd.f32 %v13423, %v13445
    %13447 = vdwg.mxu0
    %v13448 = vmax.f32 %v13446, 0.0
    %vm13449 = vcmask 516096
    %13450 = vst.msk [vmem:[#allocation2] sm:$0x1] %vm13449, %v13448
    %v13451 = vld [vmem:[%s16] sm:$0xff]
    %v13452 = vld [vmem:[%s16 + $0x8] sm:$0xff]
    %v13453 = vld [vmem:[%s16 + $0x10] sm:$0xff]
    %v13454 = vld [vmem:[%s16 + $0x18] sm:$0xff]
    %v13455 = vld [vmem:[%s16 + $0x20] sm:$0xff]
    %v13456 = vld [vmem:[%s16 + $0x28] sm:$0xff]
    %v13457 = vld [vmem:[%s16 + $0x30] sm:$0xff]
    %v13458 = vld [vmem:[%s16 + $0x38] sm:$0xff]
    %v13459 = vrot.slane %v13300, 5
    %v13460 = vsel %vm12552, %v13459, 0
    %13462 = vmatpush.msra.mxu0 0.0
    %13463 = vmatpush.msra.mxu0 0.0
    %13464 = vmatpush.msra.mxu0 0.0
    %13465 = vmatpush.msra.mxu0 0.0
    %13466 = vmatpush.msra.mxu0 0.0
    %13467 = vmatpush.msra.mxu0 0.0
    %13468 = vmatpush.msra.mxu0 0.0
    %13469 = vmatpush.msra.mxu0 0.0
    %13470 = vmatpush.msra.mxu0 0.0
    %13471 = vmatpush.msra.mxu0 0.0
    %13472 = vmatpush.msra.mxu0 0.0
    %13473 = vmatpush.msra.mxu0 0.0
    %13474 = vmatpush.msra.mxu0 %v13458
    %13475 = vmatpush.msra.mxu0 %v13457
    %13476 = vmatpush.msra.mxu0 %v13456
    %13477 = vmatpush.msra.mxu0 %v13455
    %13478 = vmatmul.f32.gmra.mxu0 %v13460
    %v13479 = vpop.f32.mrf.mxu0
    %v13480 = vadd.f32 0.0, %v13479
    %13481 = vdwg.mxu0
    %v13482 = vrot.slane %v13300, 4
    %v13483 = vsel %vm12552, %v13482, 0
    %13485 = vmatpush.msra.mxu0 0.0
    %13486 = vmatpush.msra.mxu0 0.0
    %13487 = vmatpush.msra.mxu0 0.0
    %13488 = vmatpush.msra.mxu0 0.0
    %13489 = vmatpush.msra.mxu0 0.0
    %13490 = vmatpush.msra.mxu0 0.0
    %13491 = vmatpush.msra.mxu0 0.0
    %13492 = vmatpush.msra.mxu0 0.0
    %13493 = vmatpush.msra.mxu0 0.0
    %13494 = vmatpush.msra.mxu0 0.0
    %13495 = vmatpush.msra.mxu0 0.0
    %13496 = vmatpush.msra.mxu0 0.0
    %13497 = vmatpush.msra.mxu0 %v13454
    %13498 = vmatpush.msra.mxu0 %v13453
    %13499 = vmatpush.msra.mxu0 %v13452
    %13500 = vmatpush.msra.mxu0 %v13451
    %13501 = vmatmul.f32.gmra.mxu0 %v13483
    %v13502 = vpop.f32.mrf.mxu0
    %v13503 = vadd.f32 %v13480, %v13502
    %13504 = vdwg.mxu0
    %v13505 = vld [vmem:[%s16 + $0x40] sm:$0xff]
    %v13506 = vld [vmem:[%s16 + $0x48] sm:$0xff]
    %v13507 = vld [vmem:[%s16 + $0x50] sm:$0xff]
    %v13508 = vld [vmem:[%s16 + $0x58] sm:$0xff]
    %v13509 = vrot.slane %v13300, 6
    %v13510 = vsel %vm12552, %v13509, 0
    %13512 = vmatpush.msra.mxu0 0.0
    %13513 = vmatpush.msra.mxu0 0.0
    %13514 = vmatpush.msra.mxu0 0.0
    %13515 = vmatpush.msra.mxu0 0.0
    %13516 = vmatpush.msra.mxu0 0.0
    %13517 = vmatpush.msra.mxu0 0.0
    %13518 = vmatpush.msra.mxu0 0.0
    %13519 = vmatpush.msra.mxu0 0.0
    %13520 = vmatpush.msra.mxu0 0.0
    %13521 = vmatpush.msra.mxu0 0.0
    %13522 = vmatpush.msra.mxu0 0.0
    %13523 = vmatpush.msra.mxu0 0.0
    %13524 = vmatpush.msra.mxu0 %v13508
    %13525 = vmatpush.msra.mxu0 %v13507
    %13526 = vmatpush.msra.mxu0 %v13506
    %13527 = vmatpush.msra.mxu0 %v13505
    %13528 = vmatmul.f32.gmra.mxu0 %v13510
    %v13529 = vpop.f32.mrf.mxu0
    %v13530 = vadd.f32 0.0, %v13529
    %13531 = vdwg.mxu0
    %v13532 = vadd.f32 %v13503, %v13530
    %v13533 = vld [vmem:[%s16 + $0x60] sm:$0xff]
    %v13534 = vld [vmem:[%s16 + $0x68] sm:$0xff]
    %v13535 = vld [vmem:[%s16 + $0x70] sm:$0xff]
    %v13536 = vld [vmem:[%s16 + $0x78] sm:$0xff]
    %v13537 = vrot.slane %v13300, 7
    %v13538 = vsel %vm12552, %v13537, 0
    %13540 = vmatpush.msra.mxu0 0.0
    %13541 = vmatpush.msra.mxu0 0.0
    %13542 = vmatpush.msra.mxu0 0.0
    %13543 = vmatpush.msra.mxu0 0.0
    %13544 = vmatpush.msra.mxu0 0.0
    %13545 = vmatpush.msra.mxu0 0.0
    %13546 = vmatpush.msra.mxu0 0.0
    %13547 = vmatpush.msra.mxu0 0.0
    %13548 = vmatpush.msra.mxu0 0.0
    %13549 = vmatpush.msra.mxu0 0.0
    %13550 = vmatpush.msra.mxu0 0.0
    %13551 = vmatpush.msra.mxu0 0.0
    %13552 = vmatpush.msra.mxu0 %v13536
    %13553 = vmatpush.msra.mxu0 %v13535
    %13554 = vmatpush.msra.mxu0 %v13534
    %13555 = vmatpush.msra.mxu0 %v13533
    %13556 = vmatmul.f32.gmra.mxu0 %v13538
    %v13557 = vpop.f32.mrf.mxu0
    %v13558 = vadd.f32 0.0, %v13557
    %13559 = vdwg.mxu0
    %v13560 = vadd.f32 %v13532, %v13558
    %v13561 = vld [vmem:[%s17] sm:$0x1]
    %v13562 = vadd.f32 %v13560, %v13561
    %v13563 = vmax.f32 %v13562, 0.0
    %v13564 = vld [vmem:[%s18] sm:$0xff]
    %v13565 = vld [vmem:[%s18 + $0x8] sm:$0xff]
    %v13566 = vld [vmem:[%s18 + $0x10] sm:$0xff]
    %v13567 = vld [vmem:[%s18 + $0x18] sm:$0xff]
    %v13568 = vld [vmem:[%s18 + $0x20] sm:$0xff]
    %v13569 = vld [vmem:[%s18 + $0x28] sm:$0xff]
    %v13570 = vld [vmem:[%s18 + $0x30] sm:$0xff]
    %v13571 = vld [vmem:[%s18 + $0x38] sm:$0xff]
    %v13572 = vld [vmem:[%s19] sm:$0x1]
    %v13574 = vsel %vm13424, %v13563, 0
    %13576 = vmatpush.msra.mxu0 0.0
    %13577 = vmatpush.msra.mxu0 0.0
    %13578 = vmatpush.msra.mxu0 0.0
    %13579 = vmatpush.msra.mxu0 0.0
    %13580 = vmatpush.msra.mxu0 0.0
    %13581 = vmatpush.msra.mxu0 0.0
    %13582 = vmatpush.msra.mxu0 0.0
    %13583 = vmatpush.msra.mxu0 0.0
    %13584 = vmatpush.msra.mxu0 %v13571
    %13585 = vmatpush.msra.mxu0 %v13570
    %13586 = vmatpush.msra.mxu0 %v13569
    %13587 = vmatpush.msra.mxu0 %v13568
    %13588 = vmatpush.msra.mxu0 %v13567
    %13589 = vmatpush.msra.mxu0 %v13566
    %13590 = vmatpush.msra.mxu0 %v13565
    %13591 = vmatpush.msra.mxu0 %v13564
    %13592 = vmatmul.f32.gmra.mxu0 %v13574
    %v13593 = vpop.f32.mrf.mxu0
    %v13594 = vadd.f32 %v13572, %v13593
    %13595 = vdwg.mxu0
    %v13596 = vmax.f32 %v13594, 0.0
    %13597 = vst.msk [vmem:[#allocation2 + $0x1] sm:$0x1] %vm13449, %v13596
    // Predicated region
    $region82: #{tpu_custom_call.1} parent=1 // pred_check
      _
    $region83: #{tpu_custom_call.1} parent=1 // pred_check_branch
      %13599 = sbr.rel (0) target = $region85
    $region84: #{tpu_custom_call.1} parent=1 // pred_region
      %13601 = vsyncadd [#allocation3], 0
      %s13603 = sshll.u32 [#allocation2], 4
      %s13604 = int_to_ptr.vmem [resolvable:$true] %s13603
      %s13605 = sshll.u32 %s20, 4
      %s13606 = int_to_ptr.hbm [resolvable:$true] %s13605
      %13608 = dma.vmem_to_hbm [thread:$0]  %s13604, 32, %s13606, [#allocation3]
    $region85: #{tpu_custom_call.1} parent=1 // pred_fallthru
      _
    // Predicated region
    $region86: #{tpu_custom_call.1} parent=1 // pred_check
      _
    $region87: #{tpu_custom_call.1} parent=1 // pred_check_branch
      %13610 = sbr.rel (0) target = $region89
    $region88: #{tpu_custom_call.1} parent=1 // pred_region
      %13612 = dma.done [#allocation3], 32
    $region89: #{tpu_custom_call.1} parent=1 // pred_fallthru
      _
    %13613 = vsyncpa [#allocation3], 1

</llo_original>
